<compile_context>
chip_gen: v7x
topology: tpu7x:2x2x1
jax: 0.10.0
libtpu: 0.0.40
codegen_flags: <defaults>
</compile_context>

<pallas_src>
import functools
import math

import jax
import jax.numpy as jnp
from jax.experimental import pallas as pl
from jax.experimental.pallas import tpu as pltpu


def _round_up(x, m):
    return ((x + m - 1) // m) * m


def _scft_kernel(vs_ref, vr_ref,
                 wq_ref, bq_ref, wk_ref, bk_ref, wv_ref, bv_ref,
                 q_ref, k_ref, v_ref, c_ref, *, scale):
    # vs_ref / vr_ref: (block_b, L, dvp) blocks for the current grid step.
    Bb, L, dvp = vs_ref.shape
    vs = vs_ref[...]
    vr = vr_ref[...]

    # Fused projections: one (Bb*L, dvp) x (dvp, dvp) matmul per projection.
    vs2 = vs.reshape(Bb * L, dvp)
    vr2 = vr.reshape(Bb * L, dvp)
    q2 = jnp.dot(vs2, wq_ref[...], preferred_element_type=jnp.float32) + bq_ref[...]
    k2 = jnp.dot(vr2, wk_ref[...], preferred_element_type=jnp.float32) + bk_ref[...]
    v2 = jnp.dot(vr2, wv_ref[...], preferred_element_type=jnp.float32) + bv_ref[...]

    q3 = q2.reshape(Bb, L, dvp)
    k3 = k2.reshape(Bb, L, dvp)
    v3 = v2.reshape(Bb, L, dvp)

    # Store projections early so the writebacks overlap with the attention math.
    q_ref[...] = q3.astype(q_ref.dtype)
    k_ref[...] = k3.astype(k_ref.dtype)
    v_ref[...] = v3.astype(v_ref.dtype)

    # Scaled dot-product attention.
    # Scores: contract the dv axes directly (MXU consumes K untransposed).
    cdt = vs.dtype  # f32 by default; bf16 if the wrapper casts inputs.
    scores = jax.lax.dot_general(
        q3.astype(cdt), k3.astype(cdt),
        dimension_numbers=(((2,), (2,)), ((0,), (0,))),
        preferred_element_type=jnp.float32) * scale            # (Bb, L, L)

    m = jnp.max(scores, axis=-1, keepdims=True)
    p = jnp.exp(scores - m)
    p = p * pl.reciprocal(jnp.sum(p, axis=-1, keepdims=True), approx=True)

    attn = jax.lax.dot_general(
        p.astype(cdt), v3.astype(cdt),
        dimension_numbers=(((2,), (1,)), ((0,), (0,))),
        preferred_element_type=jnp.float32)                     # (Bb, L, dvp)

    # Residual add with Vs (torch.add(..., Vs)).
    c_ref[...] = (attn + vs.astype(jnp.float32)).astype(c_ref.dtype)


def _pick_block_b(B, L, dvp, budget_bytes=20 * 1024 * 1024):
    """Largest divisor of B whose per-step working set fits a VMEM budget."""
    # 2 inputs + 4 outputs double-buffered, plus in-kernel q/k/v/attn values
    # and the scores/probs temporaries.
    per_elem = (6 * 2 + 4) * L * dvp * 4 + 2 * L * L * 4
    bb = max(1, min(B, budget_bytes // max(per_elem, 1)))
    while B % bb:
        bb -= 1
    return int(bb)


def scft_forward(Vs, Vr, params, *, block_b=None, use_bf16=False):
    """Vs, Vr: (B, L, dv) float32 with L == 256.

    Returns (c, q, k, v) like the PyTorch module: c is (B, dv, 16, 16);
    q, k, v are (B, L, dv) float32.
    """
    B, L, dv = Vs.shape
    assert L == 256, "module reshapes the sequence axis to 16x16"

    dvp = _round_up(dv, 128)        # lane-align (real module dv=992 -> 1024)
    pad = dvp - dv

    def pad_last(x):
        if pad == 0:
            return x
        return jnp.pad(x, [(0, 0)] * (x.ndim - 1) + [(0, pad)])

    def pad_w(w):                   # torch Linear weight (out, in) -> (in, out) padded
        wt = w.T
        if pad:
            wt = jnp.pad(wt, ((0, pad), (0, pad)))
        return wt

    def pad_b(b):
        b = b.reshape(1, dv)
        if pad:
            b = jnp.pad(b, ((0, 0), (0, pad)))
        return b

    vs_p, vr_p = pad_last(Vs), pad_last(Vr)
    wq_t, wk_t, wv_t = pad_w(params["wq"]), pad_w(params["wk"]), pad_w(params["wv"])
    bq, bk, bv = pad_b(params["bq"]), pad_b(params["bk"]), pad_b(params["bv"])

    if use_bf16:
        # Optional: bf16 MXU inputs (f32 accumulation stays in-kernel); loosens numerics.
        cast = lambda x: x.astype(jnp.bfloat16)
        vs_p, vr_p = cast(vs_p), cast(vr_p)
        wq_t, wk_t, wv_t = cast(wq_t), cast(wk_t), cast(wv_t)
        bq, bk, bv = cast(bq), cast(bk), cast(bv)

    if block_b is None:
        block_b = _pick_block_b(B, L, dvp)
    assert B % block_b == 0
    grid = (B // block_b,)

    kernel = functools.partial(_scft_kernel, scale=1.0 / math.sqrt(float(dv)))

    # Explicit VMEM budget (generous margin; floored at the 32 MiB default).
    est = (block_b * ((6 * 2 + 4) * L * dvp + 2 * L * L) + 2 * 3 * dvp * dvp) * 4
    vmem_limit = int(min(128 * 1024 * 1024, max(32 * 1024 * 1024, 2 * est)))

    cost = pl.CostEstimate(
        flops=2 * B * L * dvp * (3 * dvp + 2 * L),
        transcendentals=B * L * L,
        bytes_accessed=4 * (6 * B * L * dvp + 3 * dvp * dvp + 3 * dvp),
    )

    out_shapes = tuple(jax.ShapeDtypeStruct((B, L, dvp), jnp.float32)
                       for _ in range(4))          # q, k, v, c (pre-transpose)

    results = None
    for single_buffer in (True, False):
        try:
            seq_spec = pl.BlockSpec((block_b, L, dvp), lambda b: (b, 0, 0))
            if single_buffer:
                # Grid-invariant weights/biases: single VMEM buffer (no re-fetch;
                # halves weight VMEM -- important at dv~1024 fp32 on v7x).
                w_spec = pl.BlockSpec((dvp, dvp), lambda b: (0, 0),
                                      pipeline_mode=pl.Buffered(1))
                b_spec = pl.BlockSpec((1, dvp), lambda b: (0, 0),
                                      pipeline_mode=pl.Buffered(1))
            else:
                w_spec = pl.BlockSpec((dvp, dvp), lambda b: (0, 0))
                b_spec = pl.BlockSpec((1, dvp), lambda b: (0, 0))

            results = pl.pallas_call(
                kernel,
                out_shape=out_shapes,
                grid_spec=pltpu.PrefetchScalarGridSpec(
                    num_scalar_prefetch=0,
                    grid=grid,
                    in_specs=[seq_spec, seq_spec,
                              w_spec, b_spec, w_spec, b_spec, w_spec, b_spec],
                    out_specs=[seq_spec, seq_spec, seq_spec, seq_spec],
                ),
                compiler_params=pltpu.CompilerParams(
                    dimension_semantics=("parallel",),
                    vmem_limit_bytes=vmem_limit),
                cost_estimate=cost,
            )(vs_p, vr_p, wq_t, bq, wk_t, bk, wv_t, bv)
            break
        except Exception:
            if not single_buffer:
                raise   # plain-spec path failed too; surface the real error
            # Fall back to default (double-buffered) specs if Buffered(1) is
            # not supported by the installed Pallas version.

    q, k, v, c_pre = results
    if pad:
        q, k, v, c_pre = (x[..., :dv] for x in (q, k, v, c_pre))

    # c = transpose(c, 1, 2) then reshape to (B, dv, 16, 16)  -- pure XLA glue.
    c = jnp.transpose(c_pre, (0, 2, 1)).reshape(B, dv, 16, 16)
    return c, q, k, v


def _reference(Vs, Vr, params):
    """Pure-JAX reference mirroring the PyTorch forward (for sanity check)."""
    q = Vs @ params["wq"].T + params["bq"]
    k = Vr @ params["wk"].T + params["bk"]
    v = Vr @ params["wv"].T + params["bv"]
    d_k = q.shape[-1]
    scores = jnp.einsum("bld,bmd->blm", q, k) / math.sqrt(d_k)
    p = jax.nn.softmax(scores, axis=-1)
    c = jnp.einsum("blm,bmd->bld", p, v) + Vs
    c = jnp.transpose(c, (0, 2, 1)).reshape(Vs.shape[0], d_k, 16, 16)
    return c, q, k, v


def init_params(key, dv):
    """Deterministic init matching nn.Linear shapes: weight (dv, dv), bias (dv,)."""
    keys = jax.random.split(key, 6)
    bound = 1.0 / math.sqrt(dv)
    u = lambda k, shape: jax.random.uniform(k, shape, jnp.float32, -bound, bound)
    return {
        "wq": u(keys[0], (dv, dv)), "bq": u(keys[1], (dv,)),
        "wk": u(keys[2], (dv, dv)), "bk": u(keys[3], (dv,)),
        "wv": u(keys[4], (dv, dv)), "bv": u(keys[5], (dv,)),
    }


if __name__ == "__main__":
    B = 2
    L = 256          # fixed by the reshape to (B, dv, 16, 16)
    key = jax.random.PRNGKey(0)

    # dv=128: lane-aligned stand-in for the real 992.
    # dv=96 : exercises the pad-to-128 path (the real dv=992 is not %128 either).
    for dv in (128, 96):
        k_vs, k_vr, k_p = jax.random.split(jax.random.fold_in(key, dv), 3)
        Vs = jax.random.normal(k_vs, (B, L, dv), jnp.float32)
        Vr = jax.random.normal(k_vr, (B, L, dv), jnp.float32)
        params = init_params(k_p, dv)

        c, q, k, v = scft_forward(Vs, Vr, params)
        jax.block_until_ready((c, q, k, v))

        c_ref, q_ref, k_ref, v_ref = _reference(Vs, Vr, params)
        assert c.shape == (B, dv, 16, 16)
        assert jnp.allclose(q, q_ref, atol=1e-4, rtol=1e-4)
        assert jnp.allclose(k, k_ref, atol=1e-4, rtol=1e-4)
        assert jnp.allclose(v, v_ref, atol=1e-4, rtol=1e-4)
        # c uses the EUP approximate reciprocal in the softmax denominator,
        # so allow a slightly looser tolerance than the exact projections.
        assert jnp.allclose(c, c_ref, atol=1e-3, rtol=1e-3)

    print("KERNEL_OK")
</pallas_src>

<mosaic_0001>
module attributes {stable_mosaic.version = 11 : i64} {
  func.func @_scft_kernel(%arg0: i32, %arg1: memref<2x256x128xf32, #tpu.memory_space<vmem>>, %arg2: memref<2x256x128xf32, #tpu.memory_space<vmem>>, %arg3: memref<128x128xf32, #tpu.memory_space<vmem>>, %arg4: memref<1x128xf32, #tpu.memory_space<vmem>>, %arg5: memref<128x128xf32, #tpu.memory_space<vmem>>, %arg6: memref<1x128xf32, #tpu.memory_space<vmem>>, %arg7: memref<128x128xf32, #tpu.memory_space<vmem>>, %arg8: memref<1x128xf32, #tpu.memory_space<vmem>>, %arg9: memref<2x256x128xf32, #tpu.memory_space<vmem>>, %arg10: memref<2x256x128xf32, #tpu.memory_space<vmem>>, %arg11: memref<2x256x128xf32, #tpu.memory_space<vmem>>, %arg12: memref<2x256x128xf32, #tpu.memory_space<vmem>>) attributes {dimension_semantics = [#tpu.dimension_semantics<parallel>], iteration_bounds = array<i64: 1>, scalar_prefetch = 0 : i64, scratch_operands = 0 : i64, tpu.core_type = #tpu.core_type<tc>, window_params = [{transform_indices = @transform_0, window_bounds = array<i64: 2, 256, 128>}, {transform_indices = @transform_1, window_bounds = array<i64: 2, 256, 128>}, {pipeline_mode = #tpu.pipeline_mode<synchronous>, transform_indices = @transform_2, window_bounds = array<i64: 128, 128>}, {pipeline_mode = #tpu.pipeline_mode<synchronous>, transform_indices = @transform_3, window_bounds = array<i64: 1, 128>}, {pipeline_mode = #tpu.pipeline_mode<synchronous>, transform_indices = @transform_4, window_bounds = array<i64: 128, 128>}, {pipeline_mode = #tpu.pipeline_mode<synchronous>, transform_indices = @transform_5, window_bounds = array<i64: 1, 128>}, {pipeline_mode = #tpu.pipeline_mode<synchronous>, transform_indices = @transform_6, window_bounds = array<i64: 128, 128>}, {pipeline_mode = #tpu.pipeline_mode<synchronous>, transform_indices = @transform_7, window_bounds = array<i64: 1, 128>}, {transform_indices = @transform_8, window_bounds = array<i64: 2, 256, 128>}, {transform_indices = @transform_9, window_bounds = array<i64: 2, 256, 128>}, {transform_indices = @transform_10, window_bounds = array<i64: 2, 256, 128>}, {transform_indices = @transform_11, window_bounds = array<i64: 2, 256, 128>}]} {
    %c0 = arith.constant 0 : index
    %c0_0 = arith.constant 0 : index
    %c0_1 = arith.constant 0 : index
    %0 = vector.load %arg1[%c0, %c0_0, %c0_1] : memref<2x256x128xf32, #tpu.memory_space<vmem>>, vector<2x256x128xf32>
    %c0_2 = arith.constant 0 : index
    %c0_3 = arith.constant 0 : index
    %c0_4 = arith.constant 0 : index
    %1 = vector.load %arg2[%c0_2, %c0_3, %c0_4] : memref<2x256x128xf32, #tpu.memory_space<vmem>>, vector<2x256x128xf32>
    %2 = vector.shape_cast %0 : vector<2x256x128xf32> to vector<512x128xf32>
    %3 = vector.shape_cast %1 : vector<2x256x128xf32> to vector<512x128xf32>
    %c0_5 = arith.constant 0 : index
    %c0_6 = arith.constant 0 : index
    %4 = vector.load %arg3[%c0_5, %c0_6] : memref<128x128xf32, #tpu.memory_space<vmem>>, vector<128x128xf32>
    %cst = arith.constant dense<0.000000e+00> : vector<512x128xf32>
    %5 = tpu.matmul %2, %4, %cst {dimension_numbers = #tpu.dot_dimension_numbers<[1], [0], [0], [1], [0, 0, 1, 1], [], []>} : vector<512x128xf32>, vector<128x128xf32>, vector<512x128xf32> -> vector<512x128xf32>
    %c0_7 = arith.constant 0 : index
    %c0_8 = arith.constant 0 : index
    %6 = vector.load %arg4[%c0_7, %c0_8] : memref<1x128xf32, #tpu.memory_space<vmem>>, vector<1x128xf32>
    %7 = vector.broadcast %6 : vector<1x128xf32> to vector<512x128xf32>
    %8 = arith.addf %5, %7 : vector<512x128xf32>
    %c0_9 = arith.constant 0 : index
    %c0_10 = arith.constant 0 : index
    %9 = vector.load %arg5[%c0_9, %c0_10] : memref<128x128xf32, #tpu.memory_space<vmem>>, vector<128x128xf32>
    %cst_11 = arith.constant dense<0.000000e+00> : vector<512x128xf32>
    %10 = tpu.matmul %3, %9, %cst_11 {dimension_numbers = #tpu.dot_dimension_numbers<[1], [0], [0], [1], [0, 0, 1, 1], [], []>} : vector<512x128xf32>, vector<128x128xf32>, vector<512x128xf32> -> vector<512x128xf32>
    %c0_12 = arith.constant 0 : index
    %c0_13 = arith.constant 0 : index
    %11 = vector.load %arg6[%c0_12, %c0_13] : memref<1x128xf32, #tpu.memory_space<vmem>>, vector<1x128xf32>
    %12 = vector.broadcast %11 : vector<1x128xf32> to vector<512x128xf32>
    %13 = arith.addf %10, %12 : vector<512x128xf32>
    %c0_14 = arith.constant 0 : index
    %c0_15 = arith.constant 0 : index
    %14 = vector.load %arg7[%c0_14, %c0_15] : memref<128x128xf32, #tpu.memory_space<vmem>>, vector<128x128xf32>
    %cst_16 = arith.constant dense<0.000000e+00> : vector<512x128xf32>
    %15 = tpu.matmul %3, %14, %cst_16 {dimension_numbers = #tpu.dot_dimension_numbers<[1], [0], [0], [1], [0, 0, 1, 1], [], []>} : vector<512x128xf32>, vector<128x128xf32>, vector<512x128xf32> -> vector<512x128xf32>
    %c0_17 = arith.constant 0 : index
    %c0_18 = arith.constant 0 : index
    %16 = vector.load %arg8[%c0_17, %c0_18] : memref<1x128xf32, #tpu.memory_space<vmem>>, vector<1x128xf32>
    %17 = vector.broadcast %16 : vector<1x128xf32> to vector<512x128xf32>
    %18 = arith.addf %15, %17 : vector<512x128xf32>
    %19 = vector.shape_cast %8 : vector<512x128xf32> to vector<2x256x128xf32>
    %20 = vector.shape_cast %13 : vector<512x128xf32> to vector<2x256x128xf32>
    %21 = vector.shape_cast %18 : vector<512x128xf32> to vector<2x256x128xf32>
    %c0_19 = arith.constant 0 : index
    %c0_20 = arith.constant 0 : index
    %c0_21 = arith.constant 0 : index
    %22 = vector.load %arg9[%c0_19, %c0_20, %c0_21] : memref<2x256x128xf32, #tpu.memory_space<vmem>>, vector<2x256x128xf32>
    tpu.vector_store %arg9[%c0_19, %c0_20, %c0_21], %19 {strides = array<i32>} : memref<2x256x128xf32, #tpu.memory_space<vmem>>, vector<2x256x128xf32>,
    %c0_22 = arith.constant 0 : index
    %c0_23 = arith.constant 0 : index
    %c0_24 = arith.constant 0 : index
    %23 = vector.load %arg10[%c0_22, %c0_23, %c0_24] : memref<2x256x128xf32, #tpu.memory_space<vmem>>, vector<2x256x128xf32>
    tpu.vector_store %arg10[%c0_22, %c0_23, %c0_24], %20 {strides = array<i32>} : memref<2x256x128xf32, #tpu.memory_space<vmem>>, vector<2x256x128xf32>,
    %c0_25 = arith.constant 0 : index
    %c0_26 = arith.constant 0 : index
    %c0_27 = arith.constant 0 : index
    %24 = vector.load %arg11[%c0_25, %c0_26, %c0_27] : memref<2x256x128xf32, #tpu.memory_space<vmem>>, vector<2x256x128xf32>
    tpu.vector_store %arg11[%c0_25, %c0_26, %c0_27], %21 {strides = array<i32>} : memref<2x256x128xf32, #tpu.memory_space<vmem>>, vector<2x256x128xf32>,
    %cst_28 = arith.constant dense<0.000000e+00> : vector<2x256x256xf32>
    %25 = tpu.matmul %19, %20, %cst_28 {dimension_numbers = #tpu.dot_dimension_numbers<[2], [2], [1], [1], [0, 0, 0, 1, 1, 1], [0], [0]>} : vector<2x256x128xf32>, vector<2x256x128xf32>, vector<2x256x256xf32> -> vector<2x256x256xf32>
    %cst_29 = arith.constant 0.0883883461 : f32
    %26 = vector.broadcast %cst_29 : f32 to vector<2x256x256xf32>
    %27 = arith.mulf %25, %26 : vector<2x256x256xf32>
    %cst_30 = arith.constant dense<0xFF800000> : vector<2x256xf32>
    %28 = vector.multi_reduction <maximumf>, %27, %cst_30 [2] : vector<2x256x256xf32> to vector<2x256xf32>
    %29 = vector.shape_cast %28 : vector<2x256xf32> to vector<2x256x1xf32>
    %30 = vector.broadcast %29 : vector<2x256x1xf32> to vector<2x256x256xf32>
    %31 = arith.subf %27, %30 : vector<2x256x256xf32>
    %32 = math.exp %31 : vector<2x256x256xf32>
    %cst_31 = arith.constant dense<0.000000e+00> : vector<2x256xf32>
    %33 = vector.multi_reduction <add>, %32, %cst_31 [2] : vector<2x256x256xf32> to vector<2x256xf32>
    %34 = vector.shape_cast %33 : vector<2x256xf32> to vector<2x256x1xf32>
    %35 = tpu.reciprocal %34 {approx = true} : vector<2x256x1xf32> -> vector<2x256x1xf32>
    %36 = vector.broadcast %35 : vector<2x256x1xf32> to vector<2x256x256xf32>
    %37 = arith.mulf %32, %36 : vector<2x256x256xf32>
    %cst_32 = arith.constant dense<0.000000e+00> : vector<2x256x128xf32>
    %38 = tpu.matmul %37, %21, %cst_32 {dimension_numbers = #tpu.dot_dimension_numbers<[2], [1], [1], [2], [0, 0, 0, 1, 1, 2], [0], [0]>} : vector<2x256x256xf32>, vector<2x256x128xf32>, vector<2x256x128xf32> -> vector<2x256x128xf32>
    %39 = arith.addf %38, %0 : vector<2x256x128xf32>
    %c0_33 = arith.constant 0 : index
    %c0_34 = arith.constant 0 : index
    %c0_35 = arith.constant 0 : index
    %40 = vector.load %arg12[%c0_33, %c0_34, %c0_35] : memref<2x256x128xf32, #tpu.memory_space<vmem>>, vector<2x256x128xf32>
    tpu.vector_store %arg12[%c0_33, %c0_34, %c0_35], %39 {strides = array<i32>} : memref<2x256x128xf32, #tpu.memory_space<vmem>>, vector<2x256x128xf32>,
    return
  }
  func.func @transform_0(%arg0: i32) -> (i32, i32, i32) {
    %c0_i32 = arith.constant 0 : i32
    %c0_i32_0 = arith.constant 0 : i32
    %c0_i32_1 = arith.constant 0 : i32
    return %arg0, %c0_i32, %c0_i32_0 : i32, i32, i32
  }
  func.func @transform_1(%arg0: i32) -> (i32, i32, i32) {
    %c0_i32 = arith.constant 0 : i32
    %c0_i32_0 = arith.constant 0 : i32
    %c0_i32_1 = arith.constant 0 : i32
    return %arg0, %c0_i32, %c0_i32_0 : i32, i32, i32
  }
  func.func @transform_2(%arg0: i32) -> (i32, i32) {
    %c0_i32 = arith.constant 0 : i32
    %c0_i32_0 = arith.constant 0 : i32
    %c0_i32_1 = arith.constant 0 : i32
    return %c0_i32, %c0_i32_0 : i32, i32
  }
  func.func @transform_3(%arg0: i32) -> (i32, i32) {
    %c0_i32 = arith.constant 0 : i32
    %c0_i32_0 = arith.constant 0 : i32
    %c0_i32_1 = arith.constant 0 : i32
    return %c0_i32, %c0_i32_0 : i32, i32
  }
  func.func @transform_4(%arg0: i32) -> (i32, i32) {
    %c0_i32 = arith.constant 0 : i32
    %c0_i32_0 = arith.constant 0 : i32
    %c0_i32_1 = arith.constant 0 : i32
    return %c0_i32, %c0_i32_0 : i32, i32
  }
  func.func @transform_5(%arg0: i32) -> (i32, i32) {
    %c0_i32 = arith.constant 0 : i32
    %c0_i32_0 = arith.constant 0 : i32
    %c0_i32_1 = arith.constant 0 : i32
    return %c0_i32, %c0_i32_0 : i32, i32
  }
  func.func @transform_6(%arg0: i32) -> (i32, i32) {
    %c0_i32 = arith.constant 0 : i32
    %c0_i32_0 = arith.constant 0 : i32
    %c0_i32_1 = arith.constant 0 : i32
    return %c0_i32, %c0_i32_0 : i32, i32
  }
  func.func @transform_7(%arg0: i32) -> (i32, i32) {
    %c0_i32 = arith.constant 0 : i32
    %c0_i32_0 = arith.constant 0 : i32
    %c0_i32_1 = arith.constant 0 : i32
    return %c0_i32, %c0_i32_0 : i32, i32
  }
  func.func @transform_8(%arg0: i32) -> (i32, i32, i32) {
    %c0_i32 = arith.constant 0 : i32
    %c0_i32_0 = arith.constant 0 : i32
    %c0_i32_1 = arith.constant 0 : i32
    return %arg0, %c0_i32, %c0_i32_0 : i32, i32, i32
  }
  func.func @transform_9(%arg0: i32) -> (i32, i32, i32) {
    %c0_i32 = arith.constant 0 : i32
    %c0_i32_0 = arith.constant 0 : i32
    %c0_i32_1 = arith.constant 0 : i32
    return %arg0, %c0_i32, %c0_i32_0 : i32, i32, i32
  }
  func.func @transform_10(%arg0: i32) -> (i32, i32, i32) {
    %c0_i32 = arith.constant 0 : i32
    %c0_i32_0 = arith.constant 0 : i32
    %c0_i32_1 = arith.constant 0 : i32
    return %arg0, %c0_i32, %c0_i32_0 : i32, i32, i32
  }
  func.func @transform_11(%arg0: i32) -> (i32, i32, i32) {
    %c0_i32 = arith.constant 0 : i32
    %c0_i32_0 = arith.constant 0 : i32
    %c0_i32_1 = arith.constant 0 : i32
    return %arg0, %c0_i32, %c0_i32_0 : i32, i32, i32
  }
}

module attributes {stable_mosaic.version = 11 : i64} {
  func.func @_scft_kernel(%arg0: i32, %arg1: memref<2x256x128xf32, #tpu.memory_space<vmem>>, %arg2: memref<2x256x128xf32, #tpu.memory_space<vmem>>, %arg3: memref<128x128xf32, #tpu.memory_space<vmem>>, %arg4: memref<1x128xf32, #tpu.memory_space<vmem>>, %arg5: memref<128x128xf32, #tpu.memory_space<vmem>>, %arg6: memref<1x128xf32, #tpu.memory_space<vmem>>, %arg7: memref<128x128xf32, #tpu.memory_space<vmem>>, %arg8: memref<1x128xf32, #tpu.memory_space<vmem>>, %arg9: memref<2x256x128xf32, #tpu.memory_space<vmem>>, %arg10: memref<2x256x128xf32, #tpu.memory_space<vmem>>, %arg11: memref<2x256x128xf32, #tpu.memory_space<vmem>>, %arg12: memref<2x256x128xf32, #tpu.memory_space<vmem>>) attributes {dimension_semantics = [#tpu.dimension_semantics<parallel>], iteration_bounds = array<i64: 1>, scalar_prefetch = 0 : i64, scratch_operands = 0 : i64, tpu.core_type = #tpu.core_type<tc>, window_params = [{transform_indices = @transform_0, window_bounds = array<i64: 2, 256, 128>}, {transform_indices = @transform_1, window_bounds = array<i64: 2, 256, 128>}, {pipeline_mode = #tpu.pipeline_mode<synchronous>, transform_indices = @transform_2, window_bounds = array<i64: 128, 128>}, {pipeline_mode = #tpu.pipeline_mode<synchronous>, transform_indices = @transform_3, window_bounds = array<i64: 1, 128>}, {pipeline_mode = #tpu.pipeline_mode<synchronous>, transform_indices = @transform_4, window_bounds = array<i64: 128, 128>}, {pipeline_mode = #tpu.pipeline_mode<synchronous>, transform_indices = @transform_5, window_bounds = array<i64: 1, 128>}, {pipeline_mode = #tpu.pipeline_mode<synchronous>, transform_indices = @transform_6, window_bounds = array<i64: 128, 128>}, {pipeline_mode = #tpu.pipeline_mode<synchronous>, transform_indices = @transform_7, window_bounds = array<i64: 1, 128>}, {transform_indices = @transform_8, window_bounds = array<i64: 2, 256, 128>}, {transform_indices = @transform_9, window_bounds = array<i64: 2, 256, 128>}, {transform_indices = @transform_10, window_bounds = array<i64: 2, 256, 128>}, {transform_indices = @transform_11, window_bounds = array<i64: 2, 256, 128>}]} {
    %c0 = arith.constant 0 : index
    %c0_0 = arith.constant 0 : index
    %c0_1 = arith.constant 0 : index
    %0 = vector.load %arg1[%c0, %c0_0, %c0_1] : memref<2x256x128xf32, #tpu.memory_space<vmem>>, vector<2x256x128xf32>
    %c0_2 = arith.constant 0 : index
    %c0_3 = arith.constant 0 : index
    %c0_4 = arith.constant 0 : index
    %1 = vector.load %arg2[%c0_2, %c0_3, %c0_4] : memref<2x256x128xf32, #tpu.memory_space<vmem>>, vector<2x256x128xf32>
    %2 = vector.shape_cast %0 : vector<2x256x128xf32> to vector<512x128xf32>
    %3 = vector.shape_cast %1 : vector<2x256x128xf32> to vector<512x128xf32>
    %c0_5 = arith.constant 0 : index
    %c0_6 = arith.constant 0 : index
    %4 = vector.load %arg3[%c0_5, %c0_6] : memref<128x128xf32, #tpu.memory_space<vmem>>, vector<128x128xf32>
    %cst = arith.constant dense<0.000000e+00> : vector<512x128xf32>
    %5 = tpu.matmul %2, %4, %cst {dimension_numbers = #tpu.dot_dimension_numbers<[1], [0], [0], [1], [0, 0, 1, 1], [], []>} : vector<512x128xf32>, vector<128x128xf32>, vector<512x128xf32> -> vector<512x128xf32>
    %c0_7 = arith.constant 0 : index
    %c0_8 = arith.constant 0 : index
    %6 = vector.load %arg4[%c0_7, %c0_8] : memref<1x128xf32, #tpu.memory_space<vmem>>, vector<1x128xf32>
    %7 = vector.broadcast %6 : vector<1x128xf32> to vector<512x128xf32>
    %8 = arith.addf %5, %7 : vector<512x128xf32>
    %c0_9 = arith.constant 0 : index
    %c0_10 = arith.constant 0 : index
    %9 = vector.load %arg5[%c0_9, %c0_10] : memref<128x128xf32, #tpu.memory_space<vmem>>, vector<128x128xf32>
    %cst_11 = arith.constant dense<0.000000e+00> : vector<512x128xf32>
    %10 = tpu.matmul %3, %9, %cst_11 {dimension_numbers = #tpu.dot_dimension_numbers<[1], [0], [0], [1], [0, 0, 1, 1], [], []>} : vector<512x128xf32>, vector<128x128xf32>, vector<512x128xf32> -> vector<512x128xf32>
    %c0_12 = arith.constant 0 : index
    %c0_13 = arith.constant 0 : index
    %11 = vector.load %arg6[%c0_12, %c0_13] : memref<1x128xf32, #tpu.memory_space<vmem>>, vector<1x128xf32>
    %12 = vector.broadcast %11 : vector<1x128xf32> to vector<512x128xf32>
    %13 = arith.addf %10, %12 : vector<512x128xf32>
    %c0_14 = arith.constant 0 : index
    %c0_15 = arith.constant 0 : index
    %14 = vector.load %arg7[%c0_14, %c0_15] : memref<128x128xf32, #tpu.memory_space<vmem>>, vector<128x128xf32>
    %cst_16 = arith.constant dense<0.000000e+00> : vector<512x128xf32>
    %15 = tpu.matmul %3, %14, %cst_16 {dimension_numbers = #tpu.dot_dimension_numbers<[1], [0], [0], [1], [0, 0, 1, 1], [], []>} : vector<512x128xf32>, vector<128x128xf32>, vector<512x128xf32> -> vector<512x128xf32>
    %c0_17 = arith.constant 0 : index
    %c0_18 = arith.constant 0 : index
    %16 = vector.load %arg8[%c0_17, %c0_18] : memref<1x128xf32, #tpu.memory_space<vmem>>, vector<1x128xf32>
    %17 = vector.broadcast %16 : vector<1x128xf32> to vector<512x128xf32>
    %18 = arith.addf %15, %17 : vector<512x128xf32>
    %19 = vector.shape_cast %8 : vector<512x128xf32> to vector<2x256x128xf32>
    %20 = vector.shape_cast %13 : vector<512x128xf32> to vector<2x256x128xf32>
    %21 = vector.shape_cast %18 : vector<512x128xf32> to vector<2x256x128xf32>
    %c0_19 = arith.constant 0 : index
    %c0_20 = arith.constant 0 : index
    %c0_21 = arith.constant 0 : index
    %22 = vector.load %arg9[%c0_19, %c0_20, %c0_21] : memref<2x256x128xf32, #tpu.memory_space<vmem>>, vector<2x256x128xf32>
    tpu.vector_store %arg9[%c0_19, %c0_20, %c0_21], %19 {strides = array<i32>} : memref<2x256x128xf32, #tpu.memory_space<vmem>>, vector<2x256x128xf32>,
    %c0_22 = arith.constant 0 : index
    %c0_23 = arith.constant 0 : index
    %c0_24 = arith.constant 0 : index
    %23 = vector.load %arg10[%c0_22, %c0_23, %c0_24] : memref<2x256x128xf32, #tpu.memory_space<vmem>>, vector<2x256x128xf32>
    tpu.vector_store %arg10[%c0_22, %c0_23, %c0_24], %20 {strides = array<i32>} : memref<2x256x128xf32, #tpu.memory_space<vmem>>, vector<2x256x128xf32>,
    %c0_25 = arith.constant 0 : index
    %c0_26 = arith.constant 0 : index
    %c0_27 = arith.constant 0 : index
    %24 = vector.load %arg11[%c0_25, %c0_26, %c0_27] : memref<2x256x128xf32, #tpu.memory_space<vmem>>, vector<2x256x128xf32>
    tpu.vector_store %arg11[%c0_25, %c0_26, %c0_27], %21 {strides = array<i32>} : memref<2x256x128xf32, #tpu.memory_space<vmem>>, vector<2x256x128xf32>,
    %cst_28 = arith.constant dense<0.000000e+00> : vector<2x256x256xf32>
    %25 = tpu.matmul %19, %20, %cst_28 {dimension_numbers = #tpu.dot_dimension_numbers<[2], [2], [1], [1], [0, 0, 0, 1, 1, 1], [0], [0]>} : vector<2x256x128xf32>, vector<2x256x128xf32>, vector<2x256x256xf32> -> vector<2x256x256xf32>
    %cst_29 = arith.constant 0.0883883461 : f32
    %26 = vector.broadcast %cst_29 : f32 to vector<2x256x256xf32>
    %27 = arith.mulf %25, %26 : vector<2x256x256xf32>
    %cst_30 = arith.constant dense<0xFF800000> : vector<2x256xf32>
    %28 = vector.multi_reduction <maximumf>, %27, %cst_30 [2] : vector<2x256x256xf32> to vector<2x256xf32>
    %29 = vector.shape_cast %28 : vector<2x256xf32> to vector<2x256x1xf32>
    %30 = vector.broadcast %29 : vector<2x256x1xf32> to vector<2x256x256xf32>
    %31 = arith.subf %27, %30 : vector<2x256x256xf32>
    %32 = math.exp %31 : vector<2x256x256xf32>
    %cst_31 = arith.constant dense<0.000000e+00> : vector<2x256xf32>
    %33 = vector.multi_reduction <add>, %32, %cst_31 [2] : vector<2x256x256xf32> to vector<2x256xf32>
    %34 = vector.shape_cast %33 : vector<2x256xf32> to vector<2x256x1xf32>
    %35 = tpu.reciprocal %34 {approx = true} : vector<2x256x1xf32> -> vector<2x256x1xf32>
    %36 = vector.broadcast %35 : vector<2x256x1xf32> to vector<2x256x256xf32>
    %37 = arith.mulf %32, %36 : vector<2x256x256xf32>
    %cst_32 = arith.constant dense<0.000000e+00> : vector<2x256x128xf32>
    %38 = tpu.matmul %37, %21, %cst_32 {dimension_numbers = #tpu.dot_dimension_numbers<[2], [1], [1], [2], [0, 0, 0, 1, 1, 2], [0], [0]>} : vector<2x256x256xf32>, vector<2x256x128xf32>, vector<2x256x128xf32> -> vector<2x256x128xf32>
    %39 = arith.addf %38, %0 : vector<2x256x128xf32>
    %c0_33 = arith.constant 0 : index
    %c0_34 = arith.constant 0 : index
    %c0_35 = arith.constant 0 : index
    %40 = vector.load %arg12[%c0_33, %c0_34, %c0_35] : memref<2x256x128xf32, #tpu.memory_space<vmem>>, vector<2x256x128xf32>
    tpu.vector_store %arg12[%c0_33, %c0_34, %c0_35], %39 {strides = array<i32>} : memref<2x256x128xf32, #tpu.memory_space<vmem>>, vector<2x256x128xf32>,
    return
  }
  func.func @transform_0(%arg0: i32) -> (i32, i32, i32) {
    %c0_i32 = arith.constant 0 : i32
    %c0_i32_0 = arith.constant 0 : i32
    %c0_i32_1 = arith.constant 0 : i32
    return %arg0, %c0_i32, %c0_i32_0 : i32, i32, i32
  }
  func.func @transform_1(%arg0: i32) -> (i32, i32, i32) {
    %c0_i32 = arith.constant 0 : i32
    %c0_i32_0 = arith.constant 0 : i32
    %c0_i32_1 = arith.constant 0 : i32
    return %arg0, %c0_i32, %c0_i32_0 : i32, i32, i32
  }
  func.func @transform_2(%arg0: i32) -> (i32, i32) {
    %c0_i32 = arith.constant 0 : i32
    %c0_i32_0 = arith.constant 0 : i32
    %c0_i32_1 = arith.constant 0 : i32
    return %c0_i32, %c0_i32_0 : i32, i32
  }
  func.func @transform_3(%arg0: i32) -> (i32, i32) {
    %c0_i32 = arith.constant 0 : i32
    %c0_i32_0 = arith.constant 0 : i32
    %c0_i32_1 = arith.constant 0 : i32
    return %c0_i32, %c0_i32_0 : i32, i32
  }
  func.func @transform_4(%arg0: i32) -> (i32, i32) {
    %c0_i32 = arith.constant 0 : i32
    %c0_i32_0 = arith.constant 0 : i32
    %c0_i32_1 = arith.constant 0 : i32
    return %c0_i32, %c0_i32_0 : i32, i32
  }
  func.func @transform_5(%arg0: i32) -> (i32, i32) {
    %c0_i32 = arith.constant 0 : i32
    %c0_i32_0 = arith.constant 0 : i32
    %c0_i32_1 = arith.constant 0 : i32
    return %c0_i32, %c0_i32_0 : i32, i32
  }
  func.func @transform_6(%arg0: i32) -> (i32, i32) {
    %c0_i32 = arith.constant 0 : i32
    %c0_i32_0 = arith.constant 0 : i32
    %c0_i32_1 = arith.constant 0 : i32
    return %c0_i32, %c0_i32_0 : i32, i32
  }
  func.func @transform_7(%arg0: i32) -> (i32, i32) {
    %c0_i32 = arith.constant 0 : i32
    %c0_i32_0 = arith.constant 0 : i32
    %c0_i32_1 = arith.constant 0 : i32
    return %c0_i32, %c0_i32_0 : i32, i32
  }
  func.func @transform_8(%arg0: i32) -> (i32, i32, i32) {
    %c0_i32 = arith.constant 0 : i32
    %c0_i32_0 = arith.constant 0 : i32
    %c0_i32_1 = arith.constant 0 : i32
    return %arg0, %c0_i32, %c0_i32_0 : i32, i32, i32
  }
  func.func @transform_9(%arg0: i32) -> (i32, i32, i32) {
    %c0_i32 = arith.constant 0 : i32
    %c0_i32_0 = arith.constant 0 : i32
    %c0_i32_1 = arith.constant 0 : i32
    return %arg0, %c0_i32, %c0_i32_0 : i32, i32, i32
  }
  func.func @transform_10(%arg0: i32) -> (i32, i32, i32) {
    %c0_i32 = arith.constant 0 : i32
    %c0_i32_0 = arith.constant 0 : i32
    %c0_i32_1 = arith.constant 0 : i32
    return %arg0, %c0_i32, %c0_i32_0 : i32, i32, i32
  }
  func.func @transform_11(%arg0: i32) -> (i32, i32, i32) {
    %c0_i32 = arith.constant 0 : i32
    %c0_i32_0 = arith.constant 0 : i32
    %c0_i32_1 = arith.constant 0 : i32
    return %arg0, %c0_i32, %c0_i32_0 : i32, i32, i32
  }
}

</mosaic_0001>

<llo_original>
// kernel: tpu_custom_call.1
$region0: #{tpu_custom_call.1}
  #allocation0 [shape = 'u32[]', space=smem, size = 0x4, offset = 0x4, fixed_abs, tag = 'smem constant byte address 0x4 - core index']
  #allocation1 [shape = 'u32[144,128]{1,0:T(1,128)}', space=vmem, size = 0x12000, scoped, tag = 'internal scratch']
  %s0 = inlined_call_operand.hbm [shape: f32[2,256,128], index: 0, kind: input, shape index: {}]
  %s1 = inlined_call_operand.hbm [shape: f32[2,256,128], index: 1, kind: input, shape index: {}]
  %s2 = inlined_call_operand.hbm [shape: f32[128,128], index: 2, kind: input, shape index: {}]
  %s3 = inlined_call_operand.vmem [shape: f32[1,128], index: 3, kind: input, shape index: {}]
  %s4 = inlined_call_operand.hbm [shape: f32[128,128], index: 4, kind: input, shape index: {}]
  %s5 = inlined_call_operand.vmem [shape: f32[1,128], index: 5, kind: input, shape index: {}]
  %s6 = inlined_call_operand.hbm [shape: f32[128,128], index: 6, kind: input, shape index: {}]
  %s7 = inlined_call_operand.vmem [shape: f32[1,128], index: 7, kind: input, shape index: {}]
  %s8 = inlined_call_operand.hbm [shape: f32[2,256,128], index: 8, kind: output, shape index: {0}]
  %s9 = inlined_call_operand.hbm [shape: f32[2,256,128], index: 9, kind: output, shape index: {1}]
  %s10 = inlined_call_operand.hbm [shape: f32[2,256,128], index: 10, kind: output, shape index: {2}]
  %s11 = inlined_call_operand.hbm [shape: f32[2,256,128], index: 11, kind: output, shape index: {3}]
  %12 = xla_tuple %s8, %s9, %s10, %s11
  %s13 = sld [smem:[#allocation0]]
  $region86: #{tpu_custom_call.1} parent=0
    _
  %s15 = ssub.s32 1, %s13
  %s16 = scalar_select 0, %s15, %s13
  $region1: #{tpu_custom_call.1} parent=0
    #allocation2 [shape = 'u8[262144]{0}', space=vmem, size = 0x40000, scoped, tag = 'input window, operand 0, single buffered']
    #allocation3 [shape = 's32[1]{0}', space=sflag, size = 0x4, scoped, tag = 'scoped memory for tpu_custom_call.1']
    #allocation4 [shape = 's32[1]{0}', space=sflag, size = 0x4, scoped, tag = 'scoped memory for tpu_custom_call.1']
    #allocation5 [shape = 'u8[262144]{0}', space=vmem, size = 0x40000, scoped, tag = 'input window, operand 1, single buffered']
    #allocation6 [shape = 's32[1]{0}', space=sflag, size = 0x4, scoped, tag = 'scoped memory for tpu_custom_call.1']
    #allocation7 [shape = 'u8[65536]{0}', space=vmem, size = 0x10000, scoped, tag = 'input window, operand 2, single buffered']
    #allocation8 [shape = 'u8[65536]{0}', space=vmem, size = 0x10000, scoped, tag = 'input window, operand 4, single buffered']
    #allocation9 [shape = 's32[1]{0}', space=sflag, size = 0x4, scoped, tag = 'scoped memory for tpu_custom_call.1']
    #allocation10 [shape = 'u8[65536]{0}', space=vmem, size = 0x10000, scoped, tag = 'input window, operand 6, single buffered']
    #allocation11 [shape = 'u8[262144]{0}', space=vmem, size = 0x40000, scoped, tag = 'output window, operand 0, single buffered']
    #allocation12 [shape = 'u8[262144]{0}', space=vmem, size = 0x40000, scoped, tag = 'output window, operand 1, single buffered']
    #allocation13 [shape = 's32[1]{0}', space=sflag, size = 0x4, scoped, tag = 'scoped memory for tpu_custom_call.1']
    #allocation14 [shape = 'u8[262144]{0}', space=vmem, size = 0x40000, scoped, tag = 'output window, operand 2, single buffered']
    #allocation15 [shape = 'u8[262144]{0}', space=vmem, size = 0x40000, scoped, tag = 'output window, operand 3, single buffered']
    #allocation16 [shape = 's32[1]{0}', space=sflag, size = 0x4, scoped, tag = 'scoped memory for tpu_custom_call.1']
    %17 = vsyncpa [#allocation3], 0
    %18 = vsyncpa [#allocation6], 0
    %19 = vsyncpa [#allocation9], 0
    %20 = vsyncpa [#allocation4], 0
    %21 = vsyncpa [#allocation13], 0
    %22 = vsyncpa [#allocation16], 0
    // Predicated region
    $region2: #{tpu_custom_call.1} parent=1 // pred_check
      _
    $region3: #{tpu_custom_call.1} parent=1 // pred_check_branch
      %24 = sbr.rel (0) target = $region5
    $region4: #{tpu_custom_call.1} parent=1 // pred_region
      %s26 = ssub.s32 8192, 8192
      %27 = vsyncadd [#allocation3], %s26
      %s28 = sshll.u32 [#allocation2], 4
      %s29 = int_to_ptr.vmem [resolvable:$true] %s28
      %34 = dma.hbm_to_vmem [thread:$0]  %s0, 8192, %s29, [#allocation3], 128, 128, 8
    $region5: #{tpu_custom_call.1} parent=1 // pred_fallthru
      _
    // Predicated region
    $region6: #{tpu_custom_call.1} parent=1 // pred_check
      _
    $region7: #{tpu_custom_call.1} parent=1 // pred_check_branch
      %36 = sbr.rel (0) target = $region9
    $region8: #{tpu_custom_call.1} parent=1 // pred_region
      %s38 = ssub.s32 8192, 8192
      %39 = vsyncadd [#allocation6], %s38
      %s40 = sshll.u32 [#allocation5], 4
      %s41 = int_to_ptr.vmem [resolvable:$true] %s40
      %46 = dma.hbm_to_vmem [thread:$0]  %s1, 8192, %s41, [#allocation6], 128, 128, 8
    $region9: #{tpu_custom_call.1} parent=1 // pred_fallthru
      _
    // Predicated region
    $region10: #{tpu_custom_call.1} parent=1 // pred_check
      _
    $region11: #{tpu_custom_call.1} parent=1 // pred_check_branch
      %48 = sbr.rel (0) target = $region13
    $region12: #{tpu_custom_call.1} parent=1 // pred_region
      %s50 = ssub.s32 2048, 2048
      %51 = vsyncadd [#allocation6], %s50
      %s52 = sshll.u32 [#allocation7], 4
      %s53 = int_to_ptr.vmem [resolvable:$true] %s52
      %58 = dma.hbm_to_vmem [thread:$0]  %s2, 2048, %s53, [#allocation6], 128, 128, 8
    $region13: #{tpu_custom_call.1} parent=1 // pred_fallthru
      _
    // Predicated region
    $region14: #{tpu_custom_call.1} parent=1 // pred_check
      _
    $region15: #{tpu_custom_call.1} parent=1 // pred_check_branch
      %60 = sbr.rel (0) target = $region17
    $region16: #{tpu_custom_call.1} parent=1 // pred_region
      _
    $region17: #{tpu_custom_call.1} parent=1 // pred_fallthru
      _
    // Predicated region
    $region18: #{tpu_custom_call.1} parent=1 // pred_check
      _
    $region19: #{tpu_custom_call.1} parent=1 // pred_check_branch
      %62 = sbr.rel (0) target = $region21
    $region20: #{tpu_custom_call.1} parent=1 // pred_region
      %s64 = ssub.s32 2048, 2048
      %65 = vsyncadd [#allocation9], %s64
      %s66 = sshll.u32 [#allocation8], 4
      %s67 = int_to_ptr.vmem [resolvable:$true] %s66
      %72 = dma.hbm_to_vmem [thread:$0]  %s4, 2048, %s67, [#allocation9], 128, 128, 8
    $region21: #{tpu_custom_call.1} parent=1 // pred_fallthru
      _
    // Predicated region
    $region22: #{tpu_custom_call.1} parent=1 // pred_check
      _
    $region23: #{tpu_custom_call.1} parent=1 // pred_check_branch
      %74 = sbr.rel (0) target = $region25
    $region24: #{tpu_custom_call.1} parent=1 // pred_region
      _
    $region25: #{tpu_custom_call.1} parent=1 // pred_fallthru
      _
    // Predicated region
    $region26: #{tpu_custom_call.1} parent=1 // pred_check
      _
    $region27: #{tpu_custom_call.1} parent=1 // pred_check_branch
      %76 = sbr.rel (0) target = $region29
    $region28: #{tpu_custom_call.1} parent=1 // pred_region
      %s78 = ssub.s32 2048, 2048
      %79 = vsyncadd [#allocation9], %s78
      %s80 = sshll.u32 [#allocation10], 4
      %s81 = int_to_ptr.vmem [resolvable:$true] %s80
      %86 = dma.hbm_to_vmem [thread:$0]  %s6, 2048, %s81, [#allocation9], 128, 128, 8
    $region29: #{tpu_custom_call.1} parent=1 // pred_fallthru
      _
    // Predicated region
    $region30: #{tpu_custom_call.1} parent=1 // pred_check
      _
    $region31: #{tpu_custom_call.1} parent=1 // pred_check_branch
      %88 = sbr.rel (0) target = $region33
    $region32: #{tpu_custom_call.1} parent=1 // pred_region
      _
    $region33: #{tpu_custom_call.1} parent=1 // pred_fallthru
      _
    // Predicated region
    $region34: #{tpu_custom_call.1} parent=1 // pred_check
      _
    $region35: #{tpu_custom_call.1} parent=1 // pred_check_branch
      %90 = sbr.rel (0) target = $region37
    $region36: #{tpu_custom_call.1} parent=1 // pred_region
      %91 = dma.done [#allocation3], 8192
    $region37: #{tpu_custom_call.1} parent=1 // pred_fallthru
      _
    // Predicated region
    $region38: #{tpu_custom_call.1} parent=1 // pred_check
      _
    $region39: #{tpu_custom_call.1} parent=1 // pred_check_branch
      %93 = sbr.rel (0) target = $region41
    $region40: #{tpu_custom_call.1} parent=1 // pred_region
      %94 = dma.done [#allocation6], 8192
    $region41: #{tpu_custom_call.1} parent=1 // pred_fallthru
      _
    // Predicated region
    $region42: #{tpu_custom_call.1} parent=1 // pred_check
      _
    $region43: #{tpu_custom_call.1} parent=1 // pred_check_branch
      %96 = sbr.rel (0) target = $region45
    $region44: #{tpu_custom_call.1} parent=1 // pred_region
      %97 = dma.done [#allocation6], 2048
    $region45: #{tpu_custom_call.1} parent=1 // pred_fallthru
      _
    // Predicated region
    $region46: #{tpu_custom_call.1} parent=1 // pred_check
      _
    $region47: #{tpu_custom_call.1} parent=1 // pred_check_branch
      %99 = sbr.rel (0) target = $region49
    $region48: #{tpu_custom_call.1} parent=1 // pred_region
      %100 = dma.done [#allocation9], 2048
    $region49: #{tpu_custom_call.1} parent=1 // pred_fallthru
      _
    // Predicated region
    $region50: #{tpu_custom_call.1} parent=1 // pred_check
      _
    $region51: #{tpu_custom_call.1} parent=1 // pred_check_branch
      %102 = sbr.rel (0) target = $region53
    $region52: #{tpu_custom_call.1} parent=1 // pred_region
      %103 = dma.done [#allocation9], 2048
    $region53: #{tpu_custom_call.1} parent=1 // pred_fallthru
      _
    %v104 = vld [vmem:[#allocation2] sm:$0xff]
    %v105 = vld [vmem:[#allocation2 + $0x8] sm:$0xff]
    %v106 = vld [vmem:[#allocation2 + $0x10] sm:$0xff]
    %v107 = vld [vmem:[#allocation2 + $0x18] sm:$0xff]
    %v108 = vld [vmem:[#allocation2 + $0x20] sm:$0xff]
    %v109 = vld [vmem:[#allocation2 + $0x28] sm:$0xff]
    %v110 = vld [vmem:[#allocation2 + $0x30] sm:$0xff]
    %v111 = vld [vmem:[#allocation2 + $0x38] sm:$0xff]
    %v112 = vld [vmem:[#allocation2 + $0x40] sm:$0xff]
    %v113 = vld [vmem:[#allocation2 + $0x48] sm:$0xff]
    %v114 = vld [vmem:[#allocation2 + $0x50] sm:$0xff]
    %v115 = vld [vmem:[#allocation2 + $0x58] sm:$0xff]
    %v116 = vld [vmem:[#allocation2 + $0x60] sm:$0xff]
    %v117 = vld [vmem:[#allocation2 + $0x68] sm:$0xff]
    %v118 = vld [vmem:[#allocation2 + $0x70] sm:$0xff]
    %v119 = vld [vmem:[#allocation2 + $0x78] sm:$0xff]
    %v120 = vld [vmem:[#allocation2 + $0x80] sm:$0xff]
    %v121 = vld [vmem:[#allocation2 + $0x88] sm:$0xff]
    %v122 = vld [vmem:[#allocation2 + $0x90] sm:$0xff]
    %v123 = vld [vmem:[#allocation2 + $0x98] sm:$0xff]
    %v124 = vld [vmem:[#allocation2 + $0xa0] sm:$0xff]
    %v125 = vld [vmem:[#allocation2 + $0xa8] sm:$0xff]
    %v126 = vld [vmem:[#allocation2 + $0xb0] sm:$0xff]
    %v127 = vld [vmem:[#allocation2 + $0xb8] sm:$0xff]
    %v128 = vld [vmem:[#allocation2 + $0xc0] sm:$0xff]
    %v129 = vld [vmem:[#allocation2 + $0xc8] sm:$0xff]
    %v130 = vld [vmem:[#allocation2 + $0xd0] sm:$0xff]
    %v131 = vld [vmem:[#allocation2 + $0xd8] sm:$0xff]
    %v132 = vld [vmem:[#allocation2 + $0xe0] sm:$0xff]
    %v133 = vld [vmem:[#allocation2 + $0xe8] sm:$0xff]
    %v134 = vld [vmem:[#allocation2 + $0xf0] sm:$0xff]
    %v135 = vld [vmem:[#allocation2 + $0xf8] sm:$0xff]
    %v136 = vld [vmem:[#allocation2 + $0x100] sm:$0xff]
    %v137 = vld [vmem:[#allocation2 + $0x108] sm:$0xff]
    %v138 = vld [vmem:[#allocation2 + $0x110] sm:$0xff]
    %v139 = vld [vmem:[#allocation2 + $0x118] sm:$0xff]
    %v140 = vld [vmem:[#allocation2 + $0x120] sm:$0xff]
    %v141 = vld [vmem:[#allocation2 + $0x128] sm:$0xff]
    %v142 = vld [vmem:[#allocation2 + $0x130] sm:$0xff]
    %v143 = vld [vmem:[#allocation2 + $0x138] sm:$0xff]
    %v144 = vld [vmem:[#allocation2 + $0x140] sm:$0xff]
    %v145 = vld [vmem:[#allocation2 + $0x148] sm:$0xff]
    %v146 = vld [vmem:[#allocation2 + $0x150] sm:$0xff]
    %v147 = vld [vmem:[#allocation2 + $0x158] sm:$0xff]
    %v148 = vld [vmem:[#allocation2 + $0x160] sm:$0xff]
    %v149 = vld [vmem:[#allocation2 + $0x168] sm:$0xff]
    %v150 = vld [vmem:[#allocation2 + $0x170] sm:$0xff]
    %v151 = vld [vmem:[#allocation2 + $0x178] sm:$0xff]
    %v152 = vld [vmem:[#allocation2 + $0x180] sm:$0xff]
    %v153 = vld [vmem:[#allocation2 + $0x188] sm:$0xff]
    %v154 = vld [vmem:[#allocation2 + $0x190] sm:$0xff]
    %v155 = vld [vmem:[#allocation2 + $0x198] sm:$0xff]
    %v156 = vld [vmem:[#allocation2 + $0x1a0] sm:$0xff]
    %v157 = vld [vmem:[#allocation2 + $0x1a8] sm:$0xff]
    %v158 = vld [vmem:[#allocation2 + $0x1b0] sm:$0xff]
    %v159 = vld [vmem:[#allocation2 + $0x1b8] sm:$0xff]
    %v160 = vld [vmem:[#allocation2 + $0x1c0] sm:$0xff]
    %v161 = vld [vmem:[#allocation2 + $0x1c8] sm:$0xff]
    %v162 = vld [vmem:[#allocation2 + $0x1d0] sm:$0xff]
    %v163 = vld [vmem:[#allocation2 + $0x1d8] sm:$0xff]
    %v164 = vld [vmem:[#allocation2 + $0x1e0] sm:$0xff]
    %v165 = vld [vmem:[#allocation2 + $0x1e8] sm:$0xff]
    %v166 = vld [vmem:[#allocation2 + $0x1f0] sm:$0xff]
    %v167 = vld [vmem:[#allocation2 + $0x1f8] sm:$0xff]
    %v168 = vld [vmem:[#allocation5] sm:$0xff]
    %v169 = vld [vmem:[#allocation5 + $0x8] sm:$0xff]
    %v170 = vld [vmem:[#allocation5 + $0x10] sm:$0xff]
    %v171 = vld [vmem:[#allocation5 + $0x18] sm:$0xff]
    %v172 = vld [vmem:[#allocation5 + $0x20] sm:$0xff]
    %v173 = vld [vmem:[#allocation5 + $0x28] sm:$0xff]
    %v174 = vld [vmem:[#allocation5 + $0x30] sm:$0xff]
    %v175 = vld [vmem:[#allocation5 + $0x38] sm:$0xff]
    %v176 = vld [vmem:[#allocation5 + $0x40] sm:$0xff]
    %v177 = vld [vmem:[#allocation5 + $0x48] sm:$0xff]
    %v178 = vld [vmem:[#allocation5 + $0x50] sm:$0xff]
    %v179 = vld [vmem:[#allocation5 + $0x58] sm:$0xff]
    %v180 = vld [vmem:[#allocation5 + $0x60] sm:$0xff]
    %v181 = vld [vmem:[#allocation5 + $0x68] sm:$0xff]
    %v182 = vld [vmem:[#allocation5 + $0x70] sm:$0xff]
    %v183 = vld [vmem:[#allocation5 + $0x78] sm:$0xff]
    %v184 = vld [vmem:[#allocation5 + $0x80] sm:$0xff]
    %v185 = vld [vmem:[#allocation5 + $0x88] sm:$0xff]
    %v186 = vld [vmem:[#allocation5 + $0x90] sm:$0xff]
    %v187 = vld [vmem:[#allocation5 + $0x98] sm:$0xff]
    %v188 = vld [vmem:[#allocation5 + $0xa0] sm:$0xff]
    %v189 = vld [vmem:[#allocation5 + $0xa8] sm:$0xff]
    %v190 = vld [vmem:[#allocation5 + $0xb0] sm:$0xff]
    %v191 = vld [vmem:[#allocation5 + $0xb8] sm:$0xff]
    %v192 = vld [vmem:[#allocation5 + $0xc0] sm:$0xff]
    %v193 = vld [vmem:[#allocation5 + $0xc8] sm:$0xff]
    %v194 = vld [vmem:[#allocation5 + $0xd0] sm:$0xff]
    %v195 = vld [vmem:[#allocation5 + $0xd8] sm:$0xff]
    %v196 = vld [vmem:[#allocation5 + $0xe0] sm:$0xff]
    %v197 = vld [vmem:[#allocation5 + $0xe8] sm:$0xff]
    %v198 = vld [vmem:[#allocation5 + $0xf0] sm:$0xff]
    %v199 = vld [vmem:[#allocation5 + $0xf8] sm:$0xff]
    %v200 = vld [vmem:[#allocation5 + $0x100] sm:$0xff]
    %v201 = vld [vmem:[#allocation5 + $0x108] sm:$0xff]
    %v202 = vld [vmem:[#allocation5 + $0x110] sm:$0xff]
    %v203 = vld [vmem:[#allocation5 + $0x118] sm:$0xff]
    %v204 = vld [vmem:[#allocation5 + $0x120] sm:$0xff]
    %v205 = vld [vmem:[#allocation5 + $0x128] sm:$0xff]
    %v206 = vld [vmem:[#allocation5 + $0x130] sm:$0xff]
    %v207 = vld [vmem:[#allocation5 + $0x138] sm:$0xff]
    %v208 = vld [vmem:[#allocation5 + $0x140] sm:$0xff]
    %v209 = vld [vmem:[#allocation5 + $0x148] sm:$0xff]
    %v210 = vld [vmem:[#allocation5 + $0x150] sm:$0xff]
    %v211 = vld [vmem:[#allocation5 + $0x158] sm:$0xff]
    %v212 = vld [vmem:[#allocation5 + $0x160] sm:$0xff]
    %v213 = vld [vmem:[#allocation5 + $0x168] sm:$0xff]
    %v214 = vld [vmem:[#allocation5 + $0x170] sm:$0xff]
    %v215 = vld [vmem:[#allocation5 + $0x178] sm:$0xff]
    %v216 = vld [vmem:[#allocation5 + $0x180] sm:$0xff]
    %v217 = vld [vmem:[#allocation5 + $0x188] sm:$0xff]
    %v218 = vld [vmem:[#allocation5 + $0x190] sm:$0xff]
    %v219 = vld [vmem:[#allocation5 + $0x198] sm:$0xff]
    %v220 = vld [vmem:[#allocation5 + $0x1a0] sm:$0xff]
    %v221 = vld [vmem:[#allocation5 + $0x1a8] sm:$0xff]
    %v222 = vld [vmem:[#allocation5 + $0x1b0] sm:$0xff]
    %v223 = vld [vmem:[#allocation5 + $0x1b8] sm:$0xff]
    %v224 = vld [vmem:[#allocation5 + $0x1c0] sm:$0xff]
    %v225 = vld [vmem:[#allocation5 + $0x1c8] sm:$0xff]
    %v226 = vld [vmem:[#allocation5 + $0x1d0] sm:$0xff]
    %v227 = vld [vmem:[#allocation5 + $0x1d8] sm:$0xff]
    %v228 = vld [vmem:[#allocation5 + $0x1e0] sm:$0xff]
    %v229 = vld [vmem:[#allocation5 + $0x1e8] sm:$0xff]
    %v230 = vld [vmem:[#allocation5 + $0x1f0] sm:$0xff]
    %v231 = vld [vmem:[#allocation5 + $0x1f8] sm:$0xff]
    %v232 = vld [vmem:[#allocation7] sm:$0xff]
    %v233 = vld [vmem:[#allocation7 + $0x8] sm:$0xff]
    %v234 = vld [vmem:[#allocation7 + $0x10] sm:$0xff]
    %v235 = vld [vmem:[#allocation7 + $0x18] sm:$0xff]
    %v236 = vld [vmem:[#allocation7 + $0x20] sm:$0xff]
    %v237 = vld [vmem:[#allocation7 + $0x28] sm:$0xff]
    %v238 = vld [vmem:[#allocation7 + $0x30] sm:$0xff]
    %v239 = vld [vmem:[#allocation7 + $0x38] sm:$0xff]
    %v240 = vld [vmem:[#allocation7 + $0x40] sm:$0xff]
    %v241 = vld [vmem:[#allocation7 + $0x48] sm:$0xff]
    %v242 = vld [vmem:[#allocation7 + $0x50] sm:$0xff]
    %v243 = vld [vmem:[#allocation7 + $0x58] sm:$0xff]
    %v244 = vld [vmem:[#allocation7 + $0x60] sm:$0xff]
    %v245 = vld [vmem:[#allocation7 + $0x68] sm:$0xff]
    %v246 = vld [vmem:[#allocation7 + $0x70] sm:$0xff]
    %v247 = vld [vmem:[#allocation7 + $0x78] sm:$0xff]
    %v248 = vld [vmem:[%s3] sm:$0x1]
    %v250 = vlaneseq
    %v251 = vshrl.u32 %v250, 7
    %v252 = vsub.s32 0, %v251
    %v253 = vrot.slane %v248, %v252
    %255 = vmatprep.subr.mxu0 0.0
    %256 = vmatpush1.msra.mxu0 %v232
    %257 = vmatprep.subr.mxu0 0.0
    %258 = vmatpush1.msra.mxu0 %v233
    %259 = vmatprep.subr.mxu0 0.0
    %260 = vmatpush1.msra.mxu0 %v234
    %261 = vmatprep.subr.mxu0 0.0
    %262 = vmatpush1.msra.mxu0 %v235
    %263 = vmatprep.subr.mxu0 0.0
    %264 = vmatpush1.msra.mxu0 %v236
    %265 = vmatprep.subr.mxu0 0.0
    %266 = vmatpush1.msra.mxu0 %v237
    %267 = vmatprep.subr.mxu0 0.0
    %268 = vmatpush1.msra.mxu0 %v238
    %269 = vmatprep.subr.mxu0 0.0
    %270 = vmatpush1.msra.mxu0 %v239
    %271 = vmatprep.subr.mxu0 0.0
    %272 = vmatpush1.msra.mxu0 %v240
    %273 = vmatprep.subr.mxu0 0.0
    %274 = vmatpush1.msra.mxu0 %v241
    %275 = vmatprep.subr.mxu0 0.0
    %276 = vmatpush1.msra.mxu0 %v242
    %277 = vmatprep.subr.mxu0 0.0
    %278 = vmatpush1.msra.mxu0 %v243
    %279 = vmatprep.subr.mxu0 0.0
    %280 = vmatpush1.msra.mxu0 %v244
    %281 = vmatprep.subr.mxu0 0.0
    %282 = vmatpush1.msra.mxu0 %v245
    %283 = vmatprep.subr.mxu0 0.0
    %284 = vmatpush1.msra.mxu0 %v246
    %285 = vmatprep.subr.mxu0 0.0
    %286 = vmatpush1.msra.mxu0 %v247
    %287 = vmatprep.subr.mxu0 0.0
    %288 = vmatpush1.msra.mxu0 0.0
    %289 = vmatprep.subr.mxu0 0.0
    %290 = vmatpush1.msra.mxu0 0.0
    %291 = vmatprep.subr.mxu0 0.0
    %292 = vmatpush1.msra.mxu0 0.0
    %293 = vmatprep.subr.mxu0 0.0
    %294 = vmatpush1.msra.mxu0 0.0
    %295 = vmatprep.subr.mxu0 0.0
    %296 = vmatpush1.msra.mxu0 0.0
    %297 = vmatprep.subr.mxu0 0.0
    %298 = vmatpush1.msra.mxu0 0.0
    %299 = vmatprep.subr.mxu0 0.0
    %300 = vmatpush1.msra.mxu0 0.0
    %301 = vmatprep.subr.mxu0 0.0
    %302 = vmatpush1.msra.mxu0 0.0
    %303 = vmatprep.subr.mxu0 0.0
    %304 = vmatpush1.msra.mxu0 0.0
    %305 = vmatprep.subr.mxu0 0.0
    %306 = vmatpush1.msra.mxu0 0.0
    %307 = vmatprep.subr.mxu0 0.0
    %308 = vmatpush1.msra.mxu0 0.0
    %309 = vmatprep.subr.mxu0 0.0
    %310 = vmatpush1.msra.mxu0 0.0
    %311 = vmatprep.subr.mxu0 0.0
    %312 = vmatpush1.msra.mxu0 0.0
    %313 = vmatprep.subr.mxu0 0.0
    %314 = vmatpush1.msra.mxu0 0.0
    %315 = vmatprep.subr.mxu0 0.0
    %316 = vmatpush1.msra.mxu0 0.0
    %317 = vmatprep.subr.mxu0 0.0
    %318 = vmatpush1.msra.mxu0 0.0
    %319 = vmatprep.mubr.f32.mxu0 0.0
    %320 = vmatmul.mubr.f32.gmra.mrb[0].mxu0 %v104
    %v321 = vpop.f32.mrb[0].mxu0
    %v322 = vadd.f32 %v253, %v321
    %v323 = vpop.f32.mrb[0].mxu0
    %324 = vmatprep.mubr.f32.mxu0 0.0
    %325 = vmatmul.mubr.f32.gmra.mrb[0].mxu0 %v105
    %v326 = vpop.f32.mrb[0].mxu0
    %v327 = vadd.f32 %v253, %v326
    %v328 = vpop.f32.mrb[0].mxu0
    %329 = vmatprep.mubr.f32.mxu0 0.0
    %330 = vmatmul.mubr.f32.gmra.mrb[0].mxu0 %v106
    %v331 = vpop.f32.mrb[0].mxu0
    %v332 = vadd.f32 %v253, %v331
    %v333 = vpop.f32.mrb[0].mxu0
    %334 = vmatprep.mubr.f32.mxu0 0.0
    %335 = vmatmul.mubr.f32.gmra.mrb[0].mxu0 %v107
    %v336 = vpop.f32.mrb[0].mxu0
    %v337 = vadd.f32 %v253, %v336
    %v338 = vpop.f32.mrb[0].mxu0
    %339 = vmatprep.mubr.f32.mxu0 0.0
    %340 = vmatmul.mubr.f32.gmra.mrb[0].mxu0 %v108
    %v341 = vpop.f32.mrb[0].mxu0
    %v342 = vadd.f32 %v253, %v341
    %v343 = vpop.f32.mrb[0].mxu0
    %344 = vmatprep.mubr.f32.mxu0 0.0
    %345 = vmatmul.mubr.f32.gmra.mrb[0].mxu0 %v109
    %v346 = vpop.f32.mrb[0].mxu0
    %v347 = vadd.f32 %v253, %v346
    %v348 = vpop.f32.mrb[0].mxu0
    %349 = vmatprep.mubr.f32.mxu0 0.0
    %350 = vmatmul.mubr.f32.gmra.mrb[0].mxu0 %v110
    %v351 = vpop.f32.mrb[0].mxu0
    %v352 = vadd.f32 %v253, %v351
    %v353 = vpop.f32.mrb[0].mxu0
    %354 = vmatprep.mubr.f32.mxu0 0.0
    %355 = vmatmul.mubr.f32.gmra.mrb[0].mxu0 %v111
    %v356 = vpop.f32.mrb[0].mxu0
    %v357 = vadd.f32 %v253, %v356
    %v358 = vpop.f32.mrb[0].mxu0
    %359 = vmatprep.mubr.f32.mxu0 0.0
    %360 = vmatmul.mubr.f32.gmra.mrb[0].mxu0 %v112
    %v361 = vpop.f32.mrb[0].mxu0
    %v362 = vadd.f32 %v253, %v361
    %v363 = vpop.f32.mrb[0].mxu0
    %364 = vmatprep.mubr.f32.mxu0 0.0
    %365 = vmatmul.mubr.f32.gmra.mrb[0].mxu0 %v113
    %v366 = vpop.f32.mrb[0].mxu0
    %v367 = vadd.f32 %v253, %v366
    %v368 = vpop.f32.mrb[0].mxu0
    %369 = vmatprep.mubr.f32.mxu0 0.0
    %370 = vmatmul.mubr.f32.gmra.mrb[0].mxu0 %v114
    %v371 = vpop.f32.mrb[0].mxu0
    %v372 = vadd.f32 %v253, %v371
    %v373 = vpop.f32.mrb[0].mxu0
    %374 = vmatprep.mubr.f32.mxu0 0.0
    %375 = vmatmul.mubr.f32.gmra.mrb[0].mxu0 %v115
    %v376 = vpop.f32.mrb[0].mxu0
    %v377 = vadd.f32 %v253, %v376
    %v378 = vpop.f32.mrb[0].mxu0
    %379 = vmatprep.mubr.f32.mxu0 0.0
    %380 = vmatmul.mubr.f32.gmra.mrb[0].mxu0 %v116
    %v381 = vpop.f32.mrb[0].mxu0
    %v382 = vadd.f32 %v253, %v381
    %v383 = vpop.f32.mrb[0].mxu0
    %384 = vmatprep.mubr.f32.mxu0 0.0
    %385 = vmatmul.mubr.f32.gmra.mrb[0].mxu0 %v117
    %v386 = vpop.f32.mrb[0].mxu0
    %v387 = vadd.f32 %v253, %v386
    %v388 = vpop.f32.mrb[0].mxu0
    %389 = vmatprep.mubr.f32.mxu0 0.0
    %390 = vmatmul.mubr.f32.gmra.mrb[0].mxu0 %v118
    %v391 = vpop.f32.mrb[0].mxu0
    %v392 = vadd.f32 %v253, %v391
    %v393 = vpop.f32.mrb[0].mxu0
    %394 = vmatprep.mubr.f32.mxu0 0.0
    %395 = vmatmul.mubr.f32.gmra.mrb[0].mxu0 %v119
    %v396 = vpop.f32.mrb[0].mxu0
    %v397 = vadd.f32 %v253, %v396
    %v398 = vpop.f32.mrb[0].mxu0
    %399 = vmatprep.mubr.f32.mxu0 0.0
    %400 = vmatmul.mubr.f32.gmra.mrb[0].mxu0 %v120
    %v401 = vpop.f32.mrb[0].mxu0
    %v402 = vadd.f32 %v253, %v401
    %v403 = vpop.f32.mrb[0].mxu0
    %404 = vmatprep.mubr.f32.mxu0 0.0
    %405 = vmatmul.mubr.f32.gmra.mrb[0].mxu0 %v121
    %v406 = vpop.f32.mrb[0].mxu0
    %v407 = vadd.f32 %v253, %v406
    %v408 = vpop.f32.mrb[0].mxu0
    %409 = vmatprep.mubr.f32.mxu0 0.0
    %410 = vmatmul.mubr.f32.gmra.mrb[0].mxu0 %v122
    %v411 = vpop.f32.mrb[0].mxu0
    %v412 = vadd.f32 %v253, %v411
    %v413 = vpop.f32.mrb[0].mxu0
    %414 = vmatprep.mubr.f32.mxu0 0.0
    %415 = vmatmul.mubr.f32.gmra.mrb[0].mxu0 %v123
    %v416 = vpop.f32.mrb[0].mxu0
    %v417 = vadd.f32 %v253, %v416
    %v418 = vpop.f32.mrb[0].mxu0
    %419 = vmatprep.mubr.f32.mxu0 0.0
    %420 = vmatmul.mubr.f32.gmra.mrb[0].mxu0 %v124
    %v421 = vpop.f32.mrb[0].mxu0
    %v422 = vadd.f32 %v253, %v421
    %v423 = vpop.f32.mrb[0].mxu0
    %424 = vmatprep.mubr.f32.mxu0 0.0
    %425 = vmatmul.mubr.f32.gmra.mrb[0].mxu0 %v125
    %v426 = vpop.f32.mrb[0].mxu0
    %v427 = vadd.f32 %v253, %v426
    %v428 = vpop.f32.mrb[0].mxu0
    %429 = vmatprep.mubr.f32.mxu0 0.0
    %430 = vmatmul.mubr.f32.gmra.mrb[0].mxu0 %v126
    %v431 = vpop.f32.mrb[0].mxu0
    %v432 = vadd.f32 %v253, %v431
    %v433 = vpop.f32.mrb[0].mxu0
    %434 = vmatprep.mubr.f32.mxu0 0.0
    %435 = vmatmul.mubr.f32.gmra.mrb[0].mxu0 %v127
    %v436 = vpop.f32.mrb[0].mxu0
    %v437 = vadd.f32 %v253, %v436
    %v438 = vpop.f32.mrb[0].mxu0
    %439 = vmatprep.mubr.f32.mxu0 0.0
    %440 = vmatmul.mubr.f32.gmra.mrb[0].mxu0 %v128
    %v441 = vpop.f32.mrb[0].mxu0
    %v442 = vadd.f32 %v253, %v441
    %v443 = vpop.f32.mrb[0].mxu0
    %444 = vmatprep.mubr.f32.mxu0 0.0
    %445 = vmatmul.mubr.f32.gmra.mrb[0].mxu0 %v129
    %v446 = vpop.f32.mrb[0].mxu0
    %v447 = vadd.f32 %v253, %v446
    %v448 = vpop.f32.mrb[0].mxu0
    %449 = vmatprep.mubr.f32.mxu0 0.0
    %450 = vmatmul.mubr.f32.gmra.mrb[0].mxu0 %v130
    %v451 = vpop.f32.mrb[0].mxu0
    %v452 = vadd.f32 %v253, %v451
    %v453 = vpop.f32.mrb[0].mxu0
    %454 = vmatprep.mubr.f32.mxu0 0.0
    %455 = vmatmul.mubr.f32.gmra.mrb[0].mxu0 %v131
    %v456 = vpop.f32.mrb[0].mxu0
    %v457 = vadd.f32 %v253, %v456
    %v458 = vpop.f32.mrb[0].mxu0
    %459 = vmatprep.mubr.f32.mxu0 0.0
    %460 = vmatmul.mubr.f32.gmra.mrb[0].mxu0 %v132
    %v461 = vpop.f32.mrb[0].mxu0
    %v462 = vadd.f32 %v253, %v461
    %v463 = vpop.f32.mrb[0].mxu0
    %464 = vmatprep.mubr.f32.mxu0 0.0
    %465 = vmatmul.mubr.f32.gmra.mrb[0].mxu0 %v133
    %v466 = vpop.f32.mrb[0].mxu0
    %v467 = vadd.f32 %v253, %v466
    %v468 = vpop.f32.mrb[0].mxu0
    %469 = vmatprep.mubr.f32.mxu0 0.0
    %470 = vmatmul.mubr.f32.gmra.mrb[0].mxu0 %v134
    %v471 = vpop.f32.mrb[0].mxu0
    %v472 = vadd.f32 %v253, %v471
    %v473 = vpop.f32.mrb[0].mxu0
    %474 = vmatprep.mubr.f32.mxu0 0.0
    %475 = vmatmul.mubr.f32.gmra.mrb[0].mxu0 %v135
    %v476 = vpop.f32.mrb[0].mxu0
    %v477 = vadd.f32 %v253, %v476
    %v478 = vpop.f32.mrb[0].mxu0
    %479 = vmatprep.mubr.f32.mxu0 0.0
    %480 = vmatmul.mubr.f32.gmra.mrb[0].mxu0 %v136
    %v481 = vpop.f32.mrb[0].mxu0
    %v482 = vadd.f32 %v253, %v481
    %v483 = vpop.f32.mrb[0].mxu0
    %484 = vmatprep.mubr.f32.mxu0 0.0
    %485 = vmatmul.mubr.f32.gmra.mrb[0].mxu0 %v137
    %v486 = vpop.f32.mrb[0].mxu0
    %v487 = vadd.f32 %v253, %v486
    %v488 = vpop.f32.mrb[0].mxu0
    %489 = vmatprep.mubr.f32.mxu0 0.0
    %490 = vmatmul.mubr.f32.gmra.mrb[0].mxu0 %v138
    %v491 = vpop.f32.mrb[0].mxu0
    %v492 = vadd.f32 %v253, %v491
    %v493 = vpop.f32.mrb[0].mxu0
    %494 = vmatprep.mubr.f32.mxu0 0.0
    %495 = vmatmul.mubr.f32.gmra.mrb[0].mxu0 %v139
    %v496 = vpop.f32.mrb[0].mxu0
    %v497 = vadd.f32 %v253, %v496
    %v498 = vpop.f32.mrb[0].mxu0
    %499 = vmatprep.mubr.f32.mxu0 0.0
    %500 = vmatmul.mubr.f32.gmra.mrb[0].mxu0 %v140
    %v501 = vpop.f32.mrb[0].mxu0
    %v502 = vadd.f32 %v253, %v501
    %v503 = vpop.f32.mrb[0].mxu0
    %504 = vmatprep.mubr.f32.mxu0 0.0
    %505 = vmatmul.mubr.f32.gmra.mrb[0].mxu0 %v141
    %v506 = vpop.f32.mrb[0].mxu0
    %v507 = vadd.f32 %v253, %v506
    %v508 = vpop.f32.mrb[0].mxu0
    %509 = vmatprep.mubr.f32.mxu0 0.0
    %510 = vmatmul.mubr.f32.gmra.mrb[0].mxu0 %v142
    %v511 = vpop.f32.mrb[0].mxu0
    %v512 = vadd.f32 %v253, %v511
    %v513 = vpop.f32.mrb[0].mxu0
    %514 = vmatprep.mubr.f32.mxu0 0.0
    %515 = vmatmul.mubr.f32.gmra.mrb[0].mxu0 %v143
    %v516 = vpop.f32.mrb[0].mxu0
    %v517 = vadd.f32 %v253, %v516
    %v518 = vpop.f32.mrb[0].mxu0
    %519 = vmatprep.mubr.f32.mxu0 0.0
    %520 = vmatmul.mubr.f32.gmra.mrb[0].mxu0 %v144
    %v521 = vpop.f32.mrb[0].mxu0
    %v522 = vadd.f32 %v253, %v521
    %v523 = vpop.f32.mrb[0].mxu0
    %524 = vmatprep.mubr.f32.mxu0 0.0
    %525 = vmatmul.mubr.f32.gmra.mrb[0].mxu0 %v145
    %v526 = vpop.f32.mrb[0].mxu0
    %v527 = vadd.f32 %v253, %v526
    %v528 = vpop.f32.mrb[0].mxu0
    %529 = vmatprep.mubr.f32.mxu0 0.0
    %530 = vmatmul.mubr.f32.gmra.mrb[0].mxu0 %v146
    %v531 = vpop.f32.mrb[0].mxu0
    %v532 = vadd.f32 %v253, %v531
    %v533 = vpop.f32.mrb[0].mxu0
    %534 = vmatprep.mubr.f32.mxu0 0.0
    %535 = vmatmul.mubr.f32.gmra.mrb[0].mxu0 %v147
    %v536 = vpop.f32.mrb[0].mxu0
    %v537 = vadd.f32 %v253, %v536
    %v538 = vpop.f32.mrb[0].mxu0
    %539 = vmatprep.mubr.f32.mxu0 0.0
    %540 = vmatmul.mubr.f32.gmra.mrb[0].mxu0 %v148
    %v541 = vpop.f32.mrb[0].mxu0
    %v542 = vadd.f32 %v253, %v541
    %v543 = vpop.f32.mrb[0].mxu0
    %544 = vmatprep.mubr.f32.mxu0 0.0
    %545 = vmatmul.mubr.f32.gmra.mrb[0].mxu0 %v149
    %v546 = vpop.f32.mrb[0].mxu0
    %v547 = vadd.f32 %v253, %v546
    %v548 = vpop.f32.mrb[0].mxu0
    %549 = vmatprep.mubr.f32.mxu0 0.0
    %550 = vmatmul.mubr.f32.gmra.mrb[0].mxu0 %v150
    %v551 = vpop.f32.mrb[0].mxu0
    %v552 = vadd.f32 %v253, %v551
    %v553 = vpop.f32.mrb[0].mxu0
    %554 = vmatprep.mubr.f32.mxu0 0.0
    %555 = vmatmul.mubr.f32.gmra.mrb[0].mxu0 %v151
    %v556 = vpop.f32.mrb[0].mxu0
    %v557 = vadd.f32 %v253, %v556
    %v558 = vpop.f32.mrb[0].mxu0
    %559 = vmatprep.mubr.f32.mxu0 0.0
    %560 = vmatmul.mubr.f32.gmra.mrb[0].mxu0 %v152
    %v561 = vpop.f32.mrb[0].mxu0
    %v562 = vadd.f32 %v253, %v561
    %v563 = vpop.f32.mrb[0].mxu0
    %564 = vmatprep.mubr.f32.mxu0 0.0
    %565 = vmatmul.mubr.f32.gmra.mrb[0].mxu0 %v153
    %v566 = vpop.f32.mrb[0].mxu0
    %v567 = vadd.f32 %v253, %v566
    %v568 = vpop.f32.mrb[0].mxu0
    %569 = vmatprep.mubr.f32.mxu0 0.0
    %570 = vmatmul.mubr.f32.gmra.mrb[0].mxu0 %v154
    %v571 = vpop.f32.mrb[0].mxu0
    %v572 = vadd.f32 %v253, %v571
    %v573 = vpop.f32.mrb[0].mxu0
    %574 = vmatprep.mubr.f32.mxu0 0.0
    %575 = vmatmul.mubr.f32.gmra.mrb[0].mxu0 %v155
    %v576 = vpop.f32.mrb[0].mxu0
    %v577 = vadd.f32 %v253, %v576
    %v578 = vpop.f32.mrb[0].mxu0
    %579 = vmatprep.mubr.f32.mxu0 0.0
    %580 = vmatmul.mubr.f32.gmra.mrb[0].mxu0 %v156
    %v581 = vpop.f32.mrb[0].mxu0
    %v582 = vadd.f32 %v253, %v581
    %v583 = vpop.f32.mrb[0].mxu0
    %584 = vmatprep.mubr.f32.mxu0 0.0
    %585 = vmatmul.mubr.f32.gmra.mrb[0].mxu0 %v157
    %v586 = vpop.f32.mrb[0].mxu0
    %v587 = vadd.f32 %v253, %v586
    %v588 = vpop.f32.mrb[0].mxu0
    %589 = vmatprep.mubr.f32.mxu0 0.0
    %590 = vmatmul.mubr.f32.gmra.mrb[0].mxu0 %v158
    %v591 = vpop.f32.mrb[0].mxu0
    %v592 = vadd.f32 %v253, %v591
    %v593 = vpop.f32.mrb[0].mxu0
    %594 = vmatprep.mubr.f32.mxu0 0.0
    %595 = vmatmul.mubr.f32.gmra.mrb[0].mxu0 %v159
    %v596 = vpop.f32.mrb[0].mxu0
    %v597 = vadd.f32 %v253, %v596
    %v598 = vpop.f32.mrb[0].mxu0
    %599 = vmatprep.mubr.f32.mxu0 0.0
    %600 = vmatmul.mubr.f32.gmra.mrb[0].mxu0 %v160
    %v601 = vpop.f32.mrb[0].mxu0
    %v602 = vadd.f32 %v253, %v601
    %v603 = vpop.f32.mrb[0].mxu0
    %604 = vmatprep.mubr.f32.mxu0 0.0
    %605 = vmatmul.mubr.f32.gmra.mrb[0].mxu0 %v161
    %v606 = vpop.f32.mrb[0].mxu0
    %v607 = vadd.f32 %v253, %v606
    %v608 = vpop.f32.mrb[0].mxu0
    %609 = vmatprep.mubr.f32.mxu0 0.0
    %610 = vmatmul.mubr.f32.gmra.mrb[0].mxu0 %v162
    %v611 = vpop.f32.mrb[0].mxu0
    %v612 = vadd.f32 %v253, %v611
    %v613 = vpop.f32.mrb[0].mxu0
    %614 = vmatprep.mubr.f32.mxu0 0.0
    %615 = vmatmul.mubr.f32.gmra.mrb[0].mxu0 %v163
    %v616 = vpop.f32.mrb[0].mxu0
    %v617 = vadd.f32 %v253, %v616
    %v618 = vpop.f32.mrb[0].mxu0
    %619 = vmatprep.mubr.f32.mxu0 0.0
    %620 = vmatmul.mubr.f32.gmra.mrb[0].mxu0 %v164
    %v621 = vpop.f32.mrb[0].mxu0
    %v622 = vadd.f32 %v253, %v621
    %v623 = vpop.f32.mrb[0].mxu0
    %624 = vmatprep.mubr.f32.mxu0 0.0
    %625 = vmatmul.mubr.f32.gmra.mrb[0].mxu0 %v165
    %v626 = vpop.f32.mrb[0].mxu0
    %v627 = vadd.f32 %v253, %v626
    %v628 = vpop.f32.mrb[0].mxu0
    %629 = vmatprep.mubr.f32.mxu0 0.0
    %630 = vmatmul.mubr.f32.gmra.mrb[0].mxu0 %v166
    %v631 = vpop.f32.mrb[0].mxu0
    %v632 = vadd.f32 %v253, %v631
    %v633 = vpop.f32.mrb[0].mxu0
    %634 = vmatprep.mubr.f32.mxu0 0.0
    %635 = vmatmul.mubr.f32.gmra.mrb[0].mxu0 %v167
    %v636 = vpop.f32.mrb[0].mxu0
    %v637 = vadd.f32 %v253, %v636
    %v638 = vpop.f32.mrb[0].mxu0
    %639 = vdwg.mxu0
    %v640 = vld [vmem:[#allocation8] sm:$0xff]
    %v641 = vld [vmem:[#allocation8 + $0x8] sm:$0xff]
    %v642 = vld [vmem:[#allocation8 + $0x10] sm:$0xff]
    %v643 = vld [vmem:[#allocation8 + $0x18] sm:$0xff]
    %v644 = vld [vmem:[#allocation8 + $0x20] sm:$0xff]
    %v645 = vld [vmem:[#allocation8 + $0x28] sm:$0xff]
    %v646 = vld [vmem:[#allocation8 + $0x30] sm:$0xff]
    %v647 = vld [vmem:[#allocation8 + $0x38] sm:$0xff]
    %v648 = vld [vmem:[#allocation8 + $0x40] sm:$0xff]
    %v649 = vld [vmem:[#allocation8 + $0x48] sm:$0xff]
    %v650 = vld [vmem:[#allocation8 + $0x50] sm:$0xff]
    %v651 = vld [vmem:[#allocation8 + $0x58] sm:$0xff]
    %v652 = vld [vmem:[#allocation8 + $0x60] sm:$0xff]
    %v653 = vld [vmem:[#allocation8 + $0x68] sm:$0xff]
    %v654 = vld [vmem:[#allocation8 + $0x70] sm:$0xff]
    %v655 = vld [vmem:[#allocation8 + $0x78] sm:$0xff]
    %v656 = vld [vmem:[%s5] sm:$0x1]
    %v658 = vlaneseq
    %v659 = vshrl.u32 %v658, 7
    %v660 = vsub.s32 0, %v659
    %v661 = vrot.slane %v656, %v660
    %663 = vmatprep.subr.mxu0 0.0
    %664 = vmatpush1.msra.mxu0 %v640
    %665 = vmatprep.subr.mxu0 0.0
    %666 = vmatpush1.msra.mxu0 %v641
    %667 = vmatprep.subr.mxu0 0.0
    %668 = vmatpush1.msra.mxu0 %v642
    %669 = vmatprep.subr.mxu0 0.0
    %670 = vmatpush1.msra.mxu0 %v643
    %671 = vmatprep.subr.mxu0 0.0
    %672 = vmatpush1.msra.mxu0 %v644
    %673 = vmatprep.subr.mxu0 0.0
    %674 = vmatpush1.msra.mxu0 %v645
    %675 = vmatprep.subr.mxu0 0.0
    %676 = vmatpush1.msra.mxu0 %v646
    %677 = vmatprep.subr.mxu0 0.0
    %678 = vmatpush1.msra.mxu0 %v647
    %679 = vmatprep.subr.mxu0 0.0
    %680 = vmatpush1.msra.mxu0 %v648
    %681 = vmatprep.subr.mxu0 0.0
    %682 = vmatpush1.msra.mxu0 %v649
    %683 = vmatprep.subr.mxu0 0.0
    %684 = vmatpush1.msra.mxu0 %v650
    %685 = vmatprep.subr.mxu0 0.0
    %686 = vmatpush1.msra.mxu0 %v651
    %687 = vmatprep.subr.mxu0 0.0
    %688 = vmatpush1.msra.mxu0 %v652
    %689 = vmatprep.subr.mxu0 0.0
    %690 = vmatpush1.msra.mxu0 %v653
    %691 = vmatprep.subr.mxu0 0.0
    %692 = vmatpush1.msra.mxu0 %v654
    %693 = vmatprep.subr.mxu0 0.0
    %694 = vmatpush1.msra.mxu0 %v655
    %695 = vmatprep.subr.mxu0 0.0
    %696 = vmatpush1.msra.mxu0 0.0
    %697 = vmatprep.subr.mxu0 0.0
    %698 = vmatpush1.msra.mxu0 0.0
    %699 = vmatprep.subr.mxu0 0.0
    %700 = vmatpush1.msra.mxu0 0.0
    %701 = vmatprep.subr.mxu0 0.0
    %702 = vmatpush1.msra.mxu0 0.0
    %703 = vmatprep.subr.mxu0 0.0
    %704 = vmatpush1.msra.mxu0 0.0
    %705 = vmatprep.subr.mxu0 0.0
    %706 = vmatpush1.msra.mxu0 0.0
    %707 = vmatprep.subr.mxu0 0.0
    %708 = vmatpush1.msra.mxu0 0.0
    %709 = vmatprep.subr.mxu0 0.0
    %710 = vmatpush1.msra.mxu0 0.0
    %711 = vmatprep.subr.mxu0 0.0
    %712 = vmatpush1.msra.mxu0 0.0
    %713 = vmatprep.subr.mxu0 0.0
    %714 = vmatpush1.msra.mxu0 0.0
    %715 = vmatprep.subr.mxu0 0.0
    %716 = vmatpush1.msra.mxu0 0.0
    %717 = vmatprep.subr.mxu0 0.0
    %718 = vmatpush1.msra.mxu0 0.0
    %719 = vmatprep.subr.mxu0 0.0
    %720 = vmatpush1.msra.mxu0 0.0
    %721 = vmatprep.subr.mxu0 0.0
    %722 = vmatpush1.msra.mxu0 0.0
    %723 = vmatprep.subr.mxu0 0.0
    %724 = vmatpush1.msra.mxu0 0.0
    %725 = vmatprep.subr.mxu0 0.0
    %726 = vmatpush1.msra.mxu0 0.0
    %727 = vmatprep.mubr.f32.mxu0 0.0
    %728 = vmatmul.mubr.f32.gmra.mrb[0].mxu0 %v168
    %v729 = vpop.f32.mrb[0].mxu0
    %v730 = vadd.f32 %v661, %v729
    %v731 = vpop.f32.mrb[0].mxu0
    %732 = vmatprep.mubr.f32.mxu0 0.0
    %733 = vmatmul.mubr.f32.gmra.mrb[0].mxu0 %v169
    %v734 = vpop.f32.mrb[0].mxu0
    %v735 = vadd.f32 %v661, %v734
    %v736 = vpop.f32.mrb[0].mxu0
    %737 = vmatprep.mubr.f32.mxu0 0.0
    %738 = vmatmul.mubr.f32.gmra.mrb[0].mxu0 %v170
    %v739 = vpop.f32.mrb[0].mxu0
    %v740 = vadd.f32 %v661, %v739
    %v741 = vpop.f32.mrb[0].mxu0
    %742 = vmatprep.mubr.f32.mxu0 0.0
    %743 = vmatmul.mubr.f32.gmra.mrb[0].mxu0 %v171
    %v744 = vpop.f32.mrb[0].mxu0
    %v745 = vadd.f32 %v661, %v744
    %v746 = vpop.f32.mrb[0].mxu0
    %747 = vmatprep.mubr.f32.mxu0 0.0
    %748 = vmatmul.mubr.f32.gmra.mrb[0].mxu0 %v172
    %v749 = vpop.f32.mrb[0].mxu0
    %v750 = vadd.f32 %v661, %v749
    %v751 = vpop.f32.mrb[0].mxu0
    %752 = vmatprep.mubr.f32.mxu0 0.0
    %753 = vmatmul.mubr.f32.gmra.mrb[0].mxu0 %v173
    %v754 = vpop.f32.mrb[0].mxu0
    %v755 = vadd.f32 %v661, %v754
    %v756 = vpop.f32.mrb[0].mxu0
    %757 = vmatprep.mubr.f32.mxu0 0.0
    %758 = vmatmul.mubr.f32.gmra.mrb[0].mxu0 %v174
    %v759 = vpop.f32.mrb[0].mxu0
    %v760 = vadd.f32 %v661, %v759
    %v761 = vpop.f32.mrb[0].mxu0
    %762 = vmatprep.mubr.f32.mxu0 0.0
    %763 = vmatmul.mubr.f32.gmra.mrb[0].mxu0 %v175
    %v764 = vpop.f32.mrb[0].mxu0
    %v765 = vadd.f32 %v661, %v764
    %v766 = vpop.f32.mrb[0].mxu0
    %767 = vmatprep.mubr.f32.mxu0 0.0
    %768 = vmatmul.mubr.f32.gmra.mrb[0].mxu0 %v176
    %v769 = vpop.f32.mrb[0].mxu0
    %v770 = vadd.f32 %v661, %v769
    %v771 = vpop.f32.mrb[0].mxu0
    %772 = vmatprep.mubr.f32.mxu0 0.0
    %773 = vmatmul.mubr.f32.gmra.mrb[0].mxu0 %v177
    %v774 = vpop.f32.mrb[0].mxu0
    %v775 = vadd.f32 %v661, %v774
    %v776 = vpop.f32.mrb[0].mxu0
    %777 = vmatprep.mubr.f32.mxu0 0.0
    %778 = vmatmul.mubr.f32.gmra.mrb[0].mxu0 %v178
    %v779 = vpop.f32.mrb[0].mxu0
    %v780 = vadd.f32 %v661, %v779
    %v781 = vpop.f32.mrb[0].mxu0
    %782 = vmatprep.mubr.f32.mxu0 0.0
    %783 = vmatmul.mubr.f32.gmra.mrb[0].mxu0 %v179
    %v784 = vpop.f32.mrb[0].mxu0
    %v785 = vadd.f32 %v661, %v784
    %v786 = vpop.f32.mrb[0].mxu0
    %787 = vmatprep.mubr.f32.mxu0 0.0
    %788 = vmatmul.mubr.f32.gmra.mrb[0].mxu0 %v180
    %v789 = vpop.f32.mrb[0].mxu0
    %v790 = vadd.f32 %v661, %v789
    %v791 = vpop.f32.mrb[0].mxu0
    %792 = vmatprep.mubr.f32.mxu0 0.0
    %793 = vmatmul.mubr.f32.gmra.mrb[0].mxu0 %v181
    %v794 = vpop.f32.mrb[0].mxu0
    %v795 = vadd.f32 %v661, %v794
    %v796 = vpop.f32.mrb[0].mxu0
    %797 = vmatprep.mubr.f32.mxu0 0.0
    %798 = vmatmul.mubr.f32.gmra.mrb[0].mxu0 %v182
    %v799 = vpop.f32.mrb[0].mxu0
    %v800 = vadd.f32 %v661, %v799
    %v801 = vpop.f32.mrb[0].mxu0
    %802 = vmatprep.mubr.f32.mxu0 0.0
    %803 = vmatmul.mubr.f32.gmra.mrb[0].mxu0 %v183
    %v804 = vpop.f32.mrb[0].mxu0
    %v805 = vadd.f32 %v661, %v804
    %v806 = vpop.f32.mrb[0].mxu0
    %807 = vmatprep.mubr.f32.mxu0 0.0
    %808 = vmatmul.mubr.f32.gmra.mrb[0].mxu0 %v184
    %v809 = vpop.f32.mrb[0].mxu0
    %v810 = vadd.f32 %v661, %v809
    %v811 = vpop.f32.mrb[0].mxu0
    %812 = vmatprep.mubr.f32.mxu0 0.0
    %813 = vmatmul.mubr.f32.gmra.mrb[0].mxu0 %v185
    %v814 = vpop.f32.mrb[0].mxu0
    %v815 = vadd.f32 %v661, %v814
    %v816 = vpop.f32.mrb[0].mxu0
    %817 = vmatprep.mubr.f32.mxu0 0.0
    %818 = vmatmul.mubr.f32.gmra.mrb[0].mxu0 %v186
    %v819 = vpop.f32.mrb[0].mxu0
    %v820 = vadd.f32 %v661, %v819
    %v821 = vpop.f32.mrb[0].mxu0
    %822 = vmatprep.mubr.f32.mxu0 0.0
    %823 = vmatmul.mubr.f32.gmra.mrb[0].mxu0 %v187
    %v824 = vpop.f32.mrb[0].mxu0
    %v825 = vadd.f32 %v661, %v824
    %v826 = vpop.f32.mrb[0].mxu0
    %827 = vmatprep.mubr.f32.mxu0 0.0
    %828 = vmatmul.mubr.f32.gmra.mrb[0].mxu0 %v188
    %v829 = vpop.f32.mrb[0].mxu0
    %v830 = vadd.f32 %v661, %v829
    %v831 = vpop.f32.mrb[0].mxu0
    %832 = vmatprep.mubr.f32.mxu0 0.0
    %833 = vmatmul.mubr.f32.gmra.mrb[0].mxu0 %v189
    %v834 = vpop.f32.mrb[0].mxu0
    %v835 = vadd.f32 %v661, %v834
    %v836 = vpop.f32.mrb[0].mxu0
    %837 = vmatprep.mubr.f32.mxu0 0.0
    %838 = vmatmul.mubr.f32.gmra.mrb[0].mxu0 %v190
    %v839 = vpop.f32.mrb[0].mxu0
    %v840 = vadd.f32 %v661, %v839
    %v841 = vpop.f32.mrb[0].mxu0
    %842 = vmatprep.mubr.f32.mxu0 0.0
    %843 = vmatmul.mubr.f32.gmra.mrb[0].mxu0 %v191
    %v844 = vpop.f32.mrb[0].mxu0
    %v845 = vadd.f32 %v661, %v844
    %v846 = vpop.f32.mrb[0].mxu0
    %847 = vmatprep.mubr.f32.mxu0 0.0
    %848 = vmatmul.mubr.f32.gmra.mrb[0].mxu0 %v192
    %v849 = vpop.f32.mrb[0].mxu0
    %v850 = vadd.f32 %v661, %v849
    %v851 = vpop.f32.mrb[0].mxu0
    %852 = vmatprep.mubr.f32.mxu0 0.0
    %853 = vmatmul.mubr.f32.gmra.mrb[0].mxu0 %v193
    %v854 = vpop.f32.mrb[0].mxu0
    %v855 = vadd.f32 %v661, %v854
    %v856 = vpop.f32.mrb[0].mxu0
    %857 = vmatprep.mubr.f32.mxu0 0.0
    %858 = vmatmul.mubr.f32.gmra.mrb[0].mxu0 %v194
    %v859 = vpop.f32.mrb[0].mxu0
    %v860 = vadd.f32 %v661, %v859
    %v861 = vpop.f32.mrb[0].mxu0
    %862 = vmatprep.mubr.f32.mxu0 0.0
    %863 = vmatmul.mubr.f32.gmra.mrb[0].mxu0 %v195
    %v864 = vpop.f32.mrb[0].mxu0
    %v865 = vadd.f32 %v661, %v864
    %v866 = vpop.f32.mrb[0].mxu0
    %867 = vmatprep.mubr.f32.mxu0 0.0
    %868 = vmatmul.mubr.f32.gmra.mrb[0].mxu0 %v196
    %v869 = vpop.f32.mrb[0].mxu0
    %v870 = vadd.f32 %v661, %v869
    %v871 = vpop.f32.mrb[0].mxu0
    %872 = vmatprep.mubr.f32.mxu0 0.0
    %873 = vmatmul.mubr.f32.gmra.mrb[0].mxu0 %v197
    %v874 = vpop.f32.mrb[0].mxu0
    %v875 = vadd.f32 %v661, %v874
    %v876 = vpop.f32.mrb[0].mxu0
    %877 = vmatprep.mubr.f32.mxu0 0.0
    %878 = vmatmul.mubr.f32.gmra.mrb[0].mxu0 %v198
    %v879 = vpop.f32.mrb[0].mxu0
    %v880 = vadd.f32 %v661, %v879
    %v881 = vpop.f32.mrb[0].mxu0
    %882 = vmatprep.mubr.f32.mxu0 0.0
    %883 = vmatmul.mubr.f32.gmra.mrb[0].mxu0 %v199
    %v884 = vpop.f32.mrb[0].mxu0
    %v885 = vadd.f32 %v661, %v884
    %v886 = vpop.f32.mrb[0].mxu0
    %887 = vmatprep.mubr.f32.mxu0 0.0
    %888 = vmatmul.mubr.f32.gmra.mrb[0].mxu0 %v200
    %v889 = vpop.f32.mrb[0].mxu0
    %v890 = vadd.f32 %v661, %v889
    %v891 = vpop.f32.mrb[0].mxu0
    %892 = vmatprep.mubr.f32.mxu0 0.0
    %893 = vmatmul.mubr.f32.gmra.mrb[0].mxu0 %v201
    %v894 = vpop.f32.mrb[0].mxu0
    %v895 = vadd.f32 %v661, %v894
    %v896 = vpop.f32.mrb[0].mxu0
    %897 = vmatprep.mubr.f32.mxu0 0.0
    %898 = vmatmul.mubr.f32.gmra.mrb[0].mxu0 %v202
    %v899 = vpop.f32.mrb[0].mxu0
    %v900 = vadd.f32 %v661, %v899
    %v901 = vpop.f32.mrb[0].mxu0
    %902 = vmatprep.mubr.f32.mxu0 0.0
    %903 = vmatmul.mubr.f32.gmra.mrb[0].mxu0 %v203
    %v904 = vpop.f32.mrb[0].mxu0
    %v905 = vadd.f32 %v661, %v904
    %v906 = vpop.f32.mrb[0].mxu0
    %907 = vmatprep.mubr.f32.mxu0 0.0
    %908 = vmatmul.mubr.f32.gmra.mrb[0].mxu0 %v204
    %v909 = vpop.f32.mrb[0].mxu0
    %v910 = vadd.f32 %v661, %v909
    %v911 = vpop.f32.mrb[0].mxu0
    %912 = vmatprep.mubr.f32.mxu0 0.0
    %913 = vmatmul.mubr.f32.gmra.mrb[0].mxu0 %v205
    %v914 = vpop.f32.mrb[0].mxu0
    %v915 = vadd.f32 %v661, %v914
    %v916 = vpop.f32.mrb[0].mxu0
    %917 = vmatprep.mubr.f32.mxu0 0.0
    %918 = vmatmul.mubr.f32.gmra.mrb[0].mxu0 %v206
    %v919 = vpop.f32.mrb[0].mxu0
    %v920 = vadd.f32 %v661, %v919
    %v921 = vpop.f32.mrb[0].mxu0
    %922 = vmatprep.mubr.f32.mxu0 0.0
    %923 = vmatmul.mubr.f32.gmra.mrb[0].mxu0 %v207
    %v924 = vpop.f32.mrb[0].mxu0
    %v925 = vadd.f32 %v661, %v924
    %v926 = vpop.f32.mrb[0].mxu0
    %927 = vmatprep.mubr.f32.mxu0 0.0
    %928 = vmatmul.mubr.f32.gmra.mrb[0].mxu0 %v208
    %v929 = vpop.f32.mrb[0].mxu0
    %v930 = vadd.f32 %v661, %v929
    %v931 = vpop.f32.mrb[0].mxu0
    %932 = vmatprep.mubr.f32.mxu0 0.0
    %933 = vmatmul.mubr.f32.gmra.mrb[0].mxu0 %v209
    %v934 = vpop.f32.mrb[0].mxu0
    %v935 = vadd.f32 %v661, %v934
    %v936 = vpop.f32.mrb[0].mxu0
    %937 = vmatprep.mubr.f32.mxu0 0.0
    %938 = vmatmul.mubr.f32.gmra.mrb[0].mxu0 %v210
    %v939 = vpop.f32.mrb[0].mxu0
    %v940 = vadd.f32 %v661, %v939
    %v941 = vpop.f32.mrb[0].mxu0
    %942 = vmatprep.mubr.f32.mxu0 0.0
    %943 = vmatmul.mubr.f32.gmra.mrb[0].mxu0 %v211
    %v944 = vpop.f32.mrb[0].mxu0
    %v945 = vadd.f32 %v661, %v944
    %v946 = vpop.f32.mrb[0].mxu0
    %947 = vmatprep.mubr.f32.mxu0 0.0
    %948 = vmatmul.mubr.f32.gmra.mrb[0].mxu0 %v212
    %v949 = vpop.f32.mrb[0].mxu0
    %v950 = vadd.f32 %v661, %v949
    %v951 = vpop.f32.mrb[0].mxu0
    %952 = vmatprep.mubr.f32.mxu0 0.0
    %953 = vmatmul.mubr.f32.gmra.mrb[0].mxu0 %v213
    %v954 = vpop.f32.mrb[0].mxu0
    %v955 = vadd.f32 %v661, %v954
    %v956 = vpop.f32.mrb[0].mxu0
    %957 = vmatprep.mubr.f32.mxu0 0.0
    %958 = vmatmul.mubr.f32.gmra.mrb[0].mxu0 %v214
    %v959 = vpop.f32.mrb[0].mxu0
    %v960 = vadd.f32 %v661, %v959
    %v961 = vpop.f32.mrb[0].mxu0
    %962 = vmatprep.mubr.f32.mxu0 0.0
    %963 = vmatmul.mubr.f32.gmra.mrb[0].mxu0 %v215
    %v964 = vpop.f32.mrb[0].mxu0
    %v965 = vadd.f32 %v661, %v964
    %v966 = vpop.f32.mrb[0].mxu0
    %967 = vmatprep.mubr.f32.mxu0 0.0
    %968 = vmatmul.mubr.f32.gmra.mrb[0].mxu0 %v216
    %v969 = vpop.f32.mrb[0].mxu0
    %v970 = vadd.f32 %v661, %v969
    %v971 = vpop.f32.mrb[0].mxu0
    %972 = vmatprep.mubr.f32.mxu0 0.0
    %973 = vmatmul.mubr.f32.gmra.mrb[0].mxu0 %v217
    %v974 = vpop.f32.mrb[0].mxu0
    %v975 = vadd.f32 %v661, %v974
    %v976 = vpop.f32.mrb[0].mxu0
    %977 = vmatprep.mubr.f32.mxu0 0.0
    %978 = vmatmul.mubr.f32.gmra.mrb[0].mxu0 %v218
    %v979 = vpop.f32.mrb[0].mxu0
    %v980 = vadd.f32 %v661, %v979
    %v981 = vpop.f32.mrb[0].mxu0
    %982 = vmatprep.mubr.f32.mxu0 0.0
    %983 = vmatmul.mubr.f32.gmra.mrb[0].mxu0 %v219
    %v984 = vpop.f32.mrb[0].mxu0
    %v985 = vadd.f32 %v661, %v984
    %v986 = vpop.f32.mrb[0].mxu0
    %987 = vmatprep.mubr.f32.mxu0 0.0
    %988 = vmatmul.mubr.f32.gmra.mrb[0].mxu0 %v220
    %v989 = vpop.f32.mrb[0].mxu0
    %v990 = vadd.f32 %v661, %v989
    %v991 = vpop.f32.mrb[0].mxu0
    %992 = vmatprep.mubr.f32.mxu0 0.0
    %993 = vmatmul.mubr.f32.gmra.mrb[0].mxu0 %v221
    %v994 = vpop.f32.mrb[0].mxu0
    %v995 = vadd.f32 %v661, %v994
    %v996 = vpop.f32.mrb[0].mxu0
    %997 = vmatprep.mubr.f32.mxu0 0.0
    %998 = vmatmul.mubr.f32.gmra.mrb[0].mxu0 %v222
    %v999 = vpop.f32.mrb[0].mxu0
    %v1000 = vadd.f32 %v661, %v999
    %v1001 = vpop.f32.mrb[0].mxu0
    %1002 = vmatprep.mubr.f32.mxu0 0.0
    %1003 = vmatmul.mubr.f32.gmra.mrb[0].mxu0 %v223
    %v1004 = vpop.f32.mrb[0].mxu0
    %v1005 = vadd.f32 %v661, %v1004
    %v1006 = vpop.f32.mrb[0].mxu0
    %1007 = vmatprep.mubr.f32.mxu0 0.0
    %1008 = vmatmul.mubr.f32.gmra.mrb[0].mxu0 %v224
    %v1009 = vpop.f32.mrb[0].mxu0
    %v1010 = vadd.f32 %v661, %v1009
    %v1011 = vpop.f32.mrb[0].mxu0
    %1012 = vmatprep.mubr.f32.mxu0 0.0
    %1013 = vmatmul.mubr.f32.gmra.mrb[0].mxu0 %v225
    %v1014 = vpop.f32.mrb[0].mxu0
    %v1015 = vadd.f32 %v661, %v1014
    %v1016 = vpop.f32.mrb[0].mxu0
    %1017 = vmatprep.mubr.f32.mxu0 0.0
    %1018 = vmatmul.mubr.f32.gmra.mrb[0].mxu0 %v226
    %v1019 = vpop.f32.mrb[0].mxu0
    %v1020 = vadd.f32 %v661, %v1019
    %v1021 = vpop.f32.mrb[0].mxu0
    %1022 = vmatprep.mubr.f32.mxu0 0.0
    %1023 = vmatmul.mubr.f32.gmra.mrb[0].mxu0 %v227
    %v1024 = vpop.f32.mrb[0].mxu0
    %v1025 = vadd.f32 %v661, %v1024
    %v1026 = vpop.f32.mrb[0].mxu0
    %1027 = vmatprep.mubr.f32.mxu0 0.0
    %1028 = vmatmul.mubr.f32.gmra.mrb[0].mxu0 %v228
    %v1029 = vpop.f32.mrb[0].mxu0
    %v1030 = vadd.f32 %v661, %v1029
    %v1031 = vpop.f32.mrb[0].mxu0
    %1032 = vmatprep.mubr.f32.mxu0 0.0
    %1033 = vmatmul.mubr.f32.gmra.mrb[0].mxu0 %v229
    %v1034 = vpop.f32.mrb[0].mxu0
    %v1035 = vadd.f32 %v661, %v1034
    %v1036 = vpop.f32.mrb[0].mxu0
    %1037 = vmatprep.mubr.f32.mxu0 0.0
    %1038 = vmatmul.mubr.f32.gmra.mrb[0].mxu0 %v230
    %v1039 = vpop.f32.mrb[0].mxu0
    %v1040 = vadd.f32 %v661, %v1039
    %v1041 = vpop.f32.mrb[0].mxu0
    %1042 = vmatprep.mubr.f32.mxu0 0.0
    %1043 = vmatmul.mubr.f32.gmra.mrb[0].mxu0 %v231
    %v1044 = vpop.f32.mrb[0].mxu0
    %v1045 = vadd.f32 %v661, %v1044
    %v1046 = vpop.f32.mrb[0].mxu0
    %1047 = vdwg.mxu0
    %v1048 = vld [vmem:[#allocation10] sm:$0xff]
    %v1049 = vld [vmem:[#allocation10 + $0x8] sm:$0xff]
    %v1050 = vld [vmem:[#allocation10 + $0x10] sm:$0xff]
    %v1051 = vld [vmem:[#allocation10 + $0x18] sm:$0xff]
    %v1052 = vld [vmem:[#allocation10 + $0x20] sm:$0xff]
    %v1053 = vld [vmem:[#allocation10 + $0x28] sm:$0xff]
    %v1054 = vld [vmem:[#allocation10 + $0x30] sm:$0xff]
    %v1055 = vld [vmem:[#allocation10 + $0x38] sm:$0xff]
    %v1056 = vld [vmem:[#allocation10 + $0x40] sm:$0xff]
    %v1057 = vld [vmem:[#allocation10 + $0x48] sm:$0xff]
    %v1058 = vld [vmem:[#allocation10 + $0x50] sm:$0xff]
    %v1059 = vld [vmem:[#allocation10 + $0x58] sm:$0xff]
    %v1060 = vld [vmem:[#allocation10 + $0x60] sm:$0xff]
    %v1061 = vld [vmem:[#allocation10 + $0x68] sm:$0xff]
    %v1062 = vld [vmem:[#allocation10 + $0x70] sm:$0xff]
    %v1063 = vld [vmem:[#allocation10 + $0x78] sm:$0xff]
    %v1064 = vld [vmem:[%s7] sm:$0x1]
    %v1066 = vlaneseq
    %v1067 = vshrl.u32 %v1066, 7
    %v1068 = vsub.s32 0, %v1067
    %v1069 = vrot.slane %v1064, %v1068
    %1071 = vmatprep.subr.mxu0 0.0
    %1072 = vmatpush1.msra.mxu0 %v1048
    %1073 = vmatprep.subr.mxu0 0.0
    %1074 = vmatpush1.msra.mxu0 %v1049
    %1075 = vmatprep.subr.mxu0 0.0
    %1076 = vmatpush1.msra.mxu0 %v1050
    %1077 = vmatprep.subr.mxu0 0.0
    %1078 = vmatpush1.msra.mxu0 %v1051
    %1079 = vmatprep.subr.mxu0 0.0
    %1080 = vmatpush1.msra.mxu0 %v1052
    %1081 = vmatprep.subr.mxu0 0.0
    %1082 = vmatpush1.msra.mxu0 %v1053
    %1083 = vmatprep.subr.mxu0 0.0
    %1084 = vmatpush1.msra.mxu0 %v1054
    %1085 = vmatprep.subr.mxu0 0.0
    %1086 = vmatpush1.msra.mxu0 %v1055
    %1087 = vmatprep.subr.mxu0 0.0
    %1088 = vmatpush1.msra.mxu0 %v1056
    %1089 = vmatprep.subr.mxu0 0.0
    %1090 = vmatpush1.msra.mxu0 %v1057
    %1091 = vmatprep.subr.mxu0 0.0
    %1092 = vmatpush1.msra.mxu0 %v1058
    %1093 = vmatprep.subr.mxu0 0.0
    %1094 = vmatpush1.msra.mxu0 %v1059
    %1095 = vmatprep.subr.mxu0 0.0
    %1096 = vmatpush1.msra.mxu0 %v1060
    %1097 = vmatprep.subr.mxu0 0.0
    %1098 = vmatpush1.msra.mxu0 %v1061
    %1099 = vmatprep.subr.mxu0 0.0
    %1100 = vmatpush1.msra.mxu0 %v1062
    %1101 = vmatprep.subr.mxu0 0.0
    %1102 = vmatpush1.msra.mxu0 %v1063
    %1103 = vmatprep.subr.mxu0 0.0
    %1104 = vmatpush1.msra.mxu0 0.0
    %1105 = vmatprep.subr.mxu0 0.0
    %1106 = vmatpush1.msra.mxu0 0.0
    %1107 = vmatprep.subr.mxu0 0.0
    %1108 = vmatpush1.msra.mxu0 0.0
    %1109 = vmatprep.subr.mxu0 0.0
    %1110 = vmatpush1.msra.mxu0 0.0
    %1111 = vmatprep.subr.mxu0 0.0
    %1112 = vmatpush1.msra.mxu0 0.0
    %1113 = vmatprep.subr.mxu0 0.0
    %1114 = vmatpush1.msra.mxu0 0.0
    %1115 = vmatprep.subr.mxu0 0.0
    %1116 = vmatpush1.msra.mxu0 0.0
    %1117 = vmatprep.subr.mxu0 0.0
    %1118 = vmatpush1.msra.mxu0 0.0
    %1119 = vmatprep.subr.mxu0 0.0
    %1120 = vmatpush1.msra.mxu0 0.0
    %1121 = vmatprep.subr.mxu0 0.0
    %1122 = vmatpush1.msra.mxu0 0.0
    %1123 = vmatprep.subr.mxu0 0.0
    %1124 = vmatpush1.msra.mxu0 0.0
    %1125 = vmatprep.subr.mxu0 0.0
    %1126 = vmatpush1.msra.mxu0 0.0
    %1127 = vmatprep.subr.mxu0 0.0
    %1128 = vmatpush1.msra.mxu0 0.0
    %1129 = vmatprep.subr.mxu0 0.0
    %1130 = vmatpush1.msra.mxu0 0.0
    %1131 = vmatprep.subr.mxu0 0.0
    %1132 = vmatpush1.msra.mxu0 0.0
    %1133 = vmatprep.subr.mxu0 0.0
    %1134 = vmatpush1.msra.mxu0 0.0
    %1135 = vmatprep.mubr.f32.mxu0 0.0
    %1136 = vmatmul.mubr.f32.gmra.mrb[0].mxu0 %v168
    %v1137 = vpop.f32.mrb[0].mxu0
    %v1138 = vadd.f32 %v1069, %v1137
    %v1139 = vpop.f32.mrb[0].mxu0
    %1140 = vmatprep.mubr.f32.mxu0 0.0
    %1141 = vmatmul.mubr.f32.gmra.mrb[0].mxu0 %v169
    %v1142 = vpop.f32.mrb[0].mxu0
    %v1143 = vadd.f32 %v1069, %v1142
    %v1144 = vpop.f32.mrb[0].mxu0
    %1145 = vmatprep.mubr.f32.mxu0 0.0
    %1146 = vmatmul.mubr.f32.gmra.mrb[0].mxu0 %v170
    %v1147 = vpop.f32.mrb[0].mxu0
    %v1148 = vadd.f32 %v1069, %v1147
    %v1149 = vpop.f32.mrb[0].mxu0
    %1150 = vmatprep.mubr.f32.mxu0 0.0
    %1151 = vmatmul.mubr.f32.gmra.mrb[0].mxu0 %v171
    %v1152 = vpop.f32.mrb[0].mxu0
    %v1153 = vadd.f32 %v1069, %v1152
    %v1154 = vpop.f32.mrb[0].mxu0
    %1155 = vmatprep.mubr.f32.mxu0 0.0
    %1156 = vmatmul.mubr.f32.gmra.mrb[0].mxu0 %v172
    %v1157 = vpop.f32.mrb[0].mxu0
    %v1158 = vadd.f32 %v1069, %v1157
    %v1159 = vpop.f32.mrb[0].mxu0
    %1160 = vmatprep.mubr.f32.mxu0 0.0
    %1161 = vmatmul.mubr.f32.gmra.mrb[0].mxu0 %v173
    %v1162 = vpop.f32.mrb[0].mxu0
    %v1163 = vadd.f32 %v1069, %v1162
    %v1164 = vpop.f32.mrb[0].mxu0
    %1165 = vmatprep.mubr.f32.mxu0 0.0
    %1166 = vmatmul.mubr.f32.gmra.mrb[0].mxu0 %v174
    %v1167 = vpop.f32.mrb[0].mxu0
    %v1168 = vadd.f32 %v1069, %v1167
    %v1169 = vpop.f32.mrb[0].mxu0
    %1170 = vmatprep.mubr.f32.mxu0 0.0
    %1171 = vmatmul.mubr.f32.gmra.mrb[0].mxu0 %v175
    %v1172 = vpop.f32.mrb[0].mxu0
    %v1173 = vadd.f32 %v1069, %v1172
    %v1174 = vpop.f32.mrb[0].mxu0
    %1175 = vmatprep.mubr.f32.mxu0 0.0
    %1176 = vmatmul.mubr.f32.gmra.mrb[0].mxu0 %v176
    %v1177 = vpop.f32.mrb[0].mxu0
    %v1178 = vadd.f32 %v1069, %v1177
    %v1179 = vpop.f32.mrb[0].mxu0
    %1180 = vmatprep.mubr.f32.mxu0 0.0
    %1181 = vmatmul.mubr.f32.gmra.mrb[0].mxu0 %v177
    %v1182 = vpop.f32.mrb[0].mxu0
    %v1183 = vadd.f32 %v1069, %v1182
    %v1184 = vpop.f32.mrb[0].mxu0
    %1185 = vmatprep.mubr.f32.mxu0 0.0
    %1186 = vmatmul.mubr.f32.gmra.mrb[0].mxu0 %v178
    %v1187 = vpop.f32.mrb[0].mxu0
    %v1188 = vadd.f32 %v1069, %v1187
    %v1189 = vpop.f32.mrb[0].mxu0
    %1190 = vmatprep.mubr.f32.mxu0 0.0
    %1191 = vmatmul.mubr.f32.gmra.mrb[0].mxu0 %v179
    %v1192 = vpop.f32.mrb[0].mxu0
    %v1193 = vadd.f32 %v1069, %v1192
    %v1194 = vpop.f32.mrb[0].mxu0
    %1195 = vmatprep.mubr.f32.mxu0 0.0
    %1196 = vmatmul.mubr.f32.gmra.mrb[0].mxu0 %v180
    %v1197 = vpop.f32.mrb[0].mxu0
    %v1198 = vadd.f32 %v1069, %v1197
    %v1199 = vpop.f32.mrb[0].mxu0
    %1200 = vmatprep.mubr.f32.mxu0 0.0
    %1201 = vmatmul.mubr.f32.gmra.mrb[0].mxu0 %v181
    %v1202 = vpop.f32.mrb[0].mxu0
    %v1203 = vadd.f32 %v1069, %v1202
    %v1204 = vpop.f32.mrb[0].mxu0
    %1205 = vmatprep.mubr.f32.mxu0 0.0
    %1206 = vmatmul.mubr.f32.gmra.mrb[0].mxu0 %v182
    %v1207 = vpop.f32.mrb[0].mxu0
    %v1208 = vadd.f32 %v1069, %v1207
    %v1209 = vpop.f32.mrb[0].mxu0
    %1210 = vmatprep.mubr.f32.mxu0 0.0
    %1211 = vmatmul.mubr.f32.gmra.mrb[0].mxu0 %v183
    %v1212 = vpop.f32.mrb[0].mxu0
    %v1213 = vadd.f32 %v1069, %v1212
    %v1214 = vpop.f32.mrb[0].mxu0
    %1215 = vmatprep.mubr.f32.mxu0 0.0
    %1216 = vmatmul.mubr.f32.gmra.mrb[0].mxu0 %v184
    %v1217 = vpop.f32.mrb[0].mxu0
    %v1218 = vadd.f32 %v1069, %v1217
    %v1219 = vpop.f32.mrb[0].mxu0
    %1220 = vmatprep.mubr.f32.mxu0 0.0
    %1221 = vmatmul.mubr.f32.gmra.mrb[0].mxu0 %v185
    %v1222 = vpop.f32.mrb[0].mxu0
    %v1223 = vadd.f32 %v1069, %v1222
    %v1224 = vpop.f32.mrb[0].mxu0
    %1225 = vmatprep.mubr.f32.mxu0 0.0
    %1226 = vmatmul.mubr.f32.gmra.mrb[0].mxu0 %v186
    %v1227 = vpop.f32.mrb[0].mxu0
    %v1228 = vadd.f32 %v1069, %v1227
    %v1229 = vpop.f32.mrb[0].mxu0
    %1230 = vmatprep.mubr.f32.mxu0 0.0
    %1231 = vmatmul.mubr.f32.gmra.mrb[0].mxu0 %v187
    %v1232 = vpop.f32.mrb[0].mxu0
    %v1233 = vadd.f32 %v1069, %v1232
    %v1234 = vpop.f32.mrb[0].mxu0
    %1235 = vmatprep.mubr.f32.mxu0 0.0
    %1236 = vmatmul.mubr.f32.gmra.mrb[0].mxu0 %v188
    %v1237 = vpop.f32.mrb[0].mxu0
    %v1238 = vadd.f32 %v1069, %v1237
    %v1239 = vpop.f32.mrb[0].mxu0
    %1240 = vmatprep.mubr.f32.mxu0 0.0
    %1241 = vmatmul.mubr.f32.gmra.mrb[0].mxu0 %v189
    %v1242 = vpop.f32.mrb[0].mxu0
    %v1243 = vadd.f32 %v1069, %v1242
    %v1244 = vpop.f32.mrb[0].mxu0
    %1245 = vmatprep.mubr.f32.mxu0 0.0
    %1246 = vmatmul.mubr.f32.gmra.mrb[0].mxu0 %v190
    %v1247 = vpop.f32.mrb[0].mxu0
    %v1248 = vadd.f32 %v1069, %v1247
    %v1249 = vpop.f32.mrb[0].mxu0
    %1250 = vmatprep.mubr.f32.mxu0 0.0
    %1251 = vmatmul.mubr.f32.gmra.mrb[0].mxu0 %v191
    %v1252 = vpop.f32.mrb[0].mxu0
    %v1253 = vadd.f32 %v1069, %v1252
    %v1254 = vpop.f32.mrb[0].mxu0
    %1255 = vmatprep.mubr.f32.mxu0 0.0
    %1256 = vmatmul.mubr.f32.gmra.mrb[0].mxu0 %v192
    %v1257 = vpop.f32.mrb[0].mxu0
    %v1258 = vadd.f32 %v1069, %v1257
    %v1259 = vpop.f32.mrb[0].mxu0
    %1260 = vmatprep.mubr.f32.mxu0 0.0
    %1261 = vmatmul.mubr.f32.gmra.mrb[0].mxu0 %v193
    %v1262 = vpop.f32.mrb[0].mxu0
    %v1263 = vadd.f32 %v1069, %v1262
    %v1264 = vpop.f32.mrb[0].mxu0
    %1265 = vmatprep.mubr.f32.mxu0 0.0
    %1266 = vmatmul.mubr.f32.gmra.mrb[0].mxu0 %v194
    %v1267 = vpop.f32.mrb[0].mxu0
    %v1268 = vadd.f32 %v1069, %v1267
    %v1269 = vpop.f32.mrb[0].mxu0
    %1270 = vmatprep.mubr.f32.mxu0 0.0
    %1271 = vmatmul.mubr.f32.gmra.mrb[0].mxu0 %v195
    %v1272 = vpop.f32.mrb[0].mxu0
    %v1273 = vadd.f32 %v1069, %v1272
    %v1274 = vpop.f32.mrb[0].mxu0
    %1275 = vmatprep.mubr.f32.mxu0 0.0
    %1276 = vmatmul.mubr.f32.gmra.mrb[0].mxu0 %v196
    %v1277 = vpop.f32.mrb[0].mxu0
    %v1278 = vadd.f32 %v1069, %v1277
    %v1279 = vpop.f32.mrb[0].mxu0
    %1280 = vmatprep.mubr.f32.mxu0 0.0
    %1281 = vmatmul.mubr.f32.gmra.mrb[0].mxu0 %v197
    %v1282 = vpop.f32.mrb[0].mxu0
    %v1283 = vadd.f32 %v1069, %v1282
    %v1284 = vpop.f32.mrb[0].mxu0
    %1285 = vmatprep.mubr.f32.mxu0 0.0
    %1286 = vmatmul.mubr.f32.gmra.mrb[0].mxu0 %v198
    %v1287 = vpop.f32.mrb[0].mxu0
    %v1288 = vadd.f32 %v1069, %v1287
    %v1289 = vpop.f32.mrb[0].mxu0
    %1290 = vmatprep.mubr.f32.mxu0 0.0
    %1291 = vmatmul.mubr.f32.gmra.mrb[0].mxu0 %v199
    %v1292 = vpop.f32.mrb[0].mxu0
    %v1293 = vadd.f32 %v1069, %v1292
    %v1294 = vpop.f32.mrb[0].mxu0
    %1295 = vmatprep.mubr.f32.mxu0 0.0
    %1296 = vmatmul.mubr.f32.gmra.mrb[0].mxu0 %v200
    %v1297 = vpop.f32.mrb[0].mxu0
    %v1298 = vadd.f32 %v1069, %v1297
    %v1299 = vpop.f32.mrb[0].mxu0
    %1300 = vmatprep.mubr.f32.mxu0 0.0
    %1301 = vmatmul.mubr.f32.gmra.mrb[0].mxu0 %v201
    %v1302 = vpop.f32.mrb[0].mxu0
    %v1303 = vadd.f32 %v1069, %v1302
    %v1304 = vpop.f32.mrb[0].mxu0
    %1305 = vmatprep.mubr.f32.mxu0 0.0
    %1306 = vmatmul.mubr.f32.gmra.mrb[0].mxu0 %v202
    %v1307 = vpop.f32.mrb[0].mxu0
    %v1308 = vadd.f32 %v1069, %v1307
    %v1309 = vpop.f32.mrb[0].mxu0
    %1310 = vmatprep.mubr.f32.mxu0 0.0
    %1311 = vmatmul.mubr.f32.gmra.mrb[0].mxu0 %v203
    %v1312 = vpop.f32.mrb[0].mxu0
    %v1313 = vadd.f32 %v1069, %v1312
    %v1314 = vpop.f32.mrb[0].mxu0
    %1315 = vmatprep.mubr.f32.mxu0 0.0
    %1316 = vmatmul.mubr.f32.gmra.mrb[0].mxu0 %v204
    %v1317 = vpop.f32.mrb[0].mxu0
    %v1318 = vadd.f32 %v1069, %v1317
    %v1319 = vpop.f32.mrb[0].mxu0
    %1320 = vmatprep.mubr.f32.mxu0 0.0
    %1321 = vmatmul.mubr.f32.gmra.mrb[0].mxu0 %v205
    %v1322 = vpop.f32.mrb[0].mxu0
    %v1323 = vadd.f32 %v1069, %v1322
    %v1324 = vpop.f32.mrb[0].mxu0
    %1325 = vmatprep.mubr.f32.mxu0 0.0
    %1326 = vmatmul.mubr.f32.gmra.mrb[0].mxu0 %v206
    %v1327 = vpop.f32.mrb[0].mxu0
    %v1328 = vadd.f32 %v1069, %v1327
    %v1329 = vpop.f32.mrb[0].mxu0
    %1330 = vmatprep.mubr.f32.mxu0 0.0
    %1331 = vmatmul.mubr.f32.gmra.mrb[0].mxu0 %v207
    %v1332 = vpop.f32.mrb[0].mxu0
    %v1333 = vadd.f32 %v1069, %v1332
    %v1334 = vpop.f32.mrb[0].mxu0
    %1335 = vmatprep.mubr.f32.mxu0 0.0
    %1336 = vmatmul.mubr.f32.gmra.mrb[0].mxu0 %v208
    %v1337 = vpop.f32.mrb[0].mxu0
    %v1338 = vadd.f32 %v1069, %v1337
    %v1339 = vpop.f32.mrb[0].mxu0
    %1340 = vmatprep.mubr.f32.mxu0 0.0
    %1341 = vmatmul.mubr.f32.gmra.mrb[0].mxu0 %v209
    %v1342 = vpop.f32.mrb[0].mxu0
    %v1343 = vadd.f32 %v1069, %v1342
    %v1344 = vpop.f32.mrb[0].mxu0
    %1345 = vmatprep.mubr.f32.mxu0 0.0
    %1346 = vmatmul.mubr.f32.gmra.mrb[0].mxu0 %v210
    %v1347 = vpop.f32.mrb[0].mxu0
    %v1348 = vadd.f32 %v1069, %v1347
    %v1349 = vpop.f32.mrb[0].mxu0
    %1350 = vmatprep.mubr.f32.mxu0 0.0
    %1351 = vmatmul.mubr.f32.gmra.mrb[0].mxu0 %v211
    %v1352 = vpop.f32.mrb[0].mxu0
    %v1353 = vadd.f32 %v1069, %v1352
    %v1354 = vpop.f32.mrb[0].mxu0
    %1355 = vmatprep.mubr.f32.mxu0 0.0
    %1356 = vmatmul.mubr.f32.gmra.mrb[0].mxu0 %v212
    %v1357 = vpop.f32.mrb[0].mxu0
    %v1358 = vadd.f32 %v1069, %v1357
    %v1359 = vpop.f32.mrb[0].mxu0
    %1360 = vmatprep.mubr.f32.mxu0 0.0
    %1361 = vmatmul.mubr.f32.gmra.mrb[0].mxu0 %v213
    %v1362 = vpop.f32.mrb[0].mxu0
    %v1363 = vadd.f32 %v1069, %v1362
    %v1364 = vpop.f32.mrb[0].mxu0
    %1365 = vmatprep.mubr.f32.mxu0 0.0
    %1366 = vmatmul.mubr.f32.gmra.mrb[0].mxu0 %v214
    %v1367 = vpop.f32.mrb[0].mxu0
    %v1368 = vadd.f32 %v1069, %v1367
    %v1369 = vpop.f32.mrb[0].mxu0
    %1370 = vmatprep.mubr.f32.mxu0 0.0
    %1371 = vmatmul.mubr.f32.gmra.mrb[0].mxu0 %v215
    %v1372 = vpop.f32.mrb[0].mxu0
    %v1373 = vadd.f32 %v1069, %v1372
    %v1374 = vpop.f32.mrb[0].mxu0
    %1375 = vmatprep.mubr.f32.mxu0 0.0
    %1376 = vmatmul.mubr.f32.gmra.mrb[0].mxu0 %v216
    %v1377 = vpop.f32.mrb[0].mxu0
    %v1378 = vadd.f32 %v1069, %v1377
    %v1379 = vpop.f32.mrb[0].mxu0
    %1380 = vmatprep.mubr.f32.mxu0 0.0
    %1381 = vmatmul.mubr.f32.gmra.mrb[0].mxu0 %v217
    %v1382 = vpop.f32.mrb[0].mxu0
    %v1383 = vadd.f32 %v1069, %v1382
    %v1384 = vpop.f32.mrb[0].mxu0
    %1385 = vmatprep.mubr.f32.mxu0 0.0
    %1386 = vmatmul.mubr.f32.gmra.mrb[0].mxu0 %v218
    %v1387 = vpop.f32.mrb[0].mxu0
    %v1388 = vadd.f32 %v1069, %v1387
    %v1389 = vpop.f32.mrb[0].mxu0
    %1390 = vmatprep.mubr.f32.mxu0 0.0
    %1391 = vmatmul.mubr.f32.gmra.mrb[0].mxu0 %v219
    %v1392 = vpop.f32.mrb[0].mxu0
    %v1393 = vadd.f32 %v1069, %v1392
    %v1394 = vpop.f32.mrb[0].mxu0
    %1395 = vmatprep.mubr.f32.mxu0 0.0
    %1396 = vmatmul.mubr.f32.gmra.mrb[0].mxu0 %v220
    %v1397 = vpop.f32.mrb[0].mxu0
    %v1398 = vadd.f32 %v1069, %v1397
    %v1399 = vpop.f32.mrb[0].mxu0
    %1400 = vmatprep.mubr.f32.mxu0 0.0
    %1401 = vmatmul.mubr.f32.gmra.mrb[0].mxu0 %v221
    %v1402 = vpop.f32.mrb[0].mxu0
    %v1403 = vadd.f32 %v1069, %v1402
    %v1404 = vpop.f32.mrb[0].mxu0
    %1405 = vmatprep.mubr.f32.mxu0 0.0
    %1406 = vmatmul.mubr.f32.gmra.mrb[0].mxu0 %v222
    %v1407 = vpop.f32.mrb[0].mxu0
    %v1408 = vadd.f32 %v1069, %v1407
    %v1409 = vpop.f32.mrb[0].mxu0
    %1410 = vmatprep.mubr.f32.mxu0 0.0
    %1411 = vmatmul.mubr.f32.gmra.mrb[0].mxu0 %v223
    %v1412 = vpop.f32.mrb[0].mxu0
    %v1413 = vadd.f32 %v1069, %v1412
    %v1414 = vpop.f32.mrb[0].mxu0
    %1415 = vmatprep.mubr.f32.mxu0 0.0
    %1416 = vmatmul.mubr.f32.gmra.mrb[0].mxu0 %v224
    %v1417 = vpop.f32.mrb[0].mxu0
    %v1418 = vadd.f32 %v1069, %v1417
    %v1419 = vpop.f32.mrb[0].mxu0
    %1420 = vmatprep.mubr.f32.mxu0 0.0
    %1421 = vmatmul.mubr.f32.gmra.mrb[0].mxu0 %v225
    %v1422 = vpop.f32.mrb[0].mxu0
    %v1423 = vadd.f32 %v1069, %v1422
    %v1424 = vpop.f32.mrb[0].mxu0
    %1425 = vmatprep.mubr.f32.mxu0 0.0
    %1426 = vmatmul.mubr.f32.gmra.mrb[0].mxu0 %v226
    %v1427 = vpop.f32.mrb[0].mxu0
    %v1428 = vadd.f32 %v1069, %v1427
    %v1429 = vpop.f32.mrb[0].mxu0
    %1430 = vmatprep.mubr.f32.mxu0 0.0
    %1431 = vmatmul.mubr.f32.gmra.mrb[0].mxu0 %v227
    %v1432 = vpop.f32.mrb[0].mxu0
    %v1433 = vadd.f32 %v1069, %v1432
    %v1434 = vpop.f32.mrb[0].mxu0
    %1435 = vmatprep.mubr.f32.mxu0 0.0
    %1436 = vmatmul.mubr.f32.gmra.mrb[0].mxu0 %v228
    %v1437 = vpop.f32.mrb[0].mxu0
    %v1438 = vadd.f32 %v1069, %v1437
    %v1439 = vpop.f32.mrb[0].mxu0
    %1440 = vmatprep.mubr.f32.mxu0 0.0
    %1441 = vmatmul.mubr.f32.gmra.mrb[0].mxu0 %v229
    %v1442 = vpop.f32.mrb[0].mxu0
    %v1443 = vadd.f32 %v1069, %v1442
    %v1444 = vpop.f32.mrb[0].mxu0
    %1445 = vmatprep.mubr.f32.mxu0 0.0
    %1446 = vmatmul.mubr.f32.gmra.mrb[0].mxu0 %v230
    %v1447 = vpop.f32.mrb[0].mxu0
    %v1448 = vadd.f32 %v1069, %v1447
    %v1449 = vpop.f32.mrb[0].mxu0
    %1450 = vmatprep.mubr.f32.mxu0 0.0
    %1451 = vmatmul.mubr.f32.gmra.mrb[0].mxu0 %v231
    %v1452 = vpop.f32.mrb[0].mxu0
    %v1453 = vadd.f32 %v1069, %v1452
    %v1454 = vpop.f32.mrb[0].mxu0
    %1455 = vdwg.mxu0
    %1456 = vst [vmem:[#allocation11] sm:$0xff] %v322
    %1457 = vst [vmem:[#allocation11 + $0x8] sm:$0xff] %v327
    %1458 = vst [vmem:[#allocation11 + $0x10] sm:$0xff] %v332
    %1459 = vst [vmem:[#allocation11 + $0x18] sm:$0xff] %v337
    %1460 = vst [vmem:[#allocation11 + $0x20] sm:$0xff] %v342
    %1461 = vst [vmem:[#allocation11 + $0x28] sm:$0xff] %v347
    %1462 = vst [vmem:[#allocation11 + $0x30] sm:$0xff] %v352
    %1463 = vst [vmem:[#allocation11 + $0x38] sm:$0xff] %v357
    %1464 = vst [vmem:[#allocation11 + $0x40] sm:$0xff] %v362
    %1465 = vst [vmem:[#allocation11 + $0x48] sm:$0xff] %v367
    %1466 = vst [vmem:[#allocation11 + $0x50] sm:$0xff] %v372
    %1467 = vst [vmem:[#allocation11 + $0x58] sm:$0xff] %v377
    %1468 = vst [vmem:[#allocation11 + $0x60] sm:$0xff] %v382
    %1469 = vst [vmem:[#allocation11 + $0x68] sm:$0xff] %v387
    %1470 = vst [vmem:[#allocation11 + $0x70] sm:$0xff] %v392
    %1471 = vst [vmem:[#allocation11 + $0x78] sm:$0xff] %v397
    %1472 = vst [vmem:[#allocation11 + $0x80] sm:$0xff] %v402
    %1473 = vst [vmem:[#allocation11 + $0x88] sm:$0xff] %v407
    %1474 = vst [vmem:[#allocation11 + $0x90] sm:$0xff] %v412
    %1475 = vst [vmem:[#allocation11 + $0x98] sm:$0xff] %v417
    %1476 = vst [vmem:[#allocation11 + $0xa0] sm:$0xff] %v422
    %1477 = vst [vmem:[#allocation11 + $0xa8] sm:$0xff] %v427
    %1478 = vst [vmem:[#allocation11 + $0xb0] sm:$0xff] %v432
    %1479 = vst [vmem:[#allocation11 + $0xb8] sm:$0xff] %v437
    %1480 = vst [vmem:[#allocation11 + $0xc0] sm:$0xff] %v442
    %1481 = vst [vmem:[#allocation11 + $0xc8] sm:$0xff] %v447
    %1482 = vst [vmem:[#allocation11 + $0xd0] sm:$0xff] %v452
    %1483 = vst [vmem:[#allocation11 + $0xd8] sm:$0xff] %v457
    %1484 = vst [vmem:[#allocation11 + $0xe0] sm:$0xff] %v462
    %1485 = vst [vmem:[#allocation11 + $0xe8] sm:$0xff] %v467
    %1486 = vst [vmem:[#allocation11 + $0xf0] sm:$0xff] %v472
    %1487 = vst [vmem:[#allocation11 + $0xf8] sm:$0xff] %v477
    %1488 = vst [vmem:[#allocation11 + $0x100] sm:$0xff] %v482
    %1489 = vst [vmem:[#allocation11 + $0x108] sm:$0xff] %v487
    %1490 = vst [vmem:[#allocation11 + $0x110] sm:$0xff] %v492
    %1491 = vst [vmem:[#allocation11 + $0x118] sm:$0xff] %v497
    %1492 = vst [vmem:[#allocation11 + $0x120] sm:$0xff] %v502
    %1493 = vst [vmem:[#allocation11 + $0x128] sm:$0xff] %v507
    %1494 = vst [vmem:[#allocation11 + $0x130] sm:$0xff] %v512
    %1495 = vst [vmem:[#allocation11 + $0x138] sm:$0xff] %v517
    %1496 = vst [vmem:[#allocation11 + $0x140] sm:$0xff] %v522
    %1497 = vst [vmem:[#allocation11 + $0x148] sm:$0xff] %v527
    %1498 = vst [vmem:[#allocation11 + $0x150] sm:$0xff] %v532
    %1499 = vst [vmem:[#allocation11 + $0x158] sm:$0xff] %v537
    %1500 = vst [vmem:[#allocation11 + $0x160] sm:$0xff] %v542
    %1501 = vst [vmem:[#allocation11 + $0x168] sm:$0xff] %v547
    %1502 = vst [vmem:[#allocation11 + $0x170] sm:$0xff] %v552
    %1503 = vst [vmem:[#allocation11 + $0x178] sm:$0xff] %v557
    %1504 = vst [vmem:[#allocation11 + $0x180] sm:$0xff] %v562
    %1505 = vst [vmem:[#allocation11 + $0x188] sm:$0xff] %v567
    %1506 = vst [vmem:[#allocation11 + $0x190] sm:$0xff] %v572
    %1507 = vst [vmem:[#allocation11 + $0x198] sm:$0xff] %v577
    %1508 = vst [vmem:[#allocation11 + $0x1a0] sm:$0xff] %v582
    %1509 = vst [vmem:[#allocation11 + $0x1a8] sm:$0xff] %v587
    %1510 = vst [vmem:[#allocation11 + $0x1b0] sm:$0xff] %v592
    %1511 = vst [vmem:[#allocation11 + $0x1b8] sm:$0xff] %v597
    %1512 = vst [vmem:[#allocation11 + $0x1c0] sm:$0xff] %v602
    %1513 = vst [vmem:[#allocation11 + $0x1c8] sm:$0xff] %v607
    %1514 = vst [vmem:[#allocation11 + $0x1d0] sm:$0xff] %v612
    %1515 = vst [vmem:[#allocation11 + $0x1d8] sm:$0xff] %v617
    %1516 = vst [vmem:[#allocation11 + $0x1e0] sm:$0xff] %v622
    %1517 = vst [vmem:[#allocation11 + $0x1e8] sm:$0xff] %v627
    %1518 = vst [vmem:[#allocation11 + $0x1f0] sm:$0xff] %v632
    %1519 = vst [vmem:[#allocation11 + $0x1f8] sm:$0xff] %v637
    %1520 = vst [vmem:[#allocation12] sm:$0xff] %v730
    %1521 = vst [vmem:[#allocation12 + $0x8] sm:$0xff] %v735
    %1522 = vst [vmem:[#allocation12 + $0x10] sm:$0xff] %v740
    %1523 = vst [vmem:[#allocation12 + $0x18] sm:$0xff] %v745
    %1524 = vst [vmem:[#allocation12 + $0x20] sm:$0xff] %v750
    %1525 = vst [vmem:[#allocation12 + $0x28] sm:$0xff] %v755
    %1526 = vst [vmem:[#allocation12 + $0x30] sm:$0xff] %v760
    %1527 = vst [vmem:[#allocation12 + $0x38] sm:$0xff] %v765
    %1528 = vst [vmem:[#allocation12 + $0x40] sm:$0xff] %v770
    %1529 = vst [vmem:[#allocation12 + $0x48] sm:$0xff] %v775
    %1530 = vst [vmem:[#allocation12 + $0x50] sm:$0xff] %v780
    %1531 = vst [vmem:[#allocation12 + $0x58] sm:$0xff] %v785
    %1532 = vst [vmem:[#allocation12 + $0x60] sm:$0xff] %v790
    %1533 = vst [vmem:[#allocation12 + $0x68] sm:$0xff] %v795
    %1534 = vst [vmem:[#allocation12 + $0x70] sm:$0xff] %v800
    %1535 = vst [vmem:[#allocation12 + $0x78] sm:$0xff] %v805
    %1536 = vst [vmem:[#allocation12 + $0x80] sm:$0xff] %v810
    %1537 = vst [vmem:[#allocation12 + $0x88] sm:$0xff] %v815
    %1538 = vst [vmem:[#allocation12 + $0x90] sm:$0xff] %v820
    %1539 = vst [vmem:[#allocation12 + $0x98] sm:$0xff] %v825
    %1540 = vst [vmem:[#allocation12 + $0xa0] sm:$0xff] %v830
    %1541 = vst [vmem:[#allocation12 + $0xa8] sm:$0xff] %v835
    %1542 = vst [vmem:[#allocation12 + $0xb0] sm:$0xff] %v840
    %1543 = vst [vmem:[#allocation12 + $0xb8] sm:$0xff] %v845
    %1544 = vst [vmem:[#allocation12 + $0xc0] sm:$0xff] %v850
    %1545 = vst [vmem:[#allocation12 + $0xc8] sm:$0xff] %v855
    %1546 = vst [vmem:[#allocation12 + $0xd0] sm:$0xff] %v860
    %1547 = vst [vmem:[#allocation12 + $0xd8] sm:$0xff] %v865
    %1548 = vst [vmem:[#allocation12 + $0xe0] sm:$0xff] %v870
    %1549 = vst [vmem:[#allocation12 + $0xe8] sm:$0xff] %v875
    %1550 = vst [vmem:[#allocation12 + $0xf0] sm:$0xff] %v880
    %1551 = vst [vmem:[#allocation12 + $0xf8] sm:$0xff] %v885
    %1552 = vst [vmem:[#allocation12 + $0x100] sm:$0xff] %v890
    %1553 = vst [vmem:[#allocation12 + $0x108] sm:$0xff] %v895
    %1554 = vst [vmem:[#allocation12 + $0x110] sm:$0xff] %v900
    %1555 = vst [vmem:[#allocation12 + $0x118] sm:$0xff] %v905
    %1556 = vst [vmem:[#allocation12 + $0x120] sm:$0xff] %v910
    %1557 = vst [vmem:[#allocation12 + $0x128] sm:$0xff] %v915
    %1558 = vst [vmem:[#allocation12 + $0x130] sm:$0xff] %v920
    %1559 = vst [vmem:[#allocation12 + $0x138] sm:$0xff] %v925
    %1560 = vst [vmem:[#allocation12 + $0x140] sm:$0xff] %v930
    %1561 = vst [vmem:[#allocation12 + $0x148] sm:$0xff] %v935
    %1562 = vst [vmem:[#allocation12 + $0x150] sm:$0xff] %v940
    %1563 = vst [vmem:[#allocation12 + $0x158] sm:$0xff] %v945
    %1564 = vst [vmem:[#allocation12 + $0x160] sm:$0xff] %v950
    %1565 = vst [vmem:[#allocation12 + $0x168] sm:$0xff] %v955
    %1566 = vst [vmem:[#allocation12 + $0x170] sm:$0xff] %v960
    %1567 = vst [vmem:[#allocation12 + $0x178] sm:$0xff] %v965
    %1568 = vst [vmem:[#allocation12 + $0x180] sm:$0xff] %v970
    %1569 = vst [vmem:[#allocation12 + $0x188] sm:$0xff] %v975
    %1570 = vst [vmem:[#allocation12 + $0x190] sm:$0xff] %v980
    %1571 = vst [vmem:[#allocation12 + $0x198] sm:$0xff] %v985
    %1572 = vst [vmem:[#allocation12 + $0x1a0] sm:$0xff] %v990
    %1573 = vst [vmem:[#allocation12 + $0x1a8] sm:$0xff] %v995
    %1574 = vst [vmem:[#allocation12 + $0x1b0] sm:$0xff] %v1000
    %1575 = vst [vmem:[#allocation12 + $0x1b8] sm:$0xff] %v1005
    %1576 = vst [vmem:[#allocation12 + $0x1c0] sm:$0xff] %v1010
    %1577 = vst [vmem:[#allocation12 + $0x1c8] sm:$0xff] %v1015
    %1578 = vst [vmem:[#allocation12 + $0x1d0] sm:$0xff] %v1020
    %1579 = vst [vmem:[#allocation12 + $0x1d8] sm:$0xff] %v1025
    %1580 = vst [vmem:[#allocation12 + $0x1e0] sm:$0xff] %v1030
    %1581 = vst [vmem:[#allocation12 + $0x1e8] sm:$0xff] %v1035
    %1582 = vst [vmem:[#allocation12 + $0x1f0] sm:$0xff] %v1040
    %1583 = vst [vmem:[#allocation12 + $0x1f8] sm:$0xff] %v1045
    %1584 = vst [vmem:[#allocation14] sm:$0xff] %v1138
    %1585 = vst [vmem:[#allocation14 + $0x8] sm:$0xff] %v1143
    %1586 = vst [vmem:[#allocation14 + $0x10] sm:$0xff] %v1148
    %1587 = vst [vmem:[#allocation14 + $0x18] sm:$0xff] %v1153
    %1588 = vst [vmem:[#allocation14 + $0x20] sm:$0xff] %v1158
    %1589 = vst [vmem:[#allocation14 + $0x28] sm:$0xff] %v1163
    %1590 = vst [vmem:[#allocation14 + $0x30] sm:$0xff] %v1168
    %1591 = vst [vmem:[#allocation14 + $0x38] sm:$0xff] %v1173
    %1592 = vst [vmem:[#allocation14 + $0x40] sm:$0xff] %v1178
    %1593 = vst [vmem:[#allocation14 + $0x48] sm:$0xff] %v1183
    %1594 = vst [vmem:[#allocation14 + $0x50] sm:$0xff] %v1188
    %1595 = vst [vmem:[#allocation14 + $0x58] sm:$0xff] %v1193
    %1596 = vst [vmem:[#allocation14 + $0x60] sm:$0xff] %v1198
    %1597 = vst [vmem:[#allocation14 + $0x68] sm:$0xff] %v1203
    %1598 = vst [vmem:[#allocation14 + $0x70] sm:$0xff] %v1208
    %1599 = vst [vmem:[#allocation14 + $0x78] sm:$0xff] %v1213
    %1600 = vst [vmem:[#allocation14 + $0x80] sm:$0xff] %v1218
    %1601 = vst [vmem:[#allocation14 + $0x88] sm:$0xff] %v1223
    %1602 = vst [vmem:[#allocation14 + $0x90] sm:$0xff] %v1228
    %1603 = vst [vmem:[#allocation14 + $0x98] sm:$0xff] %v1233
    %1604 = vst [vmem:[#allocation14 + $0xa0] sm:$0xff] %v1238
    %1605 = vst [vmem:[#allocation14 + $0xa8] sm:$0xff] %v1243
    %1606 = vst [vmem:[#allocation14 + $0xb0] sm:$0xff] %v1248
    %1607 = vst [vmem:[#allocation14 + $0xb8] sm:$0xff] %v1253
    %1608 = vst [vmem:[#allocation14 + $0xc0] sm:$0xff] %v1258
    %1609 = vst [vmem:[#allocation14 + $0xc8] sm:$0xff] %v1263
    %1610 = vst [vmem:[#allocation14 + $0xd0] sm:$0xff] %v1268
    %1611 = vst [vmem:[#allocation14 + $0xd8] sm:$0xff] %v1273
    %1612 = vst [vmem:[#allocation14 + $0xe0] sm:$0xff] %v1278
    %1613 = vst [vmem:[#allocation14 + $0xe8] sm:$0xff] %v1283
    %1614 = vst [vmem:[#allocation14 + $0xf0] sm:$0xff] %v1288
    %1615 = vst [vmem:[#allocation14 + $0xf8] sm:$0xff] %v1293
    %1616 = vst [vmem:[#allocation14 + $0x100] sm:$0xff] %v1298
    %1617 = vst [vmem:[#allocation14 + $0x108] sm:$0xff] %v1303
    %1618 = vst [vmem:[#allocation14 + $0x110] sm:$0xff] %v1308
    %1619 = vst [vmem:[#allocation14 + $0x118] sm:$0xff] %v1313
    %1620 = vst [vmem:[#allocation14 + $0x120] sm:$0xff] %v1318
    %1621 = vst [vmem:[#allocation14 + $0x128] sm:$0xff] %v1323
    %1622 = vst [vmem:[#allocation14 + $0x130] sm:$0xff] %v1328
    %1623 = vst [vmem:[#allocation14 + $0x138] sm:$0xff] %v1333
    %1624 = vst [vmem:[#allocation14 + $0x140] sm:$0xff] %v1338
    %1625 = vst [vmem:[#allocation14 + $0x148] sm:$0xff] %v1343
    %1626 = vst [vmem:[#allocation14 + $0x150] sm:$0xff] %v1348
    %1627 = vst [vmem:[#allocation14 + $0x158] sm:$0xff] %v1353
    %1628 = vst [vmem:[#allocation14 + $0x160] sm:$0xff] %v1358
    %1629 = vst [vmem:[#allocation14 + $0x168] sm:$0xff] %v1363
    %1630 = vst [vmem:[#allocation14 + $0x170] sm:$0xff] %v1368
    %1631 = vst [vmem:[#allocation14 + $0x178] sm:$0xff] %v1373
    %1632 = vst [vmem:[#allocation14 + $0x180] sm:$0xff] %v1378
    %1633 = vst [vmem:[#allocation14 + $0x188] sm:$0xff] %v1383
    %1634 = vst [vmem:[#allocation14 + $0x190] sm:$0xff] %v1388
    %1635 = vst [vmem:[#allocation14 + $0x198] sm:$0xff] %v1393
    %1636 = vst [vmem:[#allocation14 + $0x1a0] sm:$0xff] %v1398
    %1637 = vst [vmem:[#allocation14 + $0x1a8] sm:$0xff] %v1403
    %1638 = vst [vmem:[#allocation14 + $0x1b0] sm:$0xff] %v1408
    %1639 = vst [vmem:[#allocation14 + $0x1b8] sm:$0xff] %v1413
    %1640 = vst [vmem:[#allocation14 + $0x1c0] sm:$0xff] %v1418
    %1641 = vst [vmem:[#allocation14 + $0x1c8] sm:$0xff] %v1423
    %1642 = vst [vmem:[#allocation14 + $0x1d0] sm:$0xff] %v1428
    %1643 = vst [vmem:[#allocation14 + $0x1d8] sm:$0xff] %v1433
    %1644 = vst [vmem:[#allocation14 + $0x1e0] sm:$0xff] %v1438
    %1645 = vst [vmem:[#allocation14 + $0x1e8] sm:$0xff] %v1443
    %1646 = vst [vmem:[#allocation14 + $0x1f0] sm:$0xff] %v1448
    %1647 = vst [vmem:[#allocation14 + $0x1f8] sm:$0xff] %v1453
    %1648 = vmatprep.subr.mxu0 0.0
    %1649 = vmatpush1.xpose.msra.mxu0 %v730
    %1650 = vmatprep.subr.mxu0 0.0
    %1651 = vmatpush1.xpose.msra.mxu0 %v735
    %1652 = vmatprep.subr.mxu0 0.0
    %1653 = vmatpush1.xpose.msra.mxu0 %v740
    %1654 = vmatprep.subr.mxu0 0.0
    %1655 = vmatpush1.xpose.msra.mxu0 %v745
    %1656 = vmatprep.subr.mxu0 0.0
    %1657 = vmatpush1.xpose.msra.mxu0 %v750
    %1658 = vmatprep.subr.mxu0 0.0
    %1659 = vmatpush1.xpose.msra.mxu0 %v755
    %1660 = vmatprep.subr.mxu0 0.0
    %1661 = vmatpush1.xpose.msra.mxu0 %v760
    %1662 = vmatprep.subr.mxu0 0.0
    %1663 = vmatpush1.xpose.msra.mxu0 %v765
    %1664 = vmatprep.subr.mxu0 0.0
    %1665 = vmatpush1.xpose.msra.mxu0 %v770
    %1666 = vmatprep.subr.mxu0 0.0
    %1667 = vmatpush1.xpose.msra.mxu0 %v775
    %1668 = vmatprep.subr.mxu0 0.0
    %1669 = vmatpush1.xpose.msra.mxu0 %v780
    %1670 = vmatprep.subr.mxu0 0.0
    %1671 = vmatpush1.xpose.msra.mxu0 %v785
    %1672 = vmatprep.subr.mxu0 0.0
    %1673 = vmatpush1.xpose.msra.mxu0 %v790
    %1674 = vmatprep.subr.mxu0 0.0
    %1675 = vmatpush1.xpose.msra.mxu0 %v795
    %1676 = vmatprep.subr.mxu0 0.0
    %1677 = vmatpush1.xpose.msra.mxu0 %v800
    %1678 = vmatprep.subr.mxu0 0.0
    %1679 = vmatpush1.xpose.msra.mxu0 %v805
    %1680 = vmatprep.subr.mxu0 0.0
    %1681 = vmatpush1.xpose.msra.mxu0 %v810
    %1682 = vmatprep.subr.mxu0 0.0
    %1683 = vmatpush1.xpose.msra.mxu0 %v815
    %1684 = vmatprep.subr.mxu0 0.0
    %1685 = vmatpush1.xpose.msra.mxu0 %v820
    %1686 = vmatprep.subr.mxu0 0.0
    %1687 = vmatpush1.xpose.msra.mxu0 %v825
    %1688 = vmatprep.subr.mxu0 0.0
    %1689 = vmatpush1.xpose.msra.mxu0 %v830
    %1690 = vmatprep.subr.mxu0 0.0
    %1691 = vmatpush1.xpose.msra.mxu0 %v835
    %1692 = vmatprep.subr.mxu0 0.0
    %1693 = vmatpush1.xpose.msra.mxu0 %v840
    %1694 = vmatprep.subr.mxu0 0.0
    %1695 = vmatpush1.xpose.msra.mxu0 %v845
    %1696 = vmatprep.subr.mxu0 0.0
    %1697 = vmatpush1.xpose.msra.mxu0 %v850
    %1698 = vmatprep.subr.mxu0 0.0
    %1699 = vmatpush1.xpose.msra.mxu0 %v855
    %1700 = vmatprep.subr.mxu0 0.0
    %1701 = vmatpush1.xpose.msra.mxu0 %v860
    %1702 = vmatprep.subr.mxu0 0.0
    %1703 = vmatpush1.xpose.msra.mxu0 %v865
    %1704 = vmatprep.subr.mxu0 0.0
    %1705 = vmatpush1.xpose.msra.mxu0 %v870
    %1706 = vmatprep.subr.mxu0 0.0
    %1707 = vmatpush1.xpose.msra.mxu0 %v875
    %1708 = vmatprep.subr.mxu0 0.0
    %1709 = vmatpush1.xpose.msra.mxu0 %v880
    %1710 = vmatprep.subr.mxu0 0.0
    %1711 = vmatpush1.xpose.msra.mxu0 %v885
    %1712 = vmatprep.mubr.f32.mxu0 0.0
    %1713 = vmatmul.mubr.f32.gmra.mrb[0].mxu0 %v322
    %v1714 = vpop.f32.mrb[0].mxu0
    %v1715 = vadd.f32 0.0, %v1714
    %v1716 = vpop.f32.mrb[0].mxu0
    %v1717 = vadd.f32 0.0, %v1716
    %1718 = vmatprep.mubr.f32.mxu0 0.0
    %1719 = vmatmul.mubr.f32.gmra.mrb[0].mxu0 %v327
    %v1720 = vpop.f32.mrb[0].mxu0
    %v1721 = vadd.f32 0.0, %v1720
    %v1722 = vpop.f32.mrb[0].mxu0
    %v1723 = vadd.f32 0.0, %v1722
    %1724 = vmatprep.mubr.f32.mxu0 0.0
    %1725 = vmatmul.mubr.f32.gmra.mrb[0].mxu0 %v332
    %v1726 = vpop.f32.mrb[0].mxu0
    %v1727 = vadd.f32 0.0, %v1726
    %v1728 = vpop.f32.mrb[0].mxu0
    %v1729 = vadd.f32 0.0, %v1728
    %1730 = vmatprep.mubr.f32.mxu0 0.0
    %1731 = vmatmul.mubr.f32.gmra.mrb[0].mxu0 %v337
    %v1732 = vpop.f32.mrb[0].mxu0
    %v1733 = vadd.f32 0.0, %v1732
    %v1734 = vpop.f32.mrb[0].mxu0
    %v1735 = vadd.f32 0.0, %v1734
    %1736 = vmatprep.mubr.f32.mxu0 0.0
    %1737 = vmatmul.mubr.f32.gmra.mrb[0].mxu0 %v342
    %v1738 = vpop.f32.mrb[0].mxu0
    %v1739 = vadd.f32 0.0, %v1738
    %v1740 = vpop.f32.mrb[0].mxu0
    %v1741 = vadd.f32 0.0, %v1740
    %1742 = vmatprep.mubr.f32.mxu0 0.0
    %1743 = vmatmul.mubr.f32.gmra.mrb[0].mxu0 %v347
    %v1744 = vpop.f32.mrb[0].mxu0
    %v1745 = vadd.f32 0.0, %v1744
    %v1746 = vpop.f32.mrb[0].mxu0
    %v1747 = vadd.f32 0.0, %v1746
    %1748 = vmatprep.mubr.f32.mxu0 0.0
    %1749 = vmatmul.mubr.f32.gmra.mrb[0].mxu0 %v352
    %v1750 = vpop.f32.mrb[0].mxu0
    %v1751 = vadd.f32 0.0, %v1750
    %v1752 = vpop.f32.mrb[0].mxu0
    %v1753 = vadd.f32 0.0, %v1752
    %1754 = vmatprep.mubr.f32.mxu0 0.0
    %1755 = vmatmul.mubr.f32.gmra.mrb[0].mxu0 %v357
    %v1756 = vpop.f32.mrb[0].mxu0
    %v1757 = vadd.f32 0.0, %v1756
    %v1758 = vpop.f32.mrb[0].mxu0
    %v1759 = vadd.f32 0.0, %v1758
    %1760 = vmatprep.mubr.f32.mxu0 0.0
    %1761 = vmatmul.mubr.f32.gmra.mrb[0].mxu0 %v362
    %v1762 = vpop.f32.mrb[0].mxu0
    %v1763 = vadd.f32 0.0, %v1762
    %v1764 = vpop.f32.mrb[0].mxu0
    %v1765 = vadd.f32 0.0, %v1764
    %1766 = vmatprep.mubr.f32.mxu0 0.0
    %1767 = vmatmul.mubr.f32.gmra.mrb[0].mxu0 %v367
    %v1768 = vpop.f32.mrb[0].mxu0
    %v1769 = vadd.f32 0.0, %v1768
    %v1770 = vpop.f32.mrb[0].mxu0
    %v1771 = vadd.f32 0.0, %v1770
    %1772 = vmatprep.mubr.f32.mxu0 0.0
    %1773 = vmatmul.mubr.f32.gmra.mrb[0].mxu0 %v372
    %v1774 = vpop.f32.mrb[0].mxu0
    %v1775 = vadd.f32 0.0, %v1774
    %v1776 = vpop.f32.mrb[0].mxu0
    %v1777 = vadd.f32 0.0, %v1776
    %1778 = vmatprep.mubr.f32.mxu0 0.0
    %1779 = vmatmul.mubr.f32.gmra.mrb[0].mxu0 %v377
    %v1780 = vpop.f32.mrb[0].mxu0
    %v1781 = vadd.f32 0.0, %v1780
    %v1782 = vpop.f32.mrb[0].mxu0
    %v1783 = vadd.f32 0.0, %v1782
    %1784 = vmatprep.mubr.f32.mxu0 0.0
    %1785 = vmatmul.mubr.f32.gmra.mrb[0].mxu0 %v382
    %v1786 = vpop.f32.mrb[0].mxu0
    %v1787 = vadd.f32 0.0, %v1786
    %v1788 = vpop.f32.mrb[0].mxu0
    %v1789 = vadd.f32 0.0, %v1788
    %1790 = vmatprep.mubr.f32.mxu0 0.0
    %1791 = vmatmul.mubr.f32.gmra.mrb[0].mxu0 %v387
    %v1792 = vpop.f32.mrb[0].mxu0
    %v1793 = vadd.f32 0.0, %v1792
    %v1794 = vpop.f32.mrb[0].mxu0
    %v1795 = vadd.f32 0.0, %v1794
    %1796 = vmatprep.mubr.f32.mxu0 0.0
    %1797 = vmatmul.mubr.f32.gmra.mrb[0].mxu0 %v392
    %v1798 = vpop.f32.mrb[0].mxu0
    %v1799 = vadd.f32 0.0, %v1798
    %v1800 = vpop.f32.mrb[0].mxu0
    %v1801 = vadd.f32 0.0, %v1800
    %1802 = vmatprep.mubr.f32.mxu0 0.0
    %1803 = vmatmul.mubr.f32.gmra.mrb[0].mxu0 %v397
    %v1804 = vpop.f32.mrb[0].mxu0
    %v1805 = vadd.f32 0.0, %v1804
    %v1806 = vpop.f32.mrb[0].mxu0
    %v1807 = vadd.f32 0.0, %v1806
    %1808 = vmatprep.mubr.f32.mxu0 0.0
    %1809 = vmatmul.mubr.f32.gmra.mrb[0].mxu0 %v402
    %v1810 = vpop.f32.mrb[0].mxu0
    %v1811 = vadd.f32 0.0, %v1810
    %v1812 = vpop.f32.mrb[0].mxu0
    %v1813 = vadd.f32 0.0, %v1812
    %1814 = vmatprep.mubr.f32.mxu0 0.0
    %1815 = vmatmul.mubr.f32.gmra.mrb[0].mxu0 %v407
    %v1816 = vpop.f32.mrb[0].mxu0
    %v1817 = vadd.f32 0.0, %v1816
    %v1818 = vpop.f32.mrb[0].mxu0
    %v1819 = vadd.f32 0.0, %v1818
    %1820 = vmatprep.mubr.f32.mxu0 0.0
    %1821 = vmatmul.mubr.f32.gmra.mrb[0].mxu0 %v412
    %v1822 = vpop.f32.mrb[0].mxu0
    %v1823 = vadd.f32 0.0, %v1822
    %v1824 = vpop.f32.mrb[0].mxu0
    %v1825 = vadd.f32 0.0, %v1824
    %1826 = vmatprep.mubr.f32.mxu0 0.0
    %1827 = vmatmul.mubr.f32.gmra.mrb[0].mxu0 %v417
    %v1828 = vpop.f32.mrb[0].mxu0
    %v1829 = vadd.f32 0.0, %v1828
    %v1830 = vpop.f32.mrb[0].mxu0
    %v1831 = vadd.f32 0.0, %v1830
    %1832 = vmatprep.mubr.f32.mxu0 0.0
    %1833 = vmatmul.mubr.f32.gmra.mrb[0].mxu0 %v422
    %v1834 = vpop.f32.mrb[0].mxu0
    %v1835 = vadd.f32 0.0, %v1834
    %v1836 = vpop.f32.mrb[0].mxu0
    %v1837 = vadd.f32 0.0, %v1836
    %1838 = vmatprep.mubr.f32.mxu0 0.0
    %1839 = vmatmul.mubr.f32.gmra.mrb[0].mxu0 %v427
    %v1840 = vpop.f32.mrb[0].mxu0
    %v1841 = vadd.f32 0.0, %v1840
    %v1842 = vpop.f32.mrb[0].mxu0
    %v1843 = vadd.f32 0.0, %v1842
    %1844 = vmatprep.mubr.f32.mxu0 0.0
    %1845 = vmatmul.mubr.f32.gmra.mrb[0].mxu0 %v432
    %v1846 = vpop.f32.mrb[0].mxu0
    %v1847 = vadd.f32 0.0, %v1846
    %v1848 = vpop.f32.mrb[0].mxu0
    %v1849 = vadd.f32 0.0, %v1848
    %1850 = vmatprep.mubr.f32.mxu0 0.0
    %1851 = vmatmul.mubr.f32.gmra.mrb[0].mxu0 %v437
    %v1852 = vpop.f32.mrb[0].mxu0
    %v1853 = vadd.f32 0.0, %v1852
    %v1854 = vpop.f32.mrb[0].mxu0
    %v1855 = vadd.f32 0.0, %v1854
    %1856 = vmatprep.mubr.f32.mxu0 0.0
    %1857 = vmatmul.mubr.f32.gmra.mrb[0].mxu0 %v442
    %v1858 = vpop.f32.mrb[0].mxu0
    %v1859 = vadd.f32 0.0, %v1858
    %v1860 = vpop.f32.mrb[0].mxu0
    %v1861 = vadd.f32 0.0, %v1860
    %1862 = vmatprep.mubr.f32.mxu0 0.0
    %1863 = vmatmul.mubr.f32.gmra.mrb[0].mxu0 %v447
    %v1864 = vpop.f32.mrb[0].mxu0
    %v1865 = vadd.f32 0.0, %v1864
    %v1866 = vpop.f32.mrb[0].mxu0
    %v1867 = vadd.f32 0.0, %v1866
    %1868 = vmatprep.mubr.f32.mxu0 0.0
    %1869 = vmatmul.mubr.f32.gmra.mrb[0].mxu0 %v452
    %v1870 = vpop.f32.mrb[0].mxu0
    %v1871 = vadd.f32 0.0, %v1870
    %v1872 = vpop.f32.mrb[0].mxu0
    %v1873 = vadd.f32 0.0, %v1872
    %1874 = vmatprep.mubr.f32.mxu0 0.0
    %1875 = vmatmul.mubr.f32.gmra.mrb[0].mxu0 %v457
    %v1876 = vpop.f32.mrb[0].mxu0
    %v1877 = vadd.f32 0.0, %v1876
    %v1878 = vpop.f32.mrb[0].mxu0
    %v1879 = vadd.f32 0.0, %v1878
    %1880 = vmatprep.mubr.f32.mxu0 0.0
    %1881 = vmatmul.mubr.f32.gmra.mrb[0].mxu0 %v462
    %v1882 = vpop.f32.mrb[0].mxu0
    %v1883 = vadd.f32 0.0, %v1882
    %v1884 = vpop.f32.mrb[0].mxu0
    %v1885 = vadd.f32 0.0, %v1884
    %1886 = vmatprep.mubr.f32.mxu0 0.0
    %1887 = vmatmul.mubr.f32.gmra.mrb[0].mxu0 %v467
    %v1888 = vpop.f32.mrb[0].mxu0
    %v1889 = vadd.f32 0.0, %v1888
    %v1890 = vpop.f32.mrb[0].mxu0
    %v1891 = vadd.f32 0.0, %v1890
    %1892 = vmatprep.mubr.f32.mxu0 0.0
    %1893 = vmatmul.mubr.f32.gmra.mrb[0].mxu0 %v472
    %v1894 = vpop.f32.mrb[0].mxu0
    %v1895 = vadd.f32 0.0, %v1894
    %v1896 = vpop.f32.mrb[0].mxu0
    %v1897 = vadd.f32 0.0, %v1896
    %1898 = vmatprep.mubr.f32.mxu0 0.0
    %1899 = vmatmul.mubr.f32.gmra.mrb[0].mxu0 %v477
    %v1900 = vpop.f32.mrb[0].mxu0
    %v1901 = vadd.f32 0.0, %v1900
    %v1902 = vpop.f32.mrb[0].mxu0
    %v1903 = vadd.f32 0.0, %v1902
    %1904 = vdwg.mxu0
    %1905 = vmatprep.subr.mxu0 0.0
    %1906 = vmatpush1.xpose.msra.mxu0 %v890
    %1907 = vmatprep.subr.mxu0 0.0
    %1908 = vmatpush1.xpose.msra.mxu0 %v895
    %1909 = vmatprep.subr.mxu0 0.0
    %1910 = vmatpush1.xpose.msra.mxu0 %v900
    %1911 = vmatprep.subr.mxu0 0.0
    %1912 = vmatpush1.xpose.msra.mxu0 %v905
    %1913 = vmatprep.subr.mxu0 0.0
    %1914 = vmatpush1.xpose.msra.mxu0 %v910
    %1915 = vmatprep.subr.mxu0 0.0
    %1916 = vmatpush1.xpose.msra.mxu0 %v915
    %1917 = vmatprep.subr.mxu0 0.0
    %1918 = vmatpush1.xpose.msra.mxu0 %v920
    %1919 = vmatprep.subr.mxu0 0.0
    %1920 = vmatpush1.xpose.msra.mxu0 %v925
    %1921 = vmatprep.subr.mxu0 0.0
    %1922 = vmatpush1.xpose.msra.mxu0 %v930
    %1923 = vmatprep.subr.mxu0 0.0
    %1924 = vmatpush1.xpose.msra.mxu0 %v935
    %1925 = vmatprep.subr.mxu0 0.0
    %1926 = vmatpush1.xpose.msra.mxu0 %v940
    %1927 = vmatprep.subr.mxu0 0.0
    %1928 = vmatpush1.xpose.msra.mxu0 %v945
    %1929 = vmatprep.subr.mxu0 0.0
    %1930 = vmatpush1.xpose.msra.mxu0 %v950
    %1931 = vmatprep.subr.mxu0 0.0
    %1932 = vmatpush1.xpose.msra.mxu0 %v955
    %1933 = vmatprep.subr.mxu0 0.0
    %1934 = vmatpush1.xpose.msra.mxu0 %v960
    %1935 = vmatprep.subr.mxu0 0.0
    %1936 = vmatpush1.xpose.msra.mxu0 %v965
    %1937 = vmatprep.subr.mxu0 0.0
    %1938 = vmatpush1.xpose.msra.mxu0 %v970
    %1939 = vmatprep.subr.mxu0 0.0
    %1940 = vmatpush1.xpose.msra.mxu0 %v975
    %1941 = vmatprep.subr.mxu0 0.0
    %1942 = vmatpush1.xpose.msra.mxu0 %v980
    %1943 = vmatprep.subr.mxu0 0.0
    %1944 = vmatpush1.xpose.msra.mxu0 %v985
    %1945 = vmatprep.subr.mxu0 0.0
    %1946 = vmatpush1.xpose.msra.mxu0 %v990
    %1947 = vmatprep.subr.mxu0 0.0
    %1948 = vmatpush1.xpose.msra.mxu0 %v995
    %1949 = vmatprep.subr.mxu0 0.0
    %1950 = vmatpush1.xpose.msra.mxu0 %v1000
    %1951 = vmatprep.subr.mxu0 0.0
    %1952 = vmatpush1.xpose.msra.mxu0 %v1005
    %1953 = vmatprep.subr.mxu0 0.0
    %1954 = vmatpush1.xpose.msra.mxu0 %v1010
    %1955 = vmatprep.subr.mxu0 0.0
    %1956 = vmatpush1.xpose.msra.mxu0 %v1015
    %1957 = vmatprep.subr.mxu0 0.0
    %1958 = vmatpush1.xpose.msra.mxu0 %v1020
    %1959 = vmatprep.subr.mxu0 0.0
    %1960 = vmatpush1.xpose.msra.mxu0 %v1025
    %1961 = vmatprep.subr.mxu0 0.0
    %1962 = vmatpush1.xpose.msra.mxu0 %v1030
    %1963 = vmatprep.subr.mxu0 0.0
    %1964 = vmatpush1.xpose.msra.mxu0 %v1035
    %1965 = vmatprep.subr.mxu0 0.0
    %1966 = vmatpush1.xpose.msra.mxu0 %v1040
    %1967 = vmatprep.subr.mxu0 0.0
    %1968 = vmatpush1.xpose.msra.mxu0 %v1045
    %1969 = vmatprep.mubr.f32.mxu0 0.0
    %1970 = vmatmul.mubr.f32.gmra.mrb[0].mxu0 %v482
    %v1971 = vpop.f32.mrb[0].mxu0
    %v1972 = vadd.f32 0.0, %v1971
    %v1973 = vpop.f32.mrb[0].mxu0
    %v1974 = vadd.f32 0.0, %v1973
    %1975 = vmatprep.mubr.f32.mxu0 0.0
    %1976 = vmatmul.mubr.f32.gmra.mrb[0].mxu0 %v487
    %v1977 = vpop.f32.mrb[0].mxu0
    %v1978 = vadd.f32 0.0, %v1977
    %v1979 = vpop.f32.mrb[0].mxu0
    %v1980 = vadd.f32 0.0, %v1979
    %1981 = vmatprep.mubr.f32.mxu0 0.0
    %1982 = vmatmul.mubr.f32.gmra.mrb[0].mxu0 %v492
    %v1983 = vpop.f32.mrb[0].mxu0
    %v1984 = vadd.f32 0.0, %v1983
    %v1985 = vpop.f32.mrb[0].mxu0
    %v1986 = vadd.f32 0.0, %v1985
    %1987 = vmatprep.mubr.f32.mxu0 0.0
    %1988 = vmatmul.mubr.f32.gmra.mrb[0].mxu0 %v497
    %v1989 = vpop.f32.mrb[0].mxu0
    %v1990 = vadd.f32 0.0, %v1989
    %v1991 = vpop.f32.mrb[0].mxu0
    %v1992 = vadd.f32 0.0, %v1991
    %1993 = vmatprep.mubr.f32.mxu0 0.0
    %1994 = vmatmul.mubr.f32.gmra.mrb[0].mxu0 %v502
    %v1995 = vpop.f32.mrb[0].mxu0
    %v1996 = vadd.f32 0.0, %v1995
    %v1997 = vpop.f32.mrb[0].mxu0
    %v1998 = vadd.f32 0.0, %v1997
    %1999 = vmatprep.mubr.f32.mxu0 0.0
    %2000 = vmatmul.mubr.f32.gmra.mrb[0].mxu0 %v507
    %v2001 = vpop.f32.mrb[0].mxu0
    %v2002 = vadd.f32 0.0, %v2001
    %v2003 = vpop.f32.mrb[0].mxu0
    %v2004 = vadd.f32 0.0, %v2003
    %2005 = vmatprep.mubr.f32.mxu0 0.0
    %2006 = vmatmul.mubr.f32.gmra.mrb[0].mxu0 %v512
    %v2007 = vpop.f32.mrb[0].mxu0
    %v2008 = vadd.f32 0.0, %v2007
    %v2009 = vpop.f32.mrb[0].mxu0
    %v2010 = vadd.f32 0.0, %v2009
    %2011 = vmatprep.mubr.f32.mxu0 0.0
    %2012 = vmatmul.mubr.f32.gmra.mrb[0].mxu0 %v517
    %v2013 = vpop.f32.mrb[0].mxu0
    %v2014 = vadd.f32 0.0, %v2013
    %v2015 = vpop.f32.mrb[0].mxu0
    %v2016 = vadd.f32 0.0, %v2015
    %2017 = vmatprep.mubr.f32.mxu0 0.0
    %2018 = vmatmul.mubr.f32.gmra.mrb[0].mxu0 %v522
    %v2019 = vpop.f32.mrb[0].mxu0
    %v2020 = vadd.f32 0.0, %v2019
    %v2021 = vpop.f32.mrb[0].mxu0
    %v2022 = vadd.f32 0.0, %v2021
    %2023 = vmatprep.mubr.f32.mxu0 0.0
    %2024 = vmatmul.mubr.f32.gmra.mrb[0].mxu0 %v527
    %v2025 = vpop.f32.mrb[0].mxu0
    %v2026 = vadd.f32 0.0, %v2025
    %v2027 = vpop.f32.mrb[0].mxu0
    %v2028 = vadd.f32 0.0, %v2027
    %2029 = vmatprep.mubr.f32.mxu0 0.0
    %2030 = vmatmul.mubr.f32.gmra.mrb[0].mxu0 %v532
    %v2031 = vpop.f32.mrb[0].mxu0
    %v2032 = vadd.f32 0.0, %v2031
    %v2033 = vpop.f32.mrb[0].mxu0
    %v2034 = vadd.f32 0.0, %v2033
    %2035 = vmatprep.mubr.f32.mxu0 0.0
    %2036 = vmatmul.mubr.f32.gmra.mrb[0].mxu0 %v537
    %v2037 = vpop.f32.mrb[0].mxu0
    %v2038 = vadd.f32 0.0, %v2037
    %v2039 = vpop.f32.mrb[0].mxu0
    %v2040 = vadd.f32 0.0, %v2039
    %2041 = vmatprep.mubr.f32.mxu0 0.0
    %2042 = vmatmul.mubr.f32.gmra.mrb[0].mxu0 %v542
    %v2043 = vpop.f32.mrb[0].mxu0
    %v2044 = vadd.f32 0.0, %v2043
    %v2045 = vpop.f32.mrb[0].mxu0
    %v2046 = vadd.f32 0.0, %v2045
    %2047 = vmatprep.mubr.f32.mxu0 0.0
    %2048 = vmatmul.mubr.f32.gmra.mrb[0].mxu0 %v547
    %v2049 = vpop.f32.mrb[0].mxu0
    %v2050 = vadd.f32 0.0, %v2049
    %v2051 = vpop.f32.mrb[0].mxu0
    %v2052 = vadd.f32 0.0, %v2051
    %2053 = vmatprep.mubr.f32.mxu0 0.0
    %2054 = vmatmul.mubr.f32.gmra.mrb[0].mxu0 %v552
    %v2055 = vpop.f32.mrb[0].mxu0
    %v2056 = vadd.f32 0.0, %v2055
    %v2057 = vpop.f32.mrb[0].mxu0
    %v2058 = vadd.f32 0.0, %v2057
    %2059 = vmatprep.mubr.f32.mxu0 0.0
    %2060 = vmatmul.mubr.f32.gmra.mrb[0].mxu0 %v557
    %v2061 = vpop.f32.mrb[0].mxu0
    %v2062 = vadd.f32 0.0, %v2061
    %v2063 = vpop.f32.mrb[0].mxu0
    %v2064 = vadd.f32 0.0, %v2063
    %2065 = vmatprep.mubr.f32.mxu0 0.0
    %2066 = vmatmul.mubr.f32.gmra.mrb[0].mxu0 %v562
    %v2067 = vpop.f32.mrb[0].mxu0
    %v2068 = vadd.f32 0.0, %v2067
    %v2069 = vpop.f32.mrb[0].mxu0
    %v2070 = vadd.f32 0.0, %v2069
    %2071 = vmatprep.mubr.f32.mxu0 0.0
    %2072 = vmatmul.mubr.f32.gmra.mrb[0].mxu0 %v567
    %v2073 = vpop.f32.mrb[0].mxu0
    %v2074 = vadd.f32 0.0, %v2073
    %v2075 = vpop.f32.mrb[0].mxu0
    %v2076 = vadd.f32 0.0, %v2075
    %2077 = vmatprep.mubr.f32.mxu0 0.0
    %2078 = vmatmul.mubr.f32.gmra.mrb[0].mxu0 %v572
    %v2079 = vpop.f32.mrb[0].mxu0
    %v2080 = vadd.f32 0.0, %v2079
    %v2081 = vpop.f32.mrb[0].mxu0
    %v2082 = vadd.f32 0.0, %v2081
    %2083 = vmatprep.mubr.f32.mxu0 0.0
    %2084 = vmatmul.mubr.f32.gmra.mrb[0].mxu0 %v577
    %v2085 = vpop.f32.mrb[0].mxu0
    %v2086 = vadd.f32 0.0, %v2085
    %v2087 = vpop.f32.mrb[0].mxu0
    %v2088 = vadd.f32 0.0, %v2087
    %2089 = vmatprep.mubr.f32.mxu0 0.0
    %2090 = vmatmul.mubr.f32.gmra.mrb[0].mxu0 %v582
    %v2091 = vpop.f32.mrb[0].mxu0
    %v2092 = vadd.f32 0.0, %v2091
    %v2093 = vpop.f32.mrb[0].mxu0
    %v2094 = vadd.f32 0.0, %v2093
    %2095 = vmatprep.mubr.f32.mxu0 0.0
    %2096 = vmatmul.mubr.f32.gmra.mrb[0].mxu0 %v587
    %v2097 = vpop.f32.mrb[0].mxu0
    %v2098 = vadd.f32 0.0, %v2097
    %v2099 = vpop.f32.mrb[0].mxu0
    %v2100 = vadd.f32 0.0, %v2099
    %2101 = vmatprep.mubr.f32.mxu0 0.0
    %2102 = vmatmul.mubr.f32.gmra.mrb[0].mxu0 %v592
    %v2103 = vpop.f32.mrb[0].mxu0
    %v2104 = vadd.f32 0.0, %v2103
    %v2105 = vpop.f32.mrb[0].mxu0
    %v2106 = vadd.f32 0.0, %v2105
    %2107 = vmatprep.mubr.f32.mxu0 0.0
    %2108 = vmatmul.mubr.f32.gmra.mrb[0].mxu0 %v597
    %v2109 = vpop.f32.mrb[0].mxu0
    %v2110 = vadd.f32 0.0, %v2109
    %v2111 = vpop.f32.mrb[0].mxu0
    %v2112 = vadd.f32 0.0, %v2111
    %2113 = vmatprep.mubr.f32.mxu0 0.0
    %2114 = vmatmul.mubr.f32.gmra.mrb[0].mxu0 %v602
    %v2115 = vpop.f32.mrb[0].mxu0
    %v2116 = vadd.f32 0.0, %v2115
    %v2117 = vpop.f32.mrb[0].mxu0
    %v2118 = vadd.f32 0.0, %v2117
    %2119 = vmatprep.mubr.f32.mxu0 0.0
    %2120 = vmatmul.mubr.f32.gmra.mrb[0].mxu0 %v607
    %v2121 = vpop.f32.mrb[0].mxu0
    %v2122 = vadd.f32 0.0, %v2121
    %v2123 = vpop.f32.mrb[0].mxu0
    %v2124 = vadd.f32 0.0, %v2123
    %2125 = vmatprep.mubr.f32.mxu0 0.0
    %2126 = vmatmul.mubr.f32.gmra.mrb[0].mxu0 %v612
    %v2127 = vpop.f32.mrb[0].mxu0
    %v2128 = vadd.f32 0.0, %v2127
    %v2129 = vpop.f32.mrb[0].mxu0
    %v2130 = vadd.f32 0.0, %v2129
    %2131 = vmatprep.mubr.f32.mxu0 0.0
    %2132 = vmatmul.mubr.f32.gmra.mrb[0].mxu0 %v617
    %v2133 = vpop.f32.mrb[0].mxu0
    %v2134 = vadd.f32 0.0, %v2133
    %v2135 = vpop.f32.mrb[0].mxu0
    %v2136 = vadd.f32 0.0, %v2135
    %2137 = vmatprep.mubr.f32.mxu0 0.0
    %2138 = vmatmul.mubr.f32.gmra.mrb[0].mxu0 %v622
    %v2139 = vpop.f32.mrb[0].mxu0
    %v2140 = vadd.f32 0.0, %v2139
    %v2141 = vpop.f32.mrb[0].mxu0
    %v2142 = vadd.f32 0.0, %v2141
    %2143 = vmatprep.mubr.f32.mxu0 0.0
    %2144 = vmatmul.mubr.f32.gmra.mrb[0].mxu0 %v627
    %v2145 = vpop.f32.mrb[0].mxu0
    %v2146 = vadd.f32 0.0, %v2145
    %v2147 = vpop.f32.mrb[0].mxu0
    %v2148 = vadd.f32 0.0, %v2147
    %2149 = vmatprep.mubr.f32.mxu0 0.0
    %2150 = vmatmul.mubr.f32.gmra.mrb[0].mxu0 %v632
    %v2151 = vpop.f32.mrb[0].mxu0
    %v2152 = vadd.f32 0.0, %v2151
    %v2153 = vpop.f32.mrb[0].mxu0
    %v2154 = vadd.f32 0.0, %v2153
    %2155 = vmatprep.mubr.f32.mxu0 0.0
    %2156 = vmatmul.mubr.f32.gmra.mrb[0].mxu0 %v637
    %v2157 = vpop.f32.mrb[0].mxu0
    %v2158 = vadd.f32 0.0, %v2157
    %v2159 = vpop.f32.mrb[0].mxu0
    %v2160 = vadd.f32 0.0, %v2159
    %2161 = vdwg.mxu0
    %v2162 = vmul.f32 %v1715, 0.088388346
    %v2163 = vmul.f32 %v1717, 0.088388346
    %v2164 = vmul.f32 %v1721, 0.088388346
    %v2165 = vmul.f32 %v1723, 0.088388346
    %v2166 = vmul.f32 %v1727, 0.088388346
    %v2167 = vmul.f32 %v1729, 0.088388346
    %v2168 = vmul.f32 %v1733, 0.088388346
    %v2169 = vmul.f32 %v1735, 0.088388346
    %v2170 = vmul.f32 %v1739, 0.088388346
    %v2171 = vmul.f32 %v1741, 0.088388346
    %v2172 = vmul.f32 %v1745, 0.088388346
    %v2173 = vmul.f32 %v1747, 0.088388346
    %v2174 = vmul.f32 %v1751, 0.088388346
    %v2175 = vmul.f32 %v1753, 0.088388346
    %v2176 = vmul.f32 %v1757, 0.088388346
    %v2177 = vmul.f32 %v1759, 0.088388346
    %v2178 = vmul.f32 %v1763, 0.088388346
    %v2179 = vmul.f32 %v1765, 0.088388346
    %v2180 = vmul.f32 %v1769, 0.088388346
    %v2181 = vmul.f32 %v1771, 0.088388346
    %v2182 = vmul.f32 %v1775, 0.088388346
    %v2183 = vmul.f32 %v1777, 0.088388346
    %v2184 = vmul.f32 %v1781, 0.088388346
    %v2185 = vmul.f32 %v1783, 0.088388346
    %v2186 = vmul.f32 %v1787, 0.088388346
    %v2187 = vmul.f32 %v1789, 0.088388346
    %v2188 = vmul.f32 %v1793, 0.088388346
    %v2189 = vmul.f32 %v1795, 0.088388346
    %v2190 = vmul.f32 %v1799, 0.088388346
    %v2191 = vmul.f32 %v1801, 0.088388346
    %v2192 = vmul.f32 %v1805, 0.088388346
    %v2193 = vmul.f32 %v1807, 0.088388346
    %v2194 = vmul.f32 %v1811, 0.088388346
    %v2195 = vmul.f32 %v1813, 0.088388346
    %v2196 = vmul.f32 %v1817, 0.088388346
    %v2197 = vmul.f32 %v1819, 0.088388346
    %v2198 = vmul.f32 %v1823, 0.088388346
    %v2199 = vmul.f32 %v1825, 0.088388346
    %v2200 = vmul.f32 %v1829, 0.088388346
    %v2201 = vmul.f32 %v1831, 0.088388346
    %v2202 = vmul.f32 %v1835, 0.088388346
    %v2203 = vmul.f32 %v1837, 0.088388346
    %v2204 = vmul.f32 %v1841, 0.088388346
    %v2205 = vmul.f32 %v1843, 0.088388346
    %v2206 = vmul.f32 %v1847, 0.088388346
    %v2207 = vmul.f32 %v1849, 0.088388346
    %v2208 = vmul.f32 %v1853, 0.088388346
    %v2209 = vmul.f32 %v1855, 0.088388346
    %v2210 = vmul.f32 %v1859, 0.088388346
    %v2211 = vmul.f32 %v1861, 0.088388346
    %v2212 = vmul.f32 %v1865, 0.088388346
    %v2213 = vmul.f32 %v1867, 0.088388346
    %v2214 = vmul.f32 %v1871, 0.088388346
    %v2215 = vmul.f32 %v1873, 0.088388346
    %v2216 = vmul.f32 %v1877, 0.088388346
    %v2217 = vmul.f32 %v1879, 0.088388346
    %v2218 = vmul.f32 %v1883, 0.088388346
    %v2219 = vmul.f32 %v1885, 0.088388346
    %v2220 = vmul.f32 %v1889, 0.088388346
    %v2221 = vmul.f32 %v1891, 0.088388346
    %v2222 = vmul.f32 %v1895, 0.088388346
    %v2223 = vmul.f32 %v1897, 0.088388346
    %v2224 = vmul.f32 %v1901, 0.088388346
    %v2225 = vmul.f32 %v1903, 0.088388346
    %v2226 = vmul.f32 %v1972, 0.088388346
    %v2227 = vmul.f32 %v1974, 0.088388346
    %v2228 = vmul.f32 %v1978, 0.088388346
    %v2229 = vmul.f32 %v1980, 0.088388346
    %v2230 = vmul.f32 %v1984, 0.088388346
    %v2231 = vmul.f32 %v1986, 0.088388346
    %v2232 = vmul.f32 %v1990, 0.088388346
    %v2233 = vmul.f32 %v1992, 0.088388346
    %v2234 = vmul.f32 %v1996, 0.088388346
    %v2235 = vmul.f32 %v1998, 0.088388346
    %v2236 = vmul.f32 %v2002, 0.088388346
    %v2237 = vmul.f32 %v2004, 0.088388346
    %v2238 = vmul.f32 %v2008, 0.088388346
    %v2239 = vmul.f32 %v2010, 0.088388346
    %v2240 = vmul.f32 %v2014, 0.088388346
    %v2241 = vmul.f32 %v2016, 0.088388346
    %v2242 = vmul.f32 %v2020, 0.088388346
    %v2243 = vmul.f32 %v2022, 0.088388346
    %v2244 = vmul.f32 %v2026, 0.088388346
    %v2245 = vmul.f32 %v2028, 0.088388346
    %v2246 = vmul.f32 %v2032, 0.088388346
    %v2247 = vmul.f32 %v2034, 0.088388346
    %v2248 = vmul.f32 %v2038, 0.088388346
    %v2249 = vmul.f32 %v2040, 0.088388346
    %v2250 = vmul.f32 %v2044, 0.088388346
    %v2251 = vmul.f32 %v2046, 0.088388346
    %v2252 = vmul.f32 %v2050, 0.088388346
    %v2253 = vmul.f32 %v2052, 0.088388346
    %v2254 = vmul.f32 %v2056, 0.088388346
    %v2255 = vmul.f32 %v2058, 0.088388346
    %v2256 = vmul.f32 %v2062, 0.088388346
    %v2257 = vmul.f32 %v2064, 0.088388346
    %v2258 = vmul.f32 %v2068, 0.088388346
    %v2259 = vmul.f32 %v2070, 0.088388346
    %v2260 = vmul.f32 %v2074, 0.088388346
    %v2261 = vmul.f32 %v2076, 0.088388346
    %v2262 = vmul.f32 %v2080, 0.088388346
    %v2263 = vmul.f32 %v2082, 0.088388346
    %v2264 = vmul.f32 %v2086, 0.088388346
    %v2265 = vmul.f32 %v2088, 0.088388346
    %v2266 = vmul.f32 %v2092, 0.088388346
    %v2267 = vmul.f32 %v2094, 0.088388346
    %v2268 = vmul.f32 %v2098, 0.088388346
    %v2269 = vmul.f32 %v2100, 0.088388346
    %v2270 = vmul.f32 %v2104, 0.088388346
    %v2271 = vmul.f32 %v2106, 0.088388346
    %v2272 = vmul.f32 %v2110, 0.088388346
    %v2273 = vmul.f32 %v2112, 0.088388346
    %v2274 = vmul.f32 %v2116, 0.088388346
    %v2275 = vmul.f32 %v2118, 0.088388346
    %v2276 = vmul.f32 %v2122, 0.088388346
    %v2277 = vmul.f32 %v2124, 0.088388346
    %v2278 = vmul.f32 %v2128, 0.088388346
    %v2279 = vmul.f32 %v2130, 0.088388346
    %v2280 = vmul.f32 %v2134, 0.088388346
    %v2281 = vmul.f32 %v2136, 0.088388346
    %v2282 = vmul.f32 %v2140, 0.088388346
    %v2283 = vmul.f32 %v2142, 0.088388346
    %v2284 = vmul.f32 %v2146, 0.088388346
    %v2285 = vmul.f32 %v2148, 0.088388346
    %v2286 = vmul.f32 %v2152, 0.088388346
    %v2287 = vmul.f32 %v2154, 0.088388346
    %v2288 = vmul.f32 %v2158, 0.088388346
    %v2289 = vmul.f32 %v2160, 0.088388346
    %v2290 = vmax.f32 %v2162, %v2163
    %2291 = vmax.xlane.f32.xlu0 %v2290
    %v2292 = vpop.xlane.xlu0 %2291
    %v2293 = vmax.f32 %v2164, %v2165
    %2294 = vmax.xlane.f32.xlu0 %v2293
    %v2295 = vpop.xlane.xlu0 %2294
    %v2296 = vmax.f32 %v2166, %v2167
    %2297 = vmax.xlane.f32.xlu0 %v2296
    %v2298 = vpop.xlane.xlu0 %2297
    %v2299 = vmax.f32 %v2168, %v2169
    %2300 = vmax.xlane.f32.xlu0 %v2299
    %v2301 = vpop.xlane.xlu0 %2300
    %v2302 = vmax.f32 %v2170, %v2171
    %2303 = vmax.xlane.f32.xlu0 %v2302
    %v2304 = vpop.xlane.xlu0 %2303
    %v2305 = vmax.f32 %v2172, %v2173
    %2306 = vmax.xlane.f32.xlu0 %v2305
    %v2307 = vpop.xlane.xlu0 %2306
    %v2308 = vmax.f32 %v2174, %v2175
    %2309 = vmax.xlane.f32.xlu0 %v2308
    %v2310 = vpop.xlane.xlu0 %2309
    %v2311 = vmax.f32 %v2176, %v2177
    %2312 = vmax.xlane.f32.xlu0 %v2311
    %v2313 = vpop.xlane.xlu0 %2312
    %v2314 = vmax.f32 %v2178, %v2179
    %2315 = vmax.xlane.f32.xlu0 %v2314
    %v2316 = vpop.xlane.xlu0 %2315
    %v2317 = vmax.f32 %v2180, %v2181
    %2318 = vmax.xlane.f32.xlu0 %v2317
    %v2319 = vpop.xlane.xlu0 %2318
    %v2320 = vmax.f32 %v2182, %v2183
    %2321 = vmax.xlane.f32.xlu0 %v2320
    %v2322 = vpop.xlane.xlu0 %2321
    %v2323 = vmax.f32 %v2184, %v2185
    %2324 = vmax.xlane.f32.xlu0 %v2323
    %v2325 = vpop.xlane.xlu0 %2324
    %v2326 = vmax.f32 %v2186, %v2187
    %2327 = vmax.xlane.f32.xlu0 %v2326
    %v2328 = vpop.xlane.xlu0 %2327
    %v2329 = vmax.f32 %v2188, %v2189
    %2330 = vmax.xlane.f32.xlu0 %v2329
    %v2331 = vpop.xlane.xlu0 %2330
    %v2332 = vmax.f32 %v2190, %v2191
    %2333 = vmax.xlane.f32.xlu0 %v2332
    %v2334 = vpop.xlane.xlu0 %2333
    %v2335 = vmax.f32 %v2192, %v2193
    %2336 = vmax.xlane.f32.xlu0 %v2335
    %v2337 = vpop.xlane.xlu0 %2336
    %v2338 = vmax.f32 %v2194, %v2195
    %2339 = vmax.xlane.f32.xlu0 %v2338
    %v2340 = vpop.xlane.xlu0 %2339
    %v2341 = vmax.f32 %v2196, %v2197
    %2342 = vmax.xlane.f32.xlu0 %v2341
    %v2343 = vpop.xlane.xlu0 %2342
    %v2344 = vmax.f32 %v2198, %v2199
    %2345 = vmax.xlane.f32.xlu0 %v2344
    %v2346 = vpop.xlane.xlu0 %2345
    %v2347 = vmax.f32 %v2200, %v2201
    %2348 = vmax.xlane.f32.xlu0 %v2347
    %v2349 = vpop.xlane.xlu0 %2348
    %v2350 = vmax.f32 %v2202, %v2203
    %2351 = vmax.xlane.f32.xlu0 %v2350
    %v2352 = vpop.xlane.xlu0 %2351
    %v2353 = vmax.f32 %v2204, %v2205
    %2354 = vmax.xlane.f32.xlu0 %v2353
    %v2355 = vpop.xlane.xlu0 %2354
    %v2356 = vmax.f32 %v2206, %v2207
    %2357 = vmax.xlane.f32.xlu0 %v2356
    %v2358 = vpop.xlane.xlu0 %2357
    %v2359 = vmax.f32 %v2208, %v2209
    %2360 = vmax.xlane.f32.xlu0 %v2359
    %v2361 = vpop.xlane.xlu0 %2360
    %v2362 = vmax.f32 %v2210, %v2211
    %2363 = vmax.xlane.f32.xlu0 %v2362
    %v2364 = vpop.xlane.xlu0 %2363
    %v2365 = vmax.f32 %v2212, %v2213
    %2366 = vmax.xlane.f32.xlu0 %v2365
    %v2367 = vpop.xlane.xlu0 %2366
    %v2368 = vmax.f32 %v2214, %v2215
    %2369 = vmax.xlane.f32.xlu0 %v2368
    %v2370 = vpop.xlane.xlu0 %2369
    %v2371 = vmax.f32 %v2216, %v2217
    %2372 = vmax.xlane.f32.xlu0 %v2371
    %v2373 = vpop.xlane.xlu0 %2372
    %v2374 = vmax.f32 %v2218, %v2219
    %2375 = vmax.xlane.f32.xlu0 %v2374
    %v2376 = vpop.xlane.xlu0 %2375
    %v2377 = vmax.f32 %v2220, %v2221
    %2378 = vmax.xlane.f32.xlu0 %v2377
    %v2379 = vpop.xlane.xlu0 %2378
    %v2380 = vmax.f32 %v2222, %v2223
    %2381 = vmax.xlane.f32.xlu0 %v2380
    %v2382 = vpop.xlane.xlu0 %2381
    %v2383 = vmax.f32 %v2224, %v2225
    %2384 = vmax.xlane.f32.xlu0 %v2383
    %v2385 = vpop.xlane.xlu0 %2384
    %v2386 = vmax.f32 %v2226, %v2227
    %2387 = vmax.xlane.f32.xlu0 %v2386
    %v2388 = vpop.xlane.xlu0 %2387
    %v2389 = vmax.f32 %v2228, %v2229
    %2390 = vmax.xlane.f32.xlu0 %v2389
    %v2391 = vpop.xlane.xlu0 %2390
    %v2392 = vmax.f32 %v2230, %v2231
    %2393 = vmax.xlane.f32.xlu0 %v2392
    %v2394 = vpop.xlane.xlu0 %2393
    %v2395 = vmax.f32 %v2232, %v2233
    %2396 = vmax.xlane.f32.xlu0 %v2395
    %v2397 = vpop.xlane.xlu0 %2396
    %v2398 = vmax.f32 %v2234, %v2235
    %2399 = vmax.xlane.f32.xlu0 %v2398
    %v2400 = vpop.xlane.xlu0 %2399
    %v2401 = vmax.f32 %v2236, %v2237
    %2402 = vmax.xlane.f32.xlu0 %v2401
    %v2403 = vpop.xlane.xlu0 %2402
    %v2404 = vmax.f32 %v2238, %v2239
    %2405 = vmax.xlane.f32.xlu0 %v2404
    %v2406 = vpop.xlane.xlu0 %2405
    %v2407 = vmax.f32 %v2240, %v2241
    %2408 = vmax.xlane.f32.xlu0 %v2407
    %v2409 = vpop.xlane.xlu0 %2408
    %v2410 = vmax.f32 %v2242, %v2243
    %2411 = vmax.xlane.f32.xlu0 %v2410
    %v2412 = vpop.xlane.xlu0 %2411
    %v2413 = vmax.f32 %v2244, %v2245
    %2414 = vmax.xlane.f32.xlu0 %v2413
    %v2415 = vpop.xlane.xlu0 %2414
    %v2416 = vmax.f32 %v2246, %v2247
    %2417 = vmax.xlane.f32.xlu0 %v2416
    %v2418 = vpop.xlane.xlu0 %2417
    %v2419 = vmax.f32 %v2248, %v2249
    %2420 = vmax.xlane.f32.xlu0 %v2419
    %v2421 = vpop.xlane.xlu0 %2420
    %v2422 = vmax.f32 %v2250, %v2251
    %2423 = vmax.xlane.f32.xlu0 %v2422
    %v2424 = vpop.xlane.xlu0 %2423
    %v2425 = vmax.f32 %v2252, %v2253
    %2426 = vmax.xlane.f32.xlu0 %v2425
    %v2427 = vpop.xlane.xlu0 %2426
    %v2428 = vmax.f32 %v2254, %v2255
    %2429 = vmax.xlane.f32.xlu0 %v2428
    %v2430 = vpop.xlane.xlu0 %2429
    %v2431 = vmax.f32 %v2256, %v2257
    %2432 = vmax.xlane.f32.xlu0 %v2431
    %v2433 = vpop.xlane.xlu0 %2432
    %v2434 = vmax.f32 %v2258, %v2259
    %2435 = vmax.xlane.f32.xlu0 %v2434
    %v2436 = vpop.xlane.xlu0 %2435
    %v2437 = vmax.f32 %v2260, %v2261
    %2438 = vmax.xlane.f32.xlu0 %v2437
    %v2439 = vpop.xlane.xlu0 %2438
    %v2440 = vmax.f32 %v2262, %v2263
    %2441 = vmax.xlane.f32.xlu0 %v2440
    %v2442 = vpop.xlane.xlu0 %2441
    %v2443 = vmax.f32 %v2264, %v2265
    %2444 = vmax.xlane.f32.xlu0 %v2443
    %v2445 = vpop.xlane.xlu0 %2444
    %v2446 = vmax.f32 %v2266, %v2267
    %2447 = vmax.xlane.f32.xlu0 %v2446
    %v2448 = vpop.xlane.xlu0 %2447
    %v2449 = vmax.f32 %v2268, %v2269
    %2450 = vmax.xlane.f32.xlu0 %v2449
    %v2451 = vpop.xlane.xlu0 %2450
    %v2452 = vmax.f32 %v2270, %v2271
    %2453 = vmax.xlane.f32.xlu0 %v2452
    %v2454 = vpop.xlane.xlu0 %2453
    %v2455 = vmax.f32 %v2272, %v2273
    %2456 = vmax.xlane.f32.xlu0 %v2455
    %v2457 = vpop.xlane.xlu0 %2456
    %v2458 = vmax.f32 %v2274, %v2275
    %2459 = vmax.xlane.f32.xlu0 %v2458
    %v2460 = vpop.xlane.xlu0 %2459
    %v2461 = vmax.f32 %v2276, %v2277
    %2462 = vmax.xlane.f32.xlu0 %v2461
    %v2463 = vpop.xlane.xlu0 %2462
    %v2464 = vmax.f32 %v2278, %v2279
    %2465 = vmax.xlane.f32.xlu0 %v2464
    %v2466 = vpop.xlane.xlu0 %2465
    %v2467 = vmax.f32 %v2280, %v2281
    %2468 = vmax.xlane.f32.xlu0 %v2467
    %v2469 = vpop.xlane.xlu0 %2468
    %v2470 = vmax.f32 %v2282, %v2283
    %2471 = vmax.xlane.f32.xlu0 %v2470
    %v2472 = vpop.xlane.xlu0 %2471
    %v2473 = vmax.f32 %v2284, %v2285
    %2474 = vmax.xlane.f32.xlu0 %v2473
    %v2475 = vpop.xlane.xlu0 %2474
    %v2476 = vmax.f32 %v2286, %v2287
    %2477 = vmax.xlane.f32.xlu0 %v2476
    %v2478 = vpop.xlane.xlu0 %2477
    %v2479 = vmax.f32 %v2288, %v2289
    %2480 = vmax.xlane.f32.xlu0 %v2479
    %v2481 = vpop.xlane.xlu0 %2480
    %v2482 = vsub.f32 %v2162, %v2292
    %v2483 = vsub.f32 %v2163, %v2292
    %v2484 = vsub.f32 %v2164, %v2295
    %v2485 = vsub.f32 %v2165, %v2295
    %v2486 = vsub.f32 %v2166, %v2298
    %v2487 = vsub.f32 %v2167, %v2298
    %v2488 = vsub.f32 %v2168, %v2301
    %v2489 = vsub.f32 %v2169, %v2301
    %v2490 = vsub.f32 %v2170, %v2304
    %v2491 = vsub.f32 %v2171, %v2304
    %v2492 = vsub.f32 %v2172, %v2307
    %v2493 = vsub.f32 %v2173, %v2307
    %v2494 = vsub.f32 %v2174, %v2310
    %v2495 = vsub.f32 %v2175, %v2310
    %v2496 = vsub.f32 %v2176, %v2313
    %v2497 = vsub.f32 %v2177, %v2313
    %v2498 = vsub.f32 %v2178, %v2316
    %v2499 = vsub.f32 %v2179, %v2316
    %v2500 = vsub.f32 %v2180, %v2319
    %v2501 = vsub.f32 %v2181, %v2319
    %v2502 = vsub.f32 %v2182, %v2322
    %v2503 = vsub.f32 %v2183, %v2322
    %v2504 = vsub.f32 %v2184, %v2325
    %v2505 = vsub.f32 %v2185, %v2325
    %v2506 = vsub.f32 %v2186, %v2328
    %v2507 = vsub.f32 %v2187, %v2328
    %v2508 = vsub.f32 %v2188, %v2331
    %v2509 = vsub.f32 %v2189, %v2331
    %v2510 = vsub.f32 %v2190, %v2334
    %v2511 = vsub.f32 %v2191, %v2334
    %v2512 = vsub.f32 %v2192, %v2337
    %v2513 = vsub.f32 %v2193, %v2337
    %v2514 = vsub.f32 %v2194, %v2340
    %v2515 = vsub.f32 %v2195, %v2340
    %v2516 = vsub.f32 %v2196, %v2343
    %v2517 = vsub.f32 %v2197, %v2343
    %v2518 = vsub.f32 %v2198, %v2346
    %v2519 = vsub.f32 %v2199, %v2346
    %v2520 = vsub.f32 %v2200, %v2349
    %v2521 = vsub.f32 %v2201, %v2349
    %v2522 = vsub.f32 %v2202, %v2352
    %v2523 = vsub.f32 %v2203, %v2352
    %v2524 = vsub.f32 %v2204, %v2355
    %v2525 = vsub.f32 %v2205, %v2355
    %v2526 = vsub.f32 %v2206, %v2358
    %v2527 = vsub.f32 %v2207, %v2358
    %v2528 = vsub.f32 %v2208, %v2361
    %v2529 = vsub.f32 %v2209, %v2361
    %v2530 = vsub.f32 %v2210, %v2364
    %v2531 = vsub.f32 %v2211, %v2364
    %v2532 = vsub.f32 %v2212, %v2367
    %v2533 = vsub.f32 %v2213, %v2367
    %v2534 = vsub.f32 %v2214, %v2370
    %v2535 = vsub.f32 %v2215, %v2370
    %v2536 = vsub.f32 %v2216, %v2373
    %v2537 = vsub.f32 %v2217, %v2373
    %v2538 = vsub.f32 %v2218, %v2376
    %v2539 = vsub.f32 %v2219, %v2376
    %v2540 = vsub.f32 %v2220, %v2379
    %v2541 = vsub.f32 %v2221, %v2379
    %v2542 = vsub.f32 %v2222, %v2382
    %v2543 = vsub.f32 %v2223, %v2382
    %v2544 = vsub.f32 %v2224, %v2385
    %v2545 = vsub.f32 %v2225, %v2385
    %v2546 = vsub.f32 %v2226, %v2388
    %v2547 = vsub.f32 %v2227, %v2388
    %v2548 = vsub.f32 %v2228, %v2391
    %v2549 = vsub.f32 %v2229, %v2391
    %v2550 = vsub.f32 %v2230, %v2394
    %v2551 = vsub.f32 %v2231, %v2394
    %v2552 = vsub.f32 %v2232, %v2397
    %v2553 = vsub.f32 %v2233, %v2397
    %v2554 = vsub.f32 %v2234, %v2400
    %v2555 = vsub.f32 %v2235, %v2400
    %v2556 = vsub.f32 %v2236, %v2403
    %v2557 = vsub.f32 %v2237, %v2403
    %v2558 = vsub.f32 %v2238, %v2406
    %v2559 = vsub.f32 %v2239, %v2406
    %v2560 = vsub.f32 %v2240, %v2409
    %v2561 = vsub.f32 %v2241, %v2409
    %v2562 = vsub.f32 %v2242, %v2412
    %v2563 = vsub.f32 %v2243, %v2412
    %v2564 = vsub.f32 %v2244, %v2415
    %v2565 = vsub.f32 %v2245, %v2415
    %v2566 = vsub.f32 %v2246, %v2418
    %v2567 = vsub.f32 %v2247, %v2418
    %v2568 = vsub.f32 %v2248, %v2421
    %v2569 = vsub.f32 %v2249, %v2421
    %v2570 = vsub.f32 %v2250, %v2424
    %v2571 = vsub.f32 %v2251, %v2424
    %v2572 = vsub.f32 %v2252, %v2427
    %v2573 = vsub.f32 %v2253, %v2427
    %v2574 = vsub.f32 %v2254, %v2430
    %v2575 = vsub.f32 %v2255, %v2430
    %v2576 = vsub.f32 %v2256, %v2433
    %v2577 = vsub.f32 %v2257, %v2433
    %v2578 = vsub.f32 %v2258, %v2436
    %v2579 = vsub.f32 %v2259, %v2436
    %v2580 = vsub.f32 %v2260, %v2439
    %v2581 = vsub.f32 %v2261, %v2439
    %v2582 = vsub.f32 %v2262, %v2442
    %v2583 = vsub.f32 %v2263, %v2442
    %v2584 = vsub.f32 %v2264, %v2445
    %v2585 = vsub.f32 %v2265, %v2445
    %v2586 = vsub.f32 %v2266, %v2448
    %v2587 = vsub.f32 %v2267, %v2448
    %v2588 = vsub.f32 %v2268, %v2451
    %v2589 = vsub.f32 %v2269, %v2451
    %v2590 = vsub.f32 %v2270, %v2454
    %v2591 = vsub.f32 %v2271, %v2454
    %v2592 = vsub.f32 %v2272, %v2457
    %v2593 = vsub.f32 %v2273, %v2457
    %v2594 = vsub.f32 %v2274, %v2460
    %v2595 = vsub.f32 %v2275, %v2460
    %v2596 = vsub.f32 %v2276, %v2463
    %v2597 = vsub.f32 %v2277, %v2463
    %v2598 = vsub.f32 %v2278, %v2466
    %v2599 = vsub.f32 %v2279, %v2466
    %v2600 = vsub.f32 %v2280, %v2469
    %v2601 = vsub.f32 %v2281, %v2469
    %v2602 = vsub.f32 %v2282, %v2472
    %v2603 = vsub.f32 %v2283, %v2472
    %v2604 = vsub.f32 %v2284, %v2475
    %v2605 = vsub.f32 %v2285, %v2475
    %v2606 = vsub.f32 %v2286, %v2478
    %v2607 = vsub.f32 %v2287, %v2478
    %v2608 = vsub.f32 %v2288, %v2481
    %v2609 = vsub.f32 %v2289, %v2481
    %v2610 = vmul.f32 %v2482, 1.442695
    %v2611 = vpow.pop %v2610
    %v2612 = vmul.f32 %v2483, 1.442695
    %v2613 = vpow.pop %v2612
    %v2614 = vmul.f32 %v2484, 1.442695
    %v2615 = vpow.pop %v2614
    %v2616 = vmul.f32 %v2485, 1.442695
    %v2617 = vpow.pop %v2616
    %v2618 = vmul.f32 %v2486, 1.442695
    %v2619 = vpow.pop %v2618
    %v2620 = vmul.f32 %v2487, 1.442695
    %v2621 = vpow.pop %v2620
    %v2622 = vmul.f32 %v2488, 1.442695
    %v2623 = vpow.pop %v2622
    %v2624 = vmul.f32 %v2489, 1.442695
    %v2625 = vpow.pop %v2624
    %v2626 = vmul.f32 %v2490, 1.442695
    %v2627 = vpow.pop %v2626
    %v2628 = vmul.f32 %v2491, 1.442695
    %v2629 = vpow.pop %v2628
    %v2630 = vmul.f32 %v2492, 1.442695
    %v2631 = vpow.pop %v2630
    %v2632 = vmul.f32 %v2493, 1.442695
    %v2633 = vpow.pop %v2632
    %v2634 = vmul.f32 %v2494, 1.442695
    %v2635 = vpow.pop %v2634
    %v2636 = vmul.f32 %v2495, 1.442695
    %v2637 = vpow.pop %v2636
    %v2638 = vmul.f32 %v2496, 1.442695
    %v2639 = vpow.pop %v2638
    %v2640 = vmul.f32 %v2497, 1.442695
    %v2641 = vpow.pop %v2640
    %v2642 = vmul.f32 %v2498, 1.442695
    %v2643 = vpow.pop %v2642
    %v2644 = vmul.f32 %v2499, 1.442695
    %v2645 = vpow.pop %v2644
    %v2646 = vmul.f32 %v2500, 1.442695
    %v2647 = vpow.pop %v2646
    %v2648 = vmul.f32 %v2501, 1.442695
    %v2649 = vpow.pop %v2648
    %v2650 = vmul.f32 %v2502, 1.442695
    %v2651 = vpow.pop %v2650
    %v2652 = vmul.f32 %v2503, 1.442695
    %v2653 = vpow.pop %v2652
    %v2654 = vmul.f32 %v2504, 1.442695
    %v2655 = vpow.pop %v2654
    %v2656 = vmul.f32 %v2505, 1.442695
    %v2657 = vpow.pop %v2656
    %v2658 = vmul.f32 %v2506, 1.442695
    %v2659 = vpow.pop %v2658
    %v2660 = vmul.f32 %v2507, 1.442695
    %v2661 = vpow.pop %v2660
    %v2662 = vmul.f32 %v2508, 1.442695
    %v2663 = vpow.pop %v2662
    %v2664 = vmul.f32 %v2509, 1.442695
    %v2665 = vpow.pop %v2664
    %v2666 = vmul.f32 %v2510, 1.442695
    %v2667 = vpow.pop %v2666
    %v2668 = vmul.f32 %v2511, 1.442695
    %v2669 = vpow.pop %v2668
    %v2670 = vmul.f32 %v2512, 1.442695
    %v2671 = vpow.pop %v2670
    %v2672 = vmul.f32 %v2513, 1.442695
    %v2673 = vpow.pop %v2672
    %v2674 = vmul.f32 %v2514, 1.442695
    %v2675 = vpow.pop %v2674
    %v2676 = vmul.f32 %v2515, 1.442695
    %v2677 = vpow.pop %v2676
    %v2678 = vmul.f32 %v2516, 1.442695
    %v2679 = vpow.pop %v2678
    %v2680 = vmul.f32 %v2517, 1.442695
    %v2681 = vpow.pop %v2680
    %v2682 = vmul.f32 %v2518, 1.442695
    %v2683 = vpow.pop %v2682
    %v2684 = vmul.f32 %v2519, 1.442695
    %v2685 = vpow.pop %v2684
    %v2686 = vmul.f32 %v2520, 1.442695
    %v2687 = vpow.pop %v2686
    %v2688 = vmul.f32 %v2521, 1.442695
    %v2689 = vpow.pop %v2688
    %v2690 = vmul.f32 %v2522, 1.442695
    %v2691 = vpow.pop %v2690
    %v2692 = vmul.f32 %v2523, 1.442695
    %v2693 = vpow.pop %v2692
    %v2694 = vmul.f32 %v2524, 1.442695
    %v2695 = vpow.pop %v2694
    %v2696 = vmul.f32 %v2525, 1.442695
    %v2697 = vpow.pop %v2696
    %v2698 = vmul.f32 %v2526, 1.442695
    %v2699 = vpow.pop %v2698
    %v2700 = vmul.f32 %v2527, 1.442695
    %v2701 = vpow.pop %v2700
    %v2702 = vmul.f32 %v2528, 1.442695
    %v2703 = vpow.pop %v2702
    %v2704 = vmul.f32 %v2529, 1.442695
    %v2705 = vpow.pop %v2704
    %v2706 = vmul.f32 %v2530, 1.442695
    %v2707 = vpow.pop %v2706
    %v2708 = vmul.f32 %v2531, 1.442695
    %v2709 = vpow.pop %v2708
    %v2710 = vmul.f32 %v2532, 1.442695
    %v2711 = vpow.pop %v2710
    %v2712 = vmul.f32 %v2533, 1.442695
    %v2713 = vpow.pop %v2712
    %v2714 = vmul.f32 %v2534, 1.442695
    %v2715 = vpow.pop %v2714
    %v2716 = vmul.f32 %v2535, 1.442695
    %v2717 = vpow.pop %v2716
    %v2718 = vmul.f32 %v2536, 1.442695
    %v2719 = vpow.pop %v2718
    %v2720 = vmul.f32 %v2537, 1.442695
    %v2721 = vpow.pop %v2720
    %v2722 = vmul.f32 %v2538, 1.442695
    %v2723 = vpow.pop %v2722
    %v2724 = vmul.f32 %v2539, 1.442695
    %v2725 = vpow.pop %v2724
    %v2726 = vmul.f32 %v2540, 1.442695
    %v2727 = vpow.pop %v2726
    %v2728 = vmul.f32 %v2541, 1.442695
    %v2729 = vpow.pop %v2728
    %v2730 = vmul.f32 %v2542, 1.442695
    %v2731 = vpow.pop %v2730
    %v2732 = vmul.f32 %v2543, 1.442695
    %v2733 = vpow.pop %v2732
    %v2734 = vmul.f32 %v2544, 1.442695
    %v2735 = vpow.pop %v2734
    %v2736 = vmul.f32 %v2545, 1.442695
    %v2737 = vpow.pop %v2736
    %v2738 = vmul.f32 %v2546, 1.442695
    %v2739 = vpow.pop %v2738
    %v2740 = vmul.f32 %v2547, 1.442695
    %v2741 = vpow.pop %v2740
    %v2742 = vmul.f32 %v2548, 1.442695
    %v2743 = vpow.pop %v2742
    %v2744 = vmul.f32 %v2549, 1.442695
    %v2745 = vpow.pop %v2744
    %v2746 = vmul.f32 %v2550, 1.442695
    %v2747 = vpow.pop %v2746
    %v2748 = vmul.f32 %v2551, 1.442695
    %v2749 = vpow.pop %v2748
    %v2750 = vmul.f32 %v2552, 1.442695
    %v2751 = vpow.pop %v2750
    %v2752 = vmul.f32 %v2553, 1.442695
    %v2753 = vpow.pop %v2752
    %v2754 = vmul.f32 %v2554, 1.442695
    %v2755 = vpow.pop %v2754
    %v2756 = vmul.f32 %v2555, 1.442695
    %v2757 = vpow.pop %v2756
    %v2758 = vmul.f32 %v2556, 1.442695
    %v2759 = vpow.pop %v2758
    %v2760 = vmul.f32 %v2557, 1.442695
    %v2761 = vpow.pop %v2760
    %v2762 = vmul.f32 %v2558, 1.442695
    %v2763 = vpow.pop %v2762
    %v2764 = vmul.f32 %v2559, 1.442695
    %v2765 = vpow.pop %v2764
    %v2766 = vmul.f32 %v2560, 1.442695
    %v2767 = vpow.pop %v2766
    %v2768 = vmul.f32 %v2561, 1.442695
    %v2769 = vpow.pop %v2768
    %v2770 = vmul.f32 %v2562, 1.442695
    %v2771 = vpow.pop %v2770
    %v2772 = vmul.f32 %v2563, 1.442695
    %v2773 = vpow.pop %v2772
    %v2774 = vmul.f32 %v2564, 1.442695
    %v2775 = vpow.pop %v2774
    %v2776 = vmul.f32 %v2565, 1.442695
    %v2777 = vpow.pop %v2776
    %v2778 = vmul.f32 %v2566, 1.442695
    %v2779 = vpow.pop %v2778
    %v2780 = vmul.f32 %v2567, 1.442695
    %v2781 = vpow.pop %v2780
    %v2782 = vmul.f32 %v2568, 1.442695
    %v2783 = vpow.pop %v2782
    %v2784 = vmul.f32 %v2569, 1.442695
    %v2785 = vpow.pop %v2784
    %v2786 = vmul.f32 %v2570, 1.442695
    %v2787 = vpow.pop %v2786
    %v2788 = vmul.f32 %v2571, 1.442695
    %v2789 = vpow.pop %v2788
    %v2790 = vmul.f32 %v2572, 1.442695
    %v2791 = vpow.pop %v2790
    %v2792 = vmul.f32 %v2573, 1.442695
    %v2793 = vpow.pop %v2792
    %v2794 = vmul.f32 %v2574, 1.442695
    %v2795 = vpow.pop %v2794
    %v2796 = vmul.f32 %v2575, 1.442695
    %v2797 = vpow.pop %v2796
    %v2798 = vmul.f32 %v2576, 1.442695
    %v2799 = vpow.pop %v2798
    %v2800 = vmul.f32 %v2577, 1.442695
    %v2801 = vpow.pop %v2800
    %v2802 = vmul.f32 %v2578, 1.442695
    %v2803 = vpow.pop %v2802
    %v2804 = vmul.f32 %v2579, 1.442695
    %v2805 = vpow.pop %v2804
    %v2806 = vmul.f32 %v2580, 1.442695
    %v2807 = vpow.pop %v2806
    %v2808 = vmul.f32 %v2581, 1.442695
    %v2809 = vpow.pop %v2808
    %v2810 = vmul.f32 %v2582, 1.442695
    %v2811 = vpow.pop %v2810
    %v2812 = vmul.f32 %v2583, 1.442695
    %v2813 = vpow.pop %v2812
    %v2814 = vmul.f32 %v2584, 1.442695
    %v2815 = vpow.pop %v2814
    %v2816 = vmul.f32 %v2585, 1.442695
    %v2817 = vpow.pop %v2816
    %v2818 = vmul.f32 %v2586, 1.442695
    %v2819 = vpow.pop %v2818
    %v2820 = vmul.f32 %v2587, 1.442695
    %v2821 = vpow.pop %v2820
    %v2822 = vmul.f32 %v2588, 1.442695
    %v2823 = vpow.pop %v2822
    %v2824 = vmul.f32 %v2589, 1.442695
    %v2825 = vpow.pop %v2824
    %v2826 = vmul.f32 %v2590, 1.442695
    %v2827 = vpow.pop %v2826
    %v2828 = vmul.f32 %v2591, 1.442695
    %v2829 = vpow.pop %v2828
    %v2830 = vmul.f32 %v2592, 1.442695
    %v2831 = vpow.pop %v2830
    %v2832 = vmul.f32 %v2593, 1.442695
    %v2833 = vpow.pop %v2832
    %v2834 = vmul.f32 %v2594, 1.442695
    %v2835 = vpow.pop %v2834
    %v2836 = vmul.f32 %v2595, 1.442695
    %v2837 = vpow.pop %v2836
    %v2838 = vmul.f32 %v2596, 1.442695
    %v2839 = vpow.pop %v2838
    %v2840 = vmul.f32 %v2597, 1.442695
    %v2841 = vpow.pop %v2840
    %v2842 = vmul.f32 %v2598, 1.442695
    %v2843 = vpow.pop %v2842
    %v2844 = vmul.f32 %v2599, 1.442695
    %v2845 = vpow.pop %v2844
    %v2846 = vmul.f32 %v2600, 1.442695
    %v2847 = vpow.pop %v2846
    %v2848 = vmul.f32 %v2601, 1.442695
    %v2849 = vpow.pop %v2848
    %v2850 = vmul.f32 %v2602, 1.442695
    %v2851 = vpow.pop %v2850
    %v2852 = vmul.f32 %v2603, 1.442695
    %v2853 = vpow.pop %v2852
    %v2854 = vmul.f32 %v2604, 1.442695
    %v2855 = vpow.pop %v2854
    %v2856 = vmul.f32 %v2605, 1.442695
    %v2857 = vpow.pop %v2856
    %v2858 = vmul.f32 %v2606, 1.442695
    %v2859 = vpow.pop %v2858
    %v2860 = vmul.f32 %v2607, 1.442695
    %v2861 = vpow.pop %v2860
    %v2862 = vmul.f32 %v2608, 1.442695
    %v2863 = vpow.pop %v2862
    %v2864 = vmul.f32 %v2609, 1.442695
    %v2865 = vpow.pop %v2864
    %v2866 = vadd.f32 %v2611, %v2613
    %2867 = vadd.xlane.f32.xlu0 %v2866
    %v2868 = vpop.xlane.xlu0 %2867
    %v2869 = vadd.f32 %v2615, %v2617
    %2870 = vadd.xlane.f32.xlu0 %v2869
    %v2871 = vpop.xlane.xlu0 %2870
    %v2872 = vadd.f32 %v2619, %v2621
    %2873 = vadd.xlane.f32.xlu0 %v2872
    %v2874 = vpop.xlane.xlu0 %2873
    %v2875 = vadd.f32 %v2623, %v2625
    %2876 = vadd.xlane.f32.xlu0 %v2875
    %v2877 = vpop.xlane.xlu0 %2876
    %v2878 = vadd.f32 %v2627, %v2629
    %2879 = vadd.xlane.f32.xlu0 %v2878
    %v2880 = vpop.xlane.xlu0 %2879
    %v2881 = vadd.f32 %v2631, %v2633
    %2882 = vadd.xlane.f32.xlu0 %v2881
    %v2883 = vpop.xlane.xlu0 %2882
    %v2884 = vadd.f32 %v2635, %v2637
    %2885 = vadd.xlane.f32.xlu0 %v2884
    %v2886 = vpop.xlane.xlu0 %2885
    %v2887 = vadd.f32 %v2639, %v2641
    %2888 = vadd.xlane.f32.xlu0 %v2887
    %v2889 = vpop.xlane.xlu0 %2888
    %v2890 = vadd.f32 %v2643, %v2645
    %2891 = vadd.xlane.f32.xlu0 %v2890
    %v2892 = vpop.xlane.xlu0 %2891
    %v2893 = vadd.f32 %v2647, %v2649
    %2894 = vadd.xlane.f32.xlu0 %v2893
    %v2895 = vpop.xlane.xlu0 %2894
    %v2896 = vadd.f32 %v2651, %v2653
    %2897 = vadd.xlane.f32.xlu0 %v2896
    %v2898 = vpop.xlane.xlu0 %2897
    %v2899 = vadd.f32 %v2655, %v2657
    %2900 = vadd.xlane.f32.xlu0 %v2899
    %v2901 = vpop.xlane.xlu0 %2900
    %v2902 = vadd.f32 %v2659, %v2661
    %2903 = vadd.xlane.f32.xlu0 %v2902
    %v2904 = vpop.xlane.xlu0 %2903
    %v2905 = vadd.f32 %v2663, %v2665
    %2906 = vadd.xlane.f32.xlu0 %v2905
    %v2907 = vpop.xlane.xlu0 %2906
    %v2908 = vadd.f32 %v2667, %v2669
    %2909 = vadd.xlane.f32.xlu0 %v2908
    %v2910 = vpop.xlane.xlu0 %2909
    %v2911 = vadd.f32 %v2671, %v2673
    %2912 = vadd.xlane.f32.xlu0 %v2911
    %v2913 = vpop.xlane.xlu0 %2912
    %v2914 = vadd.f32 %v2675, %v2677
    %2915 = vadd.xlane.f32.xlu0 %v2914
    %v2916 = vpop.xlane.xlu0 %2915
    %v2917 = vadd.f32 %v2679, %v2681
    %2918 = vadd.xlane.f32.xlu0 %v2917
    %v2919 = vpop.xlane.xlu0 %2918
    %v2920 = vadd.f32 %v2683, %v2685
    %2921 = vadd.xlane.f32.xlu0 %v2920
    %v2922 = vpop.xlane.xlu0 %2921
    %v2923 = vadd.f32 %v2687, %v2689
    %2924 = vadd.xlane.f32.xlu0 %v2923
    %v2925 = vpop.xlane.xlu0 %2924
    %v2926 = vadd.f32 %v2691, %v2693
    %2927 = vadd.xlane.f32.xlu0 %v2926
    %v2928 = vpop.xlane.xlu0 %2927
    %v2929 = vadd.f32 %v2695, %v2697
    %2930 = vadd.xlane.f32.xlu0 %v2929
    %v2931 = vpop.xlane.xlu0 %2930
    %v2932 = vadd.f32 %v2699, %v2701
    %2933 = vadd.xlane.f32.xlu0 %v2932
    %v2934 = vpop.xlane.xlu0 %2933
    %v2935 = vadd.f32 %v2703, %v2705
    %2936 = vadd.xlane.f32.xlu0 %v2935
    %v2937 = vpop.xlane.xlu0 %2936
    %v2938 = vadd.f32 %v2707, %v2709
    %2939 = vadd.xlane.f32.xlu0 %v2938
    %v2940 = vpop.xlane.xlu0 %2939
    %v2941 = vadd.f32 %v2711, %v2713
    %2942 = vadd.xlane.f32.xlu0 %v2941
    %v2943 = vpop.xlane.xlu0 %2942
    %v2944 = vadd.f32 %v2715, %v2717
    %2945 = vadd.xlane.f32.xlu0 %v2944
    %v2946 = vpop.xlane.xlu0 %2945
    %v2947 = vadd.f32 %v2719, %v2721
    %2948 = vadd.xlane.f32.xlu0 %v2947
    %v2949 = vpop.xlane.xlu0 %2948
    %v2950 = vadd.f32 %v2723, %v2725
    %2951 = vadd.xlane.f32.xlu0 %v2950
    %v2952 = vpop.xlane.xlu0 %2951
    %v2953 = vadd.f32 %v2727, %v2729
    %2954 = vadd.xlane.f32.xlu0 %v2953
    %v2955 = vpop.xlane.xlu0 %2954
    %v2956 = vadd.f32 %v2731, %v2733
    %2957 = vadd.xlane.f32.xlu0 %v2956
    %v2958 = vpop.xlane.xlu0 %2957
    %v2959 = vadd.f32 %v2735, %v2737
    %2960 = vadd.xlane.f32.xlu0 %v2959
    %v2961 = vpop.xlane.xlu0 %2960
    %v2962 = vadd.f32 %v2739, %v2741
    %2963 = vadd.xlane.f32.xlu0 %v2962
    %v2964 = vpop.xlane.xlu0 %2963
    %v2965 = vadd.f32 %v2743, %v2745
    %2966 = vadd.xlane.f32.xlu0 %v2965
    %v2967 = vpop.xlane.xlu0 %2966
    %v2968 = vadd.f32 %v2747, %v2749
    %2969 = vadd.xlane.f32.xlu0 %v2968
    %v2970 = vpop.xlane.xlu0 %2969
    %v2971 = vadd.f32 %v2751, %v2753
    %2972 = vadd.xlane.f32.xlu0 %v2971
    %v2973 = vpop.xlane.xlu0 %2972
    %v2974 = vadd.f32 %v2755, %v2757
    %2975 = vadd.xlane.f32.xlu0 %v2974
    %v2976 = vpop.xlane.xlu0 %2975
    %v2977 = vadd.f32 %v2759, %v2761
    %2978 = vadd.xlane.f32.xlu0 %v2977
    %v2979 = vpop.xlane.xlu0 %2978
    %v2980 = vadd.f32 %v2763, %v2765
    %2981 = vadd.xlane.f32.xlu0 %v2980
    %v2982 = vpop.xlane.xlu0 %2981
    %v2983 = vadd.f32 %v2767, %v2769
    %2984 = vadd.xlane.f32.xlu0 %v2983
    %v2985 = vpop.xlane.xlu0 %2984
    %v2986 = vadd.f32 %v2771, %v2773
    %2987 = vadd.xlane.f32.xlu0 %v2986
    %v2988 = vpop.xlane.xlu0 %2987
    %v2989 = vadd.f32 %v2775, %v2777
    %2990 = vadd.xlane.f32.xlu0 %v2989
    %v2991 = vpop.xlane.xlu0 %2990
    %v2992 = vadd.f32 %v2779, %v2781
    %2993 = vadd.xlane.f32.xlu0 %v2992
    %v2994 = vpop.xlane.xlu0 %2993
    %v2995 = vadd.f32 %v2783, %v2785
    %2996 = vadd.xlane.f32.xlu0 %v2995
    %v2997 = vpop.xlane.xlu0 %2996
    %v2998 = vadd.f32 %v2787, %v2789
    %2999 = vadd.xlane.f32.xlu0 %v2998
    %v3000 = vpop.xlane.xlu0 %2999
    %v3001 = vadd.f32 %v2791, %v2793
    %3002 = vadd.xlane.f32.xlu0 %v3001
    %v3003 = vpop.xlane.xlu0 %3002
    %v3004 = vadd.f32 %v2795, %v2797
    %3005 = vadd.xlane.f32.xlu0 %v3004
    %v3006 = vpop.xlane.xlu0 %3005
    %v3007 = vadd.f32 %v2799, %v2801
    %3008 = vadd.xlane.f32.xlu0 %v3007
    %v3009 = vpop.xlane.xlu0 %3008
    %v3010 = vadd.f32 %v2803, %v2805
    %3011 = vadd.xlane.f32.xlu0 %v3010
    %v3012 = vpop.xlane.xlu0 %3011
    %v3013 = vadd.f32 %v2807, %v2809
    %3014 = vadd.xlane.f32.xlu0 %v3013
    %v3015 = vpop.xlane.xlu0 %3014
    %v3016 = vadd.f32 %v2811, %v2813
    %3017 = vadd.xlane.f32.xlu0 %v3016
    %v3018 = vpop.xlane.xlu0 %3017
    %v3019 = vadd.f32 %v2815, %v2817
    %3020 = vadd.xlane.f32.xlu0 %v3019
    %v3021 = vpop.xlane.xlu0 %3020
    %v3022 = vadd.f32 %v2819, %v2821
    %3023 = vadd.xlane.f32.xlu0 %v3022
    %v3024 = vpop.xlane.xlu0 %3023
    %v3025 = vadd.f32 %v2823, %v2825
    %3026 = vadd.xlane.f32.xlu0 %v3025
    %v3027 = vpop.xlane.xlu0 %3026
    %v3028 = vadd.f32 %v2827, %v2829
    %3029 = vadd.xlane.f32.xlu0 %v3028
    %v3030 = vpop.xlane.xlu0 %3029
    %v3031 = vadd.f32 %v2831, %v2833
    %3032 = vadd.xlane.f32.xlu0 %v3031
    %v3033 = vpop.xlane.xlu0 %3032
    %v3034 = vadd.f32 %v2835, %v2837
    %3035 = vadd.xlane.f32.xlu0 %v3034
    %v3036 = vpop.xlane.xlu0 %3035
    %v3037 = vadd.f32 %v2839, %v2841
    %3038 = vadd.xlane.f32.xlu0 %v3037
    %v3039 = vpop.xlane.xlu0 %3038
    %v3040 = vadd.f32 %v2843, %v2845
    %3041 = vadd.xlane.f32.xlu0 %v3040
    %v3042 = vpop.xlane.xlu0 %3041
    %v3043 = vadd.f32 %v2847, %v2849
    %3044 = vadd.xlane.f32.xlu0 %v3043
    %v3045 = vpop.xlane.xlu0 %3044
    %v3046 = vadd.f32 %v2851, %v2853
    %3047 = vadd.xlane.f32.xlu0 %v3046
    %v3048 = vpop.xlane.xlu0 %3047
    %v3049 = vadd.f32 %v2855, %v2857
    %3050 = vadd.xlane.f32.xlu0 %v3049
    %v3051 = vpop.xlane.xlu0 %3050
    %v3052 = vadd.f32 %v2859, %v2861
    %3053 = vadd.xlane.f32.xlu0 %v3052
    %v3054 = vpop.xlane.xlu0 %3053
    %v3055 = vadd.f32 %v2863, %v2865
    %3056 = vadd.xlane.f32.xlu0 %v3055
    %v3057 = vpop.xlane.xlu0 %3056
    %v3058 = vrcp.pop %v2868
    %v3059 = vrcp.pop %v2871
    %v3060 = vrcp.pop %v2874
    %v3061 = vrcp.pop %v2877
    %v3062 = vrcp.pop %v2880
    %v3063 = vrcp.pop %v2883
    %v3064 = vrcp.pop %v2886
    %v3065 = vrcp.pop %v2889
    %v3066 = vrcp.pop %v2892
    %v3067 = vrcp.pop %v2895
    %v3068 = vrcp.pop %v2898
    %v3069 = vrcp.pop %v2901
    %v3070 = vrcp.pop %v2904
    %v3071 = vrcp.pop %v2907
    %v3072 = vrcp.pop %v2910
    %v3073 = vrcp.pop %v2913
    %v3074 = vrcp.pop %v2916
    %v3075 = vrcp.pop %v2919
    %v3076 = vrcp.pop %v2922
    %v3077 = vrcp.pop %v2925
    %v3078 = vrcp.pop %v2928
    %v3079 = vrcp.pop %v2931
    %v3080 = vrcp.pop %v2934
    %v3081 = vrcp.pop %v2937
    %v3082 = vrcp.pop %v2940
    %v3083 = vrcp.pop %v2943
    %v3084 = vrcp.pop %v2946
    %v3085 = vrcp.pop %v2949
    %v3086 = vrcp.pop %v2952
    %v3087 = vrcp.pop %v2955
    %v3088 = vrcp.pop %v2958
    %v3089 = vrcp.pop %v2961
    %v3090 = vrcp.pop %v2964
    %v3091 = vrcp.pop %v2967
    %v3092 = vrcp.pop %v2970
    %v3093 = vrcp.pop %v2973
    %v3094 = vrcp.pop %v2976
    %v3095 = vrcp.pop %v2979
    %v3096 = vrcp.pop %v2982
    %v3097 = vrcp.pop %v2985
    %v3098 = vrcp.pop %v2988
    %v3099 = vrcp.pop %v2991
    %v3100 = vrcp.pop %v2994
    %v3101 = vrcp.pop %v2997
    %v3102 = vrcp.pop %v3000
    %v3103 = vrcp.pop %v3003
    %v3104 = vrcp.pop %v3006
    %v3105 = vrcp.pop %v3009
    %v3106 = vrcp.pop %v3012
    %v3107 = vrcp.pop %v3015
    %v3108 = vrcp.pop %v3018
    %v3109 = vrcp.pop %v3021
    %v3110 = vrcp.pop %v3024
    %v3111 = vrcp.pop %v3027
    %v3112 = vrcp.pop %v3030
    %v3113 = vrcp.pop %v3033
    %v3114 = vrcp.pop %v3036
    %v3115 = vrcp.pop %v3039
    %v3116 = vrcp.pop %v3042
    %v3117 = vrcp.pop %v3045
    %v3118 = vrcp.pop %v3048
    %v3119 = vrcp.pop %v3051
    %v3120 = vrcp.pop %v3054
    %v3121 = vrcp.pop %v3057
    %v3122 = vmul.f32 %v2611, %v3058
    %v3123 = vmul.f32 %v2613, %v3058
    %v3124 = vmul.f32 %v2615, %v3059
    %v3125 = vmul.f32 %v2617, %v3059
    %v3126 = vmul.f32 %v2619, %v3060
    %v3127 = vmul.f32 %v2621, %v3060
    %v3128 = vmul.f32 %v2623, %v3061
    %v3129 = vmul.f32 %v2625, %v3061
    %v3130 = vmul.f32 %v2627, %v3062
    %v3131 = vmul.f32 %v2629, %v3062
    %v3132 = vmul.f32 %v2631, %v3063
    %v3133 = vmul.f32 %v2633, %v3063
    %v3134 = vmul.f32 %v2635, %v3064
    %v3135 = vmul.f32 %v2637, %v3064
    %v3136 = vmul.f32 %v2639, %v3065
    %v3137 = vmul.f32 %v2641, %v3065
    %v3138 = vmul.f32 %v2643, %v3066
    %v3139 = vmul.f32 %v2645, %v3066
    %v3140 = vmul.f32 %v2647, %v3067
    %v3141 = vmul.f32 %v2649, %v3067
    %v3142 = vmul.f32 %v2651, %v3068
    %v3143 = vmul.f32 %v2653, %v3068
    %v3144 = vmul.f32 %v2655, %v3069
    %v3145 = vmul.f32 %v2657, %v3069
    %v3146 = vmul.f32 %v2659, %v3070
    %v3147 = vmul.f32 %v2661, %v3070
    %v3148 = vmul.f32 %v2663, %v3071
    %v3149 = vmul.f32 %v2665, %v3071
    %v3150 = vmul.f32 %v2667, %v3072
    %v3151 = vmul.f32 %v2669, %v3072
    %v3152 = vmul.f32 %v2671, %v3073
    %v3153 = vmul.f32 %v2673, %v3073
    %v3154 = vmul.f32 %v2675, %v3074
    %v3155 = vmul.f32 %v2677, %v3074
    %v3156 = vmul.f32 %v2679, %v3075
    %v3157 = vmul.f32 %v2681, %v3075
    %v3158 = vmul.f32 %v2683, %v3076
    %v3159 = vmul.f32 %v2685, %v3076
    %v3160 = vmul.f32 %v2687, %v3077
    %v3161 = vmul.f32 %v2689, %v3077
    %v3162 = vmul.f32 %v2691, %v3078
    %v3163 = vmul.f32 %v2693, %v3078
    %v3164 = vmul.f32 %v2695, %v3079
    %v3165 = vmul.f32 %v2697, %v3079
    %v3166 = vmul.f32 %v2699, %v3080
    %v3167 = vmul.f32 %v2701, %v3080
    %v3168 = vmul.f32 %v2703, %v3081
    %v3169 = vmul.f32 %v2705, %v3081
    %v3170 = vmul.f32 %v2707, %v3082
    %v3171 = vmul.f32 %v2709, %v3082
    %v3172 = vmul.f32 %v2711, %v3083
    %v3173 = vmul.f32 %v2713, %v3083
    %v3174 = vmul.f32 %v2715, %v3084
    %v3175 = vmul.f32 %v2717, %v3084
    %v3176 = vmul.f32 %v2719, %v3085
    %v3177 = vmul.f32 %v2721, %v3085
    %v3178 = vmul.f32 %v2723, %v3086
    %v3179 = vmul.f32 %v2725, %v3086
    %v3180 = vmul.f32 %v2727, %v3087
    %v3181 = vmul.f32 %v2729, %v3087
    %v3182 = vmul.f32 %v2731, %v3088
    %v3183 = vmul.f32 %v2733, %v3088
    %v3184 = vmul.f32 %v2735, %v3089
    %v3185 = vmul.f32 %v2737, %v3089
    %v3186 = vmul.f32 %v2739, %v3090
    %v3187 = vmul.f32 %v2741, %v3090
    %v3188 = vmul.f32 %v2743, %v3091
    %v3189 = vmul.f32 %v2745, %v3091
    %v3190 = vmul.f32 %v2747, %v3092
    %v3191 = vmul.f32 %v2749, %v3092
    %v3192 = vmul.f32 %v2751, %v3093
    %v3193 = vmul.f32 %v2753, %v3093
    %v3194 = vmul.f32 %v2755, %v3094
    %v3195 = vmul.f32 %v2757, %v3094
    %v3196 = vmul.f32 %v2759, %v3095
    %v3197 = vmul.f32 %v2761, %v3095
    %v3198 = vmul.f32 %v2763, %v3096
    %v3199 = vmul.f32 %v2765, %v3096
    %v3200 = vmul.f32 %v2767, %v3097
    %v3201 = vmul.f32 %v2769, %v3097
    %v3202 = vmul.f32 %v2771, %v3098
    %v3203 = vmul.f32 %v2773, %v3098
    %v3204 = vmul.f32 %v2775, %v3099
    %v3205 = vmul.f32 %v2777, %v3099
    %v3206 = vmul.f32 %v2779, %v3100
    %v3207 = vmul.f32 %v2781, %v3100
    %v3208 = vmul.f32 %v2783, %v3101
    %v3209 = vmul.f32 %v2785, %v3101
    %v3210 = vmul.f32 %v2787, %v3102
    %v3211 = vmul.f32 %v2789, %v3102
    %v3212 = vmul.f32 %v2791, %v3103
    %v3213 = vmul.f32 %v2793, %v3103
    %v3214 = vmul.f32 %v2795, %v3104
    %v3215 = vmul.f32 %v2797, %v3104
    %v3216 = vmul.f32 %v2799, %v3105
    %v3217 = vmul.f32 %v2801, %v3105
    %v3218 = vmul.f32 %v2803, %v3106
    %v3219 = vmul.f32 %v2805, %v3106
    %v3220 = vmul.f32 %v2807, %v3107
    %v3221 = vmul.f32 %v2809, %v3107
    %v3222 = vmul.f32 %v2811, %v3108
    %v3223 = vmul.f32 %v2813, %v3108
    %v3224 = vmul.f32 %v2815, %v3109
    %v3225 = vmul.f32 %v2817, %v3109
    %v3226 = vmul.f32 %v2819, %v3110
    %v3227 = vmul.f32 %v2821, %v3110
    %v3228 = vmul.f32 %v2823, %v3111
    %v3229 = vmul.f32 %v2825, %v3111
    %v3230 = vmul.f32 %v2827, %v3112
    %v3231 = vmul.f32 %v2829, %v3112
    %v3232 = vmul.f32 %v2831, %v3113
    %v3233 = vmul.f32 %v2833, %v3113
    %v3234 = vmul.f32 %v2835, %v3114
    %v3235 = vmul.f32 %v2837, %v3114
    %v3236 = vmul.f32 %v2839, %v3115
    %v3237 = vmul.f32 %v2841, %v3115
    %v3238 = vmul.f32 %v2843, %v3116
    %v3239 = vmul.f32 %v2845, %v3116
    %v3240 = vmul.f32 %v2847, %v3117
    %v3241 = vmul.f32 %v2849, %v3117
    %v3242 = vmul.f32 %v2851, %v3118
    %v3243 = vmul.f32 %v2853, %v3118
    %v3244 = vmul.f32 %v2855, %v3119
    %v3245 = vmul.f32 %v2857, %v3119
    %v3246 = vmul.f32 %v2859, %v3120
    %v3247 = vmul.f32 %v2861, %v3120
    %v3248 = vmul.f32 %v2863, %v3121
    %v3249 = vmul.f32 %v2865, %v3121
    %3250 = vmatprep.subr.mxu0 0.0
    %3251 = vmatpush1.msra.mxu0 %v1138
    %3252 = vmatprep.subr.mxu0 0.0
    %3253 = vmatpush1.msra.mxu0 %v1143
    %3254 = vmatprep.subr.mxu0 0.0
    %3255 = vmatpush1.msra.mxu0 %v1148
    %3256 = vmatprep.subr.mxu0 0.0
    %3257 = vmatpush1.msra.mxu0 %v1153
    %3258 = vmatprep.subr.mxu0 0.0
    %3259 = vmatpush1.msra.mxu0 %v1158
    %3260 = vmatprep.subr.mxu0 0.0
    %3261 = vmatpush1.msra.mxu0 %v1163
    %3262 = vmatprep.subr.mxu0 0.0
    %3263 = vmatpush1.msra.mxu0 %v1168
    %3264 = vmatprep.subr.mxu0 0.0
    %3265 = vmatpush1.msra.mxu0 %v1173
    %3266 = vmatprep.subr.mxu0 0.0
    %3267 = vmatpush1.msra.mxu0 %v1178
    %3268 = vmatprep.subr.mxu0 0.0
    %3269 = vmatpush1.msra.mxu0 %v1183
    %3270 = vmatprep.subr.mxu0 0.0
    %3271 = vmatpush1.msra.mxu0 %v1188
    %3272 = vmatprep.subr.mxu0 0.0
    %3273 = vmatpush1.msra.mxu0 %v1193
    %3274 = vmatprep.subr.mxu0 0.0
    %3275 = vmatpush1.msra.mxu0 %v1198
    %3276 = vmatprep.subr.mxu0 0.0
    %3277 = vmatpush1.msra.mxu0 %v1203
    %3278 = vmatprep.subr.mxu0 0.0
    %3279 = vmatpush1.msra.mxu0 %v1208
    %3280 = vmatprep.subr.mxu0 0.0
    %3281 = vmatpush1.msra.mxu0 %v1213
    %3282 = vmatprep.subr.mxu0 0.0
    %3283 = vmatpush1.msra.mxu0 %v1218
    %3284 = vmatprep.subr.mxu0 0.0
    %3285 = vmatpush1.msra.mxu0 %v1223
    %3286 = vmatprep.subr.mxu0 0.0
    %3287 = vmatpush1.msra.mxu0 %v1228
    %3288 = vmatprep.subr.mxu0 0.0
    %3289 = vmatpush1.msra.mxu0 %v1233
    %3290 = vmatprep.subr.mxu0 0.0
    %3291 = vmatpush1.msra.mxu0 %v1238
    %3292 = vmatprep.subr.mxu0 0.0
    %3293 = vmatpush1.msra.mxu0 %v1243
    %3294 = vmatprep.subr.mxu0 0.0
    %3295 = vmatpush1.msra.mxu0 %v1248
    %3296 = vmatprep.subr.mxu0 0.0
    %3297 = vmatpush1.msra.mxu0 %v1253
    %3298 = vmatprep.subr.mxu0 0.0
    %3299 = vmatpush1.msra.mxu0 %v1258
    %3300 = vmatprep.subr.mxu0 0.0
    %3301 = vmatpush1.msra.mxu0 %v1263
    %3302 = vmatprep.subr.mxu0 0.0
    %3303 = vmatpush1.msra.mxu0 %v1268
    %3304 = vmatprep.subr.mxu0 0.0
    %3305 = vmatpush1.msra.mxu0 %v1273
    %3306 = vmatprep.subr.mxu0 0.0
    %3307 = vmatpush1.msra.mxu0 %v1278
    %3308 = vmatprep.subr.mxu0 0.0
    %3309 = vmatpush1.msra.mxu0 %v1283
    %3310 = vmatprep.subr.mxu0 0.0
    %3311 = vmatpush1.msra.mxu0 %v1288
    %3312 = vmatprep.subr.mxu0 0.0
    %3313 = vmatpush1.msra.mxu0 %v1293
    %3314 = vmatprep.mubr.f32.mxu0 %v3123
    %3315 = vmatmul.mubr.f32.gmra.mrb[0].mxu0 %v3122
    %v3316 = vpop.f32.mrb[0].mxu0
    %v3317 = vadd.f32 %v104, %v3316
    %v3318 = vpop.f32.mrb[0].mxu0
    %3319 = vmatprep.mubr.f32.mxu0 %v3125
    %3320 = vmatmul.mubr.f32.gmra.mrb[0].mxu0 %v3124
    %v3321 = vpop.f32.mrb[0].mxu0
    %v3322 = vadd.f32 %v105, %v3321
    %v3323 = vpop.f32.mrb[0].mxu0
    %3324 = vmatprep.mubr.f32.mxu0 %v3127
    %3325 = vmatmul.mubr.f32.gmra.mrb[0].mxu0 %v3126
    %v3326 = vpop.f32.mrb[0].mxu0
    %v3327 = vadd.f32 %v106, %v3326
    %v3328 = vpop.f32.mrb[0].mxu0
    %3329 = vmatprep.mubr.f32.mxu0 %v3129
    %3330 = vmatmul.mubr.f32.gmra.mrb[0].mxu0 %v3128
    %v3331 = vpop.f32.mrb[0].mxu0
    %v3332 = vadd.f32 %v107, %v3331
    %v3333 = vpop.f32.mrb[0].mxu0
    %3334 = vmatprep.mubr.f32.mxu0 %v3131
    %3335 = vmatmul.mubr.f32.gmra.mrb[0].mxu0 %v3130
    %v3336 = vpop.f32.mrb[0].mxu0
    %v3337 = vadd.f32 %v108, %v3336
    %v3338 = vpop.f32.mrb[0].mxu0
    %3339 = vmatprep.mubr.f32.mxu0 %v3133
    %3340 = vmatmul.mubr.f32.gmra.mrb[0].mxu0 %v3132
    %v3341 = vpop.f32.mrb[0].mxu0
    %v3342 = vadd.f32 %v109, %v3341
    %v3343 = vpop.f32.mrb[0].mxu0
    %3344 = vmatprep.mubr.f32.mxu0 %v3135
    %3345 = vmatmul.mubr.f32.gmra.mrb[0].mxu0 %v3134
    %v3346 = vpop.f32.mrb[0].mxu0
    %v3347 = vadd.f32 %v110, %v3346
    %v3348 = vpop.f32.mrb[0].mxu0
    %3349 = vmatprep.mubr.f32.mxu0 %v3137
    %3350 = vmatmul.mubr.f32.gmra.mrb[0].mxu0 %v3136
    %v3351 = vpop.f32.mrb[0].mxu0
    %v3352 = vadd.f32 %v111, %v3351
    %v3353 = vpop.f32.mrb[0].mxu0
    %3354 = vmatprep.mubr.f32.mxu0 %v3139
    %3355 = vmatmul.mubr.f32.gmra.mrb[0].mxu0 %v3138
    %v3356 = vpop.f32.mrb[0].mxu0
    %v3357 = vadd.f32 %v112, %v3356
    %v3358 = vpop.f32.mrb[0].mxu0
    %3359 = vmatprep.mubr.f32.mxu0 %v3141
    %3360 = vmatmul.mubr.f32.gmra.mrb[0].mxu0 %v3140
    %v3361 = vpop.f32.mrb[0].mxu0
    %v3362 = vadd.f32 %v113, %v3361
    %v3363 = vpop.f32.mrb[0].mxu0
    %3364 = vmatprep.mubr.f32.mxu0 %v3143
    %3365 = vmatmul.mubr.f32.gmra.mrb[0].mxu0 %v3142
    %v3366 = vpop.f32.mrb[0].mxu0
    %v3367 = vadd.f32 %v114, %v3366
    %v3368 = vpop.f32.mrb[0].mxu0
    %3369 = vmatprep.mubr.f32.mxu0 %v3145
    %3370 = vmatmul.mubr.f32.gmra.mrb[0].mxu0 %v3144
    %v3371 = vpop.f32.mrb[0].mxu0
    %v3372 = vadd.f32 %v115, %v3371
    %v3373 = vpop.f32.mrb[0].mxu0
    %3374 = vmatprep.mubr.f32.mxu0 %v3147
    %3375 = vmatmul.mubr.f32.gmra.mrb[0].mxu0 %v3146
    %v3376 = vpop.f32.mrb[0].mxu0
    %v3377 = vadd.f32 %v116, %v3376
    %v3378 = vpop.f32.mrb[0].mxu0
    %3379 = vmatprep.mubr.f32.mxu0 %v3149
    %3380 = vmatmul.mubr.f32.gmra.mrb[0].mxu0 %v3148
    %v3381 = vpop.f32.mrb[0].mxu0
    %v3382 = vadd.f32 %v117, %v3381
    %v3383 = vpop.f32.mrb[0].mxu0
    %3384 = vmatprep.mubr.f32.mxu0 %v3151
    %3385 = vmatmul.mubr.f32.gmra.mrb[0].mxu0 %v3150
    %v3386 = vpop.f32.mrb[0].mxu0
    %v3387 = vadd.f32 %v118, %v3386
    %v3388 = vpop.f32.mrb[0].mxu0
    %3389 = vmatprep.mubr.f32.mxu0 %v3153
    %3390 = vmatmul.mubr.f32.gmra.mrb[0].mxu0 %v3152
    %v3391 = vpop.f32.mrb[0].mxu0
    %v3392 = vadd.f32 %v119, %v3391
    %v3393 = vpop.f32.mrb[0].mxu0
    %3394 = vmatprep.mubr.f32.mxu0 %v3155
    %3395 = vmatmul.mubr.f32.gmra.mrb[0].mxu0 %v3154
    %v3396 = vpop.f32.mrb[0].mxu0
    %v3397 = vadd.f32 %v120, %v3396
    %v3398 = vpop.f32.mrb[0].mxu0
    %3399 = vmatprep.mubr.f32.mxu0 %v3157
    %3400 = vmatmul.mubr.f32.gmra.mrb[0].mxu0 %v3156
    %v3401 = vpop.f32.mrb[0].mxu0
    %v3402 = vadd.f32 %v121, %v3401
    %v3403 = vpop.f32.mrb[0].mxu0
    %3404 = vmatprep.mubr.f32.mxu0 %v3159
    %3405 = vmatmul.mubr.f32.gmra.mrb[0].mxu0 %v3158
    %v3406 = vpop.f32.mrb[0].mxu0
    %v3407 = vadd.f32 %v122, %v3406
    %v3408 = vpop.f32.mrb[0].mxu0
    %3409 = vmatprep.mubr.f32.mxu0 %v3161
    %3410 = vmatmul.mubr.f32.gmra.mrb[0].mxu0 %v3160
    %v3411 = vpop.f32.mrb[0].mxu0
    %v3412 = vadd.f32 %v123, %v3411
    %v3413 = vpop.f32.mrb[0].mxu0
    %3414 = vmatprep.mubr.f32.mxu0 %v3163
    %3415 = vmatmul.mubr.f32.gmra.mrb[0].mxu0 %v3162
    %v3416 = vpop.f32.mrb[0].mxu0
    %v3417 = vadd.f32 %v124, %v3416
    %v3418 = vpop.f32.mrb[0].mxu0
    %3419 = vmatprep.mubr.f32.mxu0 %v3165
    %3420 = vmatmul.mubr.f32.gmra.mrb[0].mxu0 %v3164
    %v3421 = vpop.f32.mrb[0].mxu0
    %v3422 = vadd.f32 %v125, %v3421
    %v3423 = vpop.f32.mrb[0].mxu0
    %3424 = vmatprep.mubr.f32.mxu0 %v3167
    %3425 = vmatmul.mubr.f32.gmra.mrb[0].mxu0 %v3166
    %v3426 = vpop.f32.mrb[0].mxu0
    %v3427 = vadd.f32 %v126, %v3426
    %v3428 = vpop.f32.mrb[0].mxu0
    %3429 = vmatprep.mubr.f32.mxu0 %v3169
    %3430 = vmatmul.mubr.f32.gmra.mrb[0].mxu0 %v3168
    %v3431 = vpop.f32.mrb[0].mxu0
    %v3432 = vadd.f32 %v127, %v3431
    %v3433 = vpop.f32.mrb[0].mxu0
    %3434 = vmatprep.mubr.f32.mxu0 %v3171
    %3435 = vmatmul.mubr.f32.gmra.mrb[0].mxu0 %v3170
    %v3436 = vpop.f32.mrb[0].mxu0
    %v3437 = vadd.f32 %v128, %v3436
    %v3438 = vpop.f32.mrb[0].mxu0
    %3439 = vmatprep.mubr.f32.mxu0 %v3173
    %3440 = vmatmul.mubr.f32.gmra.mrb[0].mxu0 %v3172
    %v3441 = vpop.f32.mrb[0].mxu0
    %v3442 = vadd.f32 %v129, %v3441
    %v3443 = vpop.f32.mrb[0].mxu0
    %3444 = vmatprep.mubr.f32.mxu0 %v3175
    %3445 = vmatmul.mubr.f32.gmra.mrb[0].mxu0 %v3174
    %v3446 = vpop.f32.mrb[0].mxu0
    %v3447 = vadd.f32 %v130, %v3446
    %v3448 = vpop.f32.mrb[0].mxu0
    %3449 = vmatprep.mubr.f32.mxu0 %v3177
    %3450 = vmatmul.mubr.f32.gmra.mrb[0].mxu0 %v3176
    %v3451 = vpop.f32.mrb[0].mxu0
    %v3452 = vadd.f32 %v131, %v3451
    %v3453 = vpop.f32.mrb[0].mxu0
    %3454 = vmatprep.mubr.f32.mxu0 %v3179
    %3455 = vmatmul.mubr.f32.gmra.mrb[0].mxu0 %v3178
    %v3456 = vpop.f32.mrb[0].mxu0
    %v3457 = vadd.f32 %v132, %v3456
    %v3458 = vpop.f32.mrb[0].mxu0
    %3459 = vmatprep.mubr.f32.mxu0 %v3181
    %3460 = vmatmul.mubr.f32.gmra.mrb[0].mxu0 %v3180
    %v3461 = vpop.f32.mrb[0].mxu0
    %v3462 = vadd.f32 %v133, %v3461
    %v3463 = vpop.f32.mrb[0].mxu0
    %3464 = vmatprep.mubr.f32.mxu0 %v3183
    %3465 = vmatmul.mubr.f32.gmra.mrb[0].mxu0 %v3182
    %v3466 = vpop.f32.mrb[0].mxu0
    %v3467 = vadd.f32 %v134, %v3466
    %v3468 = vpop.f32.mrb[0].mxu0
    %3469 = vmatprep.mubr.f32.mxu0 %v3185
    %3470 = vmatmul.mubr.f32.gmra.mrb[0].mxu0 %v3184
    %v3471 = vpop.f32.mrb[0].mxu0
    %v3472 = vadd.f32 %v135, %v3471
    %v3473 = vpop.f32.mrb[0].mxu0
    %3474 = vdwg.mxu0
    %3475 = vmatprep.subr.mxu0 0.0
    %3476 = vmatpush1.msra.mxu0 %v1298
    %3477 = vmatprep.subr.mxu0 0.0
    %3478 = vmatpush1.msra.mxu0 %v1303
    %3479 = vmatprep.subr.mxu0 0.0
    %3480 = vmatpush1.msra.mxu0 %v1308
    %3481 = vmatprep.subr.mxu0 0.0
    %3482 = vmatpush1.msra.mxu0 %v1313
    %3483 = vmatprep.subr.mxu0 0.0
    %3484 = vmatpush1.msra.mxu0 %v1318
    %3485 = vmatprep.subr.mxu0 0.0
    %3486 = vmatpush1.msra.mxu0 %v1323
    %3487 = vmatprep.subr.mxu0 0.0
    %3488 = vmatpush1.msra.mxu0 %v1328
    %3489 = vmatprep.subr.mxu0 0.0
    %3490 = vmatpush1.msra.mxu0 %v1333
    %3491 = vmatprep.subr.mxu0 0.0
    %3492 = vmatpush1.msra.mxu0 %v1338
    %3493 = vmatprep.subr.mxu0 0.0
    %3494 = vmatpush1.msra.mxu0 %v1343
    %3495 = vmatprep.subr.mxu0 0.0
    %3496 = vmatpush1.msra.mxu0 %v1348
    %3497 = vmatprep.subr.mxu0 0.0
    %3498 = vmatpush1.msra.mxu0 %v1353
    %3499 = vmatprep.subr.mxu0 0.0
    %3500 = vmatpush1.msra.mxu0 %v1358
    %3501 = vmatprep.subr.mxu0 0.0
    %3502 = vmatpush1.msra.mxu0 %v1363
    %3503 = vmatprep.subr.mxu0 0.0
    %3504 = vmatpush1.msra.mxu0 %v1368
    %3505 = vmatprep.subr.mxu0 0.0
    %3506 = vmatpush1.msra.mxu0 %v1373
    %3507 = vmatprep.subr.mxu0 0.0
    %3508 = vmatpush1.msra.mxu0 %v1378
    %3509 = vmatprep.subr.mxu0 0.0
    %3510 = vmatpush1.msra.mxu0 %v1383
    %3511 = vmatprep.subr.mxu0 0.0
    %3512 = vmatpush1.msra.mxu0 %v1388
    %3513 = vmatprep.subr.mxu0 0.0
    %3514 = vmatpush1.msra.mxu0 %v1393
    %3515 = vmatprep.subr.mxu0 0.0
    %3516 = vmatpush1.msra.mxu0 %v1398
    %3517 = vmatprep.subr.mxu0 0.0
    %3518 = vmatpush1.msra.mxu0 %v1403
    %3519 = vmatprep.subr.mxu0 0.0
    %3520 = vmatpush1.msra.mxu0 %v1408
    %3521 = vmatprep.subr.mxu0 0.0
    %3522 = vmatpush1.msra.mxu0 %v1413
    %3523 = vmatprep.subr.mxu0 0.0
    %3524 = vmatpush1.msra.mxu0 %v1418
    %3525 = vmatprep.subr.mxu0 0.0
    %3526 = vmatpush1.msra.mxu0 %v1423
    %3527 = vmatprep.subr.mxu0 0.0
    %3528 = vmatpush1.msra.mxu0 %v1428
    %3529 = vmatprep.subr.mxu0 0.0
    %3530 = vmatpush1.msra.mxu0 %v1433
    %3531 = vmatprep.subr.mxu0 0.0
    %3532 = vmatpush1.msra.mxu0 %v1438
    %3533 = vmatprep.subr.mxu0 0.0
    %3534 = vmatpush1.msra.mxu0 %v1443
    %3535 = vmatprep.subr.mxu0 0.0
    %3536 = vmatpush1.msra.mxu0 %v1448
    %3537 = vmatprep.subr.mxu0 0.0
    %3538 = vmatpush1.msra.mxu0 %v1453
    %3539 = vmatprep.mubr.f32.mxu0 %v3187
    %3540 = vmatmul.mubr.f32.gmra.mrb[0].mxu0 %v3186
    %v3541 = vpop.f32.mrb[0].mxu0
    %v3542 = vadd.f32 %v136, %v3541
    %v3543 = vpop.f32.mrb[0].mxu0
    %3544 = vmatprep.mubr.f32.mxu0 %v3189
    %3545 = vmatmul.mubr.f32.gmra.mrb[0].mxu0 %v3188
    %v3546 = vpop.f32.mrb[0].mxu0
    %v3547 = vadd.f32 %v137, %v3546
    %v3548 = vpop.f32.mrb[0].mxu0
    %3549 = vmatprep.mubr.f32.mxu0 %v3191
    %3550 = vmatmul.mubr.f32.gmra.mrb[0].mxu0 %v3190
    %v3551 = vpop.f32.mrb[0].mxu0
    %v3552 = vadd.f32 %v138, %v3551
    %v3553 = vpop.f32.mrb[0].mxu0
    %3554 = vmatprep.mubr.f32.mxu0 %v3193
    %3555 = vmatmul.mubr.f32.gmra.mrb[0].mxu0 %v3192
    %v3556 = vpop.f32.mrb[0].mxu0
    %v3557 = vadd.f32 %v139, %v3556
    %v3558 = vpop.f32.mrb[0].mxu0
    %3559 = vmatprep.mubr.f32.mxu0 %v3195
    %3560 = vmatmul.mubr.f32.gmra.mrb[0].mxu0 %v3194
    %v3561 = vpop.f32.mrb[0].mxu0
    %v3562 = vadd.f32 %v140, %v3561
    %v3563 = vpop.f32.mrb[0].mxu0
    %3564 = vmatprep.mubr.f32.mxu0 %v3197
    %3565 = vmatmul.mubr.f32.gmra.mrb[0].mxu0 %v3196
    %v3566 = vpop.f32.mrb[0].mxu0
    %v3567 = vadd.f32 %v141, %v3566
    %v3568 = vpop.f32.mrb[0].mxu0
    %3569 = vmatprep.mubr.f32.mxu0 %v3199
    %3570 = vmatmul.mubr.f32.gmra.mrb[0].mxu0 %v3198
    %v3571 = vpop.f32.mrb[0].mxu0
    %v3572 = vadd.f32 %v142, %v3571
    %v3573 = vpop.f32.mrb[0].mxu0
    %3574 = vmatprep.mubr.f32.mxu0 %v3201
    %3575 = vmatmul.mubr.f32.gmra.mrb[0].mxu0 %v3200
    %v3576 = vpop.f32.mrb[0].mxu0
    %v3577 = vadd.f32 %v143, %v3576
    %v3578 = vpop.f32.mrb[0].mxu0
    %3579 = vmatprep.mubr.f32.mxu0 %v3203
    %3580 = vmatmul.mubr.f32.gmra.mrb[0].mxu0 %v3202
    %v3581 = vpop.f32.mrb[0].mxu0
    %v3582 = vadd.f32 %v144, %v3581
    %v3583 = vpop.f32.mrb[0].mxu0
    %3584 = vmatprep.mubr.f32.mxu0 %v3205
    %3585 = vmatmul.mubr.f32.gmra.mrb[0].mxu0 %v3204
    %v3586 = vpop.f32.mrb[0].mxu0
    %v3587 = vadd.f32 %v145, %v3586
    %v3588 = vpop.f32.mrb[0].mxu0
    %3589 = vmatprep.mubr.f32.mxu0 %v3207
    %3590 = vmatmul.mubr.f32.gmra.mrb[0].mxu0 %v3206
    %v3591 = vpop.f32.mrb[0].mxu0
    %v3592 = vadd.f32 %v146, %v3591
    %v3593 = vpop.f32.mrb[0].mxu0
    %3594 = vmatprep.mubr.f32.mxu0 %v3209
    %3595 = vmatmul.mubr.f32.gmra.mrb[0].mxu0 %v3208
    %v3596 = vpop.f32.mrb[0].mxu0
    %v3597 = vadd.f32 %v147, %v3596
    %v3598 = vpop.f32.mrb[0].mxu0
    %3599 = vmatprep.mubr.f32.mxu0 %v3211
    %3600 = vmatmul.mubr.f32.gmra.mrb[0].mxu0 %v3210
    %v3601 = vpop.f32.mrb[0].mxu0
    %v3602 = vadd.f32 %v148, %v3601
    %v3603 = vpop.f32.mrb[0].mxu0
    %3604 = vmatprep.mubr.f32.mxu0 %v3213
    %3605 = vmatmul.mubr.f32.gmra.mrb[0].mxu0 %v3212
    %v3606 = vpop.f32.mrb[0].mxu0
    %v3607 = vadd.f32 %v149, %v3606
    %v3608 = vpop.f32.mrb[0].mxu0
    %3609 = vmatprep.mubr.f32.mxu0 %v3215
    %3610 = vmatmul.mubr.f32.gmra.mrb[0].mxu0 %v3214
    %v3611 = vpop.f32.mrb[0].mxu0
    %v3612 = vadd.f32 %v150, %v3611
    %v3613 = vpop.f32.mrb[0].mxu0
    %3614 = vmatprep.mubr.f32.mxu0 %v3217
    %3615 = vmatmul.mubr.f32.gmra.mrb[0].mxu0 %v3216
    %v3616 = vpop.f32.mrb[0].mxu0
    %v3617 = vadd.f32 %v151, %v3616
    %v3618 = vpop.f32.mrb[0].mxu0
    %3619 = vmatprep.mubr.f32.mxu0 %v3219
    %3620 = vmatmul.mubr.f32.gmra.mrb[0].mxu0 %v3218
    %v3621 = vpop.f32.mrb[0].mxu0
    %v3622 = vadd.f32 %v152, %v3621
    %v3623 = vpop.f32.mrb[0].mxu0
    %3624 = vmatprep.mubr.f32.mxu0 %v3221
    %3625 = vmatmul.mubr.f32.gmra.mrb[0].mxu0 %v3220
    %v3626 = vpop.f32.mrb[0].mxu0
    %v3627 = vadd.f32 %v153, %v3626
    %v3628 = vpop.f32.mrb[0].mxu0
    %3629 = vmatprep.mubr.f32.mxu0 %v3223
    %3630 = vmatmul.mubr.f32.gmra.mrb[0].mxu0 %v3222
    %v3631 = vpop.f32.mrb[0].mxu0
    %v3632 = vadd.f32 %v154, %v3631
    %v3633 = vpop.f32.mrb[0].mxu0
    %3634 = vmatprep.mubr.f32.mxu0 %v3225
    %3635 = vmatmul.mubr.f32.gmra.mrb[0].mxu0 %v3224
    %v3636 = vpop.f32.mrb[0].mxu0
    %v3637 = vadd.f32 %v155, %v3636
    %v3638 = vpop.f32.mrb[0].mxu0
    %3639 = vmatprep.mubr.f32.mxu0 %v3227
    %3640 = vmatmul.mubr.f32.gmra.mrb[0].mxu0 %v3226
    %v3641 = vpop.f32.mrb[0].mxu0
    %v3642 = vadd.f32 %v156, %v3641
    %v3643 = vpop.f32.mrb[0].mxu0
    %3644 = vmatprep.mubr.f32.mxu0 %v3229
    %3645 = vmatmul.mubr.f32.gmra.mrb[0].mxu0 %v3228
    %v3646 = vpop.f32.mrb[0].mxu0
    %v3647 = vadd.f32 %v157, %v3646
    %v3648 = vpop.f32.mrb[0].mxu0
    %3649 = vmatprep.mubr.f32.mxu0 %v3231
    %3650 = vmatmul.mubr.f32.gmra.mrb[0].mxu0 %v3230
    %v3651 = vpop.f32.mrb[0].mxu0
    %v3652 = vadd.f32 %v158, %v3651
    %v3653 = vpop.f32.mrb[0].mxu0
    %3654 = vmatprep.mubr.f32.mxu0 %v3233
    %3655 = vmatmul.mubr.f32.gmra.mrb[0].mxu0 %v3232
    %v3656 = vpop.f32.mrb[0].mxu0
    %v3657 = vadd.f32 %v159, %v3656
    %v3658 = vpop.f32.mrb[0].mxu0
    %3659 = vmatprep.mubr.f32.mxu0 %v3235
    %3660 = vmatmul.mubr.f32.gmra.mrb[0].mxu0 %v3234
    %v3661 = vpop.f32.mrb[0].mxu0
    %v3662 = vadd.f32 %v160, %v3661
    %v3663 = vpop.f32.mrb[0].mxu0
    %3664 = vmatprep.mubr.f32.mxu0 %v3237
    %3665 = vmatmul.mubr.f32.gmra.mrb[0].mxu0 %v3236
    %v3666 = vpop.f32.mrb[0].mxu0
    %v3667 = vadd.f32 %v161, %v3666
    %v3668 = vpop.f32.mrb[0].mxu0
    %3669 = vmatprep.mubr.f32.mxu0 %v3239
    %3670 = vmatmul.mubr.f32.gmra.mrb[0].mxu0 %v3238
    %v3671 = vpop.f32.mrb[0].mxu0
    %v3672 = vadd.f32 %v162, %v3671
    %v3673 = vpop.f32.mrb[0].mxu0
    %3674 = vmatprep.mubr.f32.mxu0 %v3241
    %3675 = vmatmul.mubr.f32.gmra.mrb[0].mxu0 %v3240
    %v3676 = vpop.f32.mrb[0].mxu0
    %v3677 = vadd.f32 %v163, %v3676
    %v3678 = vpop.f32.mrb[0].mxu0
    %3679 = vmatprep.mubr.f32.mxu0 %v3243
    %3680 = vmatmul.mubr.f32.gmra.mrb[0].mxu0 %v3242
    %v3681 = vpop.f32.mrb[0].mxu0
    %v3682 = vadd.f32 %v164, %v3681
    %v3683 = vpop.f32.mrb[0].mxu0
    %3684 = vmatprep.mubr.f32.mxu0 %v3245
    %3685 = vmatmul.mubr.f32.gmra.mrb[0].mxu0 %v3244
    %v3686 = vpop.f32.mrb[0].mxu0
    %v3687 = vadd.f32 %v165, %v3686
    %v3688 = vpop.f32.mrb[0].mxu0
    %3689 = vmatprep.mubr.f32.mxu0 %v3247
    %3690 = vmatmul.mubr.f32.gmra.mrb[0].mxu0 %v3246
    %v3691 = vpop.f32.mrb[0].mxu0
    %v3692 = vadd.f32 %v166, %v3691
    %v3693 = vpop.f32.mrb[0].mxu0
    %3694 = vmatprep.mubr.f32.mxu0 %v3249
    %3695 = vmatmul.mubr.f32.gmra.mrb[0].mxu0 %v3248
    %v3696 = vpop.f32.mrb[0].mxu0
    %v3697 = vadd.f32 %v167, %v3696
    %v3698 = vpop.f32.mrb[0].mxu0
    %3699 = vdwg.mxu0
    %3700 = vst [vmem:[#allocation15] sm:$0xff] %v3317
    %3701 = vst [vmem:[#allocation15 + $0x8] sm:$0xff] %v3322
    %3702 = vst [vmem:[#allocation15 + $0x10] sm:$0xff] %v3327
    %3703 = vst [vmem:[#allocation15 + $0x18] sm:$0xff] %v3332
    %3704 = vst [vmem:[#allocation15 + $0x20] sm:$0xff] %v3337
    %3705 = vst [vmem:[#allocation15 + $0x28] sm:$0xff] %v3342
    %3706 = vst [vmem:[#allocation15 + $0x30] sm:$0xff] %v3347
    %3707 = vst [vmem:[#allocation15 + $0x38] sm:$0xff] %v3352
    %3708 = vst [vmem:[#allocation15 + $0x40] sm:$0xff] %v3357
    %3709 = vst [vmem:[#allocation15 + $0x48] sm:$0xff] %v3362
    %3710 = vst [vmem:[#allocation15 + $0x50] sm:$0xff] %v3367
    %3711 = vst [vmem:[#allocation15 + $0x58] sm:$0xff] %v3372
    %3712 = vst [vmem:[#allocation15 + $0x60] sm:$0xff] %v3377
    %3713 = vst [vmem:[#allocation15 + $0x68] sm:$0xff] %v3382
    %3714 = vst [vmem:[#allocation15 + $0x70] sm:$0xff] %v3387
    %3715 = vst [vmem:[#allocation15 + $0x78] sm:$0xff] %v3392
    %3716 = vst [vmem:[#allocation15 + $0x80] sm:$0xff] %v3397
    %3717 = vst [vmem:[#allocation15 + $0x88] sm:$0xff] %v3402
    %3718 = vst [vmem:[#allocation15 + $0x90] sm:$0xff] %v3407
    %3719 = vst [vmem:[#allocation15 + $0x98] sm:$0xff] %v3412
    %3720 = vst [vmem:[#allocation15 + $0xa0] sm:$0xff] %v3417
    %3721 = vst [vmem:[#allocation15 + $0xa8] sm:$0xff] %v3422
    %3722 = vst [vmem:[#allocation15 + $0xb0] sm:$0xff] %v3427
    %3723 = vst [vmem:[#allocation15 + $0xb8] sm:$0xff] %v3432
    %3724 = vst [vmem:[#allocation15 + $0xc0] sm:$0xff] %v3437
    %3725 = vst [vmem:[#allocation15 + $0xc8] sm:$0xff] %v3442
    %3726 = vst [vmem:[#allocation15 + $0xd0] sm:$0xff] %v3447
    %3727 = vst [vmem:[#allocation15 + $0xd8] sm:$0xff] %v3452
    %3728 = vst [vmem:[#allocation15 + $0xe0] sm:$0xff] %v3457
    %3729 = vst [vmem:[#allocation15 + $0xe8] sm:$0xff] %v3462
    %3730 = vst [vmem:[#allocation15 + $0xf0] sm:$0xff] %v3467
    %3731 = vst [vmem:[#allocation15 + $0xf8] sm:$0xff] %v3472
    %3732 = vst [vmem:[#allocation15 + $0x100] sm:$0xff] %v3542
    %3733 = vst [vmem:[#allocation15 + $0x108] sm:$0xff] %v3547
    %3734 = vst [vmem:[#allocation15 + $0x110] sm:$0xff] %v3552
    %3735 = vst [vmem:[#allocation15 + $0x118] sm:$0xff] %v3557
    %3736 = vst [vmem:[#allocation15 + $0x120] sm:$0xff] %v3562
    %3737 = vst [vmem:[#allocation15 + $0x128] sm:$0xff] %v3567
    %3738 = vst [vmem:[#allocation15 + $0x130] sm:$0xff] %v3572
    %3739 = vst [vmem:[#allocation15 + $0x138] sm:$0xff] %v3577
    %3740 = vst [vmem:[#allocation15 + $0x140] sm:$0xff] %v3582
    %3741 = vst [vmem:[#allocation15 + $0x148] sm:$0xff] %v3587
    %3742 = vst [vmem:[#allocation15 + $0x150] sm:$0xff] %v3592
    %3743 = vst [vmem:[#allocation15 + $0x158] sm:$0xff] %v3597
    %3744 = vst [vmem:[#allocation15 + $0x160] sm:$0xff] %v3602
    %3745 = vst [vmem:[#allocation15 + $0x168] sm:$0xff] %v3607
    %3746 = vst [vmem:[#allocation15 + $0x170] sm:$0xff] %v3612
    %3747 = vst [vmem:[#allocation15 + $0x178] sm:$0xff] %v3617
    %3748 = vst [vmem:[#allocation15 + $0x180] sm:$0xff] %v3622
    %3749 = vst [vmem:[#allocation15 + $0x188] sm:$0xff] %v3627
    %3750 = vst [vmem:[#allocation15 + $0x190] sm:$0xff] %v3632
    %3751 = vst [vmem:[#allocation15 + $0x198] sm:$0xff] %v3637
    %3752 = vst [vmem:[#allocation15 + $0x1a0] sm:$0xff] %v3642
    %3753 = vst [vmem:[#allocation15 + $0x1a8] sm:$0xff] %v3647
    %3754 = vst [vmem:[#allocation15 + $0x1b0] sm:$0xff] %v3652
    %3755 = vst [vmem:[#allocation15 + $0x1b8] sm:$0xff] %v3657
    %3756 = vst [vmem:[#allocation15 + $0x1c0] sm:$0xff] %v3662
    %3757 = vst [vmem:[#allocation15 + $0x1c8] sm:$0xff] %v3667
    %3758 = vst [vmem:[#allocation15 + $0x1d0] sm:$0xff] %v3672
    %3759 = vst [vmem:[#allocation15 + $0x1d8] sm:$0xff] %v3677
    %3760 = vst [vmem:[#allocation15 + $0x1e0] sm:$0xff] %v3682
    %3761 = vst [vmem:[#allocation15 + $0x1e8] sm:$0xff] %v3687
    %3762 = vst [vmem:[#allocation15 + $0x1f0] sm:$0xff] %v3692
    %3763 = vst [vmem:[#allocation15 + $0x1f8] sm:$0xff] %v3697
    // Predicated region
    $region54: #{tpu_custom_call.1} parent=1 // pred_check
      _
    $region55: #{tpu_custom_call.1} parent=1 // pred_check_branch
      %3765 = sbr.rel (0) target = $region57
    $region56: #{tpu_custom_call.1} parent=1 // pred_region
      %s3767 = ssub.s32 8192, 8192
      %3768 = vsyncadd [#allocation4], %s3767
      %s3769 = sshll.u32 [#allocation11], 4
      %s3770 = int_to_ptr.vmem [resolvable:$true] %s3769
      %3775 = dma.vmem_to_hbm [thread:$0]  %s3770, 8192, %s8, [#allocation4], 128, 128, 8
    $region57: #{tpu_custom_call.1} parent=1 // pred_fallthru
      _
    // Predicated region
    $region58: #{tpu_custom_call.1} parent=1 // pred_check
      _
    $region59: #{tpu_custom_call.1} parent=1 // pred_check_branch
      %3777 = sbr.rel (0) target = $region61
    $region60: #{tpu_custom_call.1} parent=1 // pred_region
      %s3779 = ssub.s32 8192, 8192
      %3780 = vsyncadd [#allocation13], %s3779
      %s3781 = sshll.u32 [#allocation12], 4
      %s3782 = int_to_ptr.vmem [resolvable:$true] %s3781
      %3787 = dma.vmem_to_hbm [thread:$0]  %s3782, 8192, %s9, [#allocation13], 128, 128, 8
    $region61: #{tpu_custom_call.1} parent=1 // pred_fallthru
      _
    // Predicated region
    $region62: #{tpu_custom_call.1} parent=1 // pred_check
      _
    $region63: #{tpu_custom_call.1} parent=1 // pred_check_branch
      %3789 = sbr.rel (0) target = $region65
    $region64: #{tpu_custom_call.1} parent=1 // pred_region
      %s3791 = ssub.s32 8192, 8192
      %3792 = vsyncadd [#allocation13], %s3791
      %s3793 = sshll.u32 [#allocation14], 4
      %s3794 = int_to_ptr.vmem [resolvable:$true] %s3793
      %3799 = dma.vmem_to_hbm [thread:$0]  %s3794, 8192, %s10, [#allocation13], 128, 128, 8
    $region65: #{tpu_custom_call.1} parent=1 // pred_fallthru
      _
    // Predicated region
    $region66: #{tpu_custom_call.1} parent=1 // pred_check
      _
    $region67: #{tpu_custom_call.1} parent=1 // pred_check_branch
      %3801 = sbr.rel (0) target = $region69
    $region68: #{tpu_custom_call.1} parent=1 // pred_region
      %s3803 = ssub.s32 8192, 8192
      %3804 = vsyncadd [#allocation16], %s3803
      %s3805 = sshll.u32 [#allocation15], 4
      %s3806 = int_to_ptr.vmem [resolvable:$true] %s3805
      %3811 = dma.vmem_to_hbm [thread:$0]  %s3806, 8192, %s11, [#allocation16], 128, 128, 8
    $region69: #{tpu_custom_call.1} parent=1 // pred_fallthru
      _
    // Predicated region
    $region70: #{tpu_custom_call.1} parent=1 // pred_check
      _
    $region71: #{tpu_custom_call.1} parent=1 // pred_check_branch
      %3813 = sbr.rel (0) target = $region73
    $region72: #{tpu_custom_call.1} parent=1 // pred_region
      %3814 = dma.done [#allocation4], 8192
    $region73: #{tpu_custom_call.1} parent=1 // pred_fallthru
      _
    // Predicated region
    $region74: #{tpu_custom_call.1} parent=1 // pred_check
      _
    $region75: #{tpu_custom_call.1} parent=1 // pred_check_branch
      %3816 = sbr.rel (0) target = $region77
    $region76: #{tpu_custom_call.1} parent=1 // pred_region
      %3817 = dma.done [#allocation13], 8192
    $region77: #{tpu_custom_call.1} parent=1 // pred_fallthru
      _
    // Predicated region
    $region78: #{tpu_custom_call.1} parent=1 // pred_check
      _
    $region79: #{tpu_custom_call.1} parent=1 // pred_check_branch
      %3819 = sbr.rel (0) target = $region81
    $region80: #{tpu_custom_call.1} parent=1 // pred_region
      %3820 = dma.done [#allocation13], 8192
    $region81: #{tpu_custom_call.1} parent=1 // pred_fallthru
      _
    // Predicated region
    $region82: #{tpu_custom_call.1} parent=1 // pred_check
      _
    $region83: #{tpu_custom_call.1} parent=1 // pred_check_branch
      %3822 = sbr.rel (0) target = $region85
    $region84: #{tpu_custom_call.1} parent=1 // pred_region
      %3823 = dma.done [#allocation16], 8192
    $region85: #{tpu_custom_call.1} parent=1 // pred_fallthru
      _
    %3824 = vsyncpa [#allocation3], 1
    %3825 = vsyncpa [#allocation6], 1
    %3826 = vsyncpa [#allocation9], 1
    %3827 = vsyncpa [#allocation4], 1
    %3828 = vsyncpa [#allocation13], 1
    %3829 = vsyncpa [#allocation16], 1

// kernel: tpu_custom_call.1
$region0: #{tpu_custom_call.1}
  #allocation0 [shape = 'u32[]', space=smem, size = 0x4, offset = 0x4, fixed_abs, tag = 'smem constant byte address 0x4 - core index']
  #allocation1 [shape = 'u32[144,128]{1,0:T(1,128)}', space=vmem, size = 0x12000, scoped, tag = 'internal scratch']
  %s0 = inlined_call_operand.hbm [shape: f32[2,256,128], index: 0, kind: input, shape index: {}]
  %s1 = inlined_call_operand.hbm [shape: f32[2,256,128], index: 1, kind: input, shape index: {}]
  %s2 = inlined_call_operand.hbm [shape: f32[128,128], index: 2, kind: input, shape index: {}]
  %s3 = inlined_call_operand.vmem [shape: f32[1,128], index: 3, kind: input, shape index: {}]
  %s4 = inlined_call_operand.hbm [shape: f32[128,128], index: 4, kind: input, shape index: {}]
  %s5 = inlined_call_operand.vmem [shape: f32[1,128], index: 5, kind: input, shape index: {}]
  %s6 = inlined_call_operand.hbm [shape: f32[128,128], index: 6, kind: input, shape index: {}]
  %s7 = inlined_call_operand.vmem [shape: f32[1,128], index: 7, kind: input, shape index: {}]
  %s8 = inlined_call_operand.hbm [shape: f32[2,256,128], index: 8, kind: output, shape index: {0}]
  %s9 = inlined_call_operand.hbm [shape: f32[2,256,128], index: 9, kind: output, shape index: {1}]
  %s10 = inlined_call_operand.hbm [shape: f32[2,256,128], index: 10, kind: output, shape index: {2}]
  %s11 = inlined_call_operand.hbm [shape: f32[2,256,128], index: 11, kind: output, shape index: {3}]
  %12 = xla_tuple %s8, %s9, %s10, %s11
  %s13 = sld [smem:[#allocation0]]
  $region86: #{tpu_custom_call.1} parent=0
    _
  %s15 = ssub.s32 1, %s13
  %s16 = scalar_select 0, %s15, %s13
  $region1: #{tpu_custom_call.1} parent=0
    #allocation2 [shape = 'u8[262144]{0}', space=vmem, size = 0x40000, scoped, tag = 'input window, operand 0, single buffered']
    #allocation3 [shape = 's32[1]{0}', space=sflag, size = 0x4, scoped, tag = 'scoped memory for tpu_custom_call.1']
    #allocation4 [shape = 's32[1]{0}', space=sflag, size = 0x4, scoped, tag = 'scoped memory for tpu_custom_call.1']
    #allocation5 [shape = 'u8[262144]{0}', space=vmem, size = 0x40000, scoped, tag = 'input window, operand 1, single buffered']
    #allocation6 [shape = 's32[1]{0}', space=sflag, size = 0x4, scoped, tag = 'scoped memory for tpu_custom_call.1']
    #allocation7 [shape = 'u8[65536]{0}', space=vmem, size = 0x10000, scoped, tag = 'input window, operand 2, single buffered']
    #allocation8 [shape = 'u8[65536]{0}', space=vmem, size = 0x10000, scoped, tag = 'input window, operand 4, single buffered']
    #allocation9 [shape = 's32[1]{0}', space=sflag, size = 0x4, scoped, tag = 'scoped memory for tpu_custom_call.1']
    #allocation10 [shape = 'u8[65536]{0}', space=vmem, size = 0x10000, scoped, tag = 'input window, operand 6, single buffered']
    #allocation11 [shape = 'u8[262144]{0}', space=vmem, size = 0x40000, scoped, tag = 'output window, operand 0, single buffered']
    #allocation12 [shape = 'u8[262144]{0}', space=vmem, size = 0x40000, scoped, tag = 'output window, operand 1, single buffered']
    #allocation13 [shape = 's32[1]{0}', space=sflag, size = 0x4, scoped, tag = 'scoped memory for tpu_custom_call.1']
    #allocation14 [shape = 'u8[262144]{0}', space=vmem, size = 0x40000, scoped, tag = 'output window, operand 2, single buffered']
    #allocation15 [shape = 'u8[262144]{0}', space=vmem, size = 0x40000, scoped, tag = 'output window, operand 3, single buffered']
    #allocation16 [shape = 's32[1]{0}', space=sflag, size = 0x4, scoped, tag = 'scoped memory for tpu_custom_call.1']
    %17 = vsyncpa [#allocation3], 0
    %18 = vsyncpa [#allocation6], 0
    %19 = vsyncpa [#allocation9], 0
    %20 = vsyncpa [#allocation4], 0
    %21 = vsyncpa [#allocation13], 0
    %22 = vsyncpa [#allocation16], 0
    // Predicated region
    $region2: #{tpu_custom_call.1} parent=1 // pred_check
      _
    $region3: #{tpu_custom_call.1} parent=1 // pred_check_branch
      %24 = sbr.rel (0) target = $region5
    $region4: #{tpu_custom_call.1} parent=1 // pred_region
      %s26 = ssub.s32 8192, 8192
      %27 = vsyncadd [#allocation3], %s26
      %s28 = sshll.u32 [#allocation2], 4
      %s29 = int_to_ptr.vmem [resolvable:$true] %s28
      %34 = dma.hbm_to_vmem [thread:$0]  %s0, 8192, %s29, [#allocation3], 128, 128, 8
    $region5: #{tpu_custom_call.1} parent=1 // pred_fallthru
      _
    // Predicated region
    $region6: #{tpu_custom_call.1} parent=1 // pred_check
      _
    $region7: #{tpu_custom_call.1} parent=1 // pred_check_branch
      %36 = sbr.rel (0) target = $region9
    $region8: #{tpu_custom_call.1} parent=1 // pred_region
      %s38 = ssub.s32 8192, 8192
      %39 = vsyncadd [#allocation6], %s38
      %s40 = sshll.u32 [#allocation5], 4
      %s41 = int_to_ptr.vmem [resolvable:$true] %s40
      %46 = dma.hbm_to_vmem [thread:$0]  %s1, 8192, %s41, [#allocation6], 128, 128, 8
    $region9: #{tpu_custom_call.1} parent=1 // pred_fallthru
      _
    // Predicated region
    $region10: #{tpu_custom_call.1} parent=1 // pred_check
      _
    $region11: #{tpu_custom_call.1} parent=1 // pred_check_branch
      %48 = sbr.rel (0) target = $region13
    $region12: #{tpu_custom_call.1} parent=1 // pred_region
      %s50 = ssub.s32 2048, 2048
      %51 = vsyncadd [#allocation6], %s50
      %s52 = sshll.u32 [#allocation7], 4
      %s53 = int_to_ptr.vmem [resolvable:$true] %s52
      %58 = dma.hbm_to_vmem [thread:$0]  %s2, 2048, %s53, [#allocation6], 128, 128, 8
    $region13: #{tpu_custom_call.1} parent=1 // pred_fallthru
      _
    // Predicated region
    $region14: #{tpu_custom_call.1} parent=1 // pred_check
      _
    $region15: #{tpu_custom_call.1} parent=1 // pred_check_branch
      %60 = sbr.rel (0) target = $region17
    $region16: #{tpu_custom_call.1} parent=1 // pred_region
      _
    $region17: #{tpu_custom_call.1} parent=1 // pred_fallthru
      _
    // Predicated region
    $region18: #{tpu_custom_call.1} parent=1 // pred_check
      _
    $region19: #{tpu_custom_call.1} parent=1 // pred_check_branch
      %62 = sbr.rel (0) target = $region21
    $region20: #{tpu_custom_call.1} parent=1 // pred_region
      %s64 = ssub.s32 2048, 2048
      %65 = vsyncadd [#allocation9], %s64
      %s66 = sshll.u32 [#allocation8], 4
      %s67 = int_to_ptr.vmem [resolvable:$true] %s66
      %72 = dma.hbm_to_vmem [thread:$0]  %s4, 2048, %s67, [#allocation9], 128, 128, 8
    $region21: #{tpu_custom_call.1} parent=1 // pred_fallthru
      _
    // Predicated region
    $region22: #{tpu_custom_call.1} parent=1 // pred_check
      _
    $region23: #{tpu_custom_call.1} parent=1 // pred_check_branch
      %74 = sbr.rel (0) target = $region25
    $region24: #{tpu_custom_call.1} parent=1 // pred_region
      _
    $region25: #{tpu_custom_call.1} parent=1 // pred_fallthru
      _
    // Predicated region
    $region26: #{tpu_custom_call.1} parent=1 // pred_check
      _
    $region27: #{tpu_custom_call.1} parent=1 // pred_check_branch
      %76 = sbr.rel (0) target = $region29
    $region28: #{tpu_custom_call.1} parent=1 // pred_region
      %s78 = ssub.s32 2048, 2048
      %79 = vsyncadd [#allocation9], %s78
      %s80 = sshll.u32 [#allocation10], 4
      %s81 = int_to_ptr.vmem [resolvable:$true] %s80
      %86 = dma.hbm_to_vmem [thread:$0]  %s6, 2048, %s81, [#allocation9], 128, 128, 8
    $region29: #{tpu_custom_call.1} parent=1 // pred_fallthru
      _
    // Predicated region
    $region30: #{tpu_custom_call.1} parent=1 // pred_check
      _
    $region31: #{tpu_custom_call.1} parent=1 // pred_check_branch
      %88 = sbr.rel (0) target = $region33
    $region32: #{tpu_custom_call.1} parent=1 // pred_region
      _
    $region33: #{tpu_custom_call.1} parent=1 // pred_fallthru
      _
    // Predicated region
    $region34: #{tpu_custom_call.1} parent=1 // pred_check
      _
    $region35: #{tpu_custom_call.1} parent=1 // pred_check_branch
      %90 = sbr.rel (0) target = $region37
    $region36: #{tpu_custom_call.1} parent=1 // pred_region
      %91 = dma.done [#allocation3], 8192
    $region37: #{tpu_custom_call.1} parent=1 // pred_fallthru
      _
    // Predicated region
    $region38: #{tpu_custom_call.1} parent=1 // pred_check
      _
    $region39: #{tpu_custom_call.1} parent=1 // pred_check_branch
      %93 = sbr.rel (0) target = $region41
    $region40: #{tpu_custom_call.1} parent=1 // pred_region
      %94 = dma.done [#allocation6], 8192
    $region41: #{tpu_custom_call.1} parent=1 // pred_fallthru
      _
    // Predicated region
    $region42: #{tpu_custom_call.1} parent=1 // pred_check
      _
    $region43: #{tpu_custom_call.1} parent=1 // pred_check_branch
      %96 = sbr.rel (0) target = $region45
    $region44: #{tpu_custom_call.1} parent=1 // pred_region
      %97 = dma.done [#allocation6], 2048
    $region45: #{tpu_custom_call.1} parent=1 // pred_fallthru
      _
    // Predicated region
    $region46: #{tpu_custom_call.1} parent=1 // pred_check
      _
    $region47: #{tpu_custom_call.1} parent=1 // pred_check_branch
      %99 = sbr.rel (0) target = $region49
    $region48: #{tpu_custom_call.1} parent=1 // pred_region
      %100 = dma.done [#allocation9], 2048
    $region49: #{tpu_custom_call.1} parent=1 // pred_fallthru
      _
    // Predicated region
    $region50: #{tpu_custom_call.1} parent=1 // pred_check
      _
    $region51: #{tpu_custom_call.1} parent=1 // pred_check_branch
      %102 = sbr.rel (0) target = $region53
    $region52: #{tpu_custom_call.1} parent=1 // pred_region
      %103 = dma.done [#allocation9], 2048
    $region53: #{tpu_custom_call.1} parent=1 // pred_fallthru
      _
    %v104 = vld [vmem:[#allocation2] sm:$0xff]
    %v105 = vld [vmem:[#allocation2 + $0x8] sm:$0xff]
    %v106 = vld [vmem:[#allocation2 + $0x10] sm:$0xff]
    %v107 = vld [vmem:[#allocation2 + $0x18] sm:$0xff]
    %v108 = vld [vmem:[#allocation2 + $0x20] sm:$0xff]
    %v109 = vld [vmem:[#allocation2 + $0x28] sm:$0xff]
    %v110 = vld [vmem:[#allocation2 + $0x30] sm:$0xff]
    %v111 = vld [vmem:[#allocation2 + $0x38] sm:$0xff]
    %v112 = vld [vmem:[#allocation2 + $0x40] sm:$0xff]
    %v113 = vld [vmem:[#allocation2 + $0x48] sm:$0xff]
    %v114 = vld [vmem:[#allocation2 + $0x50] sm:$0xff]
    %v115 = vld [vmem:[#allocation2 + $0x58] sm:$0xff]
    %v116 = vld [vmem:[#allocation2 + $0x60] sm:$0xff]
    %v117 = vld [vmem:[#allocation2 + $0x68] sm:$0xff]
    %v118 = vld [vmem:[#allocation2 + $0x70] sm:$0xff]
    %v119 = vld [vmem:[#allocation2 + $0x78] sm:$0xff]
    %v120 = vld [vmem:[#allocation2 + $0x80] sm:$0xff]
    %v121 = vld [vmem:[#allocation2 + $0x88] sm:$0xff]
    %v122 = vld [vmem:[#allocation2 + $0x90] sm:$0xff]
    %v123 = vld [vmem:[#allocation2 + $0x98] sm:$0xff]
    %v124 = vld [vmem:[#allocation2 + $0xa0] sm:$0xff]
    %v125 = vld [vmem:[#allocation2 + $0xa8] sm:$0xff]
    %v126 = vld [vmem:[#allocation2 + $0xb0] sm:$0xff]
    %v127 = vld [vmem:[#allocation2 + $0xb8] sm:$0xff]
    %v128 = vld [vmem:[#allocation2 + $0xc0] sm:$0xff]
    %v129 = vld [vmem:[#allocation2 + $0xc8] sm:$0xff]
    %v130 = vld [vmem:[#allocation2 + $0xd0] sm:$0xff]
    %v131 = vld [vmem:[#allocation2 + $0xd8] sm:$0xff]
    %v132 = vld [vmem:[#allocation2 + $0xe0] sm:$0xff]
    %v133 = vld [vmem:[#allocation2 + $0xe8] sm:$0xff]
    %v134 = vld [vmem:[#allocation2 + $0xf0] sm:$0xff]
    %v135 = vld [vmem:[#allocation2 + $0xf8] sm:$0xff]
    %v136 = vld [vmem:[#allocation2 + $0x100] sm:$0xff]
    %v137 = vld [vmem:[#allocation2 + $0x108] sm:$0xff]
    %v138 = vld [vmem:[#allocation2 + $0x110] sm:$0xff]
    %v139 = vld [vmem:[#allocation2 + $0x118] sm:$0xff]
    %v140 = vld [vmem:[#allocation2 + $0x120] sm:$0xff]
    %v141 = vld [vmem:[#allocation2 + $0x128] sm:$0xff]
    %v142 = vld [vmem:[#allocation2 + $0x130] sm:$0xff]
    %v143 = vld [vmem:[#allocation2 + $0x138] sm:$0xff]
    %v144 = vld [vmem:[#allocation2 + $0x140] sm:$0xff]
    %v145 = vld [vmem:[#allocation2 + $0x148] sm:$0xff]
    %v146 = vld [vmem:[#allocation2 + $0x150] sm:$0xff]
    %v147 = vld [vmem:[#allocation2 + $0x158] sm:$0xff]
    %v148 = vld [vmem:[#allocation2 + $0x160] sm:$0xff]
    %v149 = vld [vmem:[#allocation2 + $0x168] sm:$0xff]
    %v150 = vld [vmem:[#allocation2 + $0x170] sm:$0xff]
    %v151 = vld [vmem:[#allocation2 + $0x178] sm:$0xff]
    %v152 = vld [vmem:[#allocation2 + $0x180] sm:$0xff]
    %v153 = vld [vmem:[#allocation2 + $0x188] sm:$0xff]
    %v154 = vld [vmem:[#allocation2 + $0x190] sm:$0xff]
    %v155 = vld [vmem:[#allocation2 + $0x198] sm:$0xff]
    %v156 = vld [vmem:[#allocation2 + $0x1a0] sm:$0xff]
    %v157 = vld [vmem:[#allocation2 + $0x1a8] sm:$0xff]
    %v158 = vld [vmem:[#allocation2 + $0x1b0] sm:$0xff]
    %v159 = vld [vmem:[#allocation2 + $0x1b8] sm:$0xff]
    %v160 = vld [vmem:[#allocation2 + $0x1c0] sm:$0xff]
    %v161 = vld [vmem:[#allocation2 + $0x1c8] sm:$0xff]
    %v162 = vld [vmem:[#allocation2 + $0x1d0] sm:$0xff]
    %v163 = vld [vmem:[#allocation2 + $0x1d8] sm:$0xff]
    %v164 = vld [vmem:[#allocation2 + $0x1e0] sm:$0xff]
    %v165 = vld [vmem:[#allocation2 + $0x1e8] sm:$0xff]
    %v166 = vld [vmem:[#allocation2 + $0x1f0] sm:$0xff]
    %v167 = vld [vmem:[#allocation2 + $0x1f8] sm:$0xff]
    %v168 = vld [vmem:[#allocation5] sm:$0xff]
    %v169 = vld [vmem:[#allocation5 + $0x8] sm:$0xff]
    %v170 = vld [vmem:[#allocation5 + $0x10] sm:$0xff]
    %v171 = vld [vmem:[#allocation5 + $0x18] sm:$0xff]
    %v172 = vld [vmem:[#allocation5 + $0x20] sm:$0xff]
    %v173 = vld [vmem:[#allocation5 + $0x28] sm:$0xff]
    %v174 = vld [vmem:[#allocation5 + $0x30] sm:$0xff]
    %v175 = vld [vmem:[#allocation5 + $0x38] sm:$0xff]
    %v176 = vld [vmem:[#allocation5 + $0x40] sm:$0xff]
    %v177 = vld [vmem:[#allocation5 + $0x48] sm:$0xff]
    %v178 = vld [vmem:[#allocation5 + $0x50] sm:$0xff]
    %v179 = vld [vmem:[#allocation5 + $0x58] sm:$0xff]
    %v180 = vld [vmem:[#allocation5 + $0x60] sm:$0xff]
    %v181 = vld [vmem:[#allocation5 + $0x68] sm:$0xff]
    %v182 = vld [vmem:[#allocation5 + $0x70] sm:$0xff]
    %v183 = vld [vmem:[#allocation5 + $0x78] sm:$0xff]
    %v184 = vld [vmem:[#allocation5 + $0x80] sm:$0xff]
    %v185 = vld [vmem:[#allocation5 + $0x88] sm:$0xff]
    %v186 = vld [vmem:[#allocation5 + $0x90] sm:$0xff]
    %v187 = vld [vmem:[#allocation5 + $0x98] sm:$0xff]
    %v188 = vld [vmem:[#allocation5 + $0xa0] sm:$0xff]
    %v189 = vld [vmem:[#allocation5 + $0xa8] sm:$0xff]
    %v190 = vld [vmem:[#allocation5 + $0xb0] sm:$0xff]
    %v191 = vld [vmem:[#allocation5 + $0xb8] sm:$0xff]
    %v192 = vld [vmem:[#allocation5 + $0xc0] sm:$0xff]
    %v193 = vld [vmem:[#allocation5 + $0xc8] sm:$0xff]
    %v194 = vld [vmem:[#allocation5 + $0xd0] sm:$0xff]
    %v195 = vld [vmem:[#allocation5 + $0xd8] sm:$0xff]
    %v196 = vld [vmem:[#allocation5 + $0xe0] sm:$0xff]
    %v197 = vld [vmem:[#allocation5 + $0xe8] sm:$0xff]
    %v198 = vld [vmem:[#allocation5 + $0xf0] sm:$0xff]
    %v199 = vld [vmem:[#allocation5 + $0xf8] sm:$0xff]
    %v200 = vld [vmem:[#allocation5 + $0x100] sm:$0xff]
    %v201 = vld [vmem:[#allocation5 + $0x108] sm:$0xff]
    %v202 = vld [vmem:[#allocation5 + $0x110] sm:$0xff]
    %v203 = vld [vmem:[#allocation5 + $0x118] sm:$0xff]
    %v204 = vld [vmem:[#allocation5 + $0x120] sm:$0xff]
    %v205 = vld [vmem:[#allocation5 + $0x128] sm:$0xff]
    %v206 = vld [vmem:[#allocation5 + $0x130] sm:$0xff]
    %v207 = vld [vmem:[#allocation5 + $0x138] sm:$0xff]
    %v208 = vld [vmem:[#allocation5 + $0x140] sm:$0xff]
    %v209 = vld [vmem:[#allocation5 + $0x148] sm:$0xff]
    %v210 = vld [vmem:[#allocation5 + $0x150] sm:$0xff]
    %v211 = vld [vmem:[#allocation5 + $0x158] sm:$0xff]
    %v212 = vld [vmem:[#allocation5 + $0x160] sm:$0xff]
    %v213 = vld [vmem:[#allocation5 + $0x168] sm:$0xff]
    %v214 = vld [vmem:[#allocation5 + $0x170] sm:$0xff]
    %v215 = vld [vmem:[#allocation5 + $0x178] sm:$0xff]
    %v216 = vld [vmem:[#allocation5 + $0x180] sm:$0xff]
    %v217 = vld [vmem:[#allocation5 + $0x188] sm:$0xff]
    %v218 = vld [vmem:[#allocation5 + $0x190] sm:$0xff]
    %v219 = vld [vmem:[#allocation5 + $0x198] sm:$0xff]
    %v220 = vld [vmem:[#allocation5 + $0x1a0] sm:$0xff]
    %v221 = vld [vmem:[#allocation5 + $0x1a8] sm:$0xff]
    %v222 = vld [vmem:[#allocation5 + $0x1b0] sm:$0xff]
    %v223 = vld [vmem:[#allocation5 + $0x1b8] sm:$0xff]
    %v224 = vld [vmem:[#allocation5 + $0x1c0] sm:$0xff]
    %v225 = vld [vmem:[#allocation5 + $0x1c8] sm:$0xff]
    %v226 = vld [vmem:[#allocation5 + $0x1d0] sm:$0xff]
    %v227 = vld [vmem:[#allocation5 + $0x1d8] sm:$0xff]
    %v228 = vld [vmem:[#allocation5 + $0x1e0] sm:$0xff]
    %v229 = vld [vmem:[#allocation5 + $0x1e8] sm:$0xff]
    %v230 = vld [vmem:[#allocation5 + $0x1f0] sm:$0xff]
    %v231 = vld [vmem:[#allocation5 + $0x1f8] sm:$0xff]
    %v232 = vld [vmem:[#allocation7] sm:$0xff]
    %v233 = vld [vmem:[#allocation7 + $0x8] sm:$0xff]
    %v234 = vld [vmem:[#allocation7 + $0x10] sm:$0xff]
    %v235 = vld [vmem:[#allocation7 + $0x18] sm:$0xff]
    %v236 = vld [vmem:[#allocation7 + $0x20] sm:$0xff]
    %v237 = vld [vmem:[#allocation7 + $0x28] sm:$0xff]
    %v238 = vld [vmem:[#allocation7 + $0x30] sm:$0xff]
    %v239 = vld [vmem:[#allocation7 + $0x38] sm:$0xff]
    %v240 = vld [vmem:[#allocation7 + $0x40] sm:$0xff]
    %v241 = vld [vmem:[#allocation7 + $0x48] sm:$0xff]
    %v242 = vld [vmem:[#allocation7 + $0x50] sm:$0xff]
    %v243 = vld [vmem:[#allocation7 + $0x58] sm:$0xff]
    %v244 = vld [vmem:[#allocation7 + $0x60] sm:$0xff]
    %v245 = vld [vmem:[#allocation7 + $0x68] sm:$0xff]
    %v246 = vld [vmem:[#allocation7 + $0x70] sm:$0xff]
    %v247 = vld [vmem:[#allocation7 + $0x78] sm:$0xff]
    %v248 = vld [vmem:[%s3] sm:$0x1]
    %v250 = vlaneseq
    %v251 = vshrl.u32 %v250, 7
    %v252 = vsub.s32 0, %v251
    %v253 = vrot.slane %v248, %v252
    %255 = vmatprep.subr.mxu0 0.0
    %256 = vmatpush1.msra.mxu0 %v232
    %257 = vmatprep.subr.mxu0 0.0
    %258 = vmatpush1.msra.mxu0 %v233
    %259 = vmatprep.subr.mxu0 0.0
    %260 = vmatpush1.msra.mxu0 %v234
    %261 = vmatprep.subr.mxu0 0.0
    %262 = vmatpush1.msra.mxu0 %v235
    %263 = vmatprep.subr.mxu0 0.0
    %264 = vmatpush1.msra.mxu0 %v236
    %265 = vmatprep.subr.mxu0 0.0
    %266 = vmatpush1.msra.mxu0 %v237
    %267 = vmatprep.subr.mxu0 0.0
    %268 = vmatpush1.msra.mxu0 %v238
    %269 = vmatprep.subr.mxu0 0.0
    %270 = vmatpush1.msra.mxu0 %v239
    %271 = vmatprep.subr.mxu0 0.0
    %272 = vmatpush1.msra.mxu0 %v240
    %273 = vmatprep.subr.mxu0 0.0
    %274 = vmatpush1.msra.mxu0 %v241
    %275 = vmatprep.subr.mxu0 0.0
    %276 = vmatpush1.msra.mxu0 %v242
    %277 = vmatprep.subr.mxu0 0.0
    %278 = vmatpush1.msra.mxu0 %v243
    %279 = vmatprep.subr.mxu0 0.0
    %280 = vmatpush1.msra.mxu0 %v244
    %281 = vmatprep.subr.mxu0 0.0
    %282 = vmatpush1.msra.mxu0 %v245
    %283 = vmatprep.subr.mxu0 0.0
    %284 = vmatpush1.msra.mxu0 %v246
    %285 = vmatprep.subr.mxu0 0.0
    %286 = vmatpush1.msra.mxu0 %v247
    %287 = vmatprep.subr.mxu0 0.0
    %288 = vmatpush1.msra.mxu0 0.0
    %289 = vmatprep.subr.mxu0 0.0
    %290 = vmatpush1.msra.mxu0 0.0
    %291 = vmatprep.subr.mxu0 0.0
    %292 = vmatpush1.msra.mxu0 0.0
    %293 = vmatprep.subr.mxu0 0.0
    %294 = vmatpush1.msra.mxu0 0.0
    %295 = vmatprep.subr.mxu0 0.0
    %296 = vmatpush1.msra.mxu0 0.0
    %297 = vmatprep.subr.mxu0 0.0
    %298 = vmatpush1.msra.mxu0 0.0
    %299 = vmatprep.subr.mxu0 0.0
    %300 = vmatpush1.msra.mxu0 0.0
    %301 = vmatprep.subr.mxu0 0.0
    %302 = vmatpush1.msra.mxu0 0.0
    %303 = vmatprep.subr.mxu0 0.0
    %304 = vmatpush1.msra.mxu0 0.0
    %305 = vmatprep.subr.mxu0 0.0
    %306 = vmatpush1.msra.mxu0 0.0
    %307 = vmatprep.subr.mxu0 0.0
    %308 = vmatpush1.msra.mxu0 0.0
    %309 = vmatprep.subr.mxu0 0.0
    %310 = vmatpush1.msra.mxu0 0.0
    %311 = vmatprep.subr.mxu0 0.0
    %312 = vmatpush1.msra.mxu0 0.0
    %313 = vmatprep.subr.mxu0 0.0
    %314 = vmatpush1.msra.mxu0 0.0
    %315 = vmatprep.subr.mxu0 0.0
    %316 = vmatpush1.msra.mxu0 0.0
    %317 = vmatprep.subr.mxu0 0.0
    %318 = vmatpush1.msra.mxu0 0.0
    %319 = vmatprep.mubr.f32.mxu0 0.0
    %320 = vmatmul.mubr.f32.gmra.mrb[0].mxu0 %v104
    %v321 = vpop.f32.mrb[0].mxu0
    %v322 = vadd.f32 %v253, %v321
    %v323 = vpop.f32.mrb[0].mxu0
    %324 = vmatprep.mubr.f32.mxu0 0.0
    %325 = vmatmul.mubr.f32.gmra.mrb[0].mxu0 %v105
    %v326 = vpop.f32.mrb[0].mxu0
    %v327 = vadd.f32 %v253, %v326
    %v328 = vpop.f32.mrb[0].mxu0
    %329 = vmatprep.mubr.f32.mxu0 0.0
    %330 = vmatmul.mubr.f32.gmra.mrb[0].mxu0 %v106
    %v331 = vpop.f32.mrb[0].mxu0
    %v332 = vadd.f32 %v253, %v331
    %v333 = vpop.f32.mrb[0].mxu0
    %334 = vmatprep.mubr.f32.mxu0 0.0
    %335 = vmatmul.mubr.f32.gmra.mrb[0].mxu0 %v107
    %v336 = vpop.f32.mrb[0].mxu0
    %v337 = vadd.f32 %v253, %v336
    %v338 = vpop.f32.mrb[0].mxu0
    %339 = vmatprep.mubr.f32.mxu0 0.0
    %340 = vmatmul.mubr.f32.gmra.mrb[0].mxu0 %v108
    %v341 = vpop.f32.mrb[0].mxu0
    %v342 = vadd.f32 %v253, %v341
    %v343 = vpop.f32.mrb[0].mxu0
    %344 = vmatprep.mubr.f32.mxu0 0.0
    %345 = vmatmul.mubr.f32.gmra.mrb[0].mxu0 %v109
    %v346 = vpop.f32.mrb[0].mxu0
    %v347 = vadd.f32 %v253, %v346
    %v348 = vpop.f32.mrb[0].mxu0
    %349 = vmatprep.mubr.f32.mxu0 0.0
    %350 = vmatmul.mubr.f32.gmra.mrb[0].mxu0 %v110
    %v351 = vpop.f32.mrb[0].mxu0
    %v352 = vadd.f32 %v253, %v351
    %v353 = vpop.f32.mrb[0].mxu0
    %354 = vmatprep.mubr.f32.mxu0 0.0
    %355 = vmatmul.mubr.f32.gmra.mrb[0].mxu0 %v111
    %v356 = vpop.f32.mrb[0].mxu0
    %v357 = vadd.f32 %v253, %v356
    %v358 = vpop.f32.mrb[0].mxu0
    %359 = vmatprep.mubr.f32.mxu0 0.0
    %360 = vmatmul.mubr.f32.gmra.mrb[0].mxu0 %v112
    %v361 = vpop.f32.mrb[0].mxu0
    %v362 = vadd.f32 %v253, %v361
    %v363 = vpop.f32.mrb[0].mxu0
    %364 = vmatprep.mubr.f32.mxu0 0.0
    %365 = vmatmul.mubr.f32.gmra.mrb[0].mxu0 %v113
    %v366 = vpop.f32.mrb[0].mxu0
    %v367 = vadd.f32 %v253, %v366
    %v368 = vpop.f32.mrb[0].mxu0
    %369 = vmatprep.mubr.f32.mxu0 0.0
    %370 = vmatmul.mubr.f32.gmra.mrb[0].mxu0 %v114
    %v371 = vpop.f32.mrb[0].mxu0
    %v372 = vadd.f32 %v253, %v371
    %v373 = vpop.f32.mrb[0].mxu0
    %374 = vmatprep.mubr.f32.mxu0 0.0
    %375 = vmatmul.mubr.f32.gmra.mrb[0].mxu0 %v115
    %v376 = vpop.f32.mrb[0].mxu0
    %v377 = vadd.f32 %v253, %v376
    %v378 = vpop.f32.mrb[0].mxu0
    %379 = vmatprep.mubr.f32.mxu0 0.0
    %380 = vmatmul.mubr.f32.gmra.mrb[0].mxu0 %v116
    %v381 = vpop.f32.mrb[0].mxu0
    %v382 = vadd.f32 %v253, %v381
    %v383 = vpop.f32.mrb[0].mxu0
    %384 = vmatprep.mubr.f32.mxu0 0.0
    %385 = vmatmul.mubr.f32.gmra.mrb[0].mxu0 %v117
    %v386 = vpop.f32.mrb[0].mxu0
    %v387 = vadd.f32 %v253, %v386
    %v388 = vpop.f32.mrb[0].mxu0
    %389 = vmatprep.mubr.f32.mxu0 0.0
    %390 = vmatmul.mubr.f32.gmra.mrb[0].mxu0 %v118
    %v391 = vpop.f32.mrb[0].mxu0
    %v392 = vadd.f32 %v253, %v391
    %v393 = vpop.f32.mrb[0].mxu0
    %394 = vmatprep.mubr.f32.mxu0 0.0
    %395 = vmatmul.mubr.f32.gmra.mrb[0].mxu0 %v119
    %v396 = vpop.f32.mrb[0].mxu0
    %v397 = vadd.f32 %v253, %v396
    %v398 = vpop.f32.mrb[0].mxu0
    %399 = vmatprep.mubr.f32.mxu0 0.0
    %400 = vmatmul.mubr.f32.gmra.mrb[0].mxu0 %v120
    %v401 = vpop.f32.mrb[0].mxu0
    %v402 = vadd.f32 %v253, %v401
    %v403 = vpop.f32.mrb[0].mxu0
    %404 = vmatprep.mubr.f32.mxu0 0.0
    %405 = vmatmul.mubr.f32.gmra.mrb[0].mxu0 %v121
    %v406 = vpop.f32.mrb[0].mxu0
    %v407 = vadd.f32 %v253, %v406
    %v408 = vpop.f32.mrb[0].mxu0
    %409 = vmatprep.mubr.f32.mxu0 0.0
    %410 = vmatmul.mubr.f32.gmra.mrb[0].mxu0 %v122
    %v411 = vpop.f32.mrb[0].mxu0
    %v412 = vadd.f32 %v253, %v411
    %v413 = vpop.f32.mrb[0].mxu0
    %414 = vmatprep.mubr.f32.mxu0 0.0
    %415 = vmatmul.mubr.f32.gmra.mrb[0].mxu0 %v123
    %v416 = vpop.f32.mrb[0].mxu0
    %v417 = vadd.f32 %v253, %v416
    %v418 = vpop.f32.mrb[0].mxu0
    %419 = vmatprep.mubr.f32.mxu0 0.0
    %420 = vmatmul.mubr.f32.gmra.mrb[0].mxu0 %v124
    %v421 = vpop.f32.mrb[0].mxu0
    %v422 = vadd.f32 %v253, %v421
    %v423 = vpop.f32.mrb[0].mxu0
    %424 = vmatprep.mubr.f32.mxu0 0.0
    %425 = vmatmul.mubr.f32.gmra.mrb[0].mxu0 %v125
    %v426 = vpop.f32.mrb[0].mxu0
    %v427 = vadd.f32 %v253, %v426
    %v428 = vpop.f32.mrb[0].mxu0
    %429 = vmatprep.mubr.f32.mxu0 0.0
    %430 = vmatmul.mubr.f32.gmra.mrb[0].mxu0 %v126
    %v431 = vpop.f32.mrb[0].mxu0
    %v432 = vadd.f32 %v253, %v431
    %v433 = vpop.f32.mrb[0].mxu0
    %434 = vmatprep.mubr.f32.mxu0 0.0
    %435 = vmatmul.mubr.f32.gmra.mrb[0].mxu0 %v127
    %v436 = vpop.f32.mrb[0].mxu0
    %v437 = vadd.f32 %v253, %v436
    %v438 = vpop.f32.mrb[0].mxu0
    %439 = vmatprep.mubr.f32.mxu0 0.0
    %440 = vmatmul.mubr.f32.gmra.mrb[0].mxu0 %v128
    %v441 = vpop.f32.mrb[0].mxu0
    %v442 = vadd.f32 %v253, %v441
    %v443 = vpop.f32.mrb[0].mxu0
    %444 = vmatprep.mubr.f32.mxu0 0.0
    %445 = vmatmul.mubr.f32.gmra.mrb[0].mxu0 %v129
    %v446 = vpop.f32.mrb[0].mxu0
    %v447 = vadd.f32 %v253, %v446
    %v448 = vpop.f32.mrb[0].mxu0
    %449 = vmatprep.mubr.f32.mxu0 0.0
    %450 = vmatmul.mubr.f32.gmra.mrb[0].mxu0 %v130
    %v451 = vpop.f32.mrb[0].mxu0
    %v452 = vadd.f32 %v253, %v451
    %v453 = vpop.f32.mrb[0].mxu0
    %454 = vmatprep.mubr.f32.mxu0 0.0
    %455 = vmatmul.mubr.f32.gmra.mrb[0].mxu0 %v131
    %v456 = vpop.f32.mrb[0].mxu0
    %v457 = vadd.f32 %v253, %v456
    %v458 = vpop.f32.mrb[0].mxu0
    %459 = vmatprep.mubr.f32.mxu0 0.0
    %460 = vmatmul.mubr.f32.gmra.mrb[0].mxu0 %v132
    %v461 = vpop.f32.mrb[0].mxu0
    %v462 = vadd.f32 %v253, %v461
    %v463 = vpop.f32.mrb[0].mxu0
    %464 = vmatprep.mubr.f32.mxu0 0.0
    %465 = vmatmul.mubr.f32.gmra.mrb[0].mxu0 %v133
    %v466 = vpop.f32.mrb[0].mxu0
    %v467 = vadd.f32 %v253, %v466
    %v468 = vpop.f32.mrb[0].mxu0
    %469 = vmatprep.mubr.f32.mxu0 0.0
    %470 = vmatmul.mubr.f32.gmra.mrb[0].mxu0 %v134
    %v471 = vpop.f32.mrb[0].mxu0
    %v472 = vadd.f32 %v253, %v471
    %v473 = vpop.f32.mrb[0].mxu0
    %474 = vmatprep.mubr.f32.mxu0 0.0
    %475 = vmatmul.mubr.f32.gmra.mrb[0].mxu0 %v135
    %v476 = vpop.f32.mrb[0].mxu0
    %v477 = vadd.f32 %v253, %v476
    %v478 = vpop.f32.mrb[0].mxu0
    %479 = vmatprep.mubr.f32.mxu0 0.0
    %480 = vmatmul.mubr.f32.gmra.mrb[0].mxu0 %v136
    %v481 = vpop.f32.mrb[0].mxu0
    %v482 = vadd.f32 %v253, %v481
    %v483 = vpop.f32.mrb[0].mxu0
    %484 = vmatprep.mubr.f32.mxu0 0.0
    %485 = vmatmul.mubr.f32.gmra.mrb[0].mxu0 %v137
    %v486 = vpop.f32.mrb[0].mxu0
    %v487 = vadd.f32 %v253, %v486
    %v488 = vpop.f32.mrb[0].mxu0
    %489 = vmatprep.mubr.f32.mxu0 0.0
    %490 = vmatmul.mubr.f32.gmra.mrb[0].mxu0 %v138
    %v491 = vpop.f32.mrb[0].mxu0
    %v492 = vadd.f32 %v253, %v491
    %v493 = vpop.f32.mrb[0].mxu0
    %494 = vmatprep.mubr.f32.mxu0 0.0
    %495 = vmatmul.mubr.f32.gmra.mrb[0].mxu0 %v139
    %v496 = vpop.f32.mrb[0].mxu0
    %v497 = vadd.f32 %v253, %v496
    %v498 = vpop.f32.mrb[0].mxu0
    %499 = vmatprep.mubr.f32.mxu0 0.0
    %500 = vmatmul.mubr.f32.gmra.mrb[0].mxu0 %v140
    %v501 = vpop.f32.mrb[0].mxu0
    %v502 = vadd.f32 %v253, %v501
    %v503 = vpop.f32.mrb[0].mxu0
    %504 = vmatprep.mubr.f32.mxu0 0.0
    %505 = vmatmul.mubr.f32.gmra.mrb[0].mxu0 %v141
    %v506 = vpop.f32.mrb[0].mxu0
    %v507 = vadd.f32 %v253, %v506
    %v508 = vpop.f32.mrb[0].mxu0
    %509 = vmatprep.mubr.f32.mxu0 0.0
    %510 = vmatmul.mubr.f32.gmra.mrb[0].mxu0 %v142
    %v511 = vpop.f32.mrb[0].mxu0
    %v512 = vadd.f32 %v253, %v511
    %v513 = vpop.f32.mrb[0].mxu0
    %514 = vmatprep.mubr.f32.mxu0 0.0
    %515 = vmatmul.mubr.f32.gmra.mrb[0].mxu0 %v143
    %v516 = vpop.f32.mrb[0].mxu0
    %v517 = vadd.f32 %v253, %v516
    %v518 = vpop.f32.mrb[0].mxu0
    %519 = vmatprep.mubr.f32.mxu0 0.0
    %520 = vmatmul.mubr.f32.gmra.mrb[0].mxu0 %v144
    %v521 = vpop.f32.mrb[0].mxu0
    %v522 = vadd.f32 %v253, %v521
    %v523 = vpop.f32.mrb[0].mxu0
    %524 = vmatprep.mubr.f32.mxu0 0.0
    %525 = vmatmul.mubr.f32.gmra.mrb[0].mxu0 %v145
    %v526 = vpop.f32.mrb[0].mxu0
    %v527 = vadd.f32 %v253, %v526
    %v528 = vpop.f32.mrb[0].mxu0
    %529 = vmatprep.mubr.f32.mxu0 0.0
    %530 = vmatmul.mubr.f32.gmra.mrb[0].mxu0 %v146
    %v531 = vpop.f32.mrb[0].mxu0
    %v532 = vadd.f32 %v253, %v531
    %v533 = vpop.f32.mrb[0].mxu0
    %534 = vmatprep.mubr.f32.mxu0 0.0
    %535 = vmatmul.mubr.f32.gmra.mrb[0].mxu0 %v147
    %v536 = vpop.f32.mrb[0].mxu0
    %v537 = vadd.f32 %v253, %v536
    %v538 = vpop.f32.mrb[0].mxu0
    %539 = vmatprep.mubr.f32.mxu0 0.0
    %540 = vmatmul.mubr.f32.gmra.mrb[0].mxu0 %v148
    %v541 = vpop.f32.mrb[0].mxu0
    %v542 = vadd.f32 %v253, %v541
    %v543 = vpop.f32.mrb[0].mxu0
    %544 = vmatprep.mubr.f32.mxu0 0.0
    %545 = vmatmul.mubr.f32.gmra.mrb[0].mxu0 %v149
    %v546 = vpop.f32.mrb[0].mxu0
    %v547 = vadd.f32 %v253, %v546
    %v548 = vpop.f32.mrb[0].mxu0
    %549 = vmatprep.mubr.f32.mxu0 0.0
    %550 = vmatmul.mubr.f32.gmra.mrb[0].mxu0 %v150
    %v551 = vpop.f32.mrb[0].mxu0
    %v552 = vadd.f32 %v253, %v551
    %v553 = vpop.f32.mrb[0].mxu0
    %554 = vmatprep.mubr.f32.mxu0 0.0
    %555 = vmatmul.mubr.f32.gmra.mrb[0].mxu0 %v151
    %v556 = vpop.f32.mrb[0].mxu0
    %v557 = vadd.f32 %v253, %v556
    %v558 = vpop.f32.mrb[0].mxu0
    %559 = vmatprep.mubr.f32.mxu0 0.0
    %560 = vmatmul.mubr.f32.gmra.mrb[0].mxu0 %v152
    %v561 = vpop.f32.mrb[0].mxu0
    %v562 = vadd.f32 %v253, %v561
    %v563 = vpop.f32.mrb[0].mxu0
    %564 = vmatprep.mubr.f32.mxu0 0.0
    %565 = vmatmul.mubr.f32.gmra.mrb[0].mxu0 %v153
    %v566 = vpop.f32.mrb[0].mxu0
    %v567 = vadd.f32 %v253, %v566
    %v568 = vpop.f32.mrb[0].mxu0
    %569 = vmatprep.mubr.f32.mxu0 0.0
    %570 = vmatmul.mubr.f32.gmra.mrb[0].mxu0 %v154
    %v571 = vpop.f32.mrb[0].mxu0
    %v572 = vadd.f32 %v253, %v571
    %v573 = vpop.f32.mrb[0].mxu0
    %574 = vmatprep.mubr.f32.mxu0 0.0
    %575 = vmatmul.mubr.f32.gmra.mrb[0].mxu0 %v155
    %v576 = vpop.f32.mrb[0].mxu0
    %v577 = vadd.f32 %v253, %v576
    %v578 = vpop.f32.mrb[0].mxu0
    %579 = vmatprep.mubr.f32.mxu0 0.0
    %580 = vmatmul.mubr.f32.gmra.mrb[0].mxu0 %v156
    %v581 = vpop.f32.mrb[0].mxu0
    %v582 = vadd.f32 %v253, %v581
    %v583 = vpop.f32.mrb[0].mxu0
    %584 = vmatprep.mubr.f32.mxu0 0.0
    %585 = vmatmul.mubr.f32.gmra.mrb[0].mxu0 %v157
    %v586 = vpop.f32.mrb[0].mxu0
    %v587 = vadd.f32 %v253, %v586
    %v588 = vpop.f32.mrb[0].mxu0
    %589 = vmatprep.mubr.f32.mxu0 0.0
    %590 = vmatmul.mubr.f32.gmra.mrb[0].mxu0 %v158
    %v591 = vpop.f32.mrb[0].mxu0
    %v592 = vadd.f32 %v253, %v591
    %v593 = vpop.f32.mrb[0].mxu0
    %594 = vmatprep.mubr.f32.mxu0 0.0
    %595 = vmatmul.mubr.f32.gmra.mrb[0].mxu0 %v159
    %v596 = vpop.f32.mrb[0].mxu0
    %v597 = vadd.f32 %v253, %v596
    %v598 = vpop.f32.mrb[0].mxu0
    %599 = vmatprep.mubr.f32.mxu0 0.0
    %600 = vmatmul.mubr.f32.gmra.mrb[0].mxu0 %v160
    %v601 = vpop.f32.mrb[0].mxu0
    %v602 = vadd.f32 %v253, %v601
    %v603 = vpop.f32.mrb[0].mxu0
    %604 = vmatprep.mubr.f32.mxu0 0.0
    %605 = vmatmul.mubr.f32.gmra.mrb[0].mxu0 %v161
    %v606 = vpop.f32.mrb[0].mxu0
    %v607 = vadd.f32 %v253, %v606
    %v608 = vpop.f32.mrb[0].mxu0
    %609 = vmatprep.mubr.f32.mxu0 0.0
    %610 = vmatmul.mubr.f32.gmra.mrb[0].mxu0 %v162
    %v611 = vpop.f32.mrb[0].mxu0
    %v612 = vadd.f32 %v253, %v611
    %v613 = vpop.f32.mrb[0].mxu0
    %614 = vmatprep.mubr.f32.mxu0 0.0
    %615 = vmatmul.mubr.f32.gmra.mrb[0].mxu0 %v163
    %v616 = vpop.f32.mrb[0].mxu0
    %v617 = vadd.f32 %v253, %v616
    %v618 = vpop.f32.mrb[0].mxu0
    %619 = vmatprep.mubr.f32.mxu0 0.0
    %620 = vmatmul.mubr.f32.gmra.mrb[0].mxu0 %v164
    %v621 = vpop.f32.mrb[0].mxu0
    %v622 = vadd.f32 %v253, %v621
    %v623 = vpop.f32.mrb[0].mxu0
    %624 = vmatprep.mubr.f32.mxu0 0.0
    %625 = vmatmul.mubr.f32.gmra.mrb[0].mxu0 %v165
    %v626 = vpop.f32.mrb[0].mxu0
    %v627 = vadd.f32 %v253, %v626
    %v628 = vpop.f32.mrb[0].mxu0
    %629 = vmatprep.mubr.f32.mxu0 0.0
    %630 = vmatmul.mubr.f32.gmra.mrb[0].mxu0 %v166
    %v631 = vpop.f32.mrb[0].mxu0
    %v632 = vadd.f32 %v253, %v631
    %v633 = vpop.f32.mrb[0].mxu0
    %634 = vmatprep.mubr.f32.mxu0 0.0
    %635 = vmatmul.mubr.f32.gmra.mrb[0].mxu0 %v167
    %v636 = vpop.f32.mrb[0].mxu0
    %v637 = vadd.f32 %v253, %v636
    %v638 = vpop.f32.mrb[0].mxu0
    %639 = vdwg.mxu0
    %v640 = vld [vmem:[#allocation8] sm:$0xff]
    %v641 = vld [vmem:[#allocation8 + $0x8] sm:$0xff]
    %v642 = vld [vmem:[#allocation8 + $0x10] sm:$0xff]
    %v643 = vld [vmem:[#allocation8 + $0x18] sm:$0xff]
    %v644 = vld [vmem:[#allocation8 + $0x20] sm:$0xff]
    %v645 = vld [vmem:[#allocation8 + $0x28] sm:$0xff]
    %v646 = vld [vmem:[#allocation8 + $0x30] sm:$0xff]
    %v647 = vld [vmem:[#allocation8 + $0x38] sm:$0xff]
    %v648 = vld [vmem:[#allocation8 + $0x40] sm:$0xff]
    %v649 = vld [vmem:[#allocation8 + $0x48] sm:$0xff]
    %v650 = vld [vmem:[#allocation8 + $0x50] sm:$0xff]
    %v651 = vld [vmem:[#allocation8 + $0x58] sm:$0xff]
    %v652 = vld [vmem:[#allocation8 + $0x60] sm:$0xff]
    %v653 = vld [vmem:[#allocation8 + $0x68] sm:$0xff]
    %v654 = vld [vmem:[#allocation8 + $0x70] sm:$0xff]
    %v655 = vld [vmem:[#allocation8 + $0x78] sm:$0xff]
    %v656 = vld [vmem:[%s5] sm:$0x1]
    %v658 = vlaneseq
    %v659 = vshrl.u32 %v658, 7
    %v660 = vsub.s32 0, %v659
    %v661 = vrot.slane %v656, %v660
    %663 = vmatprep.subr.mxu0 0.0
    %664 = vmatpush1.msra.mxu0 %v640
    %665 = vmatprep.subr.mxu0 0.0
    %666 = vmatpush1.msra.mxu0 %v641
    %667 = vmatprep.subr.mxu0 0.0
    %668 = vmatpush1.msra.mxu0 %v642
    %669 = vmatprep.subr.mxu0 0.0
    %670 = vmatpush1.msra.mxu0 %v643
    %671 = vmatprep.subr.mxu0 0.0
    %672 = vmatpush1.msra.mxu0 %v644
    %673 = vmatprep.subr.mxu0 0.0
    %674 = vmatpush1.msra.mxu0 %v645
    %675 = vmatprep.subr.mxu0 0.0
    %676 = vmatpush1.msra.mxu0 %v646
    %677 = vmatprep.subr.mxu0 0.0
    %678 = vmatpush1.msra.mxu0 %v647
    %679 = vmatprep.subr.mxu0 0.0
    %680 = vmatpush1.msra.mxu0 %v648
    %681 = vmatprep.subr.mxu0 0.0
    %682 = vmatpush1.msra.mxu0 %v649
    %683 = vmatprep.subr.mxu0 0.0
    %684 = vmatpush1.msra.mxu0 %v650
    %685 = vmatprep.subr.mxu0 0.0
    %686 = vmatpush1.msra.mxu0 %v651
    %687 = vmatprep.subr.mxu0 0.0
    %688 = vmatpush1.msra.mxu0 %v652
    %689 = vmatprep.subr.mxu0 0.0
    %690 = vmatpush1.msra.mxu0 %v653
    %691 = vmatprep.subr.mxu0 0.0
    %692 = vmatpush1.msra.mxu0 %v654
    %693 = vmatprep.subr.mxu0 0.0
    %694 = vmatpush1.msra.mxu0 %v655
    %695 = vmatprep.subr.mxu0 0.0
    %696 = vmatpush1.msra.mxu0 0.0
    %697 = vmatprep.subr.mxu0 0.0
    %698 = vmatpush1.msra.mxu0 0.0
    %699 = vmatprep.subr.mxu0 0.0
    %700 = vmatpush1.msra.mxu0 0.0
    %701 = vmatprep.subr.mxu0 0.0
    %702 = vmatpush1.msra.mxu0 0.0
    %703 = vmatprep.subr.mxu0 0.0
    %704 = vmatpush1.msra.mxu0 0.0
    %705 = vmatprep.subr.mxu0 0.0
    %706 = vmatpush1.msra.mxu0 0.0
    %707 = vmatprep.subr.mxu0 0.0
    %708 = vmatpush1.msra.mxu0 0.0
    %709 = vmatprep.subr.mxu0 0.0
    %710 = vmatpush1.msra.mxu0 0.0
    %711 = vmatprep.subr.mxu0 0.0
    %712 = vmatpush1.msra.mxu0 0.0
    %713 = vmatprep.subr.mxu0 0.0
    %714 = vmatpush1.msra.mxu0 0.0
    %715 = vmatprep.subr.mxu0 0.0
    %716 = vmatpush1.msra.mxu0 0.0
    %717 = vmatprep.subr.mxu0 0.0
    %718 = vmatpush1.msra.mxu0 0.0
    %719 = vmatprep.subr.mxu0 0.0
    %720 = vmatpush1.msra.mxu0 0.0
    %721 = vmatprep.subr.mxu0 0.0
    %722 = vmatpush1.msra.mxu0 0.0
    %723 = vmatprep.subr.mxu0 0.0
    %724 = vmatpush1.msra.mxu0 0.0
    %725 = vmatprep.subr.mxu0 0.0
    %726 = vmatpush1.msra.mxu0 0.0
    %727 = vmatprep.mubr.f32.mxu0 0.0
    %728 = vmatmul.mubr.f32.gmra.mrb[0].mxu0 %v168
    %v729 = vpop.f32.mrb[0].mxu0
    %v730 = vadd.f32 %v661, %v729
    %v731 = vpop.f32.mrb[0].mxu0
    %732 = vmatprep.mubr.f32.mxu0 0.0
    %733 = vmatmul.mubr.f32.gmra.mrb[0].mxu0 %v169
    %v734 = vpop.f32.mrb[0].mxu0
    %v735 = vadd.f32 %v661, %v734
    %v736 = vpop.f32.mrb[0].mxu0
    %737 = vmatprep.mubr.f32.mxu0 0.0
    %738 = vmatmul.mubr.f32.gmra.mrb[0].mxu0 %v170
    %v739 = vpop.f32.mrb[0].mxu0
    %v740 = vadd.f32 %v661, %v739
    %v741 = vpop.f32.mrb[0].mxu0
    %742 = vmatprep.mubr.f32.mxu0 0.0
    %743 = vmatmul.mubr.f32.gmra.mrb[0].mxu0 %v171
    %v744 = vpop.f32.mrb[0].mxu0
    %v745 = vadd.f32 %v661, %v744
    %v746 = vpop.f32.mrb[0].mxu0
    %747 = vmatprep.mubr.f32.mxu0 0.0
    %748 = vmatmul.mubr.f32.gmra.mrb[0].mxu0 %v172
    %v749 = vpop.f32.mrb[0].mxu0
    %v750 = vadd.f32 %v661, %v749
    %v751 = vpop.f32.mrb[0].mxu0
    %752 = vmatprep.mubr.f32.mxu0 0.0
    %753 = vmatmul.mubr.f32.gmra.mrb[0].mxu0 %v173
    %v754 = vpop.f32.mrb[0].mxu0
    %v755 = vadd.f32 %v661, %v754
    %v756 = vpop.f32.mrb[0].mxu0
    %757 = vmatprep.mubr.f32.mxu0 0.0
    %758 = vmatmul.mubr.f32.gmra.mrb[0].mxu0 %v174
    %v759 = vpop.f32.mrb[0].mxu0
    %v760 = vadd.f32 %v661, %v759
    %v761 = vpop.f32.mrb[0].mxu0
    %762 = vmatprep.mubr.f32.mxu0 0.0
    %763 = vmatmul.mubr.f32.gmra.mrb[0].mxu0 %v175
    %v764 = vpop.f32.mrb[0].mxu0
    %v765 = vadd.f32 %v661, %v764
    %v766 = vpop.f32.mrb[0].mxu0
    %767 = vmatprep.mubr.f32.mxu0 0.0
    %768 = vmatmul.mubr.f32.gmra.mrb[0].mxu0 %v176
    %v769 = vpop.f32.mrb[0].mxu0
    %v770 = vadd.f32 %v661, %v769
    %v771 = vpop.f32.mrb[0].mxu0
    %772 = vmatprep.mubr.f32.mxu0 0.0
    %773 = vmatmul.mubr.f32.gmra.mrb[0].mxu0 %v177
    %v774 = vpop.f32.mrb[0].mxu0
    %v775 = vadd.f32 %v661, %v774
    %v776 = vpop.f32.mrb[0].mxu0
    %777 = vmatprep.mubr.f32.mxu0 0.0
    %778 = vmatmul.mubr.f32.gmra.mrb[0].mxu0 %v178
    %v779 = vpop.f32.mrb[0].mxu0
    %v780 = vadd.f32 %v661, %v779
    %v781 = vpop.f32.mrb[0].mxu0
    %782 = vmatprep.mubr.f32.mxu0 0.0
    %783 = vmatmul.mubr.f32.gmra.mrb[0].mxu0 %v179
    %v784 = vpop.f32.mrb[0].mxu0
    %v785 = vadd.f32 %v661, %v784
    %v786 = vpop.f32.mrb[0].mxu0
    %787 = vmatprep.mubr.f32.mxu0 0.0
    %788 = vmatmul.mubr.f32.gmra.mrb[0].mxu0 %v180
    %v789 = vpop.f32.mrb[0].mxu0
    %v790 = vadd.f32 %v661, %v789
    %v791 = vpop.f32.mrb[0].mxu0
    %792 = vmatprep.mubr.f32.mxu0 0.0
    %793 = vmatmul.mubr.f32.gmra.mrb[0].mxu0 %v181
    %v794 = vpop.f32.mrb[0].mxu0
    %v795 = vadd.f32 %v661, %v794
    %v796 = vpop.f32.mrb[0].mxu0
    %797 = vmatprep.mubr.f32.mxu0 0.0
    %798 = vmatmul.mubr.f32.gmra.mrb[0].mxu0 %v182
    %v799 = vpop.f32.mrb[0].mxu0
    %v800 = vadd.f32 %v661, %v799
    %v801 = vpop.f32.mrb[0].mxu0
    %802 = vmatprep.mubr.f32.mxu0 0.0
    %803 = vmatmul.mubr.f32.gmra.mrb[0].mxu0 %v183
    %v804 = vpop.f32.mrb[0].mxu0
    %v805 = vadd.f32 %v661, %v804
    %v806 = vpop.f32.mrb[0].mxu0
    %807 = vmatprep.mubr.f32.mxu0 0.0
    %808 = vmatmul.mubr.f32.gmra.mrb[0].mxu0 %v184
    %v809 = vpop.f32.mrb[0].mxu0
    %v810 = vadd.f32 %v661, %v809
    %v811 = vpop.f32.mrb[0].mxu0
    %812 = vmatprep.mubr.f32.mxu0 0.0
    %813 = vmatmul.mubr.f32.gmra.mrb[0].mxu0 %v185
    %v814 = vpop.f32.mrb[0].mxu0
    %v815 = vadd.f32 %v661, %v814
    %v816 = vpop.f32.mrb[0].mxu0
    %817 = vmatprep.mubr.f32.mxu0 0.0
    %818 = vmatmul.mubr.f32.gmra.mrb[0].mxu0 %v186
    %v819 = vpop.f32.mrb[0].mxu0
    %v820 = vadd.f32 %v661, %v819
    %v821 = vpop.f32.mrb[0].mxu0
    %822 = vmatprep.mubr.f32.mxu0 0.0
    %823 = vmatmul.mubr.f32.gmra.mrb[0].mxu0 %v187
    %v824 = vpop.f32.mrb[0].mxu0
    %v825 = vadd.f32 %v661, %v824
    %v826 = vpop.f32.mrb[0].mxu0
    %827 = vmatprep.mubr.f32.mxu0 0.0
    %828 = vmatmul.mubr.f32.gmra.mrb[0].mxu0 %v188
    %v829 = vpop.f32.mrb[0].mxu0
    %v830 = vadd.f32 %v661, %v829
    %v831 = vpop.f32.mrb[0].mxu0
    %832 = vmatprep.mubr.f32.mxu0 0.0
    %833 = vmatmul.mubr.f32.gmra.mrb[0].mxu0 %v189
    %v834 = vpop.f32.mrb[0].mxu0
    %v835 = vadd.f32 %v661, %v834
    %v836 = vpop.f32.mrb[0].mxu0
    %837 = vmatprep.mubr.f32.mxu0 0.0
    %838 = vmatmul.mubr.f32.gmra.mrb[0].mxu0 %v190
    %v839 = vpop.f32.mrb[0].mxu0
    %v840 = vadd.f32 %v661, %v839
    %v841 = vpop.f32.mrb[0].mxu0
    %842 = vmatprep.mubr.f32.mxu0 0.0
    %843 = vmatmul.mubr.f32.gmra.mrb[0].mxu0 %v191
    %v844 = vpop.f32.mrb[0].mxu0
    %v845 = vadd.f32 %v661, %v844
    %v846 = vpop.f32.mrb[0].mxu0
    %847 = vmatprep.mubr.f32.mxu0 0.0
    %848 = vmatmul.mubr.f32.gmra.mrb[0].mxu0 %v192
    %v849 = vpop.f32.mrb[0].mxu0
    %v850 = vadd.f32 %v661, %v849
    %v851 = vpop.f32.mrb[0].mxu0
    %852 = vmatprep.mubr.f32.mxu0 0.0
    %853 = vmatmul.mubr.f32.gmra.mrb[0].mxu0 %v193
    %v854 = vpop.f32.mrb[0].mxu0
    %v855 = vadd.f32 %v661, %v854
    %v856 = vpop.f32.mrb[0].mxu0
    %857 = vmatprep.mubr.f32.mxu0 0.0
    %858 = vmatmul.mubr.f32.gmra.mrb[0].mxu0 %v194
    %v859 = vpop.f32.mrb[0].mxu0
    %v860 = vadd.f32 %v661, %v859
    %v861 = vpop.f32.mrb[0].mxu0
    %862 = vmatprep.mubr.f32.mxu0 0.0
    %863 = vmatmul.mubr.f32.gmra.mrb[0].mxu0 %v195
    %v864 = vpop.f32.mrb[0].mxu0
    %v865 = vadd.f32 %v661, %v864
    %v866 = vpop.f32.mrb[0].mxu0
    %867 = vmatprep.mubr.f32.mxu0 0.0
    %868 = vmatmul.mubr.f32.gmra.mrb[0].mxu0 %v196
    %v869 = vpop.f32.mrb[0].mxu0
    %v870 = vadd.f32 %v661, %v869
    %v871 = vpop.f32.mrb[0].mxu0
    %872 = vmatprep.mubr.f32.mxu0 0.0
    %873 = vmatmul.mubr.f32.gmra.mrb[0].mxu0 %v197
    %v874 = vpop.f32.mrb[0].mxu0
    %v875 = vadd.f32 %v661, %v874
    %v876 = vpop.f32.mrb[0].mxu0
    %877 = vmatprep.mubr.f32.mxu0 0.0
    %878 = vmatmul.mubr.f32.gmra.mrb[0].mxu0 %v198
    %v879 = vpop.f32.mrb[0].mxu0
    %v880 = vadd.f32 %v661, %v879
    %v881 = vpop.f32.mrb[0].mxu0
    %882 = vmatprep.mubr.f32.mxu0 0.0
    %883 = vmatmul.mubr.f32.gmra.mrb[0].mxu0 %v199
    %v884 = vpop.f32.mrb[0].mxu0
    %v885 = vadd.f32 %v661, %v884
    %v886 = vpop.f32.mrb[0].mxu0
    %887 = vmatprep.mubr.f32.mxu0 0.0
    %888 = vmatmul.mubr.f32.gmra.mrb[0].mxu0 %v200
    %v889 = vpop.f32.mrb[0].mxu0
    %v890 = vadd.f32 %v661, %v889
    %v891 = vpop.f32.mrb[0].mxu0
    %892 = vmatprep.mubr.f32.mxu0 0.0
    %893 = vmatmul.mubr.f32.gmra.mrb[0].mxu0 %v201
    %v894 = vpop.f32.mrb[0].mxu0
    %v895 = vadd.f32 %v661, %v894
    %v896 = vpop.f32.mrb[0].mxu0
    %897 = vmatprep.mubr.f32.mxu0 0.0
    %898 = vmatmul.mubr.f32.gmra.mrb[0].mxu0 %v202
    %v899 = vpop.f32.mrb[0].mxu0
    %v900 = vadd.f32 %v661, %v899
    %v901 = vpop.f32.mrb[0].mxu0
    %902 = vmatprep.mubr.f32.mxu0 0.0
    %903 = vmatmul.mubr.f32.gmra.mrb[0].mxu0 %v203
    %v904 = vpop.f32.mrb[0].mxu0
    %v905 = vadd.f32 %v661, %v904
    %v906 = vpop.f32.mrb[0].mxu0
    %907 = vmatprep.mubr.f32.mxu0 0.0
    %908 = vmatmul.mubr.f32.gmra.mrb[0].mxu0 %v204
    %v909 = vpop.f32.mrb[0].mxu0
    %v910 = vadd.f32 %v661, %v909
    %v911 = vpop.f32.mrb[0].mxu0
    %912 = vmatprep.mubr.f32.mxu0 0.0
    %913 = vmatmul.mubr.f32.gmra.mrb[0].mxu0 %v205
    %v914 = vpop.f32.mrb[0].mxu0
    %v915 = vadd.f32 %v661, %v914
    %v916 = vpop.f32.mrb[0].mxu0
    %917 = vmatprep.mubr.f32.mxu0 0.0
    %918 = vmatmul.mubr.f32.gmra.mrb[0].mxu0 %v206
    %v919 = vpop.f32.mrb[0].mxu0
    %v920 = vadd.f32 %v661, %v919
    %v921 = vpop.f32.mrb[0].mxu0
    %922 = vmatprep.mubr.f32.mxu0 0.0
    %923 = vmatmul.mubr.f32.gmra.mrb[0].mxu0 %v207
    %v924 = vpop.f32.mrb[0].mxu0
    %v925 = vadd.f32 %v661, %v924
    %v926 = vpop.f32.mrb[0].mxu0
    %927 = vmatprep.mubr.f32.mxu0 0.0
    %928 = vmatmul.mubr.f32.gmra.mrb[0].mxu0 %v208
    %v929 = vpop.f32.mrb[0].mxu0
    %v930 = vadd.f32 %v661, %v929
    %v931 = vpop.f32.mrb[0].mxu0
    %932 = vmatprep.mubr.f32.mxu0 0.0
    %933 = vmatmul.mubr.f32.gmra.mrb[0].mxu0 %v209
    %v934 = vpop.f32.mrb[0].mxu0
    %v935 = vadd.f32 %v661, %v934
    %v936 = vpop.f32.mrb[0].mxu0
    %937 = vmatprep.mubr.f32.mxu0 0.0
    %938 = vmatmul.mubr.f32.gmra.mrb[0].mxu0 %v210
    %v939 = vpop.f32.mrb[0].mxu0
    %v940 = vadd.f32 %v661, %v939
    %v941 = vpop.f32.mrb[0].mxu0
    %942 = vmatprep.mubr.f32.mxu0 0.0
    %943 = vmatmul.mubr.f32.gmra.mrb[0].mxu0 %v211
    %v944 = vpop.f32.mrb[0].mxu0
    %v945 = vadd.f32 %v661, %v944
    %v946 = vpop.f32.mrb[0].mxu0
    %947 = vmatprep.mubr.f32.mxu0 0.0
    %948 = vmatmul.mubr.f32.gmra.mrb[0].mxu0 %v212
    %v949 = vpop.f32.mrb[0].mxu0
    %v950 = vadd.f32 %v661, %v949
    %v951 = vpop.f32.mrb[0].mxu0
    %952 = vmatprep.mubr.f32.mxu0 0.0
    %953 = vmatmul.mubr.f32.gmra.mrb[0].mxu0 %v213
    %v954 = vpop.f32.mrb[0].mxu0
    %v955 = vadd.f32 %v661, %v954
    %v956 = vpop.f32.mrb[0].mxu0
    %957 = vmatprep.mubr.f32.mxu0 0.0
    %958 = vmatmul.mubr.f32.gmra.mrb[0].mxu0 %v214
    %v959 = vpop.f32.mrb[0].mxu0
    %v960 = vadd.f32 %v661, %v959
    %v961 = vpop.f32.mrb[0].mxu0
    %962 = vmatprep.mubr.f32.mxu0 0.0
    %963 = vmatmul.mubr.f32.gmra.mrb[0].mxu0 %v215
    %v964 = vpop.f32.mrb[0].mxu0
    %v965 = vadd.f32 %v661, %v964
    %v966 = vpop.f32.mrb[0].mxu0
    %967 = vmatprep.mubr.f32.mxu0 0.0
    %968 = vmatmul.mubr.f32.gmra.mrb[0].mxu0 %v216
    %v969 = vpop.f32.mrb[0].mxu0
    %v970 = vadd.f32 %v661, %v969
    %v971 = vpop.f32.mrb[0].mxu0
    %972 = vmatprep.mubr.f32.mxu0 0.0
    %973 = vmatmul.mubr.f32.gmra.mrb[0].mxu0 %v217
    %v974 = vpop.f32.mrb[0].mxu0
    %v975 = vadd.f32 %v661, %v974
    %v976 = vpop.f32.mrb[0].mxu0
    %977 = vmatprep.mubr.f32.mxu0 0.0
    %978 = vmatmul.mubr.f32.gmra.mrb[0].mxu0 %v218
    %v979 = vpop.f32.mrb[0].mxu0
    %v980 = vadd.f32 %v661, %v979
    %v981 = vpop.f32.mrb[0].mxu0
    %982 = vmatprep.mubr.f32.mxu0 0.0
    %983 = vmatmul.mubr.f32.gmra.mrb[0].mxu0 %v219
    %v984 = vpop.f32.mrb[0].mxu0
    %v985 = vadd.f32 %v661, %v984
    %v986 = vpop.f32.mrb[0].mxu0
    %987 = vmatprep.mubr.f32.mxu0 0.0
    %988 = vmatmul.mubr.f32.gmra.mrb[0].mxu0 %v220
    %v989 = vpop.f32.mrb[0].mxu0
    %v990 = vadd.f32 %v661, %v989
    %v991 = vpop.f32.mrb[0].mxu0
    %992 = vmatprep.mubr.f32.mxu0 0.0
    %993 = vmatmul.mubr.f32.gmra.mrb[0].mxu0 %v221
    %v994 = vpop.f32.mrb[0].mxu0
    %v995 = vadd.f32 %v661, %v994
    %v996 = vpop.f32.mrb[0].mxu0
    %997 = vmatprep.mubr.f32.mxu0 0.0
    %998 = vmatmul.mubr.f32.gmra.mrb[0].mxu0 %v222
    %v999 = vpop.f32.mrb[0].mxu0
    %v1000 = vadd.f32 %v661, %v999
    %v1001 = vpop.f32.mrb[0].mxu0
    %1002 = vmatprep.mubr.f32.mxu0 0.0
    %1003 = vmatmul.mubr.f32.gmra.mrb[0].mxu0 %v223
    %v1004 = vpop.f32.mrb[0].mxu0
    %v1005 = vadd.f32 %v661, %v1004
    %v1006 = vpop.f32.mrb[0].mxu0
    %1007 = vmatprep.mubr.f32.mxu0 0.0
    %1008 = vmatmul.mubr.f32.gmra.mrb[0].mxu0 %v224
    %v1009 = vpop.f32.mrb[0].mxu0
    %v1010 = vadd.f32 %v661, %v1009
    %v1011 = vpop.f32.mrb[0].mxu0
    %1012 = vmatprep.mubr.f32.mxu0 0.0
    %1013 = vmatmul.mubr.f32.gmra.mrb[0].mxu0 %v225
    %v1014 = vpop.f32.mrb[0].mxu0
    %v1015 = vadd.f32 %v661, %v1014
    %v1016 = vpop.f32.mrb[0].mxu0
    %1017 = vmatprep.mubr.f32.mxu0 0.0
    %1018 = vmatmul.mubr.f32.gmra.mrb[0].mxu0 %v226
    %v1019 = vpop.f32.mrb[0].mxu0
    %v1020 = vadd.f32 %v661, %v1019
    %v1021 = vpop.f32.mrb[0].mxu0
    %1022 = vmatprep.mubr.f32.mxu0 0.0
    %1023 = vmatmul.mubr.f32.gmra.mrb[0].mxu0 %v227
    %v1024 = vpop.f32.mrb[0].mxu0
    %v1025 = vadd.f32 %v661, %v1024
    %v1026 = vpop.f32.mrb[0].mxu0
    %1027 = vmatprep.mubr.f32.mxu0 0.0
    %1028 = vmatmul.mubr.f32.gmra.mrb[0].mxu0 %v228
    %v1029 = vpop.f32.mrb[0].mxu0
    %v1030 = vadd.f32 %v661, %v1029
    %v1031 = vpop.f32.mrb[0].mxu0
    %1032 = vmatprep.mubr.f32.mxu0 0.0
    %1033 = vmatmul.mubr.f32.gmra.mrb[0].mxu0 %v229
    %v1034 = vpop.f32.mrb[0].mxu0
    %v1035 = vadd.f32 %v661, %v1034
    %v1036 = vpop.f32.mrb[0].mxu0
    %1037 = vmatprep.mubr.f32.mxu0 0.0
    %1038 = vmatmul.mubr.f32.gmra.mrb[0].mxu0 %v230
    %v1039 = vpop.f32.mrb[0].mxu0
    %v1040 = vadd.f32 %v661, %v1039
    %v1041 = vpop.f32.mrb[0].mxu0
    %1042 = vmatprep.mubr.f32.mxu0 0.0
    %1043 = vmatmul.mubr.f32.gmra.mrb[0].mxu0 %v231
    %v1044 = vpop.f32.mrb[0].mxu0
    %v1045 = vadd.f32 %v661, %v1044
    %v1046 = vpop.f32.mrb[0].mxu0
    %1047 = vdwg.mxu0
    %v1048 = vld [vmem:[#allocation10] sm:$0xff]
    %v1049 = vld [vmem:[#allocation10 + $0x8] sm:$0xff]
    %v1050 = vld [vmem:[#allocation10 + $0x10] sm:$0xff]
    %v1051 = vld [vmem:[#allocation10 + $0x18] sm:$0xff]
    %v1052 = vld [vmem:[#allocation10 + $0x20] sm:$0xff]
    %v1053 = vld [vmem:[#allocation10 + $0x28] sm:$0xff]
    %v1054 = vld [vmem:[#allocation10 + $0x30] sm:$0xff]
    %v1055 = vld [vmem:[#allocation10 + $0x38] sm:$0xff]
    %v1056 = vld [vmem:[#allocation10 + $0x40] sm:$0xff]
    %v1057 = vld [vmem:[#allocation10 + $0x48] sm:$0xff]
    %v1058 = vld [vmem:[#allocation10 + $0x50] sm:$0xff]
    %v1059 = vld [vmem:[#allocation10 + $0x58] sm:$0xff]
    %v1060 = vld [vmem:[#allocation10 + $0x60] sm:$0xff]
    %v1061 = vld [vmem:[#allocation10 + $0x68] sm:$0xff]
    %v1062 = vld [vmem:[#allocation10 + $0x70] sm:$0xff]
    %v1063 = vld [vmem:[#allocation10 + $0x78] sm:$0xff]
    %v1064 = vld [vmem:[%s7] sm:$0x1]
    %v1066 = vlaneseq
    %v1067 = vshrl.u32 %v1066, 7
    %v1068 = vsub.s32 0, %v1067
    %v1069 = vrot.slane %v1064, %v1068
    %1071 = vmatprep.subr.mxu0 0.0
    %1072 = vmatpush1.msra.mxu0 %v1048
    %1073 = vmatprep.subr.mxu0 0.0
    %1074 = vmatpush1.msra.mxu0 %v1049
    %1075 = vmatprep.subr.mxu0 0.0
    %1076 = vmatpush1.msra.mxu0 %v1050
    %1077 = vmatprep.subr.mxu0 0.0
    %1078 = vmatpush1.msra.mxu0 %v1051
    %1079 = vmatprep.subr.mxu0 0.0
    %1080 = vmatpush1.msra.mxu0 %v1052
    %1081 = vmatprep.subr.mxu0 0.0
    %1082 = vmatpush1.msra.mxu0 %v1053
    %1083 = vmatprep.subr.mxu0 0.0
    %1084 = vmatpush1.msra.mxu0 %v1054
    %1085 = vmatprep.subr.mxu0 0.0
    %1086 = vmatpush1.msra.mxu0 %v1055
    %1087 = vmatprep.subr.mxu0 0.0
    %1088 = vmatpush1.msra.mxu0 %v1056
    %1089 = vmatprep.subr.mxu0 0.0
    %1090 = vmatpush1.msra.mxu0 %v1057
    %1091 = vmatprep.subr.mxu0 0.0
    %1092 = vmatpush1.msra.mxu0 %v1058
    %1093 = vmatprep.subr.mxu0 0.0
    %1094 = vmatpush1.msra.mxu0 %v1059
    %1095 = vmatprep.subr.mxu0 0.0
    %1096 = vmatpush1.msra.mxu0 %v1060
    %1097 = vmatprep.subr.mxu0 0.0
    %1098 = vmatpush1.msra.mxu0 %v1061
    %1099 = vmatprep.subr.mxu0 0.0
    %1100 = vmatpush1.msra.mxu0 %v1062
    %1101 = vmatprep.subr.mxu0 0.0
    %1102 = vmatpush1.msra.mxu0 %v1063
    %1103 = vmatprep.subr.mxu0 0.0
    %1104 = vmatpush1.msra.mxu0 0.0
    %1105 = vmatprep.subr.mxu0 0.0
    %1106 = vmatpush1.msra.mxu0 0.0
    %1107 = vmatprep.subr.mxu0 0.0
    %1108 = vmatpush1.msra.mxu0 0.0
    %1109 = vmatprep.subr.mxu0 0.0
    %1110 = vmatpush1.msra.mxu0 0.0
    %1111 = vmatprep.subr.mxu0 0.0
    %1112 = vmatpush1.msra.mxu0 0.0
    %1113 = vmatprep.subr.mxu0 0.0
    %1114 = vmatpush1.msra.mxu0 0.0
    %1115 = vmatprep.subr.mxu0 0.0
    %1116 = vmatpush1.msra.mxu0 0.0
    %1117 = vmatprep.subr.mxu0 0.0
    %1118 = vmatpush1.msra.mxu0 0.0
    %1119 = vmatprep.subr.mxu0 0.0
    %1120 = vmatpush1.msra.mxu0 0.0
    %1121 = vmatprep.subr.mxu0 0.0
    %1122 = vmatpush1.msra.mxu0 0.0
    %1123 = vmatprep.subr.mxu0 0.0
    %1124 = vmatpush1.msra.mxu0 0.0
    %1125 = vmatprep.subr.mxu0 0.0
    %1126 = vmatpush1.msra.mxu0 0.0
    %1127 = vmatprep.subr.mxu0 0.0
    %1128 = vmatpush1.msra.mxu0 0.0
    %1129 = vmatprep.subr.mxu0 0.0
    %1130 = vmatpush1.msra.mxu0 0.0
    %1131 = vmatprep.subr.mxu0 0.0
    %1132 = vmatpush1.msra.mxu0 0.0
    %1133 = vmatprep.subr.mxu0 0.0
    %1134 = vmatpush1.msra.mxu0 0.0
    %1135 = vmatprep.mubr.f32.mxu0 0.0
    %1136 = vmatmul.mubr.f32.gmra.mrb[0].mxu0 %v168
    %v1137 = vpop.f32.mrb[0].mxu0
    %v1138 = vadd.f32 %v1069, %v1137
    %v1139 = vpop.f32.mrb[0].mxu0
    %1140 = vmatprep.mubr.f32.mxu0 0.0
    %1141 = vmatmul.mubr.f32.gmra.mrb[0].mxu0 %v169
    %v1142 = vpop.f32.mrb[0].mxu0
    %v1143 = vadd.f32 %v1069, %v1142
    %v1144 = vpop.f32.mrb[0].mxu0
    %1145 = vmatprep.mubr.f32.mxu0 0.0
    %1146 = vmatmul.mubr.f32.gmra.mrb[0].mxu0 %v170
    %v1147 = vpop.f32.mrb[0].mxu0
    %v1148 = vadd.f32 %v1069, %v1147
    %v1149 = vpop.f32.mrb[0].mxu0
    %1150 = vmatprep.mubr.f32.mxu0 0.0
    %1151 = vmatmul.mubr.f32.gmra.mrb[0].mxu0 %v171
    %v1152 = vpop.f32.mrb[0].mxu0
    %v1153 = vadd.f32 %v1069, %v1152
    %v1154 = vpop.f32.mrb[0].mxu0
    %1155 = vmatprep.mubr.f32.mxu0 0.0
    %1156 = vmatmul.mubr.f32.gmra.mrb[0].mxu0 %v172
    %v1157 = vpop.f32.mrb[0].mxu0
    %v1158 = vadd.f32 %v1069, %v1157
    %v1159 = vpop.f32.mrb[0].mxu0
    %1160 = vmatprep.mubr.f32.mxu0 0.0
    %1161 = vmatmul.mubr.f32.gmra.mrb[0].mxu0 %v173
    %v1162 = vpop.f32.mrb[0].mxu0
    %v1163 = vadd.f32 %v1069, %v1162
    %v1164 = vpop.f32.mrb[0].mxu0
    %1165 = vmatprep.mubr.f32.mxu0 0.0
    %1166 = vmatmul.mubr.f32.gmra.mrb[0].mxu0 %v174
    %v1167 = vpop.f32.mrb[0].mxu0
    %v1168 = vadd.f32 %v1069, %v1167
    %v1169 = vpop.f32.mrb[0].mxu0
    %1170 = vmatprep.mubr.f32.mxu0 0.0
    %1171 = vmatmul.mubr.f32.gmra.mrb[0].mxu0 %v175
    %v1172 = vpop.f32.mrb[0].mxu0
    %v1173 = vadd.f32 %v1069, %v1172
    %v1174 = vpop.f32.mrb[0].mxu0
    %1175 = vmatprep.mubr.f32.mxu0 0.0
    %1176 = vmatmul.mubr.f32.gmra.mrb[0].mxu0 %v176
    %v1177 = vpop.f32.mrb[0].mxu0
    %v1178 = vadd.f32 %v1069, %v1177
    %v1179 = vpop.f32.mrb[0].mxu0
    %1180 = vmatprep.mubr.f32.mxu0 0.0
    %1181 = vmatmul.mubr.f32.gmra.mrb[0].mxu0 %v177
    %v1182 = vpop.f32.mrb[0].mxu0
    %v1183 = vadd.f32 %v1069, %v1182
    %v1184 = vpop.f32.mrb[0].mxu0
    %1185 = vmatprep.mubr.f32.mxu0 0.0
    %1186 = vmatmul.mubr.f32.gmra.mrb[0].mxu0 %v178
    %v1187 = vpop.f32.mrb[0].mxu0
    %v1188 = vadd.f32 %v1069, %v1187
    %v1189 = vpop.f32.mrb[0].mxu0
    %1190 = vmatprep.mubr.f32.mxu0 0.0
    %1191 = vmatmul.mubr.f32.gmra.mrb[0].mxu0 %v179
    %v1192 = vpop.f32.mrb[0].mxu0
    %v1193 = vadd.f32 %v1069, %v1192
    %v1194 = vpop.f32.mrb[0].mxu0
    %1195 = vmatprep.mubr.f32.mxu0 0.0
    %1196 = vmatmul.mubr.f32.gmra.mrb[0].mxu0 %v180
    %v1197 = vpop.f32.mrb[0].mxu0
    %v1198 = vadd.f32 %v1069, %v1197
    %v1199 = vpop.f32.mrb[0].mxu0
    %1200 = vmatprep.mubr.f32.mxu0 0.0
    %1201 = vmatmul.mubr.f32.gmra.mrb[0].mxu0 %v181
    %v1202 = vpop.f32.mrb[0].mxu0
    %v1203 = vadd.f32 %v1069, %v1202
    %v1204 = vpop.f32.mrb[0].mxu0
    %1205 = vmatprep.mubr.f32.mxu0 0.0
    %1206 = vmatmul.mubr.f32.gmra.mrb[0].mxu0 %v182
    %v1207 = vpop.f32.mrb[0].mxu0
    %v1208 = vadd.f32 %v1069, %v1207
    %v1209 = vpop.f32.mrb[0].mxu0
    %1210 = vmatprep.mubr.f32.mxu0 0.0
    %1211 = vmatmul.mubr.f32.gmra.mrb[0].mxu0 %v183
    %v1212 = vpop.f32.mrb[0].mxu0
    %v1213 = vadd.f32 %v1069, %v1212
    %v1214 = vpop.f32.mrb[0].mxu0
    %1215 = vmatprep.mubr.f32.mxu0 0.0
    %1216 = vmatmul.mubr.f32.gmra.mrb[0].mxu0 %v184
    %v1217 = vpop.f32.mrb[0].mxu0
    %v1218 = vadd.f32 %v1069, %v1217
    %v1219 = vpop.f32.mrb[0].mxu0
    %1220 = vmatprep.mubr.f32.mxu0 0.0
    %1221 = vmatmul.mubr.f32.gmra.mrb[0].mxu0 %v185
    %v1222 = vpop.f32.mrb[0].mxu0
    %v1223 = vadd.f32 %v1069, %v1222
    %v1224 = vpop.f32.mrb[0].mxu0
    %1225 = vmatprep.mubr.f32.mxu0 0.0
    %1226 = vmatmul.mubr.f32.gmra.mrb[0].mxu0 %v186
    %v1227 = vpop.f32.mrb[0].mxu0
    %v1228 = vadd.f32 %v1069, %v1227
    %v1229 = vpop.f32.mrb[0].mxu0
    %1230 = vmatprep.mubr.f32.mxu0 0.0
    %1231 = vmatmul.mubr.f32.gmra.mrb[0].mxu0 %v187
    %v1232 = vpop.f32.mrb[0].mxu0
    %v1233 = vadd.f32 %v1069, %v1232
    %v1234 = vpop.f32.mrb[0].mxu0
    %1235 = vmatprep.mubr.f32.mxu0 0.0
    %1236 = vmatmul.mubr.f32.gmra.mrb[0].mxu0 %v188
    %v1237 = vpop.f32.mrb[0].mxu0
    %v1238 = vadd.f32 %v1069, %v1237
    %v1239 = vpop.f32.mrb[0].mxu0
    %1240 = vmatprep.mubr.f32.mxu0 0.0
    %1241 = vmatmul.mubr.f32.gmra.mrb[0].mxu0 %v189
    %v1242 = vpop.f32.mrb[0].mxu0
    %v1243 = vadd.f32 %v1069, %v1242
    %v1244 = vpop.f32.mrb[0].mxu0
    %1245 = vmatprep.mubr.f32.mxu0 0.0
    %1246 = vmatmul.mubr.f32.gmra.mrb[0].mxu0 %v190
    %v1247 = vpop.f32.mrb[0].mxu0
    %v1248 = vadd.f32 %v1069, %v1247
    %v1249 = vpop.f32.mrb[0].mxu0
    %1250 = vmatprep.mubr.f32.mxu0 0.0
    %1251 = vmatmul.mubr.f32.gmra.mrb[0].mxu0 %v191
    %v1252 = vpop.f32.mrb[0].mxu0
    %v1253 = vadd.f32 %v1069, %v1252
    %v1254 = vpop.f32.mrb[0].mxu0
    %1255 = vmatprep.mubr.f32.mxu0 0.0
    %1256 = vmatmul.mubr.f32.gmra.mrb[0].mxu0 %v192
    %v1257 = vpop.f32.mrb[0].mxu0
    %v1258 = vadd.f32 %v1069, %v1257
    %v1259 = vpop.f32.mrb[0].mxu0
    %1260 = vmatprep.mubr.f32.mxu0 0.0
    %1261 = vmatmul.mubr.f32.gmra.mrb[0].mxu0 %v193
    %v1262 = vpop.f32.mrb[0].mxu0
    %v1263 = vadd.f32 %v1069, %v1262
    %v1264 = vpop.f32.mrb[0].mxu0
    %1265 = vmatprep.mubr.f32.mxu0 0.0
    %1266 = vmatmul.mubr.f32.gmra.mrb[0].mxu0 %v194
    %v1267 = vpop.f32.mrb[0].mxu0
    %v1268 = vadd.f32 %v1069, %v1267
    %v1269 = vpop.f32.mrb[0].mxu0
    %1270 = vmatprep.mubr.f32.mxu0 0.0
    %1271 = vmatmul.mubr.f32.gmra.mrb[0].mxu0 %v195
    %v1272 = vpop.f32.mrb[0].mxu0
    %v1273 = vadd.f32 %v1069, %v1272
    %v1274 = vpop.f32.mrb[0].mxu0
    %1275 = vmatprep.mubr.f32.mxu0 0.0
    %1276 = vmatmul.mubr.f32.gmra.mrb[0].mxu0 %v196
    %v1277 = vpop.f32.mrb[0].mxu0
    %v1278 = vadd.f32 %v1069, %v1277
    %v1279 = vpop.f32.mrb[0].mxu0
    %1280 = vmatprep.mubr.f32.mxu0 0.0
    %1281 = vmatmul.mubr.f32.gmra.mrb[0].mxu0 %v197
    %v1282 = vpop.f32.mrb[0].mxu0
    %v1283 = vadd.f32 %v1069, %v1282
    %v1284 = vpop.f32.mrb[0].mxu0
    %1285 = vmatprep.mubr.f32.mxu0 0.0
    %1286 = vmatmul.mubr.f32.gmra.mrb[0].mxu0 %v198
    %v1287 = vpop.f32.mrb[0].mxu0
    %v1288 = vadd.f32 %v1069, %v1287
    %v1289 = vpop.f32.mrb[0].mxu0
    %1290 = vmatprep.mubr.f32.mxu0 0.0
    %1291 = vmatmul.mubr.f32.gmra.mrb[0].mxu0 %v199
    %v1292 = vpop.f32.mrb[0].mxu0
    %v1293 = vadd.f32 %v1069, %v1292
    %v1294 = vpop.f32.mrb[0].mxu0
    %1295 = vmatprep.mubr.f32.mxu0 0.0
    %1296 = vmatmul.mubr.f32.gmra.mrb[0].mxu0 %v200
    %v1297 = vpop.f32.mrb[0].mxu0
    %v1298 = vadd.f32 %v1069, %v1297
    %v1299 = vpop.f32.mrb[0].mxu0
    %1300 = vmatprep.mubr.f32.mxu0 0.0
    %1301 = vmatmul.mubr.f32.gmra.mrb[0].mxu0 %v201
    %v1302 = vpop.f32.mrb[0].mxu0
    %v1303 = vadd.f32 %v1069, %v1302
    %v1304 = vpop.f32.mrb[0].mxu0
    %1305 = vmatprep.mubr.f32.mxu0 0.0
    %1306 = vmatmul.mubr.f32.gmra.mrb[0].mxu0 %v202
    %v1307 = vpop.f32.mrb[0].mxu0
    %v1308 = vadd.f32 %v1069, %v1307
    %v1309 = vpop.f32.mrb[0].mxu0
    %1310 = vmatprep.mubr.f32.mxu0 0.0
    %1311 = vmatmul.mubr.f32.gmra.mrb[0].mxu0 %v203
    %v1312 = vpop.f32.mrb[0].mxu0
    %v1313 = vadd.f32 %v1069, %v1312
    %v1314 = vpop.f32.mrb[0].mxu0
    %1315 = vmatprep.mubr.f32.mxu0 0.0
    %1316 = vmatmul.mubr.f32.gmra.mrb[0].mxu0 %v204
    %v1317 = vpop.f32.mrb[0].mxu0
    %v1318 = vadd.f32 %v1069, %v1317
    %v1319 = vpop.f32.mrb[0].mxu0
    %1320 = vmatprep.mubr.f32.mxu0 0.0
    %1321 = vmatmul.mubr.f32.gmra.mrb[0].mxu0 %v205
    %v1322 = vpop.f32.mrb[0].mxu0
    %v1323 = vadd.f32 %v1069, %v1322
    %v1324 = vpop.f32.mrb[0].mxu0
    %1325 = vmatprep.mubr.f32.mxu0 0.0
    %1326 = vmatmul.mubr.f32.gmra.mrb[0].mxu0 %v206
    %v1327 = vpop.f32.mrb[0].mxu0
    %v1328 = vadd.f32 %v1069, %v1327
    %v1329 = vpop.f32.mrb[0].mxu0
    %1330 = vmatprep.mubr.f32.mxu0 0.0
    %1331 = vmatmul.mubr.f32.gmra.mrb[0].mxu0 %v207
    %v1332 = vpop.f32.mrb[0].mxu0
    %v1333 = vadd.f32 %v1069, %v1332
    %v1334 = vpop.f32.mrb[0].mxu0
    %1335 = vmatprep.mubr.f32.mxu0 0.0
    %1336 = vmatmul.mubr.f32.gmra.mrb[0].mxu0 %v208
    %v1337 = vpop.f32.mrb[0].mxu0
    %v1338 = vadd.f32 %v1069, %v1337
    %v1339 = vpop.f32.mrb[0].mxu0
    %1340 = vmatprep.mubr.f32.mxu0 0.0
    %1341 = vmatmul.mubr.f32.gmra.mrb[0].mxu0 %v209
    %v1342 = vpop.f32.mrb[0].mxu0
    %v1343 = vadd.f32 %v1069, %v1342
    %v1344 = vpop.f32.mrb[0].mxu0
    %1345 = vmatprep.mubr.f32.mxu0 0.0
    %1346 = vmatmul.mubr.f32.gmra.mrb[0].mxu0 %v210
    %v1347 = vpop.f32.mrb[0].mxu0
    %v1348 = vadd.f32 %v1069, %v1347
    %v1349 = vpop.f32.mrb[0].mxu0
    %1350 = vmatprep.mubr.f32.mxu0 0.0
    %1351 = vmatmul.mubr.f32.gmra.mrb[0].mxu0 %v211
    %v1352 = vpop.f32.mrb[0].mxu0
    %v1353 = vadd.f32 %v1069, %v1352
    %v1354 = vpop.f32.mrb[0].mxu0
    %1355 = vmatprep.mubr.f32.mxu0 0.0
    %1356 = vmatmul.mubr.f32.gmra.mrb[0].mxu0 %v212
    %v1357 = vpop.f32.mrb[0].mxu0
    %v1358 = vadd.f32 %v1069, %v1357
    %v1359 = vpop.f32.mrb[0].mxu0
    %1360 = vmatprep.mubr.f32.mxu0 0.0
    %1361 = vmatmul.mubr.f32.gmra.mrb[0].mxu0 %v213
    %v1362 = vpop.f32.mrb[0].mxu0
    %v1363 = vadd.f32 %v1069, %v1362
    %v1364 = vpop.f32.mrb[0].mxu0
    %1365 = vmatprep.mubr.f32.mxu0 0.0
    %1366 = vmatmul.mubr.f32.gmra.mrb[0].mxu0 %v214
    %v1367 = vpop.f32.mrb[0].mxu0
    %v1368 = vadd.f32 %v1069, %v1367
    %v1369 = vpop.f32.mrb[0].mxu0
    %1370 = vmatprep.mubr.f32.mxu0 0.0
    %1371 = vmatmul.mubr.f32.gmra.mrb[0].mxu0 %v215
    %v1372 = vpop.f32.mrb[0].mxu0
    %v1373 = vadd.f32 %v1069, %v1372
    %v1374 = vpop.f32.mrb[0].mxu0
    %1375 = vmatprep.mubr.f32.mxu0 0.0
    %1376 = vmatmul.mubr.f32.gmra.mrb[0].mxu0 %v216
    %v1377 = vpop.f32.mrb[0].mxu0
    %v1378 = vadd.f32 %v1069, %v1377
    %v1379 = vpop.f32.mrb[0].mxu0
    %1380 = vmatprep.mubr.f32.mxu0 0.0
    %1381 = vmatmul.mubr.f32.gmra.mrb[0].mxu0 %v217
    %v1382 = vpop.f32.mrb[0].mxu0
    %v1383 = vadd.f32 %v1069, %v1382
    %v1384 = vpop.f32.mrb[0].mxu0
    %1385 = vmatprep.mubr.f32.mxu0 0.0
    %1386 = vmatmul.mubr.f32.gmra.mrb[0].mxu0 %v218
    %v1387 = vpop.f32.mrb[0].mxu0
    %v1388 = vadd.f32 %v1069, %v1387
    %v1389 = vpop.f32.mrb[0].mxu0
    %1390 = vmatprep.mubr.f32.mxu0 0.0
    %1391 = vmatmul.mubr.f32.gmra.mrb[0].mxu0 %v219
    %v1392 = vpop.f32.mrb[0].mxu0
    %v1393 = vadd.f32 %v1069, %v1392
    %v1394 = vpop.f32.mrb[0].mxu0
    %1395 = vmatprep.mubr.f32.mxu0 0.0
    %1396 = vmatmul.mubr.f32.gmra.mrb[0].mxu0 %v220
    %v1397 = vpop.f32.mrb[0].mxu0
    %v1398 = vadd.f32 %v1069, %v1397
    %v1399 = vpop.f32.mrb[0].mxu0
    %1400 = vmatprep.mubr.f32.mxu0 0.0
    %1401 = vmatmul.mubr.f32.gmra.mrb[0].mxu0 %v221
    %v1402 = vpop.f32.mrb[0].mxu0
    %v1403 = vadd.f32 %v1069, %v1402
    %v1404 = vpop.f32.mrb[0].mxu0
    %1405 = vmatprep.mubr.f32.mxu0 0.0
    %1406 = vmatmul.mubr.f32.gmra.mrb[0].mxu0 %v222
    %v1407 = vpop.f32.mrb[0].mxu0
    %v1408 = vadd.f32 %v1069, %v1407
    %v1409 = vpop.f32.mrb[0].mxu0
    %1410 = vmatprep.mubr.f32.mxu0 0.0
    %1411 = vmatmul.mubr.f32.gmra.mrb[0].mxu0 %v223
    %v1412 = vpop.f32.mrb[0].mxu0
    %v1413 = vadd.f32 %v1069, %v1412
    %v1414 = vpop.f32.mrb[0].mxu0
    %1415 = vmatprep.mubr.f32.mxu0 0.0
    %1416 = vmatmul.mubr.f32.gmra.mrb[0].mxu0 %v224
    %v1417 = vpop.f32.mrb[0].mxu0
    %v1418 = vadd.f32 %v1069, %v1417
    %v1419 = vpop.f32.mrb[0].mxu0
    %1420 = vmatprep.mubr.f32.mxu0 0.0
    %1421 = vmatmul.mubr.f32.gmra.mrb[0].mxu0 %v225
    %v1422 = vpop.f32.mrb[0].mxu0
    %v1423 = vadd.f32 %v1069, %v1422
    %v1424 = vpop.f32.mrb[0].mxu0
    %1425 = vmatprep.mubr.f32.mxu0 0.0
    %1426 = vmatmul.mubr.f32.gmra.mrb[0].mxu0 %v226
    %v1427 = vpop.f32.mrb[0].mxu0
    %v1428 = vadd.f32 %v1069, %v1427
    %v1429 = vpop.f32.mrb[0].mxu0
    %1430 = vmatprep.mubr.f32.mxu0 0.0
    %1431 = vmatmul.mubr.f32.gmra.mrb[0].mxu0 %v227
    %v1432 = vpop.f32.mrb[0].mxu0
    %v1433 = vadd.f32 %v1069, %v1432
    %v1434 = vpop.f32.mrb[0].mxu0
    %1435 = vmatprep.mubr.f32.mxu0 0.0
    %1436 = vmatmul.mubr.f32.gmra.mrb[0].mxu0 %v228
    %v1437 = vpop.f32.mrb[0].mxu0
    %v1438 = vadd.f32 %v1069, %v1437
    %v1439 = vpop.f32.mrb[0].mxu0
    %1440 = vmatprep.mubr.f32.mxu0 0.0
    %1441 = vmatmul.mubr.f32.gmra.mrb[0].mxu0 %v229
    %v1442 = vpop.f32.mrb[0].mxu0
    %v1443 = vadd.f32 %v1069, %v1442
    %v1444 = vpop.f32.mrb[0].mxu0
    %1445 = vmatprep.mubr.f32.mxu0 0.0
    %1446 = vmatmul.mubr.f32.gmra.mrb[0].mxu0 %v230
    %v1447 = vpop.f32.mrb[0].mxu0
    %v1448 = vadd.f32 %v1069, %v1447
    %v1449 = vpop.f32.mrb[0].mxu0
    %1450 = vmatprep.mubr.f32.mxu0 0.0
    %1451 = vmatmul.mubr.f32.gmra.mrb[0].mxu0 %v231
    %v1452 = vpop.f32.mrb[0].mxu0
    %v1453 = vadd.f32 %v1069, %v1452
    %v1454 = vpop.f32.mrb[0].mxu0
    %1455 = vdwg.mxu0
    %1456 = vst [vmem:[#allocation11] sm:$0xff] %v322
    %1457 = vst [vmem:[#allocation11 + $0x8] sm:$0xff] %v327
    %1458 = vst [vmem:[#allocation11 + $0x10] sm:$0xff] %v332
    %1459 = vst [vmem:[#allocation11 + $0x18] sm:$0xff] %v337
    %1460 = vst [vmem:[#allocation11 + $0x20] sm:$0xff] %v342
    %1461 = vst [vmem:[#allocation11 + $0x28] sm:$0xff] %v347
    %1462 = vst [vmem:[#allocation11 + $0x30] sm:$0xff] %v352
    %1463 = vst [vmem:[#allocation11 + $0x38] sm:$0xff] %v357
    %1464 = vst [vmem:[#allocation11 + $0x40] sm:$0xff] %v362
    %1465 = vst [vmem:[#allocation11 + $0x48] sm:$0xff] %v367
    %1466 = vst [vmem:[#allocation11 + $0x50] sm:$0xff] %v372
    %1467 = vst [vmem:[#allocation11 + $0x58] sm:$0xff] %v377
    %1468 = vst [vmem:[#allocation11 + $0x60] sm:$0xff] %v382
    %1469 = vst [vmem:[#allocation11 + $0x68] sm:$0xff] %v387
    %1470 = vst [vmem:[#allocation11 + $0x70] sm:$0xff] %v392
    %1471 = vst [vmem:[#allocation11 + $0x78] sm:$0xff] %v397
    %1472 = vst [vmem:[#allocation11 + $0x80] sm:$0xff] %v402
    %1473 = vst [vmem:[#allocation11 + $0x88] sm:$0xff] %v407
    %1474 = vst [vmem:[#allocation11 + $0x90] sm:$0xff] %v412
    %1475 = vst [vmem:[#allocation11 + $0x98] sm:$0xff] %v417
    %1476 = vst [vmem:[#allocation11 + $0xa0] sm:$0xff] %v422
    %1477 = vst [vmem:[#allocation11 + $0xa8] sm:$0xff] %v427
    %1478 = vst [vmem:[#allocation11 + $0xb0] sm:$0xff] %v432
    %1479 = vst [vmem:[#allocation11 + $0xb8] sm:$0xff] %v437
    %1480 = vst [vmem:[#allocation11 + $0xc0] sm:$0xff] %v442
    %1481 = vst [vmem:[#allocation11 + $0xc8] sm:$0xff] %v447
    %1482 = vst [vmem:[#allocation11 + $0xd0] sm:$0xff] %v452
    %1483 = vst [vmem:[#allocation11 + $0xd8] sm:$0xff] %v457
    %1484 = vst [vmem:[#allocation11 + $0xe0] sm:$0xff] %v462
    %1485 = vst [vmem:[#allocation11 + $0xe8] sm:$0xff] %v467
    %1486 = vst [vmem:[#allocation11 + $0xf0] sm:$0xff] %v472
    %1487 = vst [vmem:[#allocation11 + $0xf8] sm:$0xff] %v477
    %1488 = vst [vmem:[#allocation11 + $0x100] sm:$0xff] %v482
    %1489 = vst [vmem:[#allocation11 + $0x108] sm:$0xff] %v487
    %1490 = vst [vmem:[#allocation11 + $0x110] sm:$0xff] %v492
    %1491 = vst [vmem:[#allocation11 + $0x118] sm:$0xff] %v497
    %1492 = vst [vmem:[#allocation11 + $0x120] sm:$0xff] %v502
    %1493 = vst [vmem:[#allocation11 + $0x128] sm:$0xff] %v507
    %1494 = vst [vmem:[#allocation11 + $0x130] sm:$0xff] %v512
    %1495 = vst [vmem:[#allocation11 + $0x138] sm:$0xff] %v517
    %1496 = vst [vmem:[#allocation11 + $0x140] sm:$0xff] %v522
    %1497 = vst [vmem:[#allocation11 + $0x148] sm:$0xff] %v527
    %1498 = vst [vmem:[#allocation11 + $0x150] sm:$0xff] %v532
    %1499 = vst [vmem:[#allocation11 + $0x158] sm:$0xff] %v537
    %1500 = vst [vmem:[#allocation11 + $0x160] sm:$0xff] %v542
    %1501 = vst [vmem:[#allocation11 + $0x168] sm:$0xff] %v547
    %1502 = vst [vmem:[#allocation11 + $0x170] sm:$0xff] %v552
    %1503 = vst [vmem:[#allocation11 + $0x178] sm:$0xff] %v557
    %1504 = vst [vmem:[#allocation11 + $0x180] sm:$0xff] %v562
    %1505 = vst [vmem:[#allocation11 + $0x188] sm:$0xff] %v567
    %1506 = vst [vmem:[#allocation11 + $0x190] sm:$0xff] %v572
    %1507 = vst [vmem:[#allocation11 + $0x198] sm:$0xff] %v577
    %1508 = vst [vmem:[#allocation11 + $0x1a0] sm:$0xff] %v582
    %1509 = vst [vmem:[#allocation11 + $0x1a8] sm:$0xff] %v587
    %1510 = vst [vmem:[#allocation11 + $0x1b0] sm:$0xff] %v592
    %1511 = vst [vmem:[#allocation11 + $0x1b8] sm:$0xff] %v597
    %1512 = vst [vmem:[#allocation11 + $0x1c0] sm:$0xff] %v602
    %1513 = vst [vmem:[#allocation11 + $0x1c8] sm:$0xff] %v607
    %1514 = vst [vmem:[#allocation11 + $0x1d0] sm:$0xff] %v612
    %1515 = vst [vmem:[#allocation11 + $0x1d8] sm:$0xff] %v617
    %1516 = vst [vmem:[#allocation11 + $0x1e0] sm:$0xff] %v622
    %1517 = vst [vmem:[#allocation11 + $0x1e8] sm:$0xff] %v627
    %1518 = vst [vmem:[#allocation11 + $0x1f0] sm:$0xff] %v632
    %1519 = vst [vmem:[#allocation11 + $0x1f8] sm:$0xff] %v637
    %1520 = vst [vmem:[#allocation12] sm:$0xff] %v730
    %1521 = vst [vmem:[#allocation12 + $0x8] sm:$0xff] %v735
    %1522 = vst [vmem:[#allocation12 + $0x10] sm:$0xff] %v740
    %1523 = vst [vmem:[#allocation12 + $0x18] sm:$0xff] %v745
    %1524 = vst [vmem:[#allocation12 + $0x20] sm:$0xff] %v750
    %1525 = vst [vmem:[#allocation12 + $0x28] sm:$0xff] %v755
    %1526 = vst [vmem:[#allocation12 + $0x30] sm:$0xff] %v760
    %1527 = vst [vmem:[#allocation12 + $0x38] sm:$0xff] %v765
    %1528 = vst [vmem:[#allocation12 + $0x40] sm:$0xff] %v770
    %1529 = vst [vmem:[#allocation12 + $0x48] sm:$0xff] %v775
    %1530 = vst [vmem:[#allocation12 + $0x50] sm:$0xff] %v780
    %1531 = vst [vmem:[#allocation12 + $0x58] sm:$0xff] %v785
    %1532 = vst [vmem:[#allocation12 + $0x60] sm:$0xff] %v790
    %1533 = vst [vmem:[#allocation12 + $0x68] sm:$0xff] %v795
    %1534 = vst [vmem:[#allocation12 + $0x70] sm:$0xff] %v800
    %1535 = vst [vmem:[#allocation12 + $0x78] sm:$0xff] %v805
    %1536 = vst [vmem:[#allocation12 + $0x80] sm:$0xff] %v810
    %1537 = vst [vmem:[#allocation12 + $0x88] sm:$0xff] %v815
    %1538 = vst [vmem:[#allocation12 + $0x90] sm:$0xff] %v820
    %1539 = vst [vmem:[#allocation12 + $0x98] sm:$0xff] %v825
    %1540 = vst [vmem:[#allocation12 + $0xa0] sm:$0xff] %v830
    %1541 = vst [vmem:[#allocation12 + $0xa8] sm:$0xff] %v835
    %1542 = vst [vmem:[#allocation12 + $0xb0] sm:$0xff] %v840
    %1543 = vst [vmem:[#allocation12 + $0xb8] sm:$0xff] %v845
    %1544 = vst [vmem:[#allocation12 + $0xc0] sm:$0xff] %v850
    %1545 = vst [vmem:[#allocation12 + $0xc8] sm:$0xff] %v855
    %1546 = vst [vmem:[#allocation12 + $0xd0] sm:$0xff] %v860
    %1547 = vst [vmem:[#allocation12 + $0xd8] sm:$0xff] %v865
    %1548 = vst [vmem:[#allocation12 + $0xe0] sm:$0xff] %v870
    %1549 = vst [vmem:[#allocation12 + $0xe8] sm:$0xff] %v875
    %1550 = vst [vmem:[#allocation12 + $0xf0] sm:$0xff] %v880
    %1551 = vst [vmem:[#allocation12 + $0xf8] sm:$0xff] %v885
    %1552 = vst [vmem:[#allocation12 + $0x100] sm:$0xff] %v890
    %1553 = vst [vmem:[#allocation12 + $0x108] sm:$0xff] %v895
    %1554 = vst [vmem:[#allocation12 + $0x110] sm:$0xff] %v900
    %1555 = vst [vmem:[#allocation12 + $0x118] sm:$0xff] %v905
    %1556 = vst [vmem:[#allocation12 + $0x120] sm:$0xff] %v910
    %1557 = vst [vmem:[#allocation12 + $0x128] sm:$0xff] %v915
    %1558 = vst [vmem:[#allocation12 + $0x130] sm:$0xff] %v920
    %1559 = vst [vmem:[#allocation12 + $0x138] sm:$0xff] %v925
    %1560 = vst [vmem:[#allocation12 + $0x140] sm:$0xff] %v930
    %1561 = vst [vmem:[#allocation12 + $0x148] sm:$0xff] %v935
    %1562 = vst [vmem:[#allocation12 + $0x150] sm:$0xff] %v940
    %1563 = vst [vmem:[#allocation12 + $0x158] sm:$0xff] %v945
    %1564 = vst [vmem:[#allocation12 + $0x160] sm:$0xff] %v950
    %1565 = vst [vmem:[#allocation12 + $0x168] sm:$0xff] %v955
    %1566 = vst [vmem:[#allocation12 + $0x170] sm:$0xff] %v960
    %1567 = vst [vmem:[#allocation12 + $0x178] sm:$0xff] %v965
    %1568 = vst [vmem:[#allocation12 + $0x180] sm:$0xff] %v970
    %1569 = vst [vmem:[#allocation12 + $0x188] sm:$0xff] %v975
    %1570 = vst [vmem:[#allocation12 + $0x190] sm:$0xff] %v980
    %1571 = vst [vmem:[#allocation12 + $0x198] sm:$0xff] %v985
    %1572 = vst [vmem:[#allocation12 + $0x1a0] sm:$0xff] %v990
    %1573 = vst [vmem:[#allocation12 + $0x1a8] sm:$0xff] %v995
    %1574 = vst [vmem:[#allocation12 + $0x1b0] sm:$0xff] %v1000
    %1575 = vst [vmem:[#allocation12 + $0x1b8] sm:$0xff] %v1005
    %1576 = vst [vmem:[#allocation12 + $0x1c0] sm:$0xff] %v1010
    %1577 = vst [vmem:[#allocation12 + $0x1c8] sm:$0xff] %v1015
    %1578 = vst [vmem:[#allocation12 + $0x1d0] sm:$0xff] %v1020
    %1579 = vst [vmem:[#allocation12 + $0x1d8] sm:$0xff] %v1025
    %1580 = vst [vmem:[#allocation12 + $0x1e0] sm:$0xff] %v1030
    %1581 = vst [vmem:[#allocation12 + $0x1e8] sm:$0xff] %v1035
    %1582 = vst [vmem:[#allocation12 + $0x1f0] sm:$0xff] %v1040
    %1583 = vst [vmem:[#allocation12 + $0x1f8] sm:$0xff] %v1045
    %1584 = vst [vmem:[#allocation14] sm:$0xff] %v1138
    %1585 = vst [vmem:[#allocation14 + $0x8] sm:$0xff] %v1143
    %1586 = vst [vmem:[#allocation14 + $0x10] sm:$0xff] %v1148
    %1587 = vst [vmem:[#allocation14 + $0x18] sm:$0xff] %v1153
    %1588 = vst [vmem:[#allocation14 + $0x20] sm:$0xff] %v1158
    %1589 = vst [vmem:[#allocation14 + $0x28] sm:$0xff] %v1163
    %1590 = vst [vmem:[#allocation14 + $0x30] sm:$0xff] %v1168
    %1591 = vst [vmem:[#allocation14 + $0x38] sm:$0xff] %v1173
    %1592 = vst [vmem:[#allocation14 + $0x40] sm:$0xff] %v1178
    %1593 = vst [vmem:[#allocation14 + $0x48] sm:$0xff] %v1183
    %1594 = vst [vmem:[#allocation14 + $0x50] sm:$0xff] %v1188
    %1595 = vst [vmem:[#allocation14 + $0x58] sm:$0xff] %v1193
    %1596 = vst [vmem:[#allocation14 + $0x60] sm:$0xff] %v1198
    %1597 = vst [vmem:[#allocation14 + $0x68] sm:$0xff] %v1203
    %1598 = vst [vmem:[#allocation14 + $0x70] sm:$0xff] %v1208
    %1599 = vst [vmem:[#allocation14 + $0x78] sm:$0xff] %v1213
    %1600 = vst [vmem:[#allocation14 + $0x80] sm:$0xff] %v1218
    %1601 = vst [vmem:[#allocation14 + $0x88] sm:$0xff] %v1223
    %1602 = vst [vmem:[#allocation14 + $0x90] sm:$0xff] %v1228
    %1603 = vst [vmem:[#allocation14 + $0x98] sm:$0xff] %v1233
    %1604 = vst [vmem:[#allocation14 + $0xa0] sm:$0xff] %v1238
    %1605 = vst [vmem:[#allocation14 + $0xa8] sm:$0xff] %v1243
    %1606 = vst [vmem:[#allocation14 + $0xb0] sm:$0xff] %v1248
    %1607 = vst [vmem:[#allocation14 + $0xb8] sm:$0xff] %v1253
    %1608 = vst [vmem:[#allocation14 + $0xc0] sm:$0xff] %v1258
    %1609 = vst [vmem:[#allocation14 + $0xc8] sm:$0xff] %v1263
    %1610 = vst [vmem:[#allocation14 + $0xd0] sm:$0xff] %v1268
    %1611 = vst [vmem:[#allocation14 + $0xd8] sm:$0xff] %v1273
    %1612 = vst [vmem:[#allocation14 + $0xe0] sm:$0xff] %v1278
    %1613 = vst [vmem:[#allocation14 + $0xe8] sm:$0xff] %v1283
    %1614 = vst [vmem:[#allocation14 + $0xf0] sm:$0xff] %v1288
    %1615 = vst [vmem:[#allocation14 + $0xf8] sm:$0xff] %v1293
    %1616 = vst [vmem:[#allocation14 + $0x100] sm:$0xff] %v1298
    %1617 = vst [vmem:[#allocation14 + $0x108] sm:$0xff] %v1303
    %1618 = vst [vmem:[#allocation14 + $0x110] sm:$0xff] %v1308
    %1619 = vst [vmem:[#allocation14 + $0x118] sm:$0xff] %v1313
    %1620 = vst [vmem:[#allocation14 + $0x120] sm:$0xff] %v1318
    %1621 = vst [vmem:[#allocation14 + $0x128] sm:$0xff] %v1323
    %1622 = vst [vmem:[#allocation14 + $0x130] sm:$0xff] %v1328
    %1623 = vst [vmem:[#allocation14 + $0x138] sm:$0xff] %v1333
    %1624 = vst [vmem:[#allocation14 + $0x140] sm:$0xff] %v1338
    %1625 = vst [vmem:[#allocation14 + $0x148] sm:$0xff] %v1343
    %1626 = vst [vmem:[#allocation14 + $0x150] sm:$0xff] %v1348
    %1627 = vst [vmem:[#allocation14 + $0x158] sm:$0xff] %v1353
    %1628 = vst [vmem:[#allocation14 + $0x160] sm:$0xff] %v1358
    %1629 = vst [vmem:[#allocation14 + $0x168] sm:$0xff] %v1363
    %1630 = vst [vmem:[#allocation14 + $0x170] sm:$0xff] %v1368
    %1631 = vst [vmem:[#allocation14 + $0x178] sm:$0xff] %v1373
    %1632 = vst [vmem:[#allocation14 + $0x180] sm:$0xff] %v1378
    %1633 = vst [vmem:[#allocation14 + $0x188] sm:$0xff] %v1383
    %1634 = vst [vmem:[#allocation14 + $0x190] sm:$0xff] %v1388
    %1635 = vst [vmem:[#allocation14 + $0x198] sm:$0xff] %v1393
    %1636 = vst [vmem:[#allocation14 + $0x1a0] sm:$0xff] %v1398
    %1637 = vst [vmem:[#allocation14 + $0x1a8] sm:$0xff] %v1403
    %1638 = vst [vmem:[#allocation14 + $0x1b0] sm:$0xff] %v1408
    %1639 = vst [vmem:[#allocation14 + $0x1b8] sm:$0xff] %v1413
    %1640 = vst [vmem:[#allocation14 + $0x1c0] sm:$0xff] %v1418
    %1641 = vst [vmem:[#allocation14 + $0x1c8] sm:$0xff] %v1423
    %1642 = vst [vmem:[#allocation14 + $0x1d0] sm:$0xff] %v1428
    %1643 = vst [vmem:[#allocation14 + $0x1d8] sm:$0xff] %v1433
    %1644 = vst [vmem:[#allocation14 + $0x1e0] sm:$0xff] %v1438
    %1645 = vst [vmem:[#allocation14 + $0x1e8] sm:$0xff] %v1443
    %1646 = vst [vmem:[#allocation14 + $0x1f0] sm:$0xff] %v1448
    %1647 = vst [vmem:[#allocation14 + $0x1f8] sm:$0xff] %v1453
    %1648 = vmatprep.subr.mxu0 0.0
    %1649 = vmatpush1.xpose.msra.mxu0 %v730
    %1650 = vmatprep.subr.mxu0 0.0
    %1651 = vmatpush1.xpose.msra.mxu0 %v735
    %1652 = vmatprep.subr.mxu0 0.0
    %1653 = vmatpush1.xpose.msra.mxu0 %v740
    %1654 = vmatprep.subr.mxu0 0.0
    %1655 = vmatpush1.xpose.msra.mxu0 %v745
    %1656 = vmatprep.subr.mxu0 0.0
    %1657 = vmatpush1.xpose.msra.mxu0 %v750
    %1658 = vmatprep.subr.mxu0 0.0
    %1659 = vmatpush1.xpose.msra.mxu0 %v755
    %1660 = vmatprep.subr.mxu0 0.0
    %1661 = vmatpush1.xpose.msra.mxu0 %v760
    %1662 = vmatprep.subr.mxu0 0.0
    %1663 = vmatpush1.xpose.msra.mxu0 %v765
    %1664 = vmatprep.subr.mxu0 0.0
    %1665 = vmatpush1.xpose.msra.mxu0 %v770
    %1666 = vmatprep.subr.mxu0 0.0
    %1667 = vmatpush1.xpose.msra.mxu0 %v775
    %1668 = vmatprep.subr.mxu0 0.0
    %1669 = vmatpush1.xpose.msra.mxu0 %v780
    %1670 = vmatprep.subr.mxu0 0.0
    %1671 = vmatpush1.xpose.msra.mxu0 %v785
    %1672 = vmatprep.subr.mxu0 0.0
    %1673 = vmatpush1.xpose.msra.mxu0 %v790
    %1674 = vmatprep.subr.mxu0 0.0
    %1675 = vmatpush1.xpose.msra.mxu0 %v795
    %1676 = vmatprep.subr.mxu0 0.0
    %1677 = vmatpush1.xpose.msra.mxu0 %v800
    %1678 = vmatprep.subr.mxu0 0.0
    %1679 = vmatpush1.xpose.msra.mxu0 %v805
    %1680 = vmatprep.subr.mxu0 0.0
    %1681 = vmatpush1.xpose.msra.mxu0 %v810
    %1682 = vmatprep.subr.mxu0 0.0
    %1683 = vmatpush1.xpose.msra.mxu0 %v815
    %1684 = vmatprep.subr.mxu0 0.0
    %1685 = vmatpush1.xpose.msra.mxu0 %v820
    %1686 = vmatprep.subr.mxu0 0.0
    %1687 = vmatpush1.xpose.msra.mxu0 %v825
    %1688 = vmatprep.subr.mxu0 0.0
    %1689 = vmatpush1.xpose.msra.mxu0 %v830
    %1690 = vmatprep.subr.mxu0 0.0
    %1691 = vmatpush1.xpose.msra.mxu0 %v835
    %1692 = vmatprep.subr.mxu0 0.0
    %1693 = vmatpush1.xpose.msra.mxu0 %v840
    %1694 = vmatprep.subr.mxu0 0.0
    %1695 = vmatpush1.xpose.msra.mxu0 %v845
    %1696 = vmatprep.subr.mxu0 0.0
    %1697 = vmatpush1.xpose.msra.mxu0 %v850
    %1698 = vmatprep.subr.mxu0 0.0
    %1699 = vmatpush1.xpose.msra.mxu0 %v855
    %1700 = vmatprep.subr.mxu0 0.0
    %1701 = vmatpush1.xpose.msra.mxu0 %v860
    %1702 = vmatprep.subr.mxu0 0.0
    %1703 = vmatpush1.xpose.msra.mxu0 %v865
    %1704 = vmatprep.subr.mxu0 0.0
    %1705 = vmatpush1.xpose.msra.mxu0 %v870
    %1706 = vmatprep.subr.mxu0 0.0
    %1707 = vmatpush1.xpose.msra.mxu0 %v875
    %1708 = vmatprep.subr.mxu0 0.0
    %1709 = vmatpush1.xpose.msra.mxu0 %v880
    %1710 = vmatprep.subr.mxu0 0.0
    %1711 = vmatpush1.xpose.msra.mxu0 %v885
    %1712 = vmatprep.mubr.f32.mxu0 0.0
    %1713 = vmatmul.mubr.f32.gmra.mrb[0].mxu0 %v322
    %v1714 = vpop.f32.mrb[0].mxu0
    %v1715 = vadd.f32 0.0, %v1714
    %v1716 = vpop.f32.mrb[0].mxu0
    %v1717 = vadd.f32 0.0, %v1716
    %1718 = vmatprep.mubr.f32.mxu0 0.0
    %1719 = vmatmul.mubr.f32.gmra.mrb[0].mxu0 %v327
    %v1720 = vpop.f32.mrb[0].mxu0
    %v1721 = vadd.f32 0.0, %v1720
    %v1722 = vpop.f32.mrb[0].mxu0
    %v1723 = vadd.f32 0.0, %v1722
    %1724 = vmatprep.mubr.f32.mxu0 0.0
    %1725 = vmatmul.mubr.f32.gmra.mrb[0].mxu0 %v332
    %v1726 = vpop.f32.mrb[0].mxu0
    %v1727 = vadd.f32 0.0, %v1726
    %v1728 = vpop.f32.mrb[0].mxu0
    %v1729 = vadd.f32 0.0, %v1728
    %1730 = vmatprep.mubr.f32.mxu0 0.0
    %1731 = vmatmul.mubr.f32.gmra.mrb[0].mxu0 %v337
    %v1732 = vpop.f32.mrb[0].mxu0
    %v1733 = vadd.f32 0.0, %v1732
    %v1734 = vpop.f32.mrb[0].mxu0
    %v1735 = vadd.f32 0.0, %v1734
    %1736 = vmatprep.mubr.f32.mxu0 0.0
    %1737 = vmatmul.mubr.f32.gmra.mrb[0].mxu0 %v342
    %v1738 = vpop.f32.mrb[0].mxu0
    %v1739 = vadd.f32 0.0, %v1738
    %v1740 = vpop.f32.mrb[0].mxu0
    %v1741 = vadd.f32 0.0, %v1740
    %1742 = vmatprep.mubr.f32.mxu0 0.0
    %1743 = vmatmul.mubr.f32.gmra.mrb[0].mxu0 %v347
    %v1744 = vpop.f32.mrb[0].mxu0
    %v1745 = vadd.f32 0.0, %v1744
    %v1746 = vpop.f32.mrb[0].mxu0
    %v1747 = vadd.f32 0.0, %v1746
    %1748 = vmatprep.mubr.f32.mxu0 0.0
    %1749 = vmatmul.mubr.f32.gmra.mrb[0].mxu0 %v352
    %v1750 = vpop.f32.mrb[0].mxu0
    %v1751 = vadd.f32 0.0, %v1750
    %v1752 = vpop.f32.mrb[0].mxu0
    %v1753 = vadd.f32 0.0, %v1752
    %1754 = vmatprep.mubr.f32.mxu0 0.0
    %1755 = vmatmul.mubr.f32.gmra.mrb[0].mxu0 %v357
    %v1756 = vpop.f32.mrb[0].mxu0
    %v1757 = vadd.f32 0.0, %v1756
    %v1758 = vpop.f32.mrb[0].mxu0
    %v1759 = vadd.f32 0.0, %v1758
    %1760 = vmatprep.mubr.f32.mxu0 0.0
    %1761 = vmatmul.mubr.f32.gmra.mrb[0].mxu0 %v362
    %v1762 = vpop.f32.mrb[0].mxu0
    %v1763 = vadd.f32 0.0, %v1762
    %v1764 = vpop.f32.mrb[0].mxu0
    %v1765 = vadd.f32 0.0, %v1764
    %1766 = vmatprep.mubr.f32.mxu0 0.0
    %1767 = vmatmul.mubr.f32.gmra.mrb[0].mxu0 %v367
    %v1768 = vpop.f32.mrb[0].mxu0
    %v1769 = vadd.f32 0.0, %v1768
    %v1770 = vpop.f32.mrb[0].mxu0
    %v1771 = vadd.f32 0.0, %v1770
    %1772 = vmatprep.mubr.f32.mxu0 0.0
    %1773 = vmatmul.mubr.f32.gmra.mrb[0].mxu0 %v372
    %v1774 = vpop.f32.mrb[0].mxu0
    %v1775 = vadd.f32 0.0, %v1774
    %v1776 = vpop.f32.mrb[0].mxu0
    %v1777 = vadd.f32 0.0, %v1776
    %1778 = vmatprep.mubr.f32.mxu0 0.0
    %1779 = vmatmul.mubr.f32.gmra.mrb[0].mxu0 %v377
    %v1780 = vpop.f32.mrb[0].mxu0
    %v1781 = vadd.f32 0.0, %v1780
    %v1782 = vpop.f32.mrb[0].mxu0
    %v1783 = vadd.f32 0.0, %v1782
    %1784 = vmatprep.mubr.f32.mxu0 0.0
    %1785 = vmatmul.mubr.f32.gmra.mrb[0].mxu0 %v382
    %v1786 = vpop.f32.mrb[0].mxu0
    %v1787 = vadd.f32 0.0, %v1786
    %v1788 = vpop.f32.mrb[0].mxu0
    %v1789 = vadd.f32 0.0, %v1788
    %1790 = vmatprep.mubr.f32.mxu0 0.0
    %1791 = vmatmul.mubr.f32.gmra.mrb[0].mxu0 %v387
    %v1792 = vpop.f32.mrb[0].mxu0
    %v1793 = vadd.f32 0.0, %v1792
    %v1794 = vpop.f32.mrb[0].mxu0
    %v1795 = vadd.f32 0.0, %v1794
    %1796 = vmatprep.mubr.f32.mxu0 0.0
    %1797 = vmatmul.mubr.f32.gmra.mrb[0].mxu0 %v392
    %v1798 = vpop.f32.mrb[0].mxu0
    %v1799 = vadd.f32 0.0, %v1798
    %v1800 = vpop.f32.mrb[0].mxu0
    %v1801 = vadd.f32 0.0, %v1800
    %1802 = vmatprep.mubr.f32.mxu0 0.0
    %1803 = vmatmul.mubr.f32.gmra.mrb[0].mxu0 %v397
    %v1804 = vpop.f32.mrb[0].mxu0
    %v1805 = vadd.f32 0.0, %v1804
    %v1806 = vpop.f32.mrb[0].mxu0
    %v1807 = vadd.f32 0.0, %v1806
    %1808 = vmatprep.mubr.f32.mxu0 0.0
    %1809 = vmatmul.mubr.f32.gmra.mrb[0].mxu0 %v402
    %v1810 = vpop.f32.mrb[0].mxu0
    %v1811 = vadd.f32 0.0, %v1810
    %v1812 = vpop.f32.mrb[0].mxu0
    %v1813 = vadd.f32 0.0, %v1812
    %1814 = vmatprep.mubr.f32.mxu0 0.0
    %1815 = vmatmul.mubr.f32.gmra.mrb[0].mxu0 %v407
    %v1816 = vpop.f32.mrb[0].mxu0
    %v1817 = vadd.f32 0.0, %v1816
    %v1818 = vpop.f32.mrb[0].mxu0
    %v1819 = vadd.f32 0.0, %v1818
    %1820 = vmatprep.mubr.f32.mxu0 0.0
    %1821 = vmatmul.mubr.f32.gmra.mrb[0].mxu0 %v412
    %v1822 = vpop.f32.mrb[0].mxu0
    %v1823 = vadd.f32 0.0, %v1822
    %v1824 = vpop.f32.mrb[0].mxu0
    %v1825 = vadd.f32 0.0, %v1824
    %1826 = vmatprep.mubr.f32.mxu0 0.0
    %1827 = vmatmul.mubr.f32.gmra.mrb[0].mxu0 %v417
    %v1828 = vpop.f32.mrb[0].mxu0
    %v1829 = vadd.f32 0.0, %v1828
    %v1830 = vpop.f32.mrb[0].mxu0
    %v1831 = vadd.f32 0.0, %v1830
    %1832 = vmatprep.mubr.f32.mxu0 0.0
    %1833 = vmatmul.mubr.f32.gmra.mrb[0].mxu0 %v422
    %v1834 = vpop.f32.mrb[0].mxu0
    %v1835 = vadd.f32 0.0, %v1834
    %v1836 = vpop.f32.mrb[0].mxu0
    %v1837 = vadd.f32 0.0, %v1836
    %1838 = vmatprep.mubr.f32.mxu0 0.0
    %1839 = vmatmul.mubr.f32.gmra.mrb[0].mxu0 %v427
    %v1840 = vpop.f32.mrb[0].mxu0
    %v1841 = vadd.f32 0.0, %v1840
    %v1842 = vpop.f32.mrb[0].mxu0
    %v1843 = vadd.f32 0.0, %v1842
    %1844 = vmatprep.mubr.f32.mxu0 0.0
    %1845 = vmatmul.mubr.f32.gmra.mrb[0].mxu0 %v432
    %v1846 = vpop.f32.mrb[0].mxu0
    %v1847 = vadd.f32 0.0, %v1846
    %v1848 = vpop.f32.mrb[0].mxu0
    %v1849 = vadd.f32 0.0, %v1848
    %1850 = vmatprep.mubr.f32.mxu0 0.0
    %1851 = vmatmul.mubr.f32.gmra.mrb[0].mxu0 %v437
    %v1852 = vpop.f32.mrb[0].mxu0
    %v1853 = vadd.f32 0.0, %v1852
    %v1854 = vpop.f32.mrb[0].mxu0
    %v1855 = vadd.f32 0.0, %v1854
    %1856 = vmatprep.mubr.f32.mxu0 0.0
    %1857 = vmatmul.mubr.f32.gmra.mrb[0].mxu0 %v442
    %v1858 = vpop.f32.mrb[0].mxu0
    %v1859 = vadd.f32 0.0, %v1858
    %v1860 = vpop.f32.mrb[0].mxu0
    %v1861 = vadd.f32 0.0, %v1860
    %1862 = vmatprep.mubr.f32.mxu0 0.0
    %1863 = vmatmul.mubr.f32.gmra.mrb[0].mxu0 %v447
    %v1864 = vpop.f32.mrb[0].mxu0
    %v1865 = vadd.f32 0.0, %v1864
    %v1866 = vpop.f32.mrb[0].mxu0
    %v1867 = vadd.f32 0.0, %v1866
    %1868 = vmatprep.mubr.f32.mxu0 0.0
    %1869 = vmatmul.mubr.f32.gmra.mrb[0].mxu0 %v452
    %v1870 = vpop.f32.mrb[0].mxu0
    %v1871 = vadd.f32 0.0, %v1870
    %v1872 = vpop.f32.mrb[0].mxu0
    %v1873 = vadd.f32 0.0, %v1872
    %1874 = vmatprep.mubr.f32.mxu0 0.0
    %1875 = vmatmul.mubr.f32.gmra.mrb[0].mxu0 %v457
    %v1876 = vpop.f32.mrb[0].mxu0
    %v1877 = vadd.f32 0.0, %v1876
    %v1878 = vpop.f32.mrb[0].mxu0
    %v1879 = vadd.f32 0.0, %v1878
    %1880 = vmatprep.mubr.f32.mxu0 0.0
    %1881 = vmatmul.mubr.f32.gmra.mrb[0].mxu0 %v462
    %v1882 = vpop.f32.mrb[0].mxu0
    %v1883 = vadd.f32 0.0, %v1882
    %v1884 = vpop.f32.mrb[0].mxu0
    %v1885 = vadd.f32 0.0, %v1884
    %1886 = vmatprep.mubr.f32.mxu0 0.0
    %1887 = vmatmul.mubr.f32.gmra.mrb[0].mxu0 %v467
    %v1888 = vpop.f32.mrb[0].mxu0
    %v1889 = vadd.f32 0.0, %v1888
    %v1890 = vpop.f32.mrb[0].mxu0
    %v1891 = vadd.f32 0.0, %v1890
    %1892 = vmatprep.mubr.f32.mxu0 0.0
    %1893 = vmatmul.mubr.f32.gmra.mrb[0].mxu0 %v472
    %v1894 = vpop.f32.mrb[0].mxu0
    %v1895 = vadd.f32 0.0, %v1894
    %v1896 = vpop.f32.mrb[0].mxu0
    %v1897 = vadd.f32 0.0, %v1896
    %1898 = vmatprep.mubr.f32.mxu0 0.0
    %1899 = vmatmul.mubr.f32.gmra.mrb[0].mxu0 %v477
    %v1900 = vpop.f32.mrb[0].mxu0
    %v1901 = vadd.f32 0.0, %v1900
    %v1902 = vpop.f32.mrb[0].mxu0
    %v1903 = vadd.f32 0.0, %v1902
    %1904 = vdwg.mxu0
    %1905 = vmatprep.subr.mxu0 0.0
    %1906 = vmatpush1.xpose.msra.mxu0 %v890
    %1907 = vmatprep.subr.mxu0 0.0
    %1908 = vmatpush1.xpose.msra.mxu0 %v895
    %1909 = vmatprep.subr.mxu0 0.0
    %1910 = vmatpush1.xpose.msra.mxu0 %v900
    %1911 = vmatprep.subr.mxu0 0.0
    %1912 = vmatpush1.xpose.msra.mxu0 %v905
    %1913 = vmatprep.subr.mxu0 0.0
    %1914 = vmatpush1.xpose.msra.mxu0 %v910
    %1915 = vmatprep.subr.mxu0 0.0
    %1916 = vmatpush1.xpose.msra.mxu0 %v915
    %1917 = vmatprep.subr.mxu0 0.0
    %1918 = vmatpush1.xpose.msra.mxu0 %v920
    %1919 = vmatprep.subr.mxu0 0.0
    %1920 = vmatpush1.xpose.msra.mxu0 %v925
    %1921 = vmatprep.subr.mxu0 0.0
    %1922 = vmatpush1.xpose.msra.mxu0 %v930
    %1923 = vmatprep.subr.mxu0 0.0
    %1924 = vmatpush1.xpose.msra.mxu0 %v935
    %1925 = vmatprep.subr.mxu0 0.0
    %1926 = vmatpush1.xpose.msra.mxu0 %v940
    %1927 = vmatprep.subr.mxu0 0.0
    %1928 = vmatpush1.xpose.msra.mxu0 %v945
    %1929 = vmatprep.subr.mxu0 0.0
    %1930 = vmatpush1.xpose.msra.mxu0 %v950
    %1931 = vmatprep.subr.mxu0 0.0
    %1932 = vmatpush1.xpose.msra.mxu0 %v955
    %1933 = vmatprep.subr.mxu0 0.0
    %1934 = vmatpush1.xpose.msra.mxu0 %v960
    %1935 = vmatprep.subr.mxu0 0.0
    %1936 = vmatpush1.xpose.msra.mxu0 %v965
    %1937 = vmatprep.subr.mxu0 0.0
    %1938 = vmatpush1.xpose.msra.mxu0 %v970
    %1939 = vmatprep.subr.mxu0 0.0
    %1940 = vmatpush1.xpose.msra.mxu0 %v975
    %1941 = vmatprep.subr.mxu0 0.0
    %1942 = vmatpush1.xpose.msra.mxu0 %v980
    %1943 = vmatprep.subr.mxu0 0.0
    %1944 = vmatpush1.xpose.msra.mxu0 %v985
    %1945 = vmatprep.subr.mxu0 0.0
    %1946 = vmatpush1.xpose.msra.mxu0 %v990
    %1947 = vmatprep.subr.mxu0 0.0
    %1948 = vmatpush1.xpose.msra.mxu0 %v995
    %1949 = vmatprep.subr.mxu0 0.0
    %1950 = vmatpush1.xpose.msra.mxu0 %v1000
    %1951 = vmatprep.subr.mxu0 0.0
    %1952 = vmatpush1.xpose.msra.mxu0 %v1005
    %1953 = vmatprep.subr.mxu0 0.0
    %1954 = vmatpush1.xpose.msra.mxu0 %v1010
    %1955 = vmatprep.subr.mxu0 0.0
    %1956 = vmatpush1.xpose.msra.mxu0 %v1015
    %1957 = vmatprep.subr.mxu0 0.0
    %1958 = vmatpush1.xpose.msra.mxu0 %v1020
    %1959 = vmatprep.subr.mxu0 0.0
    %1960 = vmatpush1.xpose.msra.mxu0 %v1025
    %1961 = vmatprep.subr.mxu0 0.0
    %1962 = vmatpush1.xpose.msra.mxu0 %v1030
    %1963 = vmatprep.subr.mxu0 0.0
    %1964 = vmatpush1.xpose.msra.mxu0 %v1035
    %1965 = vmatprep.subr.mxu0 0.0
    %1966 = vmatpush1.xpose.msra.mxu0 %v1040
    %1967 = vmatprep.subr.mxu0 0.0
    %1968 = vmatpush1.xpose.msra.mxu0 %v1045
    %1969 = vmatprep.mubr.f32.mxu0 0.0
    %1970 = vmatmul.mubr.f32.gmra.mrb[0].mxu0 %v482
    %v1971 = vpop.f32.mrb[0].mxu0
    %v1972 = vadd.f32 0.0, %v1971
    %v1973 = vpop.f32.mrb[0].mxu0
    %v1974 = vadd.f32 0.0, %v1973
    %1975 = vmatprep.mubr.f32.mxu0 0.0
    %1976 = vmatmul.mubr.f32.gmra.mrb[0].mxu0 %v487
    %v1977 = vpop.f32.mrb[0].mxu0
    %v1978 = vadd.f32 0.0, %v1977
    %v1979 = vpop.f32.mrb[0].mxu0
    %v1980 = vadd.f32 0.0, %v1979
    %1981 = vmatprep.mubr.f32.mxu0 0.0
    %1982 = vmatmul.mubr.f32.gmra.mrb[0].mxu0 %v492
    %v1983 = vpop.f32.mrb[0].mxu0
    %v1984 = vadd.f32 0.0, %v1983
    %v1985 = vpop.f32.mrb[0].mxu0
    %v1986 = vadd.f32 0.0, %v1985
    %1987 = vmatprep.mubr.f32.mxu0 0.0
    %1988 = vmatmul.mubr.f32.gmra.mrb[0].mxu0 %v497
    %v1989 = vpop.f32.mrb[0].mxu0
    %v1990 = vadd.f32 0.0, %v1989
    %v1991 = vpop.f32.mrb[0].mxu0
    %v1992 = vadd.f32 0.0, %v1991
    %1993 = vmatprep.mubr.f32.mxu0 0.0
    %1994 = vmatmul.mubr.f32.gmra.mrb[0].mxu0 %v502
    %v1995 = vpop.f32.mrb[0].mxu0
    %v1996 = vadd.f32 0.0, %v1995
    %v1997 = vpop.f32.mrb[0].mxu0
    %v1998 = vadd.f32 0.0, %v1997
    %1999 = vmatprep.mubr.f32.mxu0 0.0
    %2000 = vmatmul.mubr.f32.gmra.mrb[0].mxu0 %v507
    %v2001 = vpop.f32.mrb[0].mxu0
    %v2002 = vadd.f32 0.0, %v2001
    %v2003 = vpop.f32.mrb[0].mxu0
    %v2004 = vadd.f32 0.0, %v2003
    %2005 = vmatprep.mubr.f32.mxu0 0.0
    %2006 = vmatmul.mubr.f32.gmra.mrb[0].mxu0 %v512
    %v2007 = vpop.f32.mrb[0].mxu0
    %v2008 = vadd.f32 0.0, %v2007
    %v2009 = vpop.f32.mrb[0].mxu0
    %v2010 = vadd.f32 0.0, %v2009
    %2011 = vmatprep.mubr.f32.mxu0 0.0
    %2012 = vmatmul.mubr.f32.gmra.mrb[0].mxu0 %v517
    %v2013 = vpop.f32.mrb[0].mxu0
    %v2014 = vadd.f32 0.0, %v2013
    %v2015 = vpop.f32.mrb[0].mxu0
    %v2016 = vadd.f32 0.0, %v2015
    %2017 = vmatprep.mubr.f32.mxu0 0.0
    %2018 = vmatmul.mubr.f32.gmra.mrb[0].mxu0 %v522
    %v2019 = vpop.f32.mrb[0].mxu0
    %v2020 = vadd.f32 0.0, %v2019
    %v2021 = vpop.f32.mrb[0].mxu0
    %v2022 = vadd.f32 0.0, %v2021
    %2023 = vmatprep.mubr.f32.mxu0 0.0
    %2024 = vmatmul.mubr.f32.gmra.mrb[0].mxu0 %v527
    %v2025 = vpop.f32.mrb[0].mxu0
    %v2026 = vadd.f32 0.0, %v2025
    %v2027 = vpop.f32.mrb[0].mxu0
    %v2028 = vadd.f32 0.0, %v2027
    %2029 = vmatprep.mubr.f32.mxu0 0.0
    %2030 = vmatmul.mubr.f32.gmra.mrb[0].mxu0 %v532
    %v2031 = vpop.f32.mrb[0].mxu0
    %v2032 = vadd.f32 0.0, %v2031
    %v2033 = vpop.f32.mrb[0].mxu0
    %v2034 = vadd.f32 0.0, %v2033
    %2035 = vmatprep.mubr.f32.mxu0 0.0
    %2036 = vmatmul.mubr.f32.gmra.mrb[0].mxu0 %v537
    %v2037 = vpop.f32.mrb[0].mxu0
    %v2038 = vadd.f32 0.0, %v2037
    %v2039 = vpop.f32.mrb[0].mxu0
    %v2040 = vadd.f32 0.0, %v2039
    %2041 = vmatprep.mubr.f32.mxu0 0.0
    %2042 = vmatmul.mubr.f32.gmra.mrb[0].mxu0 %v542
    %v2043 = vpop.f32.mrb[0].mxu0
    %v2044 = vadd.f32 0.0, %v2043
    %v2045 = vpop.f32.mrb[0].mxu0
    %v2046 = vadd.f32 0.0, %v2045
    %2047 = vmatprep.mubr.f32.mxu0 0.0
    %2048 = vmatmul.mubr.f32.gmra.mrb[0].mxu0 %v547
    %v2049 = vpop.f32.mrb[0].mxu0
    %v2050 = vadd.f32 0.0, %v2049
    %v2051 = vpop.f32.mrb[0].mxu0
    %v2052 = vadd.f32 0.0, %v2051
    %2053 = vmatprep.mubr.f32.mxu0 0.0
    %2054 = vmatmul.mubr.f32.gmra.mrb[0].mxu0 %v552
    %v2055 = vpop.f32.mrb[0].mxu0
    %v2056 = vadd.f32 0.0, %v2055
    %v2057 = vpop.f32.mrb[0].mxu0
    %v2058 = vadd.f32 0.0, %v2057
    %2059 = vmatprep.mubr.f32.mxu0 0.0
    %2060 = vmatmul.mubr.f32.gmra.mrb[0].mxu0 %v557
    %v2061 = vpop.f32.mrb[0].mxu0
    %v2062 = vadd.f32 0.0, %v2061
    %v2063 = vpop.f32.mrb[0].mxu0
    %v2064 = vadd.f32 0.0, %v2063
    %2065 = vmatprep.mubr.f32.mxu0 0.0
    %2066 = vmatmul.mubr.f32.gmra.mrb[0].mxu0 %v562
    %v2067 = vpop.f32.mrb[0].mxu0
    %v2068 = vadd.f32 0.0, %v2067
    %v2069 = vpop.f32.mrb[0].mxu0
    %v2070 = vadd.f32 0.0, %v2069
    %2071 = vmatprep.mubr.f32.mxu0 0.0
    %2072 = vmatmul.mubr.f32.gmra.mrb[0].mxu0 %v567
    %v2073 = vpop.f32.mrb[0].mxu0
    %v2074 = vadd.f32 0.0, %v2073
    %v2075 = vpop.f32.mrb[0].mxu0
    %v2076 = vadd.f32 0.0, %v2075
    %2077 = vmatprep.mubr.f32.mxu0 0.0
    %2078 = vmatmul.mubr.f32.gmra.mrb[0].mxu0 %v572
    %v2079 = vpop.f32.mrb[0].mxu0
    %v2080 = vadd.f32 0.0, %v2079
    %v2081 = vpop.f32.mrb[0].mxu0
    %v2082 = vadd.f32 0.0, %v2081
    %2083 = vmatprep.mubr.f32.mxu0 0.0
    %2084 = vmatmul.mubr.f32.gmra.mrb[0].mxu0 %v577
    %v2085 = vpop.f32.mrb[0].mxu0
    %v2086 = vadd.f32 0.0, %v2085
    %v2087 = vpop.f32.mrb[0].mxu0
    %v2088 = vadd.f32 0.0, %v2087
    %2089 = vmatprep.mubr.f32.mxu0 0.0
    %2090 = vmatmul.mubr.f32.gmra.mrb[0].mxu0 %v582
    %v2091 = vpop.f32.mrb[0].mxu0
    %v2092 = vadd.f32 0.0, %v2091
    %v2093 = vpop.f32.mrb[0].mxu0
    %v2094 = vadd.f32 0.0, %v2093
    %2095 = vmatprep.mubr.f32.mxu0 0.0
    %2096 = vmatmul.mubr.f32.gmra.mrb[0].mxu0 %v587
    %v2097 = vpop.f32.mrb[0].mxu0
    %v2098 = vadd.f32 0.0, %v2097
    %v2099 = vpop.f32.mrb[0].mxu0
    %v2100 = vadd.f32 0.0, %v2099
    %2101 = vmatprep.mubr.f32.mxu0 0.0
    %2102 = vmatmul.mubr.f32.gmra.mrb[0].mxu0 %v592
    %v2103 = vpop.f32.mrb[0].mxu0
    %v2104 = vadd.f32 0.0, %v2103
    %v2105 = vpop.f32.mrb[0].mxu0
    %v2106 = vadd.f32 0.0, %v2105
    %2107 = vmatprep.mubr.f32.mxu0 0.0
    %2108 = vmatmul.mubr.f32.gmra.mrb[0].mxu0 %v597
    %v2109 = vpop.f32.mrb[0].mxu0
    %v2110 = vadd.f32 0.0, %v2109
    %v2111 = vpop.f32.mrb[0].mxu0
    %v2112 = vadd.f32 0.0, %v2111
    %2113 = vmatprep.mubr.f32.mxu0 0.0
    %2114 = vmatmul.mubr.f32.gmra.mrb[0].mxu0 %v602
    %v2115 = vpop.f32.mrb[0].mxu0
    %v2116 = vadd.f32 0.0, %v2115
    %v2117 = vpop.f32.mrb[0].mxu0
    %v2118 = vadd.f32 0.0, %v2117
    %2119 = vmatprep.mubr.f32.mxu0 0.0
    %2120 = vmatmul.mubr.f32.gmra.mrb[0].mxu0 %v607
    %v2121 = vpop.f32.mrb[0].mxu0
    %v2122 = vadd.f32 0.0, %v2121
    %v2123 = vpop.f32.mrb[0].mxu0
    %v2124 = vadd.f32 0.0, %v2123
    %2125 = vmatprep.mubr.f32.mxu0 0.0
    %2126 = vmatmul.mubr.f32.gmra.mrb[0].mxu0 %v612
    %v2127 = vpop.f32.mrb[0].mxu0
    %v2128 = vadd.f32 0.0, %v2127
    %v2129 = vpop.f32.mrb[0].mxu0
    %v2130 = vadd.f32 0.0, %v2129
    %2131 = vmatprep.mubr.f32.mxu0 0.0
    %2132 = vmatmul.mubr.f32.gmra.mrb[0].mxu0 %v617
    %v2133 = vpop.f32.mrb[0].mxu0
    %v2134 = vadd.f32 0.0, %v2133
    %v2135 = vpop.f32.mrb[0].mxu0
    %v2136 = vadd.f32 0.0, %v2135
    %2137 = vmatprep.mubr.f32.mxu0 0.0
    %2138 = vmatmul.mubr.f32.gmra.mrb[0].mxu0 %v622
    %v2139 = vpop.f32.mrb[0].mxu0
    %v2140 = vadd.f32 0.0, %v2139
    %v2141 = vpop.f32.mrb[0].mxu0
    %v2142 = vadd.f32 0.0, %v2141
    %2143 = vmatprep.mubr.f32.mxu0 0.0
    %2144 = vmatmul.mubr.f32.gmra.mrb[0].mxu0 %v627
    %v2145 = vpop.f32.mrb[0].mxu0
    %v2146 = vadd.f32 0.0, %v2145
    %v2147 = vpop.f32.mrb[0].mxu0
    %v2148 = vadd.f32 0.0, %v2147
    %2149 = vmatprep.mubr.f32.mxu0 0.0
    %2150 = vmatmul.mubr.f32.gmra.mrb[0].mxu0 %v632
    %v2151 = vpop.f32.mrb[0].mxu0
    %v2152 = vadd.f32 0.0, %v2151
    %v2153 = vpop.f32.mrb[0].mxu0
    %v2154 = vadd.f32 0.0, %v2153
    %2155 = vmatprep.mubr.f32.mxu0 0.0
    %2156 = vmatmul.mubr.f32.gmra.mrb[0].mxu0 %v637
    %v2157 = vpop.f32.mrb[0].mxu0
    %v2158 = vadd.f32 0.0, %v2157
    %v2159 = vpop.f32.mrb[0].mxu0
    %v2160 = vadd.f32 0.0, %v2159
    %2161 = vdwg.mxu0
    %v2162 = vmul.f32 %v1715, 0.088388346
    %v2163 = vmul.f32 %v1717, 0.088388346
    %v2164 = vmul.f32 %v1721, 0.088388346
    %v2165 = vmul.f32 %v1723, 0.088388346
    %v2166 = vmul.f32 %v1727, 0.088388346
    %v2167 = vmul.f32 %v1729, 0.088388346
    %v2168 = vmul.f32 %v1733, 0.088388346
    %v2169 = vmul.f32 %v1735, 0.088388346
    %v2170 = vmul.f32 %v1739, 0.088388346
    %v2171 = vmul.f32 %v1741, 0.088388346
    %v2172 = vmul.f32 %v1745, 0.088388346
    %v2173 = vmul.f32 %v1747, 0.088388346
    %v2174 = vmul.f32 %v1751, 0.088388346
    %v2175 = vmul.f32 %v1753, 0.088388346
    %v2176 = vmul.f32 %v1757, 0.088388346
    %v2177 = vmul.f32 %v1759, 0.088388346
    %v2178 = vmul.f32 %v1763, 0.088388346
    %v2179 = vmul.f32 %v1765, 0.088388346
    %v2180 = vmul.f32 %v1769, 0.088388346
    %v2181 = vmul.f32 %v1771, 0.088388346
    %v2182 = vmul.f32 %v1775, 0.088388346
    %v2183 = vmul.f32 %v1777, 0.088388346
    %v2184 = vmul.f32 %v1781, 0.088388346
    %v2185 = vmul.f32 %v1783, 0.088388346
    %v2186 = vmul.f32 %v1787, 0.088388346
    %v2187 = vmul.f32 %v1789, 0.088388346
    %v2188 = vmul.f32 %v1793, 0.088388346
    %v2189 = vmul.f32 %v1795, 0.088388346
    %v2190 = vmul.f32 %v1799, 0.088388346
    %v2191 = vmul.f32 %v1801, 0.088388346
    %v2192 = vmul.f32 %v1805, 0.088388346
    %v2193 = vmul.f32 %v1807, 0.088388346
    %v2194 = vmul.f32 %v1811, 0.088388346
    %v2195 = vmul.f32 %v1813, 0.088388346
    %v2196 = vmul.f32 %v1817, 0.088388346
    %v2197 = vmul.f32 %v1819, 0.088388346
    %v2198 = vmul.f32 %v1823, 0.088388346
    %v2199 = vmul.f32 %v1825, 0.088388346
    %v2200 = vmul.f32 %v1829, 0.088388346
    %v2201 = vmul.f32 %v1831, 0.088388346
    %v2202 = vmul.f32 %v1835, 0.088388346
    %v2203 = vmul.f32 %v1837, 0.088388346
    %v2204 = vmul.f32 %v1841, 0.088388346
    %v2205 = vmul.f32 %v1843, 0.088388346
    %v2206 = vmul.f32 %v1847, 0.088388346
    %v2207 = vmul.f32 %v1849, 0.088388346
    %v2208 = vmul.f32 %v1853, 0.088388346
    %v2209 = vmul.f32 %v1855, 0.088388346
    %v2210 = vmul.f32 %v1859, 0.088388346
    %v2211 = vmul.f32 %v1861, 0.088388346
    %v2212 = vmul.f32 %v1865, 0.088388346
    %v2213 = vmul.f32 %v1867, 0.088388346
    %v2214 = vmul.f32 %v1871, 0.088388346
    %v2215 = vmul.f32 %v1873, 0.088388346
    %v2216 = vmul.f32 %v1877, 0.088388346
    %v2217 = vmul.f32 %v1879, 0.088388346
    %v2218 = vmul.f32 %v1883, 0.088388346
    %v2219 = vmul.f32 %v1885, 0.088388346
    %v2220 = vmul.f32 %v1889, 0.088388346
    %v2221 = vmul.f32 %v1891, 0.088388346
    %v2222 = vmul.f32 %v1895, 0.088388346
    %v2223 = vmul.f32 %v1897, 0.088388346
    %v2224 = vmul.f32 %v1901, 0.088388346
    %v2225 = vmul.f32 %v1903, 0.088388346
    %v2226 = vmul.f32 %v1972, 0.088388346
    %v2227 = vmul.f32 %v1974, 0.088388346
    %v2228 = vmul.f32 %v1978, 0.088388346
    %v2229 = vmul.f32 %v1980, 0.088388346
    %v2230 = vmul.f32 %v1984, 0.088388346
    %v2231 = vmul.f32 %v1986, 0.088388346
    %v2232 = vmul.f32 %v1990, 0.088388346
    %v2233 = vmul.f32 %v1992, 0.088388346
    %v2234 = vmul.f32 %v1996, 0.088388346
    %v2235 = vmul.f32 %v1998, 0.088388346
    %v2236 = vmul.f32 %v2002, 0.088388346
    %v2237 = vmul.f32 %v2004, 0.088388346
    %v2238 = vmul.f32 %v2008, 0.088388346
    %v2239 = vmul.f32 %v2010, 0.088388346
    %v2240 = vmul.f32 %v2014, 0.088388346
    %v2241 = vmul.f32 %v2016, 0.088388346
    %v2242 = vmul.f32 %v2020, 0.088388346
    %v2243 = vmul.f32 %v2022, 0.088388346
    %v2244 = vmul.f32 %v2026, 0.088388346
    %v2245 = vmul.f32 %v2028, 0.088388346
    %v2246 = vmul.f32 %v2032, 0.088388346
    %v2247 = vmul.f32 %v2034, 0.088388346
    %v2248 = vmul.f32 %v2038, 0.088388346
    %v2249 = vmul.f32 %v2040, 0.088388346
    %v2250 = vmul.f32 %v2044, 0.088388346
    %v2251 = vmul.f32 %v2046, 0.088388346
    %v2252 = vmul.f32 %v2050, 0.088388346
    %v2253 = vmul.f32 %v2052, 0.088388346
    %v2254 = vmul.f32 %v2056, 0.088388346
    %v2255 = vmul.f32 %v2058, 0.088388346
    %v2256 = vmul.f32 %v2062, 0.088388346
    %v2257 = vmul.f32 %v2064, 0.088388346
    %v2258 = vmul.f32 %v2068, 0.088388346
    %v2259 = vmul.f32 %v2070, 0.088388346
    %v2260 = vmul.f32 %v2074, 0.088388346
    %v2261 = vmul.f32 %v2076, 0.088388346
    %v2262 = vmul.f32 %v2080, 0.088388346
    %v2263 = vmul.f32 %v2082, 0.088388346
    %v2264 = vmul.f32 %v2086, 0.088388346
    %v2265 = vmul.f32 %v2088, 0.088388346
    %v2266 = vmul.f32 %v2092, 0.088388346
    %v2267 = vmul.f32 %v2094, 0.088388346
    %v2268 = vmul.f32 %v2098, 0.088388346
    %v2269 = vmul.f32 %v2100, 0.088388346
    %v2270 = vmul.f32 %v2104, 0.088388346
    %v2271 = vmul.f32 %v2106, 0.088388346
    %v2272 = vmul.f32 %v2110, 0.088388346
    %v2273 = vmul.f32 %v2112, 0.088388346
    %v2274 = vmul.f32 %v2116, 0.088388346
    %v2275 = vmul.f32 %v2118, 0.088388346
    %v2276 = vmul.f32 %v2122, 0.088388346
    %v2277 = vmul.f32 %v2124, 0.088388346
    %v2278 = vmul.f32 %v2128, 0.088388346
    %v2279 = vmul.f32 %v2130, 0.088388346
    %v2280 = vmul.f32 %v2134, 0.088388346
    %v2281 = vmul.f32 %v2136, 0.088388346
    %v2282 = vmul.f32 %v2140, 0.088388346
    %v2283 = vmul.f32 %v2142, 0.088388346
    %v2284 = vmul.f32 %v2146, 0.088388346
    %v2285 = vmul.f32 %v2148, 0.088388346
    %v2286 = vmul.f32 %v2152, 0.088388346
    %v2287 = vmul.f32 %v2154, 0.088388346
    %v2288 = vmul.f32 %v2158, 0.088388346
    %v2289 = vmul.f32 %v2160, 0.088388346
    %v2290 = vmax.f32 %v2162, %v2163
    %2291 = vmax.xlane.f32.xlu0 %v2290
    %v2292 = vpop.xlane.xlu0 %2291
    %v2293 = vmax.f32 %v2164, %v2165
    %2294 = vmax.xlane.f32.xlu0 %v2293
    %v2295 = vpop.xlane.xlu0 %2294
    %v2296 = vmax.f32 %v2166, %v2167
    %2297 = vmax.xlane.f32.xlu0 %v2296
    %v2298 = vpop.xlane.xlu0 %2297
    %v2299 = vmax.f32 %v2168, %v2169
    %2300 = vmax.xlane.f32.xlu0 %v2299
    %v2301 = vpop.xlane.xlu0 %2300
    %v2302 = vmax.f32 %v2170, %v2171
    %2303 = vmax.xlane.f32.xlu0 %v2302
    %v2304 = vpop.xlane.xlu0 %2303
    %v2305 = vmax.f32 %v2172, %v2173
    %2306 = vmax.xlane.f32.xlu0 %v2305
    %v2307 = vpop.xlane.xlu0 %2306
    %v2308 = vmax.f32 %v2174, %v2175
    %2309 = vmax.xlane.f32.xlu0 %v2308
    %v2310 = vpop.xlane.xlu0 %2309
    %v2311 = vmax.f32 %v2176, %v2177
    %2312 = vmax.xlane.f32.xlu0 %v2311
    %v2313 = vpop.xlane.xlu0 %2312
    %v2314 = vmax.f32 %v2178, %v2179
    %2315 = vmax.xlane.f32.xlu0 %v2314
    %v2316 = vpop.xlane.xlu0 %2315
    %v2317 = vmax.f32 %v2180, %v2181
    %2318 = vmax.xlane.f32.xlu0 %v2317
    %v2319 = vpop.xlane.xlu0 %2318
    %v2320 = vmax.f32 %v2182, %v2183
    %2321 = vmax.xlane.f32.xlu0 %v2320
    %v2322 = vpop.xlane.xlu0 %2321
    %v2323 = vmax.f32 %v2184, %v2185
    %2324 = vmax.xlane.f32.xlu0 %v2323
    %v2325 = vpop.xlane.xlu0 %2324
    %v2326 = vmax.f32 %v2186, %v2187
    %2327 = vmax.xlane.f32.xlu0 %v2326
    %v2328 = vpop.xlane.xlu0 %2327
    %v2329 = vmax.f32 %v2188, %v2189
    %2330 = vmax.xlane.f32.xlu0 %v2329
    %v2331 = vpop.xlane.xlu0 %2330
    %v2332 = vmax.f32 %v2190, %v2191
    %2333 = vmax.xlane.f32.xlu0 %v2332
    %v2334 = vpop.xlane.xlu0 %2333
    %v2335 = vmax.f32 %v2192, %v2193
    %2336 = vmax.xlane.f32.xlu0 %v2335
    %v2337 = vpop.xlane.xlu0 %2336
    %v2338 = vmax.f32 %v2194, %v2195
    %2339 = vmax.xlane.f32.xlu0 %v2338
    %v2340 = vpop.xlane.xlu0 %2339
    %v2341 = vmax.f32 %v2196, %v2197
    %2342 = vmax.xlane.f32.xlu0 %v2341
    %v2343 = vpop.xlane.xlu0 %2342
    %v2344 = vmax.f32 %v2198, %v2199
    %2345 = vmax.xlane.f32.xlu0 %v2344
    %v2346 = vpop.xlane.xlu0 %2345
    %v2347 = vmax.f32 %v2200, %v2201
    %2348 = vmax.xlane.f32.xlu0 %v2347
    %v2349 = vpop.xlane.xlu0 %2348
    %v2350 = vmax.f32 %v2202, %v2203
    %2351 = vmax.xlane.f32.xlu0 %v2350
    %v2352 = vpop.xlane.xlu0 %2351
    %v2353 = vmax.f32 %v2204, %v2205
    %2354 = vmax.xlane.f32.xlu0 %v2353
    %v2355 = vpop.xlane.xlu0 %2354
    %v2356 = vmax.f32 %v2206, %v2207
    %2357 = vmax.xlane.f32.xlu0 %v2356
    %v2358 = vpop.xlane.xlu0 %2357
    %v2359 = vmax.f32 %v2208, %v2209
    %2360 = vmax.xlane.f32.xlu0 %v2359
    %v2361 = vpop.xlane.xlu0 %2360
    %v2362 = vmax.f32 %v2210, %v2211
    %2363 = vmax.xlane.f32.xlu0 %v2362
    %v2364 = vpop.xlane.xlu0 %2363
    %v2365 = vmax.f32 %v2212, %v2213
    %2366 = vmax.xlane.f32.xlu0 %v2365
    %v2367 = vpop.xlane.xlu0 %2366
    %v2368 = vmax.f32 %v2214, %v2215
    %2369 = vmax.xlane.f32.xlu0 %v2368
    %v2370 = vpop.xlane.xlu0 %2369
    %v2371 = vmax.f32 %v2216, %v2217
    %2372 = vmax.xlane.f32.xlu0 %v2371
    %v2373 = vpop.xlane.xlu0 %2372
    %v2374 = vmax.f32 %v2218, %v2219
    %2375 = vmax.xlane.f32.xlu0 %v2374
    %v2376 = vpop.xlane.xlu0 %2375
    %v2377 = vmax.f32 %v2220, %v2221
    %2378 = vmax.xlane.f32.xlu0 %v2377
    %v2379 = vpop.xlane.xlu0 %2378
    %v2380 = vmax.f32 %v2222, %v2223
    %2381 = vmax.xlane.f32.xlu0 %v2380
    %v2382 = vpop.xlane.xlu0 %2381
    %v2383 = vmax.f32 %v2224, %v2225
    %2384 = vmax.xlane.f32.xlu0 %v2383
    %v2385 = vpop.xlane.xlu0 %2384
    %v2386 = vmax.f32 %v2226, %v2227
    %2387 = vmax.xlane.f32.xlu0 %v2386
    %v2388 = vpop.xlane.xlu0 %2387
    %v2389 = vmax.f32 %v2228, %v2229
    %2390 = vmax.xlane.f32.xlu0 %v2389
    %v2391 = vpop.xlane.xlu0 %2390
    %v2392 = vmax.f32 %v2230, %v2231
    %2393 = vmax.xlane.f32.xlu0 %v2392
    %v2394 = vpop.xlane.xlu0 %2393
    %v2395 = vmax.f32 %v2232, %v2233
    %2396 = vmax.xlane.f32.xlu0 %v2395
    %v2397 = vpop.xlane.xlu0 %2396
    %v2398 = vmax.f32 %v2234, %v2235
    %2399 = vmax.xlane.f32.xlu0 %v2398
    %v2400 = vpop.xlane.xlu0 %2399
    %v2401 = vmax.f32 %v2236, %v2237
    %2402 = vmax.xlane.f32.xlu0 %v2401
    %v2403 = vpop.xlane.xlu0 %2402
    %v2404 = vmax.f32 %v2238, %v2239
    %2405 = vmax.xlane.f32.xlu0 %v2404
    %v2406 = vpop.xlane.xlu0 %2405
    %v2407 = vmax.f32 %v2240, %v2241
    %2408 = vmax.xlane.f32.xlu0 %v2407
    %v2409 = vpop.xlane.xlu0 %2408
    %v2410 = vmax.f32 %v2242, %v2243
    %2411 = vmax.xlane.f32.xlu0 %v2410
    %v2412 = vpop.xlane.xlu0 %2411
    %v2413 = vmax.f32 %v2244, %v2245
    %2414 = vmax.xlane.f32.xlu0 %v2413
    %v2415 = vpop.xlane.xlu0 %2414
    %v2416 = vmax.f32 %v2246, %v2247
    %2417 = vmax.xlane.f32.xlu0 %v2416
    %v2418 = vpop.xlane.xlu0 %2417
    %v2419 = vmax.f32 %v2248, %v2249
    %2420 = vmax.xlane.f32.xlu0 %v2419
    %v2421 = vpop.xlane.xlu0 %2420
    %v2422 = vmax.f32 %v2250, %v2251
    %2423 = vmax.xlane.f32.xlu0 %v2422
    %v2424 = vpop.xlane.xlu0 %2423
    %v2425 = vmax.f32 %v2252, %v2253
    %2426 = vmax.xlane.f32.xlu0 %v2425
    %v2427 = vpop.xlane.xlu0 %2426
    %v2428 = vmax.f32 %v2254, %v2255
    %2429 = vmax.xlane.f32.xlu0 %v2428
    %v2430 = vpop.xlane.xlu0 %2429
    %v2431 = vmax.f32 %v2256, %v2257
    %2432 = vmax.xlane.f32.xlu0 %v2431
    %v2433 = vpop.xlane.xlu0 %2432
    %v2434 = vmax.f32 %v2258, %v2259
    %2435 = vmax.xlane.f32.xlu0 %v2434
    %v2436 = vpop.xlane.xlu0 %2435
    %v2437 = vmax.f32 %v2260, %v2261
    %2438 = vmax.xlane.f32.xlu0 %v2437
    %v2439 = vpop.xlane.xlu0 %2438
    %v2440 = vmax.f32 %v2262, %v2263
    %2441 = vmax.xlane.f32.xlu0 %v2440
    %v2442 = vpop.xlane.xlu0 %2441
    %v2443 = vmax.f32 %v2264, %v2265
    %2444 = vmax.xlane.f32.xlu0 %v2443
    %v2445 = vpop.xlane.xlu0 %2444
    %v2446 = vmax.f32 %v2266, %v2267
    %2447 = vmax.xlane.f32.xlu0 %v2446
    %v2448 = vpop.xlane.xlu0 %2447
    %v2449 = vmax.f32 %v2268, %v2269
    %2450 = vmax.xlane.f32.xlu0 %v2449
    %v2451 = vpop.xlane.xlu0 %2450
    %v2452 = vmax.f32 %v2270, %v2271
    %2453 = vmax.xlane.f32.xlu0 %v2452
    %v2454 = vpop.xlane.xlu0 %2453
    %v2455 = vmax.f32 %v2272, %v2273
    %2456 = vmax.xlane.f32.xlu0 %v2455
    %v2457 = vpop.xlane.xlu0 %2456
    %v2458 = vmax.f32 %v2274, %v2275
    %2459 = vmax.xlane.f32.xlu0 %v2458
    %v2460 = vpop.xlane.xlu0 %2459
    %v2461 = vmax.f32 %v2276, %v2277
    %2462 = vmax.xlane.f32.xlu0 %v2461
    %v2463 = vpop.xlane.xlu0 %2462
    %v2464 = vmax.f32 %v2278, %v2279
    %2465 = vmax.xlane.f32.xlu0 %v2464
    %v2466 = vpop.xlane.xlu0 %2465
    %v2467 = vmax.f32 %v2280, %v2281
    %2468 = vmax.xlane.f32.xlu0 %v2467
    %v2469 = vpop.xlane.xlu0 %2468
    %v2470 = vmax.f32 %v2282, %v2283
    %2471 = vmax.xlane.f32.xlu0 %v2470
    %v2472 = vpop.xlane.xlu0 %2471
    %v2473 = vmax.f32 %v2284, %v2285
    %2474 = vmax.xlane.f32.xlu0 %v2473
    %v2475 = vpop.xlane.xlu0 %2474
    %v2476 = vmax.f32 %v2286, %v2287
    %2477 = vmax.xlane.f32.xlu0 %v2476
    %v2478 = vpop.xlane.xlu0 %2477
    %v2479 = vmax.f32 %v2288, %v2289
    %2480 = vmax.xlane.f32.xlu0 %v2479
    %v2481 = vpop.xlane.xlu0 %2480
    %v2482 = vsub.f32 %v2162, %v2292
    %v2483 = vsub.f32 %v2163, %v2292
    %v2484 = vsub.f32 %v2164, %v2295
    %v2485 = vsub.f32 %v2165, %v2295
    %v2486 = vsub.f32 %v2166, %v2298
    %v2487 = vsub.f32 %v2167, %v2298
    %v2488 = vsub.f32 %v2168, %v2301
    %v2489 = vsub.f32 %v2169, %v2301
    %v2490 = vsub.f32 %v2170, %v2304
    %v2491 = vsub.f32 %v2171, %v2304
    %v2492 = vsub.f32 %v2172, %v2307
    %v2493 = vsub.f32 %v2173, %v2307
    %v2494 = vsub.f32 %v2174, %v2310
    %v2495 = vsub.f32 %v2175, %v2310
    %v2496 = vsub.f32 %v2176, %v2313
    %v2497 = vsub.f32 %v2177, %v2313
    %v2498 = vsub.f32 %v2178, %v2316
    %v2499 = vsub.f32 %v2179, %v2316
    %v2500 = vsub.f32 %v2180, %v2319
    %v2501 = vsub.f32 %v2181, %v2319
    %v2502 = vsub.f32 %v2182, %v2322
    %v2503 = vsub.f32 %v2183, %v2322
    %v2504 = vsub.f32 %v2184, %v2325
    %v2505 = vsub.f32 %v2185, %v2325
    %v2506 = vsub.f32 %v2186, %v2328
    %v2507 = vsub.f32 %v2187, %v2328
    %v2508 = vsub.f32 %v2188, %v2331
    %v2509 = vsub.f32 %v2189, %v2331
    %v2510 = vsub.f32 %v2190, %v2334
    %v2511 = vsub.f32 %v2191, %v2334
    %v2512 = vsub.f32 %v2192, %v2337
    %v2513 = vsub.f32 %v2193, %v2337
    %v2514 = vsub.f32 %v2194, %v2340
    %v2515 = vsub.f32 %v2195, %v2340
    %v2516 = vsub.f32 %v2196, %v2343
    %v2517 = vsub.f32 %v2197, %v2343
    %v2518 = vsub.f32 %v2198, %v2346
    %v2519 = vsub.f32 %v2199, %v2346
    %v2520 = vsub.f32 %v2200, %v2349
    %v2521 = vsub.f32 %v2201, %v2349
    %v2522 = vsub.f32 %v2202, %v2352
    %v2523 = vsub.f32 %v2203, %v2352
    %v2524 = vsub.f32 %v2204, %v2355
    %v2525 = vsub.f32 %v2205, %v2355
    %v2526 = vsub.f32 %v2206, %v2358
    %v2527 = vsub.f32 %v2207, %v2358
    %v2528 = vsub.f32 %v2208, %v2361
    %v2529 = vsub.f32 %v2209, %v2361
    %v2530 = vsub.f32 %v2210, %v2364
    %v2531 = vsub.f32 %v2211, %v2364
    %v2532 = vsub.f32 %v2212, %v2367
    %v2533 = vsub.f32 %v2213, %v2367
    %v2534 = vsub.f32 %v2214, %v2370
    %v2535 = vsub.f32 %v2215, %v2370
    %v2536 = vsub.f32 %v2216, %v2373
    %v2537 = vsub.f32 %v2217, %v2373
    %v2538 = vsub.f32 %v2218, %v2376
    %v2539 = vsub.f32 %v2219, %v2376
    %v2540 = vsub.f32 %v2220, %v2379
    %v2541 = vsub.f32 %v2221, %v2379
    %v2542 = vsub.f32 %v2222, %v2382
    %v2543 = vsub.f32 %v2223, %v2382
    %v2544 = vsub.f32 %v2224, %v2385
    %v2545 = vsub.f32 %v2225, %v2385
    %v2546 = vsub.f32 %v2226, %v2388
    %v2547 = vsub.f32 %v2227, %v2388
    %v2548 = vsub.f32 %v2228, %v2391
    %v2549 = vsub.f32 %v2229, %v2391
    %v2550 = vsub.f32 %v2230, %v2394
    %v2551 = vsub.f32 %v2231, %v2394
    %v2552 = vsub.f32 %v2232, %v2397
    %v2553 = vsub.f32 %v2233, %v2397
    %v2554 = vsub.f32 %v2234, %v2400
    %v2555 = vsub.f32 %v2235, %v2400
    %v2556 = vsub.f32 %v2236, %v2403
    %v2557 = vsub.f32 %v2237, %v2403
    %v2558 = vsub.f32 %v2238, %v2406
    %v2559 = vsub.f32 %v2239, %v2406
    %v2560 = vsub.f32 %v2240, %v2409
    %v2561 = vsub.f32 %v2241, %v2409
    %v2562 = vsub.f32 %v2242, %v2412
    %v2563 = vsub.f32 %v2243, %v2412
    %v2564 = vsub.f32 %v2244, %v2415
    %v2565 = vsub.f32 %v2245, %v2415
    %v2566 = vsub.f32 %v2246, %v2418
    %v2567 = vsub.f32 %v2247, %v2418
    %v2568 = vsub.f32 %v2248, %v2421
    %v2569 = vsub.f32 %v2249, %v2421
    %v2570 = vsub.f32 %v2250, %v2424
    %v2571 = vsub.f32 %v2251, %v2424
    %v2572 = vsub.f32 %v2252, %v2427
    %v2573 = vsub.f32 %v2253, %v2427
    %v2574 = vsub.f32 %v2254, %v2430
    %v2575 = vsub.f32 %v2255, %v2430
    %v2576 = vsub.f32 %v2256, %v2433
    %v2577 = vsub.f32 %v2257, %v2433
    %v2578 = vsub.f32 %v2258, %v2436
    %v2579 = vsub.f32 %v2259, %v2436
    %v2580 = vsub.f32 %v2260, %v2439
    %v2581 = vsub.f32 %v2261, %v2439
    %v2582 = vsub.f32 %v2262, %v2442
    %v2583 = vsub.f32 %v2263, %v2442
    %v2584 = vsub.f32 %v2264, %v2445
    %v2585 = vsub.f32 %v2265, %v2445
    %v2586 = vsub.f32 %v2266, %v2448
    %v2587 = vsub.f32 %v2267, %v2448
    %v2588 = vsub.f32 %v2268, %v2451
    %v2589 = vsub.f32 %v2269, %v2451
    %v2590 = vsub.f32 %v2270, %v2454
    %v2591 = vsub.f32 %v2271, %v2454
    %v2592 = vsub.f32 %v2272, %v2457
    %v2593 = vsub.f32 %v2273, %v2457
    %v2594 = vsub.f32 %v2274, %v2460
    %v2595 = vsub.f32 %v2275, %v2460
    %v2596 = vsub.f32 %v2276, %v2463
    %v2597 = vsub.f32 %v2277, %v2463
    %v2598 = vsub.f32 %v2278, %v2466
    %v2599 = vsub.f32 %v2279, %v2466
    %v2600 = vsub.f32 %v2280, %v2469
    %v2601 = vsub.f32 %v2281, %v2469
    %v2602 = vsub.f32 %v2282, %v2472
    %v2603 = vsub.f32 %v2283, %v2472
    %v2604 = vsub.f32 %v2284, %v2475
    %v2605 = vsub.f32 %v2285, %v2475
    %v2606 = vsub.f32 %v2286, %v2478
    %v2607 = vsub.f32 %v2287, %v2478
    %v2608 = vsub.f32 %v2288, %v2481
    %v2609 = vsub.f32 %v2289, %v2481
    %v2610 = vmul.f32 %v2482, 1.442695
    %v2611 = vpow.pop %v2610
    %v2612 = vmul.f32 %v2483, 1.442695
    %v2613 = vpow.pop %v2612
    %v2614 = vmul.f32 %v2484, 1.442695
    %v2615 = vpow.pop %v2614
    %v2616 = vmul.f32 %v2485, 1.442695
    %v2617 = vpow.pop %v2616
    %v2618 = vmul.f32 %v2486, 1.442695
    %v2619 = vpow.pop %v2618
    %v2620 = vmul.f32 %v2487, 1.442695
    %v2621 = vpow.pop %v2620
    %v2622 = vmul.f32 %v2488, 1.442695
    %v2623 = vpow.pop %v2622
    %v2624 = vmul.f32 %v2489, 1.442695
    %v2625 = vpow.pop %v2624
    %v2626 = vmul.f32 %v2490, 1.442695
    %v2627 = vpow.pop %v2626
    %v2628 = vmul.f32 %v2491, 1.442695
    %v2629 = vpow.pop %v2628
    %v2630 = vmul.f32 %v2492, 1.442695
    %v2631 = vpow.pop %v2630
    %v2632 = vmul.f32 %v2493, 1.442695
    %v2633 = vpow.pop %v2632
    %v2634 = vmul.f32 %v2494, 1.442695
    %v2635 = vpow.pop %v2634
    %v2636 = vmul.f32 %v2495, 1.442695
    %v2637 = vpow.pop %v2636
    %v2638 = vmul.f32 %v2496, 1.442695
    %v2639 = vpow.pop %v2638
    %v2640 = vmul.f32 %v2497, 1.442695
    %v2641 = vpow.pop %v2640
    %v2642 = vmul.f32 %v2498, 1.442695
    %v2643 = vpow.pop %v2642
    %v2644 = vmul.f32 %v2499, 1.442695
    %v2645 = vpow.pop %v2644
    %v2646 = vmul.f32 %v2500, 1.442695
    %v2647 = vpow.pop %v2646
    %v2648 = vmul.f32 %v2501, 1.442695
    %v2649 = vpow.pop %v2648
    %v2650 = vmul.f32 %v2502, 1.442695
    %v2651 = vpow.pop %v2650
    %v2652 = vmul.f32 %v2503, 1.442695
    %v2653 = vpow.pop %v2652
    %v2654 = vmul.f32 %v2504, 1.442695
    %v2655 = vpow.pop %v2654
    %v2656 = vmul.f32 %v2505, 1.442695
    %v2657 = vpow.pop %v2656
    %v2658 = vmul.f32 %v2506, 1.442695
    %v2659 = vpow.pop %v2658
    %v2660 = vmul.f32 %v2507, 1.442695
    %v2661 = vpow.pop %v2660
    %v2662 = vmul.f32 %v2508, 1.442695
    %v2663 = vpow.pop %v2662
    %v2664 = vmul.f32 %v2509, 1.442695
    %v2665 = vpow.pop %v2664
    %v2666 = vmul.f32 %v2510, 1.442695
    %v2667 = vpow.pop %v2666
    %v2668 = vmul.f32 %v2511, 1.442695
    %v2669 = vpow.pop %v2668
    %v2670 = vmul.f32 %v2512, 1.442695
    %v2671 = vpow.pop %v2670
    %v2672 = vmul.f32 %v2513, 1.442695
    %v2673 = vpow.pop %v2672
    %v2674 = vmul.f32 %v2514, 1.442695
    %v2675 = vpow.pop %v2674
    %v2676 = vmul.f32 %v2515, 1.442695
    %v2677 = vpow.pop %v2676
    %v2678 = vmul.f32 %v2516, 1.442695
    %v2679 = vpow.pop %v2678
    %v2680 = vmul.f32 %v2517, 1.442695
    %v2681 = vpow.pop %v2680
    %v2682 = vmul.f32 %v2518, 1.442695
    %v2683 = vpow.pop %v2682
    %v2684 = vmul.f32 %v2519, 1.442695
    %v2685 = vpow.pop %v2684
    %v2686 = vmul.f32 %v2520, 1.442695
    %v2687 = vpow.pop %v2686
    %v2688 = vmul.f32 %v2521, 1.442695
    %v2689 = vpow.pop %v2688
    %v2690 = vmul.f32 %v2522, 1.442695
    %v2691 = vpow.pop %v2690
    %v2692 = vmul.f32 %v2523, 1.442695
    %v2693 = vpow.pop %v2692
    %v2694 = vmul.f32 %v2524, 1.442695
    %v2695 = vpow.pop %v2694
    %v2696 = vmul.f32 %v2525, 1.442695
    %v2697 = vpow.pop %v2696
    %v2698 = vmul.f32 %v2526, 1.442695
    %v2699 = vpow.pop %v2698
    %v2700 = vmul.f32 %v2527, 1.442695
    %v2701 = vpow.pop %v2700
    %v2702 = vmul.f32 %v2528, 1.442695
    %v2703 = vpow.pop %v2702
    %v2704 = vmul.f32 %v2529, 1.442695
    %v2705 = vpow.pop %v2704
    %v2706 = vmul.f32 %v2530, 1.442695
    %v2707 = vpow.pop %v2706
    %v2708 = vmul.f32 %v2531, 1.442695
    %v2709 = vpow.pop %v2708
    %v2710 = vmul.f32 %v2532, 1.442695
    %v2711 = vpow.pop %v2710
    %v2712 = vmul.f32 %v2533, 1.442695
    %v2713 = vpow.pop %v2712
    %v2714 = vmul.f32 %v2534, 1.442695
    %v2715 = vpow.pop %v2714
    %v2716 = vmul.f32 %v2535, 1.442695
    %v2717 = vpow.pop %v2716
    %v2718 = vmul.f32 %v2536, 1.442695
    %v2719 = vpow.pop %v2718
    %v2720 = vmul.f32 %v2537, 1.442695
    %v2721 = vpow.pop %v2720
    %v2722 = vmul.f32 %v2538, 1.442695
    %v2723 = vpow.pop %v2722
    %v2724 = vmul.f32 %v2539, 1.442695
    %v2725 = vpow.pop %v2724
    %v2726 = vmul.f32 %v2540, 1.442695
    %v2727 = vpow.pop %v2726
    %v2728 = vmul.f32 %v2541, 1.442695
    %v2729 = vpow.pop %v2728
    %v2730 = vmul.f32 %v2542, 1.442695
    %v2731 = vpow.pop %v2730
    %v2732 = vmul.f32 %v2543, 1.442695
    %v2733 = vpow.pop %v2732
    %v2734 = vmul.f32 %v2544, 1.442695
    %v2735 = vpow.pop %v2734
    %v2736 = vmul.f32 %v2545, 1.442695
    %v2737 = vpow.pop %v2736
    %v2738 = vmul.f32 %v2546, 1.442695
    %v2739 = vpow.pop %v2738
    %v2740 = vmul.f32 %v2547, 1.442695
    %v2741 = vpow.pop %v2740
    %v2742 = vmul.f32 %v2548, 1.442695
    %v2743 = vpow.pop %v2742
    %v2744 = vmul.f32 %v2549, 1.442695
    %v2745 = vpow.pop %v2744
    %v2746 = vmul.f32 %v2550, 1.442695
    %v2747 = vpow.pop %v2746
    %v2748 = vmul.f32 %v2551, 1.442695
    %v2749 = vpow.pop %v2748
    %v2750 = vmul.f32 %v2552, 1.442695
    %v2751 = vpow.pop %v2750
    %v2752 = vmul.f32 %v2553, 1.442695
    %v2753 = vpow.pop %v2752
    %v2754 = vmul.f32 %v2554, 1.442695
    %v2755 = vpow.pop %v2754
    %v2756 = vmul.f32 %v2555, 1.442695
    %v2757 = vpow.pop %v2756
    %v2758 = vmul.f32 %v2556, 1.442695
    %v2759 = vpow.pop %v2758
    %v2760 = vmul.f32 %v2557, 1.442695
    %v2761 = vpow.pop %v2760
    %v2762 = vmul.f32 %v2558, 1.442695
    %v2763 = vpow.pop %v2762
    %v2764 = vmul.f32 %v2559, 1.442695
    %v2765 = vpow.pop %v2764
    %v2766 = vmul.f32 %v2560, 1.442695
    %v2767 = vpow.pop %v2766
    %v2768 = vmul.f32 %v2561, 1.442695
    %v2769 = vpow.pop %v2768
    %v2770 = vmul.f32 %v2562, 1.442695
    %v2771 = vpow.pop %v2770
    %v2772 = vmul.f32 %v2563, 1.442695
    %v2773 = vpow.pop %v2772
    %v2774 = vmul.f32 %v2564, 1.442695
    %v2775 = vpow.pop %v2774
    %v2776 = vmul.f32 %v2565, 1.442695
    %v2777 = vpow.pop %v2776
    %v2778 = vmul.f32 %v2566, 1.442695
    %v2779 = vpow.pop %v2778
    %v2780 = vmul.f32 %v2567, 1.442695
    %v2781 = vpow.pop %v2780
    %v2782 = vmul.f32 %v2568, 1.442695
    %v2783 = vpow.pop %v2782
    %v2784 = vmul.f32 %v2569, 1.442695
    %v2785 = vpow.pop %v2784
    %v2786 = vmul.f32 %v2570, 1.442695
    %v2787 = vpow.pop %v2786
    %v2788 = vmul.f32 %v2571, 1.442695
    %v2789 = vpow.pop %v2788
    %v2790 = vmul.f32 %v2572, 1.442695
    %v2791 = vpow.pop %v2790
    %v2792 = vmul.f32 %v2573, 1.442695
    %v2793 = vpow.pop %v2792
    %v2794 = vmul.f32 %v2574, 1.442695
    %v2795 = vpow.pop %v2794
    %v2796 = vmul.f32 %v2575, 1.442695
    %v2797 = vpow.pop %v2796
    %v2798 = vmul.f32 %v2576, 1.442695
    %v2799 = vpow.pop %v2798
    %v2800 = vmul.f32 %v2577, 1.442695
    %v2801 = vpow.pop %v2800
    %v2802 = vmul.f32 %v2578, 1.442695
    %v2803 = vpow.pop %v2802
    %v2804 = vmul.f32 %v2579, 1.442695
    %v2805 = vpow.pop %v2804
    %v2806 = vmul.f32 %v2580, 1.442695
    %v2807 = vpow.pop %v2806
    %v2808 = vmul.f32 %v2581, 1.442695
    %v2809 = vpow.pop %v2808
    %v2810 = vmul.f32 %v2582, 1.442695
    %v2811 = vpow.pop %v2810
    %v2812 = vmul.f32 %v2583, 1.442695
    %v2813 = vpow.pop %v2812
    %v2814 = vmul.f32 %v2584, 1.442695
    %v2815 = vpow.pop %v2814
    %v2816 = vmul.f32 %v2585, 1.442695
    %v2817 = vpow.pop %v2816
    %v2818 = vmul.f32 %v2586, 1.442695
    %v2819 = vpow.pop %v2818
    %v2820 = vmul.f32 %v2587, 1.442695
    %v2821 = vpow.pop %v2820
    %v2822 = vmul.f32 %v2588, 1.442695
    %v2823 = vpow.pop %v2822
    %v2824 = vmul.f32 %v2589, 1.442695
    %v2825 = vpow.pop %v2824
    %v2826 = vmul.f32 %v2590, 1.442695
    %v2827 = vpow.pop %v2826
    %v2828 = vmul.f32 %v2591, 1.442695
    %v2829 = vpow.pop %v2828
    %v2830 = vmul.f32 %v2592, 1.442695
    %v2831 = vpow.pop %v2830
    %v2832 = vmul.f32 %v2593, 1.442695
    %v2833 = vpow.pop %v2832
    %v2834 = vmul.f32 %v2594, 1.442695
    %v2835 = vpow.pop %v2834
    %v2836 = vmul.f32 %v2595, 1.442695
    %v2837 = vpow.pop %v2836
    %v2838 = vmul.f32 %v2596, 1.442695
    %v2839 = vpow.pop %v2838
    %v2840 = vmul.f32 %v2597, 1.442695
    %v2841 = vpow.pop %v2840
    %v2842 = vmul.f32 %v2598, 1.442695
    %v2843 = vpow.pop %v2842
    %v2844 = vmul.f32 %v2599, 1.442695
    %v2845 = vpow.pop %v2844
    %v2846 = vmul.f32 %v2600, 1.442695
    %v2847 = vpow.pop %v2846
    %v2848 = vmul.f32 %v2601, 1.442695
    %v2849 = vpow.pop %v2848
    %v2850 = vmul.f32 %v2602, 1.442695
    %v2851 = vpow.pop %v2850
    %v2852 = vmul.f32 %v2603, 1.442695
    %v2853 = vpow.pop %v2852
    %v2854 = vmul.f32 %v2604, 1.442695
    %v2855 = vpow.pop %v2854
    %v2856 = vmul.f32 %v2605, 1.442695
    %v2857 = vpow.pop %v2856
    %v2858 = vmul.f32 %v2606, 1.442695
    %v2859 = vpow.pop %v2858
    %v2860 = vmul.f32 %v2607, 1.442695
    %v2861 = vpow.pop %v2860
    %v2862 = vmul.f32 %v2608, 1.442695
    %v2863 = vpow.pop %v2862
    %v2864 = vmul.f32 %v2609, 1.442695
    %v2865 = vpow.pop %v2864
    %v2866 = vadd.f32 %v2611, %v2613
    %2867 = vadd.xlane.f32.xlu0 %v2866
    %v2868 = vpop.xlane.xlu0 %2867
    %v2869 = vadd.f32 %v2615, %v2617
    %2870 = vadd.xlane.f32.xlu0 %v2869
    %v2871 = vpop.xlane.xlu0 %2870
    %v2872 = vadd.f32 %v2619, %v2621
    %2873 = vadd.xlane.f32.xlu0 %v2872
    %v2874 = vpop.xlane.xlu0 %2873
    %v2875 = vadd.f32 %v2623, %v2625
    %2876 = vadd.xlane.f32.xlu0 %v2875
    %v2877 = vpop.xlane.xlu0 %2876
    %v2878 = vadd.f32 %v2627, %v2629
    %2879 = vadd.xlane.f32.xlu0 %v2878
    %v2880 = vpop.xlane.xlu0 %2879
    %v2881 = vadd.f32 %v2631, %v2633
    %2882 = vadd.xlane.f32.xlu0 %v2881
    %v2883 = vpop.xlane.xlu0 %2882
    %v2884 = vadd.f32 %v2635, %v2637
    %2885 = vadd.xlane.f32.xlu0 %v2884
    %v2886 = vpop.xlane.xlu0 %2885
    %v2887 = vadd.f32 %v2639, %v2641
    %2888 = vadd.xlane.f32.xlu0 %v2887
    %v2889 = vpop.xlane.xlu0 %2888
    %v2890 = vadd.f32 %v2643, %v2645
    %2891 = vadd.xlane.f32.xlu0 %v2890
    %v2892 = vpop.xlane.xlu0 %2891
    %v2893 = vadd.f32 %v2647, %v2649
    %2894 = vadd.xlane.f32.xlu0 %v2893
    %v2895 = vpop.xlane.xlu0 %2894
    %v2896 = vadd.f32 %v2651, %v2653
    %2897 = vadd.xlane.f32.xlu0 %v2896
    %v2898 = vpop.xlane.xlu0 %2897
    %v2899 = vadd.f32 %v2655, %v2657
    %2900 = vadd.xlane.f32.xlu0 %v2899
    %v2901 = vpop.xlane.xlu0 %2900
    %v2902 = vadd.f32 %v2659, %v2661
    %2903 = vadd.xlane.f32.xlu0 %v2902
    %v2904 = vpop.xlane.xlu0 %2903
    %v2905 = vadd.f32 %v2663, %v2665
    %2906 = vadd.xlane.f32.xlu0 %v2905
    %v2907 = vpop.xlane.xlu0 %2906
    %v2908 = vadd.f32 %v2667, %v2669
    %2909 = vadd.xlane.f32.xlu0 %v2908
    %v2910 = vpop.xlane.xlu0 %2909
    %v2911 = vadd.f32 %v2671, %v2673
    %2912 = vadd.xlane.f32.xlu0 %v2911
    %v2913 = vpop.xlane.xlu0 %2912
    %v2914 = vadd.f32 %v2675, %v2677
    %2915 = vadd.xlane.f32.xlu0 %v2914
    %v2916 = vpop.xlane.xlu0 %2915
    %v2917 = vadd.f32 %v2679, %v2681
    %2918 = vadd.xlane.f32.xlu0 %v2917
    %v2919 = vpop.xlane.xlu0 %2918
    %v2920 = vadd.f32 %v2683, %v2685
    %2921 = vadd.xlane.f32.xlu0 %v2920
    %v2922 = vpop.xlane.xlu0 %2921
    %v2923 = vadd.f32 %v2687, %v2689
    %2924 = vadd.xlane.f32.xlu0 %v2923
    %v2925 = vpop.xlane.xlu0 %2924
    %v2926 = vadd.f32 %v2691, %v2693
    %2927 = vadd.xlane.f32.xlu0 %v2926
    %v2928 = vpop.xlane.xlu0 %2927
    %v2929 = vadd.f32 %v2695, %v2697
    %2930 = vadd.xlane.f32.xlu0 %v2929
    %v2931 = vpop.xlane.xlu0 %2930
    %v2932 = vadd.f32 %v2699, %v2701
    %2933 = vadd.xlane.f32.xlu0 %v2932
    %v2934 = vpop.xlane.xlu0 %2933
    %v2935 = vadd.f32 %v2703, %v2705
    %2936 = vadd.xlane.f32.xlu0 %v2935
    %v2937 = vpop.xlane.xlu0 %2936
    %v2938 = vadd.f32 %v2707, %v2709
    %2939 = vadd.xlane.f32.xlu0 %v2938
    %v2940 = vpop.xlane.xlu0 %2939
    %v2941 = vadd.f32 %v2711, %v2713
    %2942 = vadd.xlane.f32.xlu0 %v2941
    %v2943 = vpop.xlane.xlu0 %2942
    %v2944 = vadd.f32 %v2715, %v2717
    %2945 = vadd.xlane.f32.xlu0 %v2944
    %v2946 = vpop.xlane.xlu0 %2945
    %v2947 = vadd.f32 %v2719, %v2721
    %2948 = vadd.xlane.f32.xlu0 %v2947
    %v2949 = vpop.xlane.xlu0 %2948
    %v2950 = vadd.f32 %v2723, %v2725
    %2951 = vadd.xlane.f32.xlu0 %v2950
    %v2952 = vpop.xlane.xlu0 %2951
    %v2953 = vadd.f32 %v2727, %v2729
    %2954 = vadd.xlane.f32.xlu0 %v2953
    %v2955 = vpop.xlane.xlu0 %2954
    %v2956 = vadd.f32 %v2731, %v2733
    %2957 = vadd.xlane.f32.xlu0 %v2956
    %v2958 = vpop.xlane.xlu0 %2957
    %v2959 = vadd.f32 %v2735, %v2737
    %2960 = vadd.xlane.f32.xlu0 %v2959
    %v2961 = vpop.xlane.xlu0 %2960
    %v2962 = vadd.f32 %v2739, %v2741
    %2963 = vadd.xlane.f32.xlu0 %v2962
    %v2964 = vpop.xlane.xlu0 %2963
    %v2965 = vadd.f32 %v2743, %v2745
    %2966 = vadd.xlane.f32.xlu0 %v2965
    %v2967 = vpop.xlane.xlu0 %2966
    %v2968 = vadd.f32 %v2747, %v2749
    %2969 = vadd.xlane.f32.xlu0 %v2968
    %v2970 = vpop.xlane.xlu0 %2969
    %v2971 = vadd.f32 %v2751, %v2753
    %2972 = vadd.xlane.f32.xlu0 %v2971
    %v2973 = vpop.xlane.xlu0 %2972
    %v2974 = vadd.f32 %v2755, %v2757
    %2975 = vadd.xlane.f32.xlu0 %v2974
    %v2976 = vpop.xlane.xlu0 %2975
    %v2977 = vadd.f32 %v2759, %v2761
    %2978 = vadd.xlane.f32.xlu0 %v2977
    %v2979 = vpop.xlane.xlu0 %2978
    %v2980 = vadd.f32 %v2763, %v2765
    %2981 = vadd.xlane.f32.xlu0 %v2980
    %v2982 = vpop.xlane.xlu0 %2981
    %v2983 = vadd.f32 %v2767, %v2769
    %2984 = vadd.xlane.f32.xlu0 %v2983
    %v2985 = vpop.xlane.xlu0 %2984
    %v2986 = vadd.f32 %v2771, %v2773
    %2987 = vadd.xlane.f32.xlu0 %v2986
    %v2988 = vpop.xlane.xlu0 %2987
    %v2989 = vadd.f32 %v2775, %v2777
    %2990 = vadd.xlane.f32.xlu0 %v2989
    %v2991 = vpop.xlane.xlu0 %2990
    %v2992 = vadd.f32 %v2779, %v2781
    %2993 = vadd.xlane.f32.xlu0 %v2992
    %v2994 = vpop.xlane.xlu0 %2993
    %v2995 = vadd.f32 %v2783, %v2785
    %2996 = vadd.xlane.f32.xlu0 %v2995
    %v2997 = vpop.xlane.xlu0 %2996
    %v2998 = vadd.f32 %v2787, %v2789
    %2999 = vadd.xlane.f32.xlu0 %v2998
    %v3000 = vpop.xlane.xlu0 %2999
    %v3001 = vadd.f32 %v2791, %v2793
    %3002 = vadd.xlane.f32.xlu0 %v3001
    %v3003 = vpop.xlane.xlu0 %3002
    %v3004 = vadd.f32 %v2795, %v2797
    %3005 = vadd.xlane.f32.xlu0 %v3004
    %v3006 = vpop.xlane.xlu0 %3005
    %v3007 = vadd.f32 %v2799, %v2801
    %3008 = vadd.xlane.f32.xlu0 %v3007
    %v3009 = vpop.xlane.xlu0 %3008
    %v3010 = vadd.f32 %v2803, %v2805
    %3011 = vadd.xlane.f32.xlu0 %v3010
    %v3012 = vpop.xlane.xlu0 %3011
    %v3013 = vadd.f32 %v2807, %v2809
    %3014 = vadd.xlane.f32.xlu0 %v3013
    %v3015 = vpop.xlane.xlu0 %3014
    %v3016 = vadd.f32 %v2811, %v2813
    %3017 = vadd.xlane.f32.xlu0 %v3016
    %v3018 = vpop.xlane.xlu0 %3017
    %v3019 = vadd.f32 %v2815, %v2817
    %3020 = vadd.xlane.f32.xlu0 %v3019
    %v3021 = vpop.xlane.xlu0 %3020
    %v3022 = vadd.f32 %v2819, %v2821
    %3023 = vadd.xlane.f32.xlu0 %v3022
    %v3024 = vpop.xlane.xlu0 %3023
    %v3025 = vadd.f32 %v2823, %v2825
    %3026 = vadd.xlane.f32.xlu0 %v3025
    %v3027 = vpop.xlane.xlu0 %3026
    %v3028 = vadd.f32 %v2827, %v2829
    %3029 = vadd.xlane.f32.xlu0 %v3028
    %v3030 = vpop.xlane.xlu0 %3029
    %v3031 = vadd.f32 %v2831, %v2833
    %3032 = vadd.xlane.f32.xlu0 %v3031
    %v3033 = vpop.xlane.xlu0 %3032
    %v3034 = vadd.f32 %v2835, %v2837
    %3035 = vadd.xlane.f32.xlu0 %v3034
    %v3036 = vpop.xlane.xlu0 %3035
    %v3037 = vadd.f32 %v2839, %v2841
    %3038 = vadd.xlane.f32.xlu0 %v3037
    %v3039 = vpop.xlane.xlu0 %3038
    %v3040 = vadd.f32 %v2843, %v2845
    %3041 = vadd.xlane.f32.xlu0 %v3040
    %v3042 = vpop.xlane.xlu0 %3041
    %v3043 = vadd.f32 %v2847, %v2849
    %3044 = vadd.xlane.f32.xlu0 %v3043
    %v3045 = vpop.xlane.xlu0 %3044
    %v3046 = vadd.f32 %v2851, %v2853
    %3047 = vadd.xlane.f32.xlu0 %v3046
    %v3048 = vpop.xlane.xlu0 %3047
    %v3049 = vadd.f32 %v2855, %v2857
    %3050 = vadd.xlane.f32.xlu0 %v3049
    %v3051 = vpop.xlane.xlu0 %3050
    %v3052 = vadd.f32 %v2859, %v2861
    %3053 = vadd.xlane.f32.xlu0 %v3052
    %v3054 = vpop.xlane.xlu0 %3053
    %v3055 = vadd.f32 %v2863, %v2865
    %3056 = vadd.xlane.f32.xlu0 %v3055
    %v3057 = vpop.xlane.xlu0 %3056
    %v3058 = vrcp.pop %v2868
    %v3059 = vrcp.pop %v2871
    %v3060 = vrcp.pop %v2874
    %v3061 = vrcp.pop %v2877
    %v3062 = vrcp.pop %v2880
    %v3063 = vrcp.pop %v2883
    %v3064 = vrcp.pop %v2886
    %v3065 = vrcp.pop %v2889
    %v3066 = vrcp.pop %v2892
    %v3067 = vrcp.pop %v2895
    %v3068 = vrcp.pop %v2898
    %v3069 = vrcp.pop %v2901
    %v3070 = vrcp.pop %v2904
    %v3071 = vrcp.pop %v2907
    %v3072 = vrcp.pop %v2910
    %v3073 = vrcp.pop %v2913
    %v3074 = vrcp.pop %v2916
    %v3075 = vrcp.pop %v2919
    %v3076 = vrcp.pop %v2922
    %v3077 = vrcp.pop %v2925
    %v3078 = vrcp.pop %v2928
    %v3079 = vrcp.pop %v2931
    %v3080 = vrcp.pop %v2934
    %v3081 = vrcp.pop %v2937
    %v3082 = vrcp.pop %v2940
    %v3083 = vrcp.pop %v2943
    %v3084 = vrcp.pop %v2946
    %v3085 = vrcp.pop %v2949
    %v3086 = vrcp.pop %v2952
    %v3087 = vrcp.pop %v2955
    %v3088 = vrcp.pop %v2958
    %v3089 = vrcp.pop %v2961
    %v3090 = vrcp.pop %v2964
    %v3091 = vrcp.pop %v2967
    %v3092 = vrcp.pop %v2970
    %v3093 = vrcp.pop %v2973
    %v3094 = vrcp.pop %v2976
    %v3095 = vrcp.pop %v2979
    %v3096 = vrcp.pop %v2982
    %v3097 = vrcp.pop %v2985
    %v3098 = vrcp.pop %v2988
    %v3099 = vrcp.pop %v2991
    %v3100 = vrcp.pop %v2994
    %v3101 = vrcp.pop %v2997
    %v3102 = vrcp.pop %v3000
    %v3103 = vrcp.pop %v3003
    %v3104 = vrcp.pop %v3006
    %v3105 = vrcp.pop %v3009
    %v3106 = vrcp.pop %v3012
    %v3107 = vrcp.pop %v3015
    %v3108 = vrcp.pop %v3018
    %v3109 = vrcp.pop %v3021
    %v3110 = vrcp.pop %v3024
    %v3111 = vrcp.pop %v3027
    %v3112 = vrcp.pop %v3030
    %v3113 = vrcp.pop %v3033
    %v3114 = vrcp.pop %v3036
    %v3115 = vrcp.pop %v3039
    %v3116 = vrcp.pop %v3042
    %v3117 = vrcp.pop %v3045
    %v3118 = vrcp.pop %v3048
    %v3119 = vrcp.pop %v3051
    %v3120 = vrcp.pop %v3054
    %v3121 = vrcp.pop %v3057
    %v3122 = vmul.f32 %v2611, %v3058
    %v3123 = vmul.f32 %v2613, %v3058
    %v3124 = vmul.f32 %v2615, %v3059
    %v3125 = vmul.f32 %v2617, %v3059
    %v3126 = vmul.f32 %v2619, %v3060
    %v3127 = vmul.f32 %v2621, %v3060
    %v3128 = vmul.f32 %v2623, %v3061
    %v3129 = vmul.f32 %v2625, %v3061
    %v3130 = vmul.f32 %v2627, %v3062
    %v3131 = vmul.f32 %v2629, %v3062
    %v3132 = vmul.f32 %v2631, %v3063
    %v3133 = vmul.f32 %v2633, %v3063
    %v3134 = vmul.f32 %v2635, %v3064
    %v3135 = vmul.f32 %v2637, %v3064
    %v3136 = vmul.f32 %v2639, %v3065
    %v3137 = vmul.f32 %v2641, %v3065
    %v3138 = vmul.f32 %v2643, %v3066
    %v3139 = vmul.f32 %v2645, %v3066
    %v3140 = vmul.f32 %v2647, %v3067
    %v3141 = vmul.f32 %v2649, %v3067
    %v3142 = vmul.f32 %v2651, %v3068
    %v3143 = vmul.f32 %v2653, %v3068
    %v3144 = vmul.f32 %v2655, %v3069
    %v3145 = vmul.f32 %v2657, %v3069
    %v3146 = vmul.f32 %v2659, %v3070
    %v3147 = vmul.f32 %v2661, %v3070
    %v3148 = vmul.f32 %v2663, %v3071
    %v3149 = vmul.f32 %v2665, %v3071
    %v3150 = vmul.f32 %v2667, %v3072
    %v3151 = vmul.f32 %v2669, %v3072
    %v3152 = vmul.f32 %v2671, %v3073
    %v3153 = vmul.f32 %v2673, %v3073
    %v3154 = vmul.f32 %v2675, %v3074
    %v3155 = vmul.f32 %v2677, %v3074
    %v3156 = vmul.f32 %v2679, %v3075
    %v3157 = vmul.f32 %v2681, %v3075
    %v3158 = vmul.f32 %v2683, %v3076
    %v3159 = vmul.f32 %v2685, %v3076
    %v3160 = vmul.f32 %v2687, %v3077
    %v3161 = vmul.f32 %v2689, %v3077
    %v3162 = vmul.f32 %v2691, %v3078
    %v3163 = vmul.f32 %v2693, %v3078
    %v3164 = vmul.f32 %v2695, %v3079
    %v3165 = vmul.f32 %v2697, %v3079
    %v3166 = vmul.f32 %v2699, %v3080
    %v3167 = vmul.f32 %v2701, %v3080
    %v3168 = vmul.f32 %v2703, %v3081
    %v3169 = vmul.f32 %v2705, %v3081
    %v3170 = vmul.f32 %v2707, %v3082
    %v3171 = vmul.f32 %v2709, %v3082
    %v3172 = vmul.f32 %v2711, %v3083
    %v3173 = vmul.f32 %v2713, %v3083
    %v3174 = vmul.f32 %v2715, %v3084
    %v3175 = vmul.f32 %v2717, %v3084
    %v3176 = vmul.f32 %v2719, %v3085
    %v3177 = vmul.f32 %v2721, %v3085
    %v3178 = vmul.f32 %v2723, %v3086
    %v3179 = vmul.f32 %v2725, %v3086
    %v3180 = vmul.f32 %v2727, %v3087
    %v3181 = vmul.f32 %v2729, %v3087
    %v3182 = vmul.f32 %v2731, %v3088
    %v3183 = vmul.f32 %v2733, %v3088
    %v3184 = vmul.f32 %v2735, %v3089
    %v3185 = vmul.f32 %v2737, %v3089
    %v3186 = vmul.f32 %v2739, %v3090
    %v3187 = vmul.f32 %v2741, %v3090
    %v3188 = vmul.f32 %v2743, %v3091
    %v3189 = vmul.f32 %v2745, %v3091
    %v3190 = vmul.f32 %v2747, %v3092
    %v3191 = vmul.f32 %v2749, %v3092
    %v3192 = vmul.f32 %v2751, %v3093
    %v3193 = vmul.f32 %v2753, %v3093
    %v3194 = vmul.f32 %v2755, %v3094
    %v3195 = vmul.f32 %v2757, %v3094
    %v3196 = vmul.f32 %v2759, %v3095
    %v3197 = vmul.f32 %v2761, %v3095
    %v3198 = vmul.f32 %v2763, %v3096
    %v3199 = vmul.f32 %v2765, %v3096
    %v3200 = vmul.f32 %v2767, %v3097
    %v3201 = vmul.f32 %v2769, %v3097
    %v3202 = vmul.f32 %v2771, %v3098
    %v3203 = vmul.f32 %v2773, %v3098
    %v3204 = vmul.f32 %v2775, %v3099
    %v3205 = vmul.f32 %v2777, %v3099
    %v3206 = vmul.f32 %v2779, %v3100
    %v3207 = vmul.f32 %v2781, %v3100
    %v3208 = vmul.f32 %v2783, %v3101
    %v3209 = vmul.f32 %v2785, %v3101
    %v3210 = vmul.f32 %v2787, %v3102
    %v3211 = vmul.f32 %v2789, %v3102
    %v3212 = vmul.f32 %v2791, %v3103
    %v3213 = vmul.f32 %v2793, %v3103
    %v3214 = vmul.f32 %v2795, %v3104
    %v3215 = vmul.f32 %v2797, %v3104
    %v3216 = vmul.f32 %v2799, %v3105
    %v3217 = vmul.f32 %v2801, %v3105
    %v3218 = vmul.f32 %v2803, %v3106
    %v3219 = vmul.f32 %v2805, %v3106
    %v3220 = vmul.f32 %v2807, %v3107
    %v3221 = vmul.f32 %v2809, %v3107
    %v3222 = vmul.f32 %v2811, %v3108
    %v3223 = vmul.f32 %v2813, %v3108
    %v3224 = vmul.f32 %v2815, %v3109
    %v3225 = vmul.f32 %v2817, %v3109
    %v3226 = vmul.f32 %v2819, %v3110
    %v3227 = vmul.f32 %v2821, %v3110
    %v3228 = vmul.f32 %v2823, %v3111
    %v3229 = vmul.f32 %v2825, %v3111
    %v3230 = vmul.f32 %v2827, %v3112
    %v3231 = vmul.f32 %v2829, %v3112
    %v3232 = vmul.f32 %v2831, %v3113
    %v3233 = vmul.f32 %v2833, %v3113
    %v3234 = vmul.f32 %v2835, %v3114
    %v3235 = vmul.f32 %v2837, %v3114
    %v3236 = vmul.f32 %v2839, %v3115
    %v3237 = vmul.f32 %v2841, %v3115
    %v3238 = vmul.f32 %v2843, %v3116
    %v3239 = vmul.f32 %v2845, %v3116
    %v3240 = vmul.f32 %v2847, %v3117
    %v3241 = vmul.f32 %v2849, %v3117
    %v3242 = vmul.f32 %v2851, %v3118
    %v3243 = vmul.f32 %v2853, %v3118
    %v3244 = vmul.f32 %v2855, %v3119
    %v3245 = vmul.f32 %v2857, %v3119
    %v3246 = vmul.f32 %v2859, %v3120
    %v3247 = vmul.f32 %v2861, %v3120
    %v3248 = vmul.f32 %v2863, %v3121
    %v3249 = vmul.f32 %v2865, %v3121
    %3250 = vmatprep.subr.mxu0 0.0
    %3251 = vmatpush1.msra.mxu0 %v1138
    %3252 = vmatprep.subr.mxu0 0.0
    %3253 = vmatpush1.msra.mxu0 %v1143
    %3254 = vmatprep.subr.mxu0 0.0
    %3255 = vmatpush1.msra.mxu0 %v1148
    %3256 = vmatprep.subr.mxu0 0.0
    %3257 = vmatpush1.msra.mxu0 %v1153
    %3258 = vmatprep.subr.mxu0 0.0
    %3259 = vmatpush1.msra.mxu0 %v1158
    %3260 = vmatprep.subr.mxu0 0.0
    %3261 = vmatpush1.msra.mxu0 %v1163
    %3262 = vmatprep.subr.mxu0 0.0
    %3263 = vmatpush1.msra.mxu0 %v1168
    %3264 = vmatprep.subr.mxu0 0.0
    %3265 = vmatpush1.msra.mxu0 %v1173
    %3266 = vmatprep.subr.mxu0 0.0
    %3267 = vmatpush1.msra.mxu0 %v1178
    %3268 = vmatprep.subr.mxu0 0.0
    %3269 = vmatpush1.msra.mxu0 %v1183
    %3270 = vmatprep.subr.mxu0 0.0
    %3271 = vmatpush1.msra.mxu0 %v1188
    %3272 = vmatprep.subr.mxu0 0.0
    %3273 = vmatpush1.msra.mxu0 %v1193
    %3274 = vmatprep.subr.mxu0 0.0
    %3275 = vmatpush1.msra.mxu0 %v1198
    %3276 = vmatprep.subr.mxu0 0.0
    %3277 = vmatpush1.msra.mxu0 %v1203
    %3278 = vmatprep.subr.mxu0 0.0
    %3279 = vmatpush1.msra.mxu0 %v1208
    %3280 = vmatprep.subr.mxu0 0.0
    %3281 = vmatpush1.msra.mxu0 %v1213
    %3282 = vmatprep.subr.mxu0 0.0
    %3283 = vmatpush1.msra.mxu0 %v1218
    %3284 = vmatprep.subr.mxu0 0.0
    %3285 = vmatpush1.msra.mxu0 %v1223
    %3286 = vmatprep.subr.mxu0 0.0
    %3287 = vmatpush1.msra.mxu0 %v1228
    %3288 = vmatprep.subr.mxu0 0.0
    %3289 = vmatpush1.msra.mxu0 %v1233
    %3290 = vmatprep.subr.mxu0 0.0
    %3291 = vmatpush1.msra.mxu0 %v1238
    %3292 = vmatprep.subr.mxu0 0.0
    %3293 = vmatpush1.msra.mxu0 %v1243
    %3294 = vmatprep.subr.mxu0 0.0
    %3295 = vmatpush1.msra.mxu0 %v1248
    %3296 = vmatprep.subr.mxu0 0.0
    %3297 = vmatpush1.msra.mxu0 %v1253
    %3298 = vmatprep.subr.mxu0 0.0
    %3299 = vmatpush1.msra.mxu0 %v1258
    %3300 = vmatprep.subr.mxu0 0.0
    %3301 = vmatpush1.msra.mxu0 %v1263
    %3302 = vmatprep.subr.mxu0 0.0
    %3303 = vmatpush1.msra.mxu0 %v1268
    %3304 = vmatprep.subr.mxu0 0.0
    %3305 = vmatpush1.msra.mxu0 %v1273
    %3306 = vmatprep.subr.mxu0 0.0
    %3307 = vmatpush1.msra.mxu0 %v1278
    %3308 = vmatprep.subr.mxu0 0.0
    %3309 = vmatpush1.msra.mxu0 %v1283
    %3310 = vmatprep.subr.mxu0 0.0
    %3311 = vmatpush1.msra.mxu0 %v1288
    %3312 = vmatprep.subr.mxu0 0.0
    %3313 = vmatpush1.msra.mxu0 %v1293
    %3314 = vmatprep.mubr.f32.mxu0 %v3123
    %3315 = vmatmul.mubr.f32.gmra.mrb[0].mxu0 %v3122
    %v3316 = vpop.f32.mrb[0].mxu0
    %v3317 = vadd.f32 %v104, %v3316
    %v3318 = vpop.f32.mrb[0].mxu0
    %3319 = vmatprep.mubr.f32.mxu0 %v3125
    %3320 = vmatmul.mubr.f32.gmra.mrb[0].mxu0 %v3124
    %v3321 = vpop.f32.mrb[0].mxu0
    %v3322 = vadd.f32 %v105, %v3321
    %v3323 = vpop.f32.mrb[0].mxu0
    %3324 = vmatprep.mubr.f32.mxu0 %v3127
    %3325 = vmatmul.mubr.f32.gmra.mrb[0].mxu0 %v3126
    %v3326 = vpop.f32.mrb[0].mxu0
    %v3327 = vadd.f32 %v106, %v3326
    %v3328 = vpop.f32.mrb[0].mxu0
    %3329 = vmatprep.mubr.f32.mxu0 %v3129
    %3330 = vmatmul.mubr.f32.gmra.mrb[0].mxu0 %v3128
    %v3331 = vpop.f32.mrb[0].mxu0
    %v3332 = vadd.f32 %v107, %v3331
    %v3333 = vpop.f32.mrb[0].mxu0
    %3334 = vmatprep.mubr.f32.mxu0 %v3131
    %3335 = vmatmul.mubr.f32.gmra.mrb[0].mxu0 %v3130
    %v3336 = vpop.f32.mrb[0].mxu0
    %v3337 = vadd.f32 %v108, %v3336
    %v3338 = vpop.f32.mrb[0].mxu0
    %3339 = vmatprep.mubr.f32.mxu0 %v3133
    %3340 = vmatmul.mubr.f32.gmra.mrb[0].mxu0 %v3132
    %v3341 = vpop.f32.mrb[0].mxu0
    %v3342 = vadd.f32 %v109, %v3341
    %v3343 = vpop.f32.mrb[0].mxu0
    %3344 = vmatprep.mubr.f32.mxu0 %v3135
    %3345 = vmatmul.mubr.f32.gmra.mrb[0].mxu0 %v3134
    %v3346 = vpop.f32.mrb[0].mxu0
    %v3347 = vadd.f32 %v110, %v3346
    %v3348 = vpop.f32.mrb[0].mxu0
    %3349 = vmatprep.mubr.f32.mxu0 %v3137
    %3350 = vmatmul.mubr.f32.gmra.mrb[0].mxu0 %v3136
    %v3351 = vpop.f32.mrb[0].mxu0
    %v3352 = vadd.f32 %v111, %v3351
    %v3353 = vpop.f32.mrb[0].mxu0
    %3354 = vmatprep.mubr.f32.mxu0 %v3139
    %3355 = vmatmul.mubr.f32.gmra.mrb[0].mxu0 %v3138
    %v3356 = vpop.f32.mrb[0].mxu0
    %v3357 = vadd.f32 %v112, %v3356
    %v3358 = vpop.f32.mrb[0].mxu0
    %3359 = vmatprep.mubr.f32.mxu0 %v3141
    %3360 = vmatmul.mubr.f32.gmra.mrb[0].mxu0 %v3140
    %v3361 = vpop.f32.mrb[0].mxu0
    %v3362 = vadd.f32 %v113, %v3361
    %v3363 = vpop.f32.mrb[0].mxu0
    %3364 = vmatprep.mubr.f32.mxu0 %v3143
    %3365 = vmatmul.mubr.f32.gmra.mrb[0].mxu0 %v3142
    %v3366 = vpop.f32.mrb[0].mxu0
    %v3367 = vadd.f32 %v114, %v3366
    %v3368 = vpop.f32.mrb[0].mxu0
    %3369 = vmatprep.mubr.f32.mxu0 %v3145
    %3370 = vmatmul.mubr.f32.gmra.mrb[0].mxu0 %v3144
    %v3371 = vpop.f32.mrb[0].mxu0
    %v3372 = vadd.f32 %v115, %v3371
    %v3373 = vpop.f32.mrb[0].mxu0
    %3374 = vmatprep.mubr.f32.mxu0 %v3147
    %3375 = vmatmul.mubr.f32.gmra.mrb[0].mxu0 %v3146
    %v3376 = vpop.f32.mrb[0].mxu0
    %v3377 = vadd.f32 %v116, %v3376
    %v3378 = vpop.f32.mrb[0].mxu0
    %3379 = vmatprep.mubr.f32.mxu0 %v3149
    %3380 = vmatmul.mubr.f32.gmra.mrb[0].mxu0 %v3148
    %v3381 = vpop.f32.mrb[0].mxu0
    %v3382 = vadd.f32 %v117, %v3381
    %v3383 = vpop.f32.mrb[0].mxu0
    %3384 = vmatprep.mubr.f32.mxu0 %v3151
    %3385 = vmatmul.mubr.f32.gmra.mrb[0].mxu0 %v3150
    %v3386 = vpop.f32.mrb[0].mxu0
    %v3387 = vadd.f32 %v118, %v3386
    %v3388 = vpop.f32.mrb[0].mxu0
    %3389 = vmatprep.mubr.f32.mxu0 %v3153
    %3390 = vmatmul.mubr.f32.gmra.mrb[0].mxu0 %v3152
    %v3391 = vpop.f32.mrb[0].mxu0
    %v3392 = vadd.f32 %v119, %v3391
    %v3393 = vpop.f32.mrb[0].mxu0
    %3394 = vmatprep.mubr.f32.mxu0 %v3155
    %3395 = vmatmul.mubr.f32.gmra.mrb[0].mxu0 %v3154
    %v3396 = vpop.f32.mrb[0].mxu0
    %v3397 = vadd.f32 %v120, %v3396
    %v3398 = vpop.f32.mrb[0].mxu0
    %3399 = vmatprep.mubr.f32.mxu0 %v3157
    %3400 = vmatmul.mubr.f32.gmra.mrb[0].mxu0 %v3156
    %v3401 = vpop.f32.mrb[0].mxu0
    %v3402 = vadd.f32 %v121, %v3401
    %v3403 = vpop.f32.mrb[0].mxu0
    %3404 = vmatprep.mubr.f32.mxu0 %v3159
    %3405 = vmatmul.mubr.f32.gmra.mrb[0].mxu0 %v3158
    %v3406 = vpop.f32.mrb[0].mxu0
    %v3407 = vadd.f32 %v122, %v3406
    %v3408 = vpop.f32.mrb[0].mxu0
    %3409 = vmatprep.mubr.f32.mxu0 %v3161
    %3410 = vmatmul.mubr.f32.gmra.mrb[0].mxu0 %v3160
    %v3411 = vpop.f32.mrb[0].mxu0
    %v3412 = vadd.f32 %v123, %v3411
    %v3413 = vpop.f32.mrb[0].mxu0
    %3414 = vmatprep.mubr.f32.mxu0 %v3163
    %3415 = vmatmul.mubr.f32.gmra.mrb[0].mxu0 %v3162
    %v3416 = vpop.f32.mrb[0].mxu0
    %v3417 = vadd.f32 %v124, %v3416
    %v3418 = vpop.f32.mrb[0].mxu0
    %3419 = vmatprep.mubr.f32.mxu0 %v3165
    %3420 = vmatmul.mubr.f32.gmra.mrb[0].mxu0 %v3164
    %v3421 = vpop.f32.mrb[0].mxu0
    %v3422 = vadd.f32 %v125, %v3421
    %v3423 = vpop.f32.mrb[0].mxu0
    %3424 = vmatprep.mubr.f32.mxu0 %v3167
    %3425 = vmatmul.mubr.f32.gmra.mrb[0].mxu0 %v3166
    %v3426 = vpop.f32.mrb[0].mxu0
    %v3427 = vadd.f32 %v126, %v3426
    %v3428 = vpop.f32.mrb[0].mxu0
    %3429 = vmatprep.mubr.f32.mxu0 %v3169
    %3430 = vmatmul.mubr.f32.gmra.mrb[0].mxu0 %v3168
    %v3431 = vpop.f32.mrb[0].mxu0
    %v3432 = vadd.f32 %v127, %v3431
    %v3433 = vpop.f32.mrb[0].mxu0
    %3434 = vmatprep.mubr.f32.mxu0 %v3171
    %3435 = vmatmul.mubr.f32.gmra.mrb[0].mxu0 %v3170
    %v3436 = vpop.f32.mrb[0].mxu0
    %v3437 = vadd.f32 %v128, %v3436
    %v3438 = vpop.f32.mrb[0].mxu0
    %3439 = vmatprep.mubr.f32.mxu0 %v3173
    %3440 = vmatmul.mubr.f32.gmra.mrb[0].mxu0 %v3172
    %v3441 = vpop.f32.mrb[0].mxu0
    %v3442 = vadd.f32 %v129, %v3441
    %v3443 = vpop.f32.mrb[0].mxu0
    %3444 = vmatprep.mubr.f32.mxu0 %v3175
    %3445 = vmatmul.mubr.f32.gmra.mrb[0].mxu0 %v3174
    %v3446 = vpop.f32.mrb[0].mxu0
    %v3447 = vadd.f32 %v130, %v3446
    %v3448 = vpop.f32.mrb[0].mxu0
    %3449 = vmatprep.mubr.f32.mxu0 %v3177
    %3450 = vmatmul.mubr.f32.gmra.mrb[0].mxu0 %v3176
    %v3451 = vpop.f32.mrb[0].mxu0
    %v3452 = vadd.f32 %v131, %v3451
    %v3453 = vpop.f32.mrb[0].mxu0
    %3454 = vmatprep.mubr.f32.mxu0 %v3179
    %3455 = vmatmul.mubr.f32.gmra.mrb[0].mxu0 %v3178
    %v3456 = vpop.f32.mrb[0].mxu0
    %v3457 = vadd.f32 %v132, %v3456
    %v3458 = vpop.f32.mrb[0].mxu0
    %3459 = vmatprep.mubr.f32.mxu0 %v3181
    %3460 = vmatmul.mubr.f32.gmra.mrb[0].mxu0 %v3180
    %v3461 = vpop.f32.mrb[0].mxu0
    %v3462 = vadd.f32 %v133, %v3461
    %v3463 = vpop.f32.mrb[0].mxu0
    %3464 = vmatprep.mubr.f32.mxu0 %v3183
    %3465 = vmatmul.mubr.f32.gmra.mrb[0].mxu0 %v3182
    %v3466 = vpop.f32.mrb[0].mxu0
    %v3467 = vadd.f32 %v134, %v3466
    %v3468 = vpop.f32.mrb[0].mxu0
    %3469 = vmatprep.mubr.f32.mxu0 %v3185
    %3470 = vmatmul.mubr.f32.gmra.mrb[0].mxu0 %v3184
    %v3471 = vpop.f32.mrb[0].mxu0
    %v3472 = vadd.f32 %v135, %v3471
    %v3473 = vpop.f32.mrb[0].mxu0
    %3474 = vdwg.mxu0
    %3475 = vmatprep.subr.mxu0 0.0
    %3476 = vmatpush1.msra.mxu0 %v1298
    %3477 = vmatprep.subr.mxu0 0.0
    %3478 = vmatpush1.msra.mxu0 %v1303
    %3479 = vmatprep.subr.mxu0 0.0
    %3480 = vmatpush1.msra.mxu0 %v1308
    %3481 = vmatprep.subr.mxu0 0.0
    %3482 = vmatpush1.msra.mxu0 %v1313
    %3483 = vmatprep.subr.mxu0 0.0
    %3484 = vmatpush1.msra.mxu0 %v1318
    %3485 = vmatprep.subr.mxu0 0.0
    %3486 = vmatpush1.msra.mxu0 %v1323
    %3487 = vmatprep.subr.mxu0 0.0
    %3488 = vmatpush1.msra.mxu0 %v1328
    %3489 = vmatprep.subr.mxu0 0.0
    %3490 = vmatpush1.msra.mxu0 %v1333
    %3491 = vmatprep.subr.mxu0 0.0
    %3492 = vmatpush1.msra.mxu0 %v1338
    %3493 = vmatprep.subr.mxu0 0.0
    %3494 = vmatpush1.msra.mxu0 %v1343
    %3495 = vmatprep.subr.mxu0 0.0
    %3496 = vmatpush1.msra.mxu0 %v1348
    %3497 = vmatprep.subr.mxu0 0.0
    %3498 = vmatpush1.msra.mxu0 %v1353
    %3499 = vmatprep.subr.mxu0 0.0
    %3500 = vmatpush1.msra.mxu0 %v1358
    %3501 = vmatprep.subr.mxu0 0.0
    %3502 = vmatpush1.msra.mxu0 %v1363
    %3503 = vmatprep.subr.mxu0 0.0
    %3504 = vmatpush1.msra.mxu0 %v1368
    %3505 = vmatprep.subr.mxu0 0.0
    %3506 = vmatpush1.msra.mxu0 %v1373
    %3507 = vmatprep.subr.mxu0 0.0
    %3508 = vmatpush1.msra.mxu0 %v1378
    %3509 = vmatprep.subr.mxu0 0.0
    %3510 = vmatpush1.msra.mxu0 %v1383
    %3511 = vmatprep.subr.mxu0 0.0
    %3512 = vmatpush1.msra.mxu0 %v1388
    %3513 = vmatprep.subr.mxu0 0.0
    %3514 = vmatpush1.msra.mxu0 %v1393
    %3515 = vmatprep.subr.mxu0 0.0
    %3516 = vmatpush1.msra.mxu0 %v1398
    %3517 = vmatprep.subr.mxu0 0.0
    %3518 = vmatpush1.msra.mxu0 %v1403
    %3519 = vmatprep.subr.mxu0 0.0
    %3520 = vmatpush1.msra.mxu0 %v1408
    %3521 = vmatprep.subr.mxu0 0.0
    %3522 = vmatpush1.msra.mxu0 %v1413
    %3523 = vmatprep.subr.mxu0 0.0
    %3524 = vmatpush1.msra.mxu0 %v1418
    %3525 = vmatprep.subr.mxu0 0.0
    %3526 = vmatpush1.msra.mxu0 %v1423
    %3527 = vmatprep.subr.mxu0 0.0
    %3528 = vmatpush1.msra.mxu0 %v1428
    %3529 = vmatprep.subr.mxu0 0.0
    %3530 = vmatpush1.msra.mxu0 %v1433
    %3531 = vmatprep.subr.mxu0 0.0
    %3532 = vmatpush1.msra.mxu0 %v1438
    %3533 = vmatprep.subr.mxu0 0.0
    %3534 = vmatpush1.msra.mxu0 %v1443
    %3535 = vmatprep.subr.mxu0 0.0
    %3536 = vmatpush1.msra.mxu0 %v1448
    %3537 = vmatprep.subr.mxu0 0.0
    %3538 = vmatpush1.msra.mxu0 %v1453
    %3539 = vmatprep.mubr.f32.mxu0 %v3187
    %3540 = vmatmul.mubr.f32.gmra.mrb[0].mxu0 %v3186
    %v3541 = vpop.f32.mrb[0].mxu0
    %v3542 = vadd.f32 %v136, %v3541
    %v3543 = vpop.f32.mrb[0].mxu0
    %3544 = vmatprep.mubr.f32.mxu0 %v3189
    %3545 = vmatmul.mubr.f32.gmra.mrb[0].mxu0 %v3188
    %v3546 = vpop.f32.mrb[0].mxu0
    %v3547 = vadd.f32 %v137, %v3546
    %v3548 = vpop.f32.mrb[0].mxu0
    %3549 = vmatprep.mubr.f32.mxu0 %v3191
    %3550 = vmatmul.mubr.f32.gmra.mrb[0].mxu0 %v3190
    %v3551 = vpop.f32.mrb[0].mxu0
    %v3552 = vadd.f32 %v138, %v3551
    %v3553 = vpop.f32.mrb[0].mxu0
    %3554 = vmatprep.mubr.f32.mxu0 %v3193
    %3555 = vmatmul.mubr.f32.gmra.mrb[0].mxu0 %v3192
    %v3556 = vpop.f32.mrb[0].mxu0
    %v3557 = vadd.f32 %v139, %v3556
    %v3558 = vpop.f32.mrb[0].mxu0
    %3559 = vmatprep.mubr.f32.mxu0 %v3195
    %3560 = vmatmul.mubr.f32.gmra.mrb[0].mxu0 %v3194
    %v3561 = vpop.f32.mrb[0].mxu0
    %v3562 = vadd.f32 %v140, %v3561
    %v3563 = vpop.f32.mrb[0].mxu0
    %3564 = vmatprep.mubr.f32.mxu0 %v3197
    %3565 = vmatmul.mubr.f32.gmra.mrb[0].mxu0 %v3196
    %v3566 = vpop.f32.mrb[0].mxu0
    %v3567 = vadd.f32 %v141, %v3566
    %v3568 = vpop.f32.mrb[0].mxu0
    %3569 = vmatprep.mubr.f32.mxu0 %v3199
    %3570 = vmatmul.mubr.f32.gmra.mrb[0].mxu0 %v3198
    %v3571 = vpop.f32.mrb[0].mxu0
    %v3572 = vadd.f32 %v142, %v3571
    %v3573 = vpop.f32.mrb[0].mxu0
    %3574 = vmatprep.mubr.f32.mxu0 %v3201
    %3575 = vmatmul.mubr.f32.gmra.mrb[0].mxu0 %v3200
    %v3576 = vpop.f32.mrb[0].mxu0
    %v3577 = vadd.f32 %v143, %v3576
    %v3578 = vpop.f32.mrb[0].mxu0
    %3579 = vmatprep.mubr.f32.mxu0 %v3203
    %3580 = vmatmul.mubr.f32.gmra.mrb[0].mxu0 %v3202
    %v3581 = vpop.f32.mrb[0].mxu0
    %v3582 = vadd.f32 %v144, %v3581
    %v3583 = vpop.f32.mrb[0].mxu0
    %3584 = vmatprep.mubr.f32.mxu0 %v3205
    %3585 = vmatmul.mubr.f32.gmra.mrb[0].mxu0 %v3204
    %v3586 = vpop.f32.mrb[0].mxu0
    %v3587 = vadd.f32 %v145, %v3586
    %v3588 = vpop.f32.mrb[0].mxu0
    %3589 = vmatprep.mubr.f32.mxu0 %v3207
    %3590 = vmatmul.mubr.f32.gmra.mrb[0].mxu0 %v3206
    %v3591 = vpop.f32.mrb[0].mxu0
    %v3592 = vadd.f32 %v146, %v3591
    %v3593 = vpop.f32.mrb[0].mxu0
    %3594 = vmatprep.mubr.f32.mxu0 %v3209
    %3595 = vmatmul.mubr.f32.gmra.mrb[0].mxu0 %v3208
    %v3596 = vpop.f32.mrb[0].mxu0
    %v3597 = vadd.f32 %v147, %v3596
    %v3598 = vpop.f32.mrb[0].mxu0
    %3599 = vmatprep.mubr.f32.mxu0 %v3211
    %3600 = vmatmul.mubr.f32.gmra.mrb[0].mxu0 %v3210
    %v3601 = vpop.f32.mrb[0].mxu0
    %v3602 = vadd.f32 %v148, %v3601
    %v3603 = vpop.f32.mrb[0].mxu0
    %3604 = vmatprep.mubr.f32.mxu0 %v3213
    %3605 = vmatmul.mubr.f32.gmra.mrb[0].mxu0 %v3212
    %v3606 = vpop.f32.mrb[0].mxu0
    %v3607 = vadd.f32 %v149, %v3606
    %v3608 = vpop.f32.mrb[0].mxu0
    %3609 = vmatprep.mubr.f32.mxu0 %v3215
    %3610 = vmatmul.mubr.f32.gmra.mrb[0].mxu0 %v3214
    %v3611 = vpop.f32.mrb[0].mxu0
    %v3612 = vadd.f32 %v150, %v3611
    %v3613 = vpop.f32.mrb[0].mxu0
    %3614 = vmatprep.mubr.f32.mxu0 %v3217
    %3615 = vmatmul.mubr.f32.gmra.mrb[0].mxu0 %v3216
    %v3616 = vpop.f32.mrb[0].mxu0
    %v3617 = vadd.f32 %v151, %v3616
    %v3618 = vpop.f32.mrb[0].mxu0
    %3619 = vmatprep.mubr.f32.mxu0 %v3219
    %3620 = vmatmul.mubr.f32.gmra.mrb[0].mxu0 %v3218
    %v3621 = vpop.f32.mrb[0].mxu0
    %v3622 = vadd.f32 %v152, %v3621
    %v3623 = vpop.f32.mrb[0].mxu0
    %3624 = vmatprep.mubr.f32.mxu0 %v3221
    %3625 = vmatmul.mubr.f32.gmra.mrb[0].mxu0 %v3220
    %v3626 = vpop.f32.mrb[0].mxu0
    %v3627 = vadd.f32 %v153, %v3626
    %v3628 = vpop.f32.mrb[0].mxu0
    %3629 = vmatprep.mubr.f32.mxu0 %v3223
    %3630 = vmatmul.mubr.f32.gmra.mrb[0].mxu0 %v3222
    %v3631 = vpop.f32.mrb[0].mxu0
    %v3632 = vadd.f32 %v154, %v3631
    %v3633 = vpop.f32.mrb[0].mxu0
    %3634 = vmatprep.mubr.f32.mxu0 %v3225
    %3635 = vmatmul.mubr.f32.gmra.mrb[0].mxu0 %v3224
    %v3636 = vpop.f32.mrb[0].mxu0
    %v3637 = vadd.f32 %v155, %v3636
    %v3638 = vpop.f32.mrb[0].mxu0
    %3639 = vmatprep.mubr.f32.mxu0 %v3227
    %3640 = vmatmul.mubr.f32.gmra.mrb[0].mxu0 %v3226
    %v3641 = vpop.f32.mrb[0].mxu0
    %v3642 = vadd.f32 %v156, %v3641
    %v3643 = vpop.f32.mrb[0].mxu0
    %3644 = vmatprep.mubr.f32.mxu0 %v3229
    %3645 = vmatmul.mubr.f32.gmra.mrb[0].mxu0 %v3228
    %v3646 = vpop.f32.mrb[0].mxu0
    %v3647 = vadd.f32 %v157, %v3646
    %v3648 = vpop.f32.mrb[0].mxu0
    %3649 = vmatprep.mubr.f32.mxu0 %v3231
    %3650 = vmatmul.mubr.f32.gmra.mrb[0].mxu0 %v3230
    %v3651 = vpop.f32.mrb[0].mxu0
    %v3652 = vadd.f32 %v158, %v3651
    %v3653 = vpop.f32.mrb[0].mxu0
    %3654 = vmatprep.mubr.f32.mxu0 %v3233
    %3655 = vmatmul.mubr.f32.gmra.mrb[0].mxu0 %v3232
    %v3656 = vpop.f32.mrb[0].mxu0
    %v3657 = vadd.f32 %v159, %v3656
    %v3658 = vpop.f32.mrb[0].mxu0
    %3659 = vmatprep.mubr.f32.mxu0 %v3235
    %3660 = vmatmul.mubr.f32.gmra.mrb[0].mxu0 %v3234
    %v3661 = vpop.f32.mrb[0].mxu0
    %v3662 = vadd.f32 %v160, %v3661
    %v3663 = vpop.f32.mrb[0].mxu0
    %3664 = vmatprep.mubr.f32.mxu0 %v3237
    %3665 = vmatmul.mubr.f32.gmra.mrb[0].mxu0 %v3236
    %v3666 = vpop.f32.mrb[0].mxu0
    %v3667 = vadd.f32 %v161, %v3666
    %v3668 = vpop.f32.mrb[0].mxu0
    %3669 = vmatprep.mubr.f32.mxu0 %v3239
    %3670 = vmatmul.mubr.f32.gmra.mrb[0].mxu0 %v3238
    %v3671 = vpop.f32.mrb[0].mxu0
    %v3672 = vadd.f32 %v162, %v3671
    %v3673 = vpop.f32.mrb[0].mxu0
    %3674 = vmatprep.mubr.f32.mxu0 %v3241
    %3675 = vmatmul.mubr.f32.gmra.mrb[0].mxu0 %v3240
    %v3676 = vpop.f32.mrb[0].mxu0
    %v3677 = vadd.f32 %v163, %v3676
    %v3678 = vpop.f32.mrb[0].mxu0
    %3679 = vmatprep.mubr.f32.mxu0 %v3243
    %3680 = vmatmul.mubr.f32.gmra.mrb[0].mxu0 %v3242
    %v3681 = vpop.f32.mrb[0].mxu0
    %v3682 = vadd.f32 %v164, %v3681
    %v3683 = vpop.f32.mrb[0].mxu0
    %3684 = vmatprep.mubr.f32.mxu0 %v3245
    %3685 = vmatmul.mubr.f32.gmra.mrb[0].mxu0 %v3244
    %v3686 = vpop.f32.mrb[0].mxu0
    %v3687 = vadd.f32 %v165, %v3686
    %v3688 = vpop.f32.mrb[0].mxu0
    %3689 = vmatprep.mubr.f32.mxu0 %v3247
    %3690 = vmatmul.mubr.f32.gmra.mrb[0].mxu0 %v3246
    %v3691 = vpop.f32.mrb[0].mxu0
    %v3692 = vadd.f32 %v166, %v3691
    %v3693 = vpop.f32.mrb[0].mxu0
    %3694 = vmatprep.mubr.f32.mxu0 %v3249
    %3695 = vmatmul.mubr.f32.gmra.mrb[0].mxu0 %v3248
    %v3696 = vpop.f32.mrb[0].mxu0
    %v3697 = vadd.f32 %v167, %v3696
    %v3698 = vpop.f32.mrb[0].mxu0
    %3699 = vdwg.mxu0
    %3700 = vst [vmem:[#allocation15] sm:$0xff] %v3317
    %3701 = vst [vmem:[#allocation15 + $0x8] sm:$0xff] %v3322
    %3702 = vst [vmem:[#allocation15 + $0x10] sm:$0xff] %v3327
    %3703 = vst [vmem:[#allocation15 + $0x18] sm:$0xff] %v3332
    %3704 = vst [vmem:[#allocation15 + $0x20] sm:$0xff] %v3337
    %3705 = vst [vmem:[#allocation15 + $0x28] sm:$0xff] %v3342
    %3706 = vst [vmem:[#allocation15 + $0x30] sm:$0xff] %v3347
    %3707 = vst [vmem:[#allocation15 + $0x38] sm:$0xff] %v3352
    %3708 = vst [vmem:[#allocation15 + $0x40] sm:$0xff] %v3357
    %3709 = vst [vmem:[#allocation15 + $0x48] sm:$0xff] %v3362
    %3710 = vst [vmem:[#allocation15 + $0x50] sm:$0xff] %v3367
    %3711 = vst [vmem:[#allocation15 + $0x58] sm:$0xff] %v3372
    %3712 = vst [vmem:[#allocation15 + $0x60] sm:$0xff] %v3377
    %3713 = vst [vmem:[#allocation15 + $0x68] sm:$0xff] %v3382
    %3714 = vst [vmem:[#allocation15 + $0x70] sm:$0xff] %v3387
    %3715 = vst [vmem:[#allocation15 + $0x78] sm:$0xff] %v3392
    %3716 = vst [vmem:[#allocation15 + $0x80] sm:$0xff] %v3397
    %3717 = vst [vmem:[#allocation15 + $0x88] sm:$0xff] %v3402
    %3718 = vst [vmem:[#allocation15 + $0x90] sm:$0xff] %v3407
    %3719 = vst [vmem:[#allocation15 + $0x98] sm:$0xff] %v3412
    %3720 = vst [vmem:[#allocation15 + $0xa0] sm:$0xff] %v3417
    %3721 = vst [vmem:[#allocation15 + $0xa8] sm:$0xff] %v3422
    %3722 = vst [vmem:[#allocation15 + $0xb0] sm:$0xff] %v3427
    %3723 = vst [vmem:[#allocation15 + $0xb8] sm:$0xff] %v3432
    %3724 = vst [vmem:[#allocation15 + $0xc0] sm:$0xff] %v3437
    %3725 = vst [vmem:[#allocation15 + $0xc8] sm:$0xff] %v3442
    %3726 = vst [vmem:[#allocation15 + $0xd0] sm:$0xff] %v3447
    %3727 = vst [vmem:[#allocation15 + $0xd8] sm:$0xff] %v3452
    %3728 = vst [vmem:[#allocation15 + $0xe0] sm:$0xff] %v3457
    %3729 = vst [vmem:[#allocation15 + $0xe8] sm:$0xff] %v3462
    %3730 = vst [vmem:[#allocation15 + $0xf0] sm:$0xff] %v3467
    %3731 = vst [vmem:[#allocation15 + $0xf8] sm:$0xff] %v3472
    %3732 = vst [vmem:[#allocation15 + $0x100] sm:$0xff] %v3542
    %3733 = vst [vmem:[#allocation15 + $0x108] sm:$0xff] %v3547
    %3734 = vst [vmem:[#allocation15 + $0x110] sm:$0xff] %v3552
    %3735 = vst [vmem:[#allocation15 + $0x118] sm:$0xff] %v3557
    %3736 = vst [vmem:[#allocation15 + $0x120] sm:$0xff] %v3562
    %3737 = vst [vmem:[#allocation15 + $0x128] sm:$0xff] %v3567
    %3738 = vst [vmem:[#allocation15 + $0x130] sm:$0xff] %v3572
    %3739 = vst [vmem:[#allocation15 + $0x138] sm:$0xff] %v3577
    %3740 = vst [vmem:[#allocation15 + $0x140] sm:$0xff] %v3582
    %3741 = vst [vmem:[#allocation15 + $0x148] sm:$0xff] %v3587
    %3742 = vst [vmem:[#allocation15 + $0x150] sm:$0xff] %v3592
    %3743 = vst [vmem:[#allocation15 + $0x158] sm:$0xff] %v3597
    %3744 = vst [vmem:[#allocation15 + $0x160] sm:$0xff] %v3602
    %3745 = vst [vmem:[#allocation15 + $0x168] sm:$0xff] %v3607
    %3746 = vst [vmem:[#allocation15 + $0x170] sm:$0xff] %v3612
    %3747 = vst [vmem:[#allocation15 + $0x178] sm:$0xff] %v3617
    %3748 = vst [vmem:[#allocation15 + $0x180] sm:$0xff] %v3622
    %3749 = vst [vmem:[#allocation15 + $0x188] sm:$0xff] %v3627
    %3750 = vst [vmem:[#allocation15 + $0x190] sm:$0xff] %v3632
    %3751 = vst [vmem:[#allocation15 + $0x198] sm:$0xff] %v3637
    %3752 = vst [vmem:[#allocation15 + $0x1a0] sm:$0xff] %v3642
    %3753 = vst [vmem:[#allocation15 + $0x1a8] sm:$0xff] %v3647
    %3754 = vst [vmem:[#allocation15 + $0x1b0] sm:$0xff] %v3652
    %3755 = vst [vmem:[#allocation15 + $0x1b8] sm:$0xff] %v3657
    %3756 = vst [vmem:[#allocation15 + $0x1c0] sm:$0xff] %v3662
    %3757 = vst [vmem:[#allocation15 + $0x1c8] sm:$0xff] %v3667
    %3758 = vst [vmem:[#allocation15 + $0x1d0] sm:$0xff] %v3672
    %3759 = vst [vmem:[#allocation15 + $0x1d8] sm:$0xff] %v3677
    %3760 = vst [vmem:[#allocation15 + $0x1e0] sm:$0xff] %v3682
    %3761 = vst [vmem:[#allocation15 + $0x1e8] sm:$0xff] %v3687
    %3762 = vst [vmem:[#allocation15 + $0x1f0] sm:$0xff] %v3692
    %3763 = vst [vmem:[#allocation15 + $0x1f8] sm:$0xff] %v3697
    // Predicated region
    $region54: #{tpu_custom_call.1} parent=1 // pred_check
      _
    $region55: #{tpu_custom_call.1} parent=1 // pred_check_branch
      %3765 = sbr.rel (0) target = $region57
    $region56: #{tpu_custom_call.1} parent=1 // pred_region
      %s3767 = ssub.s32 8192, 8192
      %3768 = vsyncadd [#allocation4], %s3767
      %s3769 = sshll.u32 [#allocation11], 4
      %s3770 = int_to_ptr.vmem [resolvable:$true] %s3769
      %3775 = dma.vmem_to_hbm [thread:$0]  %s3770, 8192, %s8, [#allocation4], 128, 128, 8
    $region57: #{tpu_custom_call.1} parent=1 // pred_fallthru
      _
    // Predicated region
    $region58: #{tpu_custom_call.1} parent=1 // pred_check
      _
    $region59: #{tpu_custom_call.1} parent=1 // pred_check_branch
      %3777 = sbr.rel (0) target = $region61
    $region60: #{tpu_custom_call.1} parent=1 // pred_region
      %s3779 = ssub.s32 8192, 8192
      %3780 = vsyncadd [#allocation13], %s3779
      %s3781 = sshll.u32 [#allocation12], 4
      %s3782 = int_to_ptr.vmem [resolvable:$true] %s3781
      %3787 = dma.vmem_to_hbm [thread:$0]  %s3782, 8192, %s9, [#allocation13], 128, 128, 8
    $region61: #{tpu_custom_call.1} parent=1 // pred_fallthru
      _
    // Predicated region
    $region62: #{tpu_custom_call.1} parent=1 // pred_check
      _
    $region63: #{tpu_custom_call.1} parent=1 // pred_check_branch
      %3789 = sbr.rel (0) target = $region65
    $region64: #{tpu_custom_call.1} parent=1 // pred_region
      %s3791 = ssub.s32 8192, 8192
      %3792 = vsyncadd [#allocation13], %s3791
      %s3793 = sshll.u32 [#allocation14], 4
      %s3794 = int_to_ptr.vmem [resolvable:$true] %s3793
      %3799 = dma.vmem_to_hbm [thread:$0]  %s3794, 8192, %s10, [#allocation13], 128, 128, 8
    $region65: #{tpu_custom_call.1} parent=1 // pred_fallthru
      _
    // Predicated region
    $region66: #{tpu_custom_call.1} parent=1 // pred_check
      _
    $region67: #{tpu_custom_call.1} parent=1 // pred_check_branch
      %3801 = sbr.rel (0) target = $region69
    $region68: #{tpu_custom_call.1} parent=1 // pred_region
      %s3803 = ssub.s32 8192, 8192
      %3804 = vsyncadd [#allocation16], %s3803
      %s3805 = sshll.u32 [#allocation15], 4
      %s3806 = int_to_ptr.vmem [resolvable:$true] %s3805
      %3811 = dma.vmem_to_hbm [thread:$0]  %s3806, 8192, %s11, [#allocation16], 128, 128, 8
    $region69: #{tpu_custom_call.1} parent=1 // pred_fallthru
      _
    // Predicated region
    $region70: #{tpu_custom_call.1} parent=1 // pred_check
      _
    $region71: #{tpu_custom_call.1} parent=1 // pred_check_branch
      %3813 = sbr.rel (0) target = $region73
    $region72: #{tpu_custom_call.1} parent=1 // pred_region
      %3814 = dma.done [#allocation4], 8192
    $region73: #{tpu_custom_call.1} parent=1 // pred_fallthru
      _
    // Predicated region
    $region74: #{tpu_custom_call.1} parent=1 // pred_check
      _
    $region75: #{tpu_custom_call.1} parent=1 // pred_check_branch
      %3816 = sbr.rel (0) target = $region77
    $region76: #{tpu_custom_call.1} parent=1 // pred_region
      %3817 = dma.done [#allocation13], 8192
    $region77: #{tpu_custom_call.1} parent=1 // pred_fallthru
      _
    // Predicated region
    $region78: #{tpu_custom_call.1} parent=1 // pred_check
      _
    $region79: #{tpu_custom_call.1} parent=1 // pred_check_branch
      %3819 = sbr.rel (0) target = $region81
    $region80: #{tpu_custom_call.1} parent=1 // pred_region
      %3820 = dma.done [#allocation13], 8192
    $region81: #{tpu_custom_call.1} parent=1 // pred_fallthru
      _
    // Predicated region
    $region82: #{tpu_custom_call.1} parent=1 // pred_check
      _
    $region83: #{tpu_custom_call.1} parent=1 // pred_check_branch
      %3822 = sbr.rel (0) target = $region85
    $region84: #{tpu_custom_call.1} parent=1 // pred_region
      %3823 = dma.done [#allocation16], 8192
    $region85: #{tpu_custom_call.1} parent=1 // pred_fallthru
      _
    %3824 = vsyncpa [#allocation3], 1
    %3825 = vsyncpa [#allocation6], 1
    %3826 = vsyncpa [#allocation9], 1
    %3827 = vsyncpa [#allocation4], 1
    %3828 = vsyncpa [#allocation13], 1
    %3829 = vsyncpa [#allocation16], 1

</llo_original>
